<compile_context>
chip_gen: v7x
topology: tpu7x:2x2x1
jax: 0.10.0
libtpu: 0.0.40
codegen_flags: <defaults>
</compile_context>

<pallas_src>
import functools

import jax
import jax.numpy as jnp
import numpy as np
from jax.experimental import pallas as pl
from jax.experimental.pallas import tpu as pltpu

BN_EPS = 1e-5
LANE = 128


def _round_up(x, m):
    return (x + m - 1) // m * m


def _vmem_capacity_bytes():
    try:
        return int(pltpu.get_tpu_info().vmem_capacity_bytes)
    except Exception:
        return 128 << 20


def _default_compute_dtype():
    """bf16 matmuls / hidden scratch on bf16-native MXUs, f32 elsewhere."""
    try:
        kind = jax.devices()[0].device_kind.lower()
    except Exception:
        return jnp.float32
    if any(tag in kind for tag in ("v6", "v7", "tpu7", "trillium", "ironwood")):
        return jnp.bfloat16
    return jnp.float32


def _pick_row_block(out_h, out_w, hidden_p, acc_budget):
    """Output-row tile: a divisor of out_h that is a multiple of 8 (or the
    full extent), preferring (a) f32 accumulator within budget, (b) matmul
    M >= 256, (c) >= 2 row tiles (megacore / pipelining), (d) larger tiles."""
    cands = [d for d in range(1, out_h + 1)
             if out_h % d == 0 and (d % 8 == 0 or d == out_h)]
    best, best_key = None, None
    for d in cands:
        fits = d * out_w * hidden_p * 4 <= acc_budget
        key = (1, d * out_w >= 256, out_h // d >= 2, d) if fits else (0, 0, 0, -d)
        if best_key is None or key > best_key:
            best, best_key = d, key
    return best


# ---------------------------------------------------------------------------
# Fused kernel: expand (1x1) -> depthwise (3x3) -> project (1x1) -> +residual
# One invocation handles one (batch, output-row-tile) grid point.
# ---------------------------------------------------------------------------
def _inverted_residual_kernel(
        *refs, has_expand, W, Wp, RB, HR, out_w, stride, Cout, hidden_p,
        n_row_tiles, bot_zero, use_shortcut, compute_dtype):
    if has_expand:
        (x_ref, w_exp_ref, b_exp_ref, w_dw_ref, b_dw_ref,
         w_proj_ref, b_proj_ref, o_ref, hid_ref) = refs
    else:
        (x_ref, w_dw_ref, b_dw_ref, w_proj_ref, b_proj_ref,
         o_ref, hid_ref) = refs

    s = stride
    prec = (jax.lax.Precision.HIGHEST
            if np.dtype(compute_dtype) == np.dtype(np.float32) else None)
    mm = functools.partial(jnp.dot, preferred_element_type=jnp.float32,
                           precision=prec)

    r = pl.program_id(1)                                 # row-tile index
    row0 = pl.multiple_of(r * (RB * s), RB * s)          # first padded-x row

    # ---- stage 1: expanded hidden activation for this tile (VMEM only) -----
    if has_expand:
        xw = x_ref[0, pl.ds(row0, HR), :, :]             # (HR, Wp, Cin)
        cin = xw.shape[-1]
        x2d = xw.reshape(HR * Wp, cin).astype(compute_dtype)
        y = mm(x2d, w_exp_ref[...].astype(compute_dtype))
        y = jnp.clip(y + b_exp_ref[...], 0.0, 6.0)
        hid_ref[...] = y.reshape(HR, Wp, hidden_p).astype(hid_ref.dtype)
        # Zero the spatial halo: the host zero-pads x, but expand(0) != 0
        # because of the folded BN bias, so halo rows/cols are re-zeroed here.
        hid_ref[:, 0:1, :] = jnp.zeros((HR, 1, hidden_p), hid_ref.dtype)
        hid_ref[:, W + 1:Wp, :] = jnp.zeros((HR, Wp - W - 1, hidden_p),
                                            hid_ref.dtype)

        @pl.when(r == 0)
        def _():
            hid_ref[0:1, :, :] = jnp.zeros((1, Wp, hidden_p), hid_ref.dtype)

        if bot_zero:
            @pl.when(r == n_row_tiles - 1)
            def _():
                hid_ref[HR - 1:HR, :, :] = jnp.zeros((1, Wp, hidden_p),
                                                     hid_ref.dtype)
    else:
        # expand_ratio == 1: the hidden activation is x itself; the halo zeros
        # come directly from the host-side zero padding of x.
        hid_ref[...] = x_ref[0, pl.ds(row0, HR), :, :].astype(hid_ref.dtype)

    # ---- stage 2: 3x3 depthwise conv + BN + ReLU6 (f32 accumulation) -------
    acc = jnp.zeros((RB, out_w, hidden_p), jnp.float32)
    for kh in range(3):
        for kw in range(3):
            if s == 1:
                win = hid_ref[pl.ds(kh, RB), pl.ds(kw, out_w), :]
            else:
                # TODO(synk): for stride-2 blocks, replace this strided value
                # decimation with a phase-decomposed (even/odd) hidden layout
                # so every tap is a contiguous load.
                win = hid_ref[pl.ds(kh, s * (RB - 1) + 1),
                              pl.ds(kw, s * (out_w - 1) + 1), :]
                win = win[::s, ::s, :]
            tap = w_dw_ref[pl.ds(3 * kh + kw, 1), :].reshape(1, 1, hidden_p)
            acc = acc + win.astype(jnp.float32) * tap
    dw = jnp.clip(acc + b_dw_ref[...].reshape(1, 1, hidden_p), 0.0, 6.0)

    # ---- stage 3: 1x1 projection + BN (+ residual), lane-dense store -------
    p = mm(dw.reshape(RB * out_w, hidden_p).astype(compute_dtype),
           w_proj_ref[...].astype(compute_dtype))
    p = (p + b_proj_ref[...]).reshape(RB, out_w, Cout)
    if use_shortcut:
        xres = x_ref[0, pl.ds(row0 + 1, RB), pl.ds(1, W), :]
        p = p + xres.astype(jnp.float32)
    o_ref[0] = p.reshape(RB, out_w * Cout).astype(o_ref.dtype)


# ---------------------------------------------------------------------------
# Host-side wrapper: BN folding, padding, BlockSpecs, pallas_call
# ---------------------------------------------------------------------------
def _fold_bn(gamma, beta, mean, var):
    scale = gamma / jnp.sqrt(var + BN_EPS)
    return scale, beta - mean * scale


def inverted_residual(x_nchw, params, *, in_channel, out_channel, stride,
                      expand_ratio, compute_dtype=None, row_block=None):
    """Forward pass of the PyTorch InvertedResidual module (eval-mode BN)."""
    if compute_dtype is None:
        compute_dtype = _default_compute_dtype()

    N, Cin, H, W = x_nchw.shape
    assert Cin == in_channel
    Cout = out_channel
    s = stride
    use_shortcut = (s == 1 and in_channel == out_channel)
    has_expand = (expand_ratio != 1)
    hidden = in_channel * expand_ratio
    hidden_p = _round_up(hidden, LANE) if has_expand else hidden
    pad_c = hidden_p - hidden

    out_h = (H - 1) // s + 1
    out_w = (W - 1) // s + 1

    # Host-side zero padding of x: 1 halo row/col on top/left, enough on the
    # bottom/right for the last tap, width rounded to a sublane multiple so
    # in-kernel reshapes stay aligned.
    Hp = max(H + 2, s * (out_h - 1) + 3)
    Wp = _round_up(max(W + 2, s * (out_w - 1) + 3), 8)
    x_nhwc = jnp.transpose(x_nchw, (0, 2, 3, 1)).astype(jnp.float32)
    x_pad = jnp.pad(x_nhwc, ((0, 0), (1, Hp - H - 1), (1, Wp - W - 1), (0, 0)))
    # Is the bottom halo row ever read by the depthwise taps?
    bot_zero = int(s * (out_h - 1) + 2 >= H + 1)

    cap = _vmem_capacity_bytes()
    acc_budget = (128 if cap <= (64 << 20) else 192) * 1024
    if row_block is None:
        RB = _pick_row_block(out_h, out_w, hidden_p, acc_budget)
    else:
        RB = int(row_block)
        assert out_h % RB == 0 and (RB % 8 == 0 or RB == out_h), (
            "row_block must divide out_h and be a multiple of 8 (or == out_h)")
    R = out_h // RB                                  # number of row tiles
    HR = s * (RB - 1) + 3                            # padded-x rows per tile

    # Fold eval-mode BN into the conv weights (only bias adds stay in-kernel).
    s2, b2 = _fold_bn(*params["bn2"])
    w_dw = jnp.transpose(params["w_dw"][:, 0, :, :], (1, 2, 0)) * s2[None, None, :]
    w_dw = w_dw.reshape(9, hidden)
    s3, b3 = _fold_bn(*params["bn3"])
    w_proj = params["w_proj"].reshape(out_channel, hidden).T * s3[None, :]

    w_dw_p = jnp.pad(w_dw, ((0, 0), (0, pad_c))).astype(jnp.float32)
    b_dw_p = jnp.pad(b2, (0, pad_c)).reshape(1, hidden_p).astype(jnp.float32)
    w_proj_p = jnp.pad(w_proj, ((0, pad_c), (0, 0))).astype(jnp.float32)
    b_proj = b3.reshape(1, Cout).astype(jnp.float32)

    in_specs = [pl.BlockSpec((1, Hp, Wp, Cin), lambda b, r: (b, 0, 0, 0))]
    args = [x_pad]
    if has_expand:
        s1, b1 = _fold_bn(*params["bn1"])
        w_exp = params["w_exp"].reshape(hidden, in_channel).T * s1[None, :]
        w_exp_p = jnp.pad(w_exp, ((0, 0), (0, pad_c))).astype(jnp.float32)
        b_exp_p = jnp.pad(b1, (0, pad_c)).reshape(1, hidden_p).astype(jnp.float32)
        in_specs += [pl.BlockSpec((Cin, hidden_p), lambda b, r: (0, 0)),
                     pl.BlockSpec((1, hidden_p), lambda b, r: (0, 0))]
        args += [w_exp_p, b_exp_p]
    in_specs += [pl.BlockSpec((9, hidden_p), lambda b, r: (0, 0)),
                 pl.BlockSpec((1, hidden_p), lambda b, r: (0, 0)),
                 pl.BlockSpec((hidden_p, Cout), lambda b, r: (0, 0)),
                 pl.BlockSpec((1, Cout), lambda b, r: (0, 0))]
    args += [w_dw_p, b_dw_p, w_proj_p, b_proj]

    kernel = functools.partial(
        _inverted_residual_kernel,
        has_expand=has_expand, W=W, Wp=Wp, RB=RB, HR=HR, out_w=out_w,
        stride=s, Cout=Cout, hidden_p=hidden_p, n_row_tiles=R,
        bot_zero=bot_zero, use_shortcut=use_shortcut,
        compute_dtype=compute_dtype)

    # Per-generation VMEM budget (v7x: 64 MiB physical; v5e/v6e: 128 MiB).
    csize = np.dtype(compute_dtype).itemsize
    est = 4 * 2 * (Hp * Wp * Cin + RB * out_w * Cout)               # I/O blocks
    est += 4 * 2 * ((Cin * hidden_p if has_expand else 0)
                    + hidden_p * Cout + 12 * hidden_p + Cout)        # weights
    est += csize * HR * Wp * hidden_p                                # hid scratch
    est += 4 * (HR * Wp * hidden_p + 3 * RB * out_w * hidden_p)      # temporaries
    hi = (48 << 20) if cap <= (64 << 20) else (100 << 20)
    vmem_limit = int(min(hi, max(32 << 20, 2 * est)))

    out_flat = pl.pallas_call(
        kernel,
        out_shape=jax.ShapeDtypeStruct((N, out_h, out_w * Cout), jnp.float32),
        grid=(N, R),
        in_specs=in_specs,
        out_specs=pl.BlockSpec((1, RB, out_w * Cout), lambda b, r: (b, r, 0)),
        scratch_shapes=[pltpu.VMEM((HR, Wp, hidden_p), compute_dtype)],
        compiler_params=pltpu.CompilerParams(
            dimension_semantics=("parallel", "parallel"),
            vmem_limit_bytes=vmem_limit),
    )(*args)

    out_nhwc = out_flat.reshape(N, out_h, out_w, Cout)
    return jnp.transpose(out_nhwc, (0, 3, 1, 2))


# ---------------------------------------------------------------------------
# Parameter init (PyTorch weight-shape conventions) + pure-JAX reference
# ---------------------------------------------------------------------------
def make_params(key, in_channel, out_channel, expand_ratio):
    hidden = in_channel * expand_ratio
    keys = jax.random.split(key, 12)

    def bn_params(k0, k1, k2, k3, c):
        gamma = 1.0 + 0.1 * jax.random.normal(k0, (c,), jnp.float32)
        beta = 0.1 * jax.random.normal(k1, (c,), jnp.float32)
        mean = 0.1 * jax.random.normal(k2, (c,), jnp.float32)
        var = 0.5 + jnp.abs(jax.random.normal(k3, (c,), jnp.float32))
        return gamma, beta, mean, var

    w_exp = 0.2 * jax.random.normal(keys[0], (hidden, in_channel, 1, 1), jnp.float32)
    w_dw = 0.2 * jax.random.normal(keys[1], (hidden, 1, 3, 3), jnp.float32)
    w_proj = 0.2 * jax.random.normal(keys[2], (out_channel, hidden, 1, 1), jnp.float32)

    return {
        "w_exp": w_exp,
        "w_dw": w_dw,
        "w_proj": w_proj,
        "bn1": bn_params(*keys[3:7], hidden),
        "bn2": bn_params(*keys[7:11], hidden),
        "bn3": bn_params(keys[11], keys[3], keys[7], keys[0], out_channel),
    }


def reference_forward(x_nchw, params, *, in_channel, out_channel, stride,
                      expand_ratio):
    """Pure-JAX reference mirroring the PyTorch module (eval-mode BN)."""
    dn = ("NCHW", "OIHW", "NCHW")

    def bn(x, g, b, m, v):
        rs = lambda a: a.reshape(1, -1, 1, 1)
        return rs(g) * (x - rs(m)) / jnp.sqrt(rs(v) + BN_EPS) + rs(b)

    h = x_nchw
    if expand_ratio != 1:
        h = jax.lax.conv_general_dilated(h, params["w_exp"], (1, 1), "VALID",
                                         dimension_numbers=dn)
        h = jnp.clip(bn(h, *params["bn1"]), 0.0, 6.0)
    hidden = h.shape[1]
    h = jax.lax.conv_general_dilated(h, params["w_dw"], (stride, stride),
                                     ((1, 1), (1, 1)), dimension_numbers=dn,
                                     feature_group_count=hidden)
    h = jnp.clip(bn(h, *params["bn2"]), 0.0, 6.0)
    h = jax.lax.conv_general_dilated(h, params["w_proj"], (1, 1), "VALID",
                                     dimension_numbers=dn)
    h = bn(h, *params["bn3"])
    if stride == 1 and in_channel == out_channel:
        h = x_nchw + h
    return h


if __name__ == "__main__":
    # Both the reference convs and the kernel matmuls get f32-accurate
    # precision so the tight f32 comparisons are meaningful.
    jax.config.update("jax_default_matmul_precision", "highest")

    key = jax.random.PRNGKey(0)
    k1, k2, k3, k4 = jax.random.split(key, 4)

    cases = [
        # expand=4, shortcut, single row tile, exact f32
        dict(key=k1, N=2, H=16, W=16, cin=4, cout=4, stride=1, expand=4,
             cdt=jnp.float32, row_block=None, rtol=2e-4, atol=2e-4),
        # same block, but forced 2 row tiles -> exercises per-tile halo logic
        dict(key=k2, N=2, H=16, W=16, cin=4, cout=4, stride=1, expand=4,
             cdt=jnp.float32, row_block=8, rtol=2e-4, atol=2e-4),
        # expand_ratio=1 path (no expand conv), no shortcut, N=1, 2 row tiles
        dict(key=k3, N=1, H=16, W=16, cin=8, cout=16, stride=1, expand=1,
             cdt=jnp.float32, row_block=8, rtol=2e-4, atol=2e-4),
        # bf16 compute path (v6e/v7x default), loose tolerance
        dict(key=k4, N=2, H=16, W=16, cin=4, cout=4, stride=1, expand=4,
             cdt=jnp.bfloat16, row_block=None, rtol=1e-1, atol=1e-1),
    ]

    for c in cases:
        kx, kp = jax.random.split(c["key"])
        x = jax.random.normal(kx, (c["N"], c["cin"], c["H"], c["W"]), jnp.float32)
        params = make_params(kp, c["cin"], c["cout"], c["expand"])

        out = inverted_residual(
            x, params, in_channel=c["cin"], out_channel=c["cout"],
            stride=c["stride"], expand_ratio=c["expand"],
            compute_dtype=c["cdt"], row_block=c["row_block"])
        out = jax.block_until_ready(out)

        ref = jax.block_until_ready(reference_forward(
            x, params, in_channel=c["cin"], out_channel=c["cout"],
            stride=c["stride"], expand_ratio=c["expand"]))

        assert out.shape == ref.shape
        np.testing.assert_allclose(np.asarray(out), np.asarray(ref),
                                   rtol=c["rtol"], atol=c["atol"])

    print("KERNEL_OK")
</pallas_src>

<mosaic_0001>
module attributes {stable_mosaic.version = 11 : i64} {
  func.func @_inverted_residual_kernel(%arg0: i32, %arg1: i32, %arg2: memref<1x18x24x4xf32, #tpu.memory_space<vmem>>, %arg3: memref<4x128xf32, #tpu.memory_space<vmem>>, %arg4: memref<1x128xf32, #tpu.memory_space<vmem>>, %arg5: memref<9x128xf32, #tpu.memory_space<vmem>>, %arg6: memref<1x128xf32, #tpu.memory_space<vmem>>, %arg7: memref<128x4xf32, #tpu.memory_space<vmem>>, %arg8: memref<1x4xf32, #tpu.memory_space<vmem>>, %arg9: memref<1x16x64xf32, #tpu.memory_space<vmem>>, %arg10: memref<18x24x128xf32, #tpu.memory_space<vmem>>) attributes {dimension_semantics = [#tpu.dimension_semantics<parallel>, #tpu.dimension_semantics<parallel>], iteration_bounds = array<i64: 2, 1>, scalar_prefetch = 0 : i64, scratch_operands = 1 : i64, tpu.core_type = #tpu.core_type<tc>, window_params = [{transform_indices = @transform_0, window_bounds = array<i64: 1, 18, 24, 4>}, {pipeline_mode = #tpu.pipeline_mode<synchronous>, transform_indices = @transform_1, window_bounds = array<i64: 4, 128>}, {pipeline_mode = #tpu.pipeline_mode<synchronous>, transform_indices = @transform_2, window_bounds = array<i64: 1, 128>}, {pipeline_mode = #tpu.pipeline_mode<synchronous>, transform_indices = @transform_3, window_bounds = array<i64: 9, 128>}, {pipeline_mode = #tpu.pipeline_mode<synchronous>, transform_indices = @transform_4, window_bounds = array<i64: 1, 128>}, {pipeline_mode = #tpu.pipeline_mode<synchronous>, transform_indices = @transform_5, window_bounds = array<i64: 128, 4>}, {pipeline_mode = #tpu.pipeline_mode<synchronous>, transform_indices = @transform_6, window_bounds = array<i64: 1, 4>}, {transform_indices = @transform_7, window_bounds = array<i64: 1, 16, 64>}]} {
    %c16_i32 = arith.constant 16 : i32
    %0 = arith.muli %arg1, %c16_i32 : i32
    %1 = tpu.assume_multiple %0, 16 : i32
    %c0 = arith.constant 0 : index
    %2 = arith.index_cast %1 : i32 to index
    %c0_0 = arith.constant 0 : index
    %c0_1 = arith.constant 0 : index
    %3 = vector.load %arg2[%c0, %2, %c0_0, %c0_1] : memref<1x18x24x4xf32, #tpu.memory_space<vmem>>, vector<1x18x24x4xf32>
    %4 = vector.shape_cast %3 : vector<1x18x24x4xf32> to vector<18x24x4xf32>
    %5 = vector.shape_cast %4 : vector<18x24x4xf32> to vector<432x4xf32>
    %c0_2 = arith.constant 0 : index
    %c0_3 = arith.constant 0 : index
    %6 = vector.load %arg3[%c0_2, %c0_3] : memref<4x128xf32, #tpu.memory_space<vmem>>, vector<4x128xf32>
    %cst = arith.constant dense<0.000000e+00> : vector<432x128xf32>
    %7 = tpu.matmul %5, %6, %cst {dimension_numbers = #tpu.dot_dimension_numbers<[1], [0], [0], [1], [0, 0, 1, 1], [], []>, precision = #tpu.contract_precision<fp32>} : vector<432x4xf32>, vector<4x128xf32>, vector<432x128xf32> -> vector<432x128xf32>
    %c0_4 = arith.constant 0 : index
    %c0_5 = arith.constant 0 : index
    %8 = vector.load %arg4[%c0_4, %c0_5] : memref<1x128xf32, #tpu.memory_space<vmem>>, vector<1x128xf32>
    %9 = vector.broadcast %8 : vector<1x128xf32> to vector<432x128xf32>
    %10 = arith.addf %7, %9 : vector<432x128xf32>
    %cst_6 = arith.constant 0.000000e+00 : f32
    %cst_7 = arith.constant 6.000000e+00 : f32
    %11 = vector.broadcast %cst_6 : f32 to vector<432x128xf32>
    %12 = arith.maximumf %11, %10 : vector<432x128xf32>
    %13 = vector.broadcast %cst_7 : f32 to vector<432x128xf32>
    %14 = arith.minimumf %13, %12 : vector<432x128xf32>
    %15 = vector.shape_cast %14 : vector<432x128xf32> to vector<18x24x128xf32>
    %c0_8 = arith.constant 0 : index
    %c0_9 = arith.constant 0 : index
    %c0_10 = arith.constant 0 : index
    %16 = vector.load %arg10[%c0_8, %c0_9, %c0_10] : memref<18x24x128xf32, #tpu.memory_space<vmem>>, vector<18x24x128xf32>
    tpu.vector_store %arg10[%c0_8, %c0_9, %c0_10], %15 {strides = array<i32>} : memref<18x24x128xf32, #tpu.memory_space<vmem>>, vector<18x24x128xf32>,
    %cst_11 = arith.constant 0.000000e+00 : f32
    %17 = vector.broadcast %cst_11 : f32 to vector<18x1x128xf32>
    %c0_12 = arith.constant 0 : index
    %c0_13 = arith.constant 0 : index
    %c0_14 = arith.constant 0 : index
    %18 = vector.load %arg10[%c0_12, %c0_13, %c0_14] : memref<18x24x128xf32, #tpu.memory_space<vmem>>, vector<18x1x128xf32>
    tpu.vector_store %arg10[%c0_12, %c0_13, %c0_14], %17 {strides = array<i32>} : memref<18x24x128xf32, #tpu.memory_space<vmem>>, vector<18x1x128xf32>,
    %cst_15 = arith.constant 0.000000e+00 : f32
    %19 = vector.broadcast %cst_15 : f32 to vector<18x7x128xf32>
    %c0_16 = arith.constant 0 : index
    %c17 = arith.constant 17 : index
    %c0_17 = arith.constant 0 : index
    %20 = vector.load %arg10[%c0_16, %c17, %c0_17] : memref<18x24x128xf32, #tpu.memory_space<vmem>>, vector<18x7x128xf32>
    tpu.vector_store %arg10[%c0_16, %c17, %c0_17], %19 {strides = array<i32>} : memref<18x24x128xf32, #tpu.memory_space<vmem>>, vector<18x7x128xf32>,
    %c0_i32 = arith.constant 0 : i32
    %21 = arith.cmpi eq, %arg1, %c0_i32 : i32
    %22 = arith.extui %21 : i1 to i32
    %c0_i32_18 = arith.constant 0 : i32
    %23 = arith.cmpi ne, %22, %c0_i32_18 : i32
    scf.if %23 {
      %cst_74 = arith.constant 0.000000e+00 : f32
      %106 = vector.broadcast %cst_74 : f32 to vector<1x24x128xf32>
      %c0_75 = arith.constant 0 : index
      %c0_76 = arith.constant 0 : index
      %c0_77 = arith.constant 0 : index
      %107 = vector.load %arg10[%c0_75, %c0_76, %c0_77] : memref<18x24x128xf32, #tpu.memory_space<vmem>>, vector<1x24x128xf32>
      tpu.vector_store %arg10[%c0_75, %c0_76, %c0_77], %106 {strides = array<i32>} : memref<18x24x128xf32, #tpu.memory_space<vmem>>, vector<1x24x128xf32>,
    } else {
    }
    %c0_i32_19 = arith.constant 0 : i32
    %24 = arith.cmpi eq, %arg1, %c0_i32_19 : i32
    %25 = arith.extui %24 : i1 to i32
    %c0_i32_20 = arith.constant 0 : i32
    %26 = arith.cmpi ne, %25, %c0_i32_20 : i32
    scf.if %26 {
      %cst_74 = arith.constant 0.000000e+00 : f32
      %106 = vector.broadcast %cst_74 : f32 to vector<1x24x128xf32>
      %c17_75 = arith.constant 17 : index
      %c0_76 = arith.constant 0 : index
      %c0_77 = arith.constant 0 : index
      %107 = vector.load %arg10[%c17_75, %c0_76, %c0_77] : memref<18x24x128xf32, #tpu.memory_space<vmem>>, vector<1x24x128xf32>
      tpu.vector_store %arg10[%c17_75, %c0_76, %c0_77], %106 {strides = array<i32>} : memref<18x24x128xf32, #tpu.memory_space<vmem>>, vector<1x24x128xf32>,
    } else {
    }
    %cst_21 = arith.constant 0.000000e+00 : f32
    %27 = vector.broadcast %cst_21 : f32 to vector<16x16x128xf32>
    %c0_22 = arith.constant 0 : index
    %c0_23 = arith.constant 0 : index
    %c0_24 = arith.constant 0 : index
    %28 = vector.load %arg10[%c0_22, %c0_23, %c0_24] : memref<18x24x128xf32, #tpu.memory_space<vmem>>, vector<16x16x128xf32>
    %c0_25 = arith.constant 0 : index
    %c0_26 = arith.constant 0 : index
    %29 = vector.load %arg5[%c0_25, %c0_26] : memref<9x128xf32, #tpu.memory_space<vmem>>, vector<1x128xf32>
    %30 = vector.shape_cast %29 : vector<1x128xf32> to vector<1x1x128xf32>
    %31 = vector.broadcast %30 : vector<1x1x128xf32> to vector<16x16x128xf32>
    %32 = arith.mulf %28, %31 : vector<16x16x128xf32>
    %33 = arith.addf %27, %32 : vector<16x16x128xf32>
    %c0_27 = arith.constant 0 : index
    %c1 = arith.constant 1 : index
    %c0_28 = arith.constant 0 : index
    %34 = vector.load %arg10[%c0_27, %c1, %c0_28] : memref<18x24x128xf32, #tpu.memory_space<vmem>>, vector<16x16x128xf32>
    %c1_29 = arith.constant 1 : index
    %c0_30 = arith.constant 0 : index
    %35 = vector.load %arg5[%c1_29, %c0_30] : memref<9x128xf32, #tpu.memory_space<vmem>>, vector<1x128xf32>
    %36 = vector.shape_cast %35 : vector<1x128xf32> to vector<1x1x128xf32>
    %37 = vector.broadcast %36 : vector<1x1x128xf32> to vector<16x16x128xf32>
    %38 = arith.mulf %34, %37 : vector<16x16x128xf32>
    %39 = arith.addf %33, %38 : vector<16x16x128xf32>
    %c0_31 = arith.constant 0 : index
    %c2 = arith.constant 2 : index
    %c0_32 = arith.constant 0 : index
    %40 = vector.load %arg10[%c0_31, %c2, %c0_32] : memref<18x24x128xf32, #tpu.memory_space<vmem>>, vector<16x16x128xf32>
    %c2_33 = arith.constant 2 : index
    %c0_34 = arith.constant 0 : index
    %41 = vector.load %arg5[%c2_33, %c0_34] : memref<9x128xf32, #tpu.memory_space<vmem>>, vector<1x128xf32>
    %42 = vector.shape_cast %41 : vector<1x128xf32> to vector<1x1x128xf32>
    %43 = vector.broadcast %42 : vector<1x1x128xf32> to vector<16x16x128xf32>
    %44 = arith.mulf %40, %43 : vector<16x16x128xf32>
    %45 = arith.addf %39, %44 : vector<16x16x128xf32>
    %c1_35 = arith.constant 1 : index
    %c0_36 = arith.constant 0 : index
    %c0_37 = arith.constant 0 : index
    %46 = vector.load %arg10[%c1_35, %c0_36, %c0_37] : memref<18x24x128xf32, #tpu.memory_space<vmem>>, vector<16x16x128xf32>
    %c3 = arith.constant 3 : index
    %c0_38 = arith.constant 0 : index
    %47 = vector.load %arg5[%c3, %c0_38] : memref<9x128xf32, #tpu.memory_space<vmem>>, vector<1x128xf32>
    %48 = vector.shape_cast %47 : vector<1x128xf32> to vector<1x1x128xf32>
    %49 = vector.broadcast %48 : vector<1x1x128xf32> to vector<16x16x128xf32>
    %50 = arith.mulf %46, %49 : vector<16x16x128xf32>
    %51 = arith.addf %45, %50 : vector<16x16x128xf32>
    %c1_39 = arith.constant 1 : index
    %c1_40 = arith.constant 1 : index
    %c0_41 = arith.constant 0 : index
    %52 = vector.load %arg10[%c1_39, %c1_40, %c0_41] : memref<18x24x128xf32, #tpu.memory_space<vmem>>, vector<16x16x128xf32>
    %c4 = arith.constant 4 : index
    %c0_42 = arith.constant 0 : index
    %53 = vector.load %arg5[%c4, %c0_42] : memref<9x128xf32, #tpu.memory_space<vmem>>, vector<1x128xf32>
    %54 = vector.shape_cast %53 : vector<1x128xf32> to vector<1x1x128xf32>
    %55 = vector.broadcast %54 : vector<1x1x128xf32> to vector<16x16x128xf32>
    %56 = arith.mulf %52, %55 : vector<16x16x128xf32>
    %57 = arith.addf %51, %56 : vector<16x16x128xf32>
    %c1_43 = arith.constant 1 : index
    %c2_44 = arith.constant 2 : index
    %c0_45 = arith.constant 0 : index
    %58 = vector.load %arg10[%c1_43, %c2_44, %c0_45] : memref<18x24x128xf32, #tpu.memory_space<vmem>>, vector<16x16x128xf32>
    %c5 = arith.constant 5 : index
    %c0_46 = arith.constant 0 : index
    %59 = vector.load %arg5[%c5, %c0_46] : memref<9x128xf32, #tpu.memory_space<vmem>>, vector<1x128xf32>
    %60 = vector.shape_cast %59 : vector<1x128xf32> to vector<1x1x128xf32>
    %61 = vector.broadcast %60 : vector<1x1x128xf32> to vector<16x16x128xf32>
    %62 = arith.mulf %58, %61 : vector<16x16x128xf32>
    %63 = arith.addf %57, %62 : vector<16x16x128xf32>
    %c2_47 = arith.constant 2 : index
    %c0_48 = arith.constant 0 : index
    %c0_49 = arith.constant 0 : index
    %64 = vector.load %arg10[%c2_47, %c0_48, %c0_49] : memref<18x24x128xf32, #tpu.memory_space<vmem>>, vector<16x16x128xf32>
    %c6 = arith.constant 6 : index
    %c0_50 = arith.constant 0 : index
    %65 = vector.load %arg5[%c6, %c0_50] : memref<9x128xf32, #tpu.memory_space<vmem>>, vector<1x128xf32>
    %66 = vector.shape_cast %65 : vector<1x128xf32> to vector<1x1x128xf32>
    %67 = vector.broadcast %66 : vector<1x1x128xf32> to vector<16x16x128xf32>
    %68 = arith.mulf %64, %67 : vector<16x16x128xf32>
    %69 = arith.addf %63, %68 : vector<16x16x128xf32>
    %c2_51 = arith.constant 2 : index
    %c1_52 = arith.constant 1 : index
    %c0_53 = arith.constant 0 : index
    %70 = vector.load %arg10[%c2_51, %c1_52, %c0_53] : memref<18x24x128xf32, #tpu.memory_space<vmem>>, vector<16x16x128xf32>
    %c7 = arith.constant 7 : index
    %c0_54 = arith.constant 0 : index
    %71 = vector.load %arg5[%c7, %c0_54] : memref<9x128xf32, #tpu.memory_space<vmem>>, vector<1x128xf32>
    %72 = vector.shape_cast %71 : vector<1x128xf32> to vector<1x1x128xf32>
    %73 = vector.broadcast %72 : vector<1x1x128xf32> to vector<16x16x128xf32>
    %74 = arith.mulf %70, %73 : vector<16x16x128xf32>
    %75 = arith.addf %69, %74 : vector<16x16x128xf32>
    %c2_55 = arith.constant 2 : index
    %c2_56 = arith.constant 2 : index
    %c0_57 = arith.constant 0 : index
    %76 = vector.load %arg10[%c2_55, %c2_56, %c0_57] : memref<18x24x128xf32, #tpu.memory_space<vmem>>, vector<16x16x128xf32>
    %c8 = arith.constant 8 : index
    %c0_58 = arith.constant 0 : index
    %77 = vector.load %arg5[%c8, %c0_58] : memref<9x128xf32, #tpu.memory_space<vmem>>, vector<1x128xf32>
    %78 = vector.shape_cast %77 : vector<1x128xf32> to vector<1x1x128xf32>
    %79 = vector.broadcast %78 : vector<1x1x128xf32> to vector<16x16x128xf32>
    %80 = arith.mulf %76, %79 : vector<16x16x128xf32>
    %81 = arith.addf %75, %80 : vector<16x16x128xf32>
    %c0_59 = arith.constant 0 : index
    %c0_60 = arith.constant 0 : index
    %82 = vector.load %arg6[%c0_59, %c0_60] : memref<1x128xf32, #tpu.memory_space<vmem>>, vector<1x128xf32>
    %83 = vector.shape_cast %82 : vector<1x128xf32> to vector<1x1x128xf32>
    %84 = vector.broadcast %83 : vector<1x1x128xf32> to vector<16x16x128xf32>
    %85 = arith.addf %81, %84 : vector<16x16x128xf32>
    %cst_61 = arith.constant 0.000000e+00 : f32
    %cst_62 = arith.constant 6.000000e+00 : f32
    %86 = vector.broadcast %cst_61 : f32 to vector<16x16x128xf32>
    %87 = arith.maximumf %86, %85 : vector<16x16x128xf32>
    %88 = vector.broadcast %cst_62 : f32 to vector<16x16x128xf32>
    %89 = arith.minimumf %88, %87 : vector<16x16x128xf32>
    %90 = vector.shape_cast %89 : vector<16x16x128xf32> to vector<256x128xf32>
    %c0_63 = arith.constant 0 : index
    %c0_64 = arith.constant 0 : index
    %91 = vector.load %arg7[%c0_63, %c0_64] : memref<128x4xf32, #tpu.memory_space<vmem>>, vector<128x4xf32>
    %cst_65 = arith.constant dense<0.000000e+00> : vector<256x4xf32>
    %92 = tpu.matmul %90, %91, %cst_65 {dimension_numbers = #tpu.dot_dimension_numbers<[1], [0], [0], [1], [0, 0, 1, 1], [], []>, precision = #tpu.contract_precision<fp32>} : vector<256x128xf32>, vector<128x4xf32>, vector<256x4xf32> -> vector<256x4xf32>
    %c0_66 = arith.constant 0 : index
    %c0_67 = arith.constant 0 : index
    %93 = vector.load %arg8[%c0_66, %c0_67] : memref<1x4xf32, #tpu.memory_space<vmem>>, vector<1x4xf32>
    %94 = vector.broadcast %93 : vector<1x4xf32> to vector<256x4xf32>
    %95 = arith.addf %92, %94 : vector<256x4xf32>
    %96 = vector.shape_cast %95 : vector<256x4xf32> to vector<16x16x4xf32>
    %c1_i32 = arith.constant 1 : i32
    %97 = arith.addi %1, %c1_i32 : i32
    %c0_68 = arith.constant 0 : index
    %98 = arith.index_cast %97 : i32 to index
    %c1_69 = arith.constant 1 : index
    %c0_70 = arith.constant 0 : index
    %99 = vector.load %arg2[%c0_68, %98, %c1_69, %c0_70] : memref<1x18x24x4xf32, #tpu.memory_space<vmem>>, vector<1x16x16x4xf32>
    %100 = vector.shape_cast %99 : vector<1x16x16x4xf32> to vector<16x16x4xf32>
    %101 = arith.addf %96, %100 : vector<16x16x4xf32>
    %102 = vector.shape_cast %101 : vector<16x16x4xf32> to vector<16x64xf32>
    %c0_71 = arith.constant 0 : index
    %c0_72 = arith.constant 0 : index
    %c0_73 = arith.constant 0 : index
    %103 = vector.load %arg9[%c0_71, %c0_72, %c0_73] : memref<1x16x64xf32, #tpu.memory_space<vmem>>, vector<1x16x64xf32>
    %104 = vector.shape_cast %103 : vector<1x16x64xf32> to vector<16x64xf32>
    %105 = vector.shape_cast %102 : vector<16x64xf32> to vector<1x16x64xf32>
    tpu.vector_store %arg9[%c0_71, %c0_72, %c0_73], %105 {strides = array<i32>} : memref<1x16x64xf32, #tpu.memory_space<vmem>>, vector<1x16x64xf32>,
    return
  }
  func.func @transform_0(%arg0: i32, %arg1: i32) -> (i32, i32, i32, i32) {
    %c0_i32 = arith.constant 0 : i32
    %c0_i32_0 = arith.constant 0 : i32
    %c0_i32_1 = arith.constant 0 : i32
    %c0_i32_2 = arith.constant 0 : i32
    return %arg0, %c0_i32, %c0_i32_0, %c0_i32_1 : i32, i32, i32, i32
  }
  func.func @transform_1(%arg0: i32, %arg1: i32) -> (i32, i32) {
    %c0_i32 = arith.constant 0 : i32
    %c0_i32_0 = arith.constant 0 : i32
    %c0_i32_1 = arith.constant 0 : i32
    return %c0_i32, %c0_i32_0 : i32, i32
  }
  func.func @transform_2(%arg0: i32, %arg1: i32) -> (i32, i32) {
    %c0_i32 = arith.constant 0 : i32
    %c0_i32_0 = arith.constant 0 : i32
    %c0_i32_1 = arith.constant 0 : i32
    return %c0_i32, %c0_i32_0 : i32, i32
  }
  func.func @transform_3(%arg0: i32, %arg1: i32) -> (i32, i32) {
    %c0_i32 = arith.constant 0 : i32
    %c0_i32_0 = arith.constant 0 : i32
    %c0_i32_1 = arith.constant 0 : i32
    return %c0_i32, %c0_i32_0 : i32, i32
  }
  func.func @transform_4(%arg0: i32, %arg1: i32) -> (i32, i32) {
    %c0_i32 = arith.constant 0 : i32
    %c0_i32_0 = arith.constant 0 : i32
    %c0_i32_1 = arith.constant 0 : i32
    return %c0_i32, %c0_i32_0 : i32, i32
  }
  func.func @transform_5(%arg0: i32, %arg1: i32) -> (i32, i32) {
    %c0_i32 = arith.constant 0 : i32
    %c0_i32_0 = arith.constant 0 : i32
    %c0_i32_1 = arith.constant 0 : i32
    return %c0_i32, %c0_i32_0 : i32, i32
  }
  func.func @transform_6(%arg0: i32, %arg1: i32) -> (i32, i32) {
    %c0_i32 = arith.constant 0 : i32
    %c0_i32_0 = arith.constant 0 : i32
    %c0_i32_1 = arith.constant 0 : i32
    return %c0_i32, %c0_i32_0 : i32, i32
  }
  func.func @transform_7(%arg0: i32, %arg1: i32) -> (i32, i32, i32) {
    %c0_i32 = arith.constant 0 : i32
    %c0_i32_0 = arith.constant 0 : i32
    return %arg0, %arg1, %c0_i32 : i32, i32, i32
  }
}

</mosaic_0001>

<llo_original>
// kernel: tpu_custom_call.1
$region0: #{tpu_custom_call.1}
  #allocation0 [shape = 'u32[]', space=smem, size = 0x4, offset = 0x4, fixed_abs, tag = 'smem constant byte address 0x4 - core index']
  #allocation1 [shape = 'u32[144,128]{1,0:T(1,128)}', space=vmem, size = 0x12000, scoped, tag = 'internal scratch']
  #allocation2 [shape = 'f32[18,24,128]{2,1,0:T(8,128)}', space=vmem, size = 0x36000, scoped, tag = 'scratch operand']
  %s0 = inlined_call_operand.vmem [shape: f32[2,18,24,4], index: 0, kind: input, shape index: {}]
  %s1 = inlined_call_operand.vmem [shape: f32[4,128], index: 1, kind: input, shape index: {}]
  %s2 = inlined_call_operand.vmem [shape: f32[1,128], index: 2, kind: input, shape index: {}]
  %s3 = inlined_call_operand.vmem [shape: f32[9,128], index: 3, kind: input, shape index: {}]
  %s4 = inlined_call_operand.vmem [shape: f32[1,128], index: 4, kind: input, shape index: {}]
  %s5 = inlined_call_operand.vmem [shape: f32[128,4], index: 5, kind: input, shape index: {}]
  %s6 = inlined_call_operand.vmem [shape: f32[1,4], index: 6, kind: input, shape index: {}]
  %s7 = inlined_call_operand.hbm [shape: f32[2,16,64], index: 7, kind: output, shape index: {}]
  %s8 = sld [smem:[#allocation0]]
  $region65: #{tpu_custom_call.1} parent=0
    _
  %s10 = ssub.s32 1, %s8
  %s11 = scalar_select 0, %s10, %s8
  $region1: #{tpu_custom_call.1} parent=0
    #allocation3 [shape = 'u8[16384]{0}', space=vmem, size = 0x4000, scoped, tag = 'output window, operand 0']
    #allocation4 [shape = 's32[2]{0}', space=sflag, size = 0x8, scoped, tag = 'scoped memory for tpu_custom_call.1']
    %12 = vsyncpa [#allocation4], 0
    %s13 = scalar_lea.sflag [#allocation4], 1
    %14 = vsyncpa %s13, 0
    loop: start=0, step=1, limit=4
    $region2: #{tpu_custom_call.1} parent=1 // loop_pre_header
      _
    $region3: #{tpu_custom_call.1} parent=1 // loop_header
      %s16 = sphi 0, %s20
      %p17 = scmp.ge.s32.totalorder %s16, 4
      %s23 = sphi 0, %s35
      %s24 = sphi 0, %s31
      %s25 = sphi 0, %s23
      %s26 = sphi 0, %s24
      %s27 = sphi 0, %s25
      %s28 = sphi 0, %s26
      %s38 = sphi 0, %s40
      %s41 = sphi 0, %s38
      %s42 = sphi 0, %s41
      %s58 = sphi 0, %s42
      %s62 = sphi 0, %s62
      %s64 = sphi 0, %s62
      %s65 = sphi 0, %s64
      %s79 = sphi 0, %s65
      %s83 = sphi 0, %s83
      %s85 = sphi 0, %s83
      %s86 = sphi 0, %s85
      %s100 = sphi 0, %s86
      %s104 = sphi 0, %s104
      %s106 = sphi 0, %s104
      %s107 = sphi 0, %s106
      %s121 = sphi 0, %s107
      %s125 = sphi 0, %s125
      %s127 = sphi 0, %s125
      %s128 = sphi 0, %s127
      %s142 = sphi 0, %s128
      %s146 = sphi 0, %s146
      %s148 = sphi 0, %s146
      %s149 = sphi 0, %s148
      %s163 = sphi 0, %s149
      %s167 = sphi 0, %s167
      %s169 = sphi 0, %s167
      %s170 = sphi 0, %s169
      %s184 = sphi 0, %s170
      %s192 = sphi 0, %s194
      %s195 = sphi 0, %s192
      %s196 = sphi 0, %s195
      %s212 = sphi 0, %s196
    $region4: #{tpu_custom_call.1} parent=1 // loop_header_branch
      %19 = sbr.rel (%p17) target = $region8
    $region5: #{tpu_custom_call.1} parent=1 // loop_body
      %s21 = ssub.s32 %s16, 1
      %s22 = ssub.s32 %s16, 2
      %s29 = sadd.s32 1, %s24
      %p30 = scmp.ge.s32.totalorder %s29, 1
      %s31 = scalar_select %p30, 0, %s29
      %s32 = sadd.s32 1, %s23
      %s33 = scalar_select %p30, %s32, %s23
      %p34 = scmp.ge.s32.totalorder %s33, 2
      %s35 = scalar_select %p34, 0, %s33
      %s36 = ssub.s32 %s23, %s35
      %p37 = scmp.eq.s32.totalorder %s36, 0
      %s39 = sadd.s32 %s38, 1
      %s40 = scalar_select %p37, %s38, %s39
      %p43 = pneg %p37
      %p44 = scmp.eq.s32.totalorder %s16, 1
      %p45 = por %p43, %p44
      %p46 = scmp.ne.s32.totalorder %s38, %s41
      %p47 = scmp.eq.s32.totalorder %s16, 0
      %p48 = por %p46, %p47
      %p49 = scmp.ne.s32.totalorder %s38, %s41
      %p50 = scmp.eq.s32.totalorder %s21, 1
      %p51 = por %p49, %p50
      %p52 = scmp.ne.s32.totalorder %s41, %s42
      %p53 = scmp.eq.s32.totalorder %s21, 0
      %p54 = por %p52, %p53
      %p55 = scmp.ne.s32.totalorder %s41, %s42
      %p56 = scmp.eq.s32.totalorder %s22, 1
      %p57 = por %p55, %p56
      %p59 = scmp.ne.s32.totalorder %s42, %s58
      %p60 = scmp.eq.s32.totalorder %s22, 0
      %p61 = por %p59, %p60
      %s63 = sadd.s32 %s62, 1
      %p66 = scmp.eq.s32.totalorder %s16, 1
      %p67 = scmp.ne.s32.totalorder %s62, %s64
      %p68 = scmp.eq.s32.totalorder %s16, 0
      %p69 = por %p67, %p68
      %p70 = scmp.ne.s32.totalorder %s62, %s64
      %p71 = scmp.eq.s32.totalorder %s21, 1
      %p72 = por %p70, %p71
      %p73 = scmp.ne.s32.totalorder %s64, %s65
      %p74 = scmp.eq.s32.totalorder %s21, 0
      %p75 = por %p73, %p74
      %p76 = scmp.ne.s32.totalorder %s64, %s65
      %p77 = scmp.eq.s32.totalorder %s22, 1
      %p78 = por %p76, %p77
      %p80 = scmp.ne.s32.totalorder %s65, %s79
      %p81 = scmp.eq.s32.totalorder %s22, 0
      %p82 = por %p80, %p81
      %s84 = sadd.s32 %s83, 1
      %p87 = scmp.eq.s32.totalorder %s16, 1
      %p88 = scmp.ne.s32.totalorder %s83, %s85
      %p89 = scmp.eq.s32.totalorder %s16, 0
      %p90 = por %p88, %p89
      %p91 = scmp.ne.s32.totalorder %s83, %s85
      %p92 = scmp.eq.s32.totalorder %s21, 1
      %p93 = por %p91, %p92
      %p94 = scmp.ne.s32.totalorder %s85, %s86
      %p95 = scmp.eq.s32.totalorder %s21, 0
      %p96 = por %p94, %p95
      %p97 = scmp.ne.s32.totalorder %s85, %s86
      %p98 = scmp.eq.s32.totalorder %s22, 1
      %p99 = por %p97, %p98
      %p101 = scmp.ne.s32.totalorder %s86, %s100
      %p102 = scmp.eq.s32.totalorder %s22, 0
      %p103 = por %p101, %p102
      %s105 = sadd.s32 %s104, 1
      %p108 = scmp.eq.s32.totalorder %s16, 1
      %p109 = scmp.ne.s32.totalorder %s104, %s106
      %p110 = scmp.eq.s32.totalorder %s16, 0
      %p111 = por %p109, %p110
      %p112 = scmp.ne.s32.totalorder %s104, %s106
      %p113 = scmp.eq.s32.totalorder %s21, 1
      %p114 = por %p112, %p113
      %p115 = scmp.ne.s32.totalorder %s106, %s107
      %p116 = scmp.eq.s32.totalorder %s21, 0
      %p117 = por %p115, %p116
      %p118 = scmp.ne.s32.totalorder %s106, %s107
      %p119 = scmp.eq.s32.totalorder %s22, 1
      %p120 = por %p118, %p119
      %p122 = scmp.ne.s32.totalorder %s107, %s121
      %p123 = scmp.eq.s32.totalorder %s22, 0
      %p124 = por %p122, %p123
      %s126 = sadd.s32 %s125, 1
      %p129 = scmp.eq.s32.totalorder %s16, 1
      %p130 = scmp.ne.s32.totalorder %s125, %s127
      %p131 = scmp.eq.s32.totalorder %s16, 0
      %p132 = por %p130, %p131
      %p133 = scmp.ne.s32.totalorder %s125, %s127
      %p134 = scmp.eq.s32.totalorder %s21, 1
      %p135 = por %p133, %p134
      %p136 = scmp.ne.s32.totalorder %s127, %s128
      %p137 = scmp.eq.s32.totalorder %s21, 0
      %p138 = por %p136, %p137
      %p139 = scmp.ne.s32.totalorder %s127, %s128
      %p140 = scmp.eq.s32.totalorder %s22, 1
      %p141 = por %p139, %p140
      %p143 = scmp.ne.s32.totalorder %s128, %s142
      %p144 = scmp.eq.s32.totalorder %s22, 0
      %p145 = por %p143, %p144
      %s147 = sadd.s32 %s146, 1
      %p150 = scmp.eq.s32.totalorder %s16, 1
      %p151 = scmp.ne.s32.totalorder %s146, %s148
      %p152 = scmp.eq.s32.totalorder %s16, 0
      %p153 = por %p151, %p152
      %p154 = scmp.ne.s32.totalorder %s146, %s148
      %p155 = scmp.eq.s32.totalorder %s21, 1
      %p156 = por %p154, %p155
      %p157 = scmp.ne.s32.totalorder %s148, %s149
      %p158 = scmp.eq.s32.totalorder %s21, 0
      %p159 = por %p157, %p158
      %p160 = scmp.ne.s32.totalorder %s148, %s149
      %p161 = scmp.eq.s32.totalorder %s22, 1
      %p162 = por %p160, %p161
      %p164 = scmp.ne.s32.totalorder %s149, %s163
      %p165 = scmp.eq.s32.totalorder %s22, 0
      %p166 = por %p164, %p165
      %s168 = sadd.s32 %s167, 1
      %p171 = scmp.eq.s32.totalorder %s16, 1
      %p172 = scmp.ne.s32.totalorder %s167, %s169
      %p173 = scmp.eq.s32.totalorder %s16, 0
      %p174 = por %p172, %p173
      %p175 = scmp.ne.s32.totalorder %s167, %s169
      %p176 = scmp.eq.s32.totalorder %s21, 1
      %p177 = por %p175, %p176
      %p178 = scmp.ne.s32.totalorder %s169, %s170
      %p179 = scmp.eq.s32.totalorder %s21, 0
      %p180 = por %p178, %p179
      %p181 = scmp.ne.s32.totalorder %s169, %s170
      %p182 = scmp.eq.s32.totalorder %s22, 1
      %p183 = por %p181, %p182
      %p185 = scmp.ne.s32.totalorder %s170, %s184
      %p186 = scmp.eq.s32.totalorder %s22, 0
      %p187 = por %p185, %p186
      %s188 = ssub.s32 %s23, %s35
      %s189 = ssub.s32 %s24, %s31
      %s190 = sor.u32 %s188, %s189
      %p191 = scmp.eq.s32.totalorder %s190, 0
      %s193 = sadd.s32 %s192, 1
      %s194 = scalar_select %p191, %s192, %s193
      %p197 = pneg %p191
      %p198 = scmp.eq.s32.totalorder %s16, 1
      %p199 = por %p197, %p198
      %p200 = scmp.ne.s32.totalorder %s192, %s195
      %p201 = scmp.eq.s32.totalorder %s16, 0
      %p202 = por %p200, %p201
      %p203 = scmp.ne.s32.totalorder %s192, %s195
      %p204 = scmp.eq.s32.totalorder %s21, 1
      %p205 = por %p203, %p204
      %p206 = scmp.ne.s32.totalorder %s195, %s196
      %p207 = scmp.eq.s32.totalorder %s21, 0
      %p208 = por %p206, %p207
      %p209 = scmp.ne.s32.totalorder %s195, %s196
      %p210 = scmp.eq.s32.totalorder %s22, 1
      %p211 = por %p209, %p210
      %p213 = scmp.ne.s32.totalorder %s196, %s212
      %p214 = scmp.eq.s32.totalorder %s22, 0
      %p215 = por %p213, %p214
      %p216 = scmp.le.s32.totalorder 1, %s16
      %p217 = scmp.lt.s32.totalorder %s16, 3
      %p218 = pnand %p216, %p217
      %p219 = pneg %p218
      // Predicated region
      $region9: #{tpu_custom_call.1} parent=5 // pred_check
        _
      $region10: #{tpu_custom_call.1} parent=5 // pred_check_branch
        %221 = sbr.rel (%p218) target = $region12
      $region11: #{tpu_custom_call.1} parent=5 // pred_region
        %s222 = ssub.s32 %s16, 1
        // Predicated region
        $region13: #{tpu_custom_call.1} parent=11 // pred_check
          %p223 = pneg %p75
        $region14: #{tpu_custom_call.1} parent=11 // pred_check_branch
          %225 = sbr.rel (%p223) target = $region16
        $region15: #{tpu_custom_call.1} parent=11 // pred_region
          _
        $region16: #{tpu_custom_call.1} parent=11 // pred_fallthru
          _
        // Predicated region
        $region17: #{tpu_custom_call.1} parent=11 // pred_check
          %p226 = pneg %p96
        $region18: #{tpu_custom_call.1} parent=11 // pred_check_branch
          %228 = sbr.rel (%p226) target = $region20
        $region19: #{tpu_custom_call.1} parent=11 // pred_region
          _
        $region20: #{tpu_custom_call.1} parent=11 // pred_fallthru
          _
        // Predicated region
        $region21: #{tpu_custom_call.1} parent=11 // pred_check
          %p229 = pneg %p117
        $region22: #{tpu_custom_call.1} parent=11 // pred_check_branch
          %231 = sbr.rel (%p229) target = $region24
        $region23: #{tpu_custom_call.1} parent=11 // pred_region
          _
        $region24: #{tpu_custom_call.1} parent=11 // pred_fallthru
          _
        // Predicated region
        $region25: #{tpu_custom_call.1} parent=11 // pred_check
          %p232 = pneg %p138
        $region26: #{tpu_custom_call.1} parent=11 // pred_check_branch
          %234 = sbr.rel (%p232) target = $region28
        $region27: #{tpu_custom_call.1} parent=11 // pred_region
          _
        $region28: #{tpu_custom_call.1} parent=11 // pred_fallthru
          _
        // Predicated region
        $region29: #{tpu_custom_call.1} parent=11 // pred_check
          %p235 = pneg %p159
        $region30: #{tpu_custom_call.1} parent=11 // pred_check_branch
          %237 = sbr.rel (%p235) target = $region32
        $region31: #{tpu_custom_call.1} parent=11 // pred_region
          _
        $region32: #{tpu_custom_call.1} parent=11 // pred_fallthru
          _
        // Predicated region
        $region33: #{tpu_custom_call.1} parent=11 // pred_check
          %p238 = pneg %p180
        $region34: #{tpu_custom_call.1} parent=11 // pred_check_branch
          %240 = sbr.rel (%p238) target = $region36
        $region35: #{tpu_custom_call.1} parent=11 // pred_region
          _
        $region36: #{tpu_custom_call.1} parent=11 // pred_fallthru
          _
      $region12: #{tpu_custom_call.1} parent=5 // pred_fallthru
        _
      %p241 = scmp.lt.s32.totalorder %s16, 2
      // Predicated region
      $region37: #{tpu_custom_call.1} parent=5 // pred_check
        %p242 = pneg %p241
      $region38: #{tpu_custom_call.1} parent=5 // pred_check_branch
        %244 = sbr.rel (%p242) target = $region40
      $region39: #{tpu_custom_call.1} parent=5 // pred_region
        // Predicated region
        $region41: #{tpu_custom_call.1} parent=39 // pred_check
          %p245 = pneg %p48
        $region42: #{tpu_custom_call.1} parent=39 // pred_check_branch
          %247 = sbr.rel (%p245) target = $region44
        $region43: #{tpu_custom_call.1} parent=39 // pred_region
          %p248 = scmp.lt.s32.totalorder %s23, 1
          %s249 = scalar_select %p248, %s23, 1
          %s250 = smul.addr %s249, 54
          %s251 = smul.addr %s250, 8
          %s252 = scalar_lea.vmem %s0, %s251
        $region44: #{tpu_custom_call.1} parent=39 // pred_fallthru
          _
      $region40: #{tpu_custom_call.1} parent=5 // pred_fallthru
        _
      %p253 = scmp.le.s32.totalorder 1, %s16
      %p254 = scmp.lt.s32.totalorder %s16, 3
      %p255 = pnand %p253, %p254
      %p256 = pneg %p255
      // Predicated region
      $region45: #{tpu_custom_call.1} parent=5 // pred_check
        _
      $region46: #{tpu_custom_call.1} parent=5 // pred_check_branch
        %258 = sbr.rel (%p255) target = $region48
      $region47: #{tpu_custom_call.1} parent=5 // pred_region
        %s259 = ssub.s32 %s16, 1
        %p260 = scmp.lt.s32.totalorder %s25, 1
        %s261 = scalar_select %p260, %s25, 1
        %s262 = smul.addr %s261, 54
        %s263 = smul.addr %s262, 8
        %s264 = scalar_lea.vmem %s0, %s263
        %p265 = pneg %p54
        %p266 = pneg %p51
        %p267 = pneg %p75
        %p268 = pneg %p72
        %p269 = pneg %p96
        %p270 = pneg %p93
        %p271 = pneg %p117
        %p272 = pneg %p114
        %p273 = pneg %p138
        %p274 = pneg %p135
        %p275 = pneg %p159
        %p276 = pneg %p156
        %p277 = pneg %p180
        %p278 = pneg %p177
        %p279 = pneg %p208
        %p280 = pneg %p205
        %s281 = sand.u32 %s195, 1
        %s282 = scalar_lea.sflag [#allocation4], %s281
        %s283 = sand.u32 %s195, 1
        %s284 = smul.addr %s283, 16
        %s285 = scalar_lea.vmem [#allocation3], %s284
        %p286 = scmp.lt.s32.totalorder %s25, 1
        %s287 = scalar_select %p286, %s25, 1
        %s288 = smul.addr %s287, 54
        %s289 = smul.addr %s288, 8
        %s290 = scalar_lea.vmem %s0, %s289
        %s291 = smul.u32 2, %s26
        %s292 = smul.u32 %s26, 16
        %s293 = smul.u32 %s292, 24
        %s294 = scalar_lea.vmem %s290, %s293
        %v295 = vld [vmem:[%s294] sm:$0xff]
        %v296 = vld [vmem:[%s294 + $0x8] sm:$0xff]
        %v297 = vld [vmem:[%s294 + $0x10] sm:$0xff]
        %v298 = vld [vmem:[%s294 + $0x18] sm:$0xff]
        %v299 = vld [vmem:[%s294 + $0x20] sm:$0xff]
        %v300 = vld [vmem:[%s294 + $0x28] sm:$0xff]
        %v301 = vld [vmem:[%s294 + $0x30] sm:$0xff]
        %v302 = vld [vmem:[%s294 + $0x38] sm:$0xff]
        %v303 = vld [vmem:[%s294 + $0x40] sm:$0xff]
        %v304 = vld [vmem:[%s294 + $0x48] sm:$0xff]
        %v305 = vld [vmem:[%s294 + $0x50] sm:$0xff]
        %v306 = vld [vmem:[%s294 + $0x58] sm:$0xff]
        %v307 = vld [vmem:[%s294 + $0x60] sm:$0xff]
        %v308 = vld [vmem:[%s294 + $0x68] sm:$0xff]
        %v309 = vld [vmem:[%s294 + $0x70] sm:$0xff]
        %v310 = vld [vmem:[%s294 + $0x78] sm:$0xff]
        %v311 = vld [vmem:[%s294 + $0x80] sm:$0xff]
        %v312 = vld [vmem:[%s294 + $0x88] sm:$0xff]
        %v313 = vld [vmem:[%s294 + $0x90] sm:$0xff]
        %v314 = vld [vmem:[%s294 + $0x98] sm:$0xff]
        %v315 = vld [vmem:[%s294 + $0xa0] sm:$0xff]
        %v316 = vld [vmem:[%s294 + $0xa8] sm:$0xff]
        %v317 = vld [vmem:[%s294 + $0xb0] sm:$0xff]
        %v318 = vld [vmem:[%s294 + $0xb8] sm:$0xff]
        %v319 = vld [vmem:[%s294 + $0xc0] sm:$0xff]
        %v320 = vld [vmem:[%s294 + $0xc8] sm:$0xff]
        %v321 = vld [vmem:[%s294 + $0xd0] sm:$0xff]
        %v322 = vld [vmem:[%s294 + $0xd8] sm:$0xff]
        %v323 = vld [vmem:[%s294 + $0xe0] sm:$0xff]
        %v324 = vld [vmem:[%s294 + $0xe8] sm:$0xff]
        %v325 = vld [vmem:[%s294 + $0xf0] sm:$0xff]
        %v326 = vld [vmem:[%s294 + $0xf8] sm:$0xff]
        %v327 = vld [vmem:[%s294 + $0x100] sm:$0xff]
        %v328 = vld [vmem:[%s294 + $0x108] sm:$0xff]
        %v329 = vld [vmem:[%s294 + $0x110] sm:$0xff]
        %v330 = vld [vmem:[%s294 + $0x118] sm:$0xff]
        %v331 = vld [vmem:[%s294 + $0x120] sm:$0xff]
        %v332 = vld [vmem:[%s294 + $0x128] sm:$0xff]
        %v333 = vld [vmem:[%s294 + $0x130] sm:$0xff]
        %v334 = vld [vmem:[%s294 + $0x138] sm:$0xff]
        %v335 = vld [vmem:[%s294 + $0x140] sm:$0xff]
        %v336 = vld [vmem:[%s294 + $0x148] sm:$0xff]
        %v337 = vld [vmem:[%s294 + $0x150] sm:$0xff]
        %v338 = vld [vmem:[%s294 + $0x158] sm:$0xff]
        %v339 = vld [vmem:[%s294 + $0x160] sm:$0xff]
        %v340 = vld [vmem:[%s294 + $0x168] sm:$0xff]
        %v341 = vld [vmem:[%s294 + $0x170] sm:$0xff]
        %v342 = vld [vmem:[%s294 + $0x178] sm:$0xff]
        %v343 = vld [vmem:[%s294 + $0x180] sm:$0xff]
        %v344 = vld [vmem:[%s294 + $0x188] sm:$0xff]
        %v345 = vld [vmem:[%s294 + $0x190] sm:$0xff]
        %v346 = vld [vmem:[%s294 + $0x198] sm:$0xff]
        %v347 = vld [vmem:[%s294 + $0x1a0] sm:$0xff]
        %v348 = vld [vmem:[%s294 + $0x1a8] sm:$0xff]
        %v349 = vld [vmem:[%s1] sm:$0xf]
        %v350 = vld [vmem:[%s2] sm:$0x1]
        %v352 = vlaneseq
        %v353 = vshrl.u32 %v352, 7
        %v354 = vsub.s32 0, %v353
        %v355 = vrot.slane %v350, %v354
        %vm357 = vcmask 31744
        %v359 = vsel %vm357, %v295, 0
        %v362 = vsel %vm357, %v296, 0
        %v365 = vsel %vm357, %v297, 0
        %v368 = vsel %vm357, %v298, 0
        %v371 = vsel %vm357, %v299, 0
        %v374 = vsel %vm357, %v300, 0
        %v377 = vsel %vm357, %v301, 0
        %v380 = vsel %vm357, %v302, 0
        %v383 = vsel %vm357, %v303, 0
        %v386 = vsel %vm357, %v304, 0
        %v389 = vsel %vm357, %v305, 0
        %v392 = vsel %vm357, %v306, 0
        %v395 = vsel %vm357, %v307, 0
        %v398 = vsel %vm357, %v308, 0
        %v401 = vsel %vm357, %v309, 0
        %v404 = vsel %vm357, %v310, 0
        %v407 = vsel %vm357, %v311, 0
        %v410 = vsel %vm357, %v312, 0
        %v413 = vsel %vm357, %v313, 0
        %v416 = vsel %vm357, %v314, 0
        %v419 = vsel %vm357, %v315, 0
        %v422 = vsel %vm357, %v316, 0
        %v425 = vsel %vm357, %v317, 0
        %v428 = vsel %vm357, %v318, 0
        %v431 = vsel %vm357, %v319, 0
        %v434 = vsel %vm357, %v320, 0
        %v437 = vsel %vm357, %v321, 0
        %v440 = vsel %vm357, %v322, 0
        %v443 = vsel %vm357, %v323, 0
        %v446 = vsel %vm357, %v324, 0
        %v449 = vsel %vm357, %v325, 0
        %v452 = vsel %vm357, %v326, 0
        %v455 = vsel %vm357, %v327, 0
        %v458 = vsel %vm357, %v328, 0
        %v461 = vsel %vm357, %v329, 0
        %v464 = vsel %vm357, %v330, 0
        %v467 = vsel %vm357, %v331, 0
        %v470 = vsel %vm357, %v332, 0
        %v473 = vsel %vm357, %v333, 0
        %v476 = vsel %vm357, %v334, 0
        %v479 = vsel %vm357, %v335, 0
        %v482 = vsel %vm357, %v336, 0
        %v485 = vsel %vm357, %v337, 0
        %v488 = vsel %vm357, %v338, 0
        %v491 = vsel %vm357, %v339, 0
        %v494 = vsel %vm357, %v340, 0
        %v497 = vsel %vm357, %v341, 0
        %v500 = vsel %vm357, %v342, 0
        %v503 = vsel %vm357, %v343, 0
        %v506 = vsel %vm357, %v344, 0
        %v509 = vsel %vm357, %v345, 0
        %v512 = vsel %vm357, %v346, 0
        %v515 = vsel %vm357, %v347, 0
        %v518 = vsel %vm357, %v348, 0
        %vm520 = vcmask 1043456
        %v522 = vsel %vm520, %v349, 0
        %524 = vmatprep.subr.mxu0 0.0
        %v525 = vand.u32 %v522, 4294901760
        %526 = vmatpush1.msra.mxu0 %v525
        %527 = vmatprep.subr.mxu0 0.0
        %528 = vmatpush1.msra.mxu0 0.0
        %529 = vmatprep.subr.mxu0 0.0
        %530 = vmatpush1.msra.mxu0 0.0
        %531 = vmatprep.subr.mxu0 0.0
        %532 = vmatpush1.msra.mxu0 0.0
        %533 = vmatprep.subr.mxu0 0.0
        %534 = vmatpush1.msra.mxu0 0.0
        %535 = vmatprep.subr.mxu0 0.0
        %536 = vmatpush1.msra.mxu0 0.0
        %537 = vmatprep.subr.mxu0 0.0
        %538 = vmatpush1.msra.mxu0 0.0
        %539 = vmatprep.subr.mxu0 0.0
        %540 = vmatpush1.msra.mxu0 0.0
        %541 = vmatprep.subr.mxu0 0.0
        %542 = vmatpush1.msra.mxu0 0.0
        %543 = vmatprep.subr.mxu0 0.0
        %544 = vmatpush1.msra.mxu0 0.0
        %545 = vmatprep.subr.mxu0 0.0
        %546 = vmatpush1.msra.mxu0 0.0
        %547 = vmatprep.subr.mxu0 0.0
        %548 = vmatpush1.msra.mxu0 0.0
        %549 = vmatprep.subr.mxu0 0.0
        %550 = vmatpush1.msra.mxu0 0.0
        %551 = vmatprep.subr.mxu0 0.0
        %552 = vmatpush1.msra.mxu0 0.0
        %553 = vmatprep.subr.mxu0 0.0
        %554 = vmatpush1.msra.mxu0 0.0
        %555 = vmatprep.subr.mxu0 0.0
        %556 = vmatpush1.msra.mxu0 0.0
        %557 = vmatprep.subr.mxu0 0.0
        %558 = vmatpush1.msra.mxu0 0.0
        %559 = vmatprep.subr.mxu0 0.0
        %560 = vmatpush1.msra.mxu0 0.0
        %561 = vmatprep.subr.mxu0 0.0
        %562 = vmatpush1.msra.mxu0 0.0
        %563 = vmatprep.subr.mxu0 0.0
        %564 = vmatpush1.msra.mxu0 0.0
        %565 = vmatprep.subr.mxu0 0.0
        %566 = vmatpush1.msra.mxu0 0.0
        %567 = vmatprep.subr.mxu0 0.0
        %568 = vmatpush1.msra.mxu0 0.0
        %569 = vmatprep.subr.mxu0 0.0
        %570 = vmatpush1.msra.mxu0 0.0
        %571 = vmatprep.subr.mxu0 0.0
        %572 = vmatpush1.msra.mxu0 0.0
        %573 = vmatprep.subr.mxu0 0.0
        %574 = vmatpush1.msra.mxu0 0.0
        %575 = vmatprep.subr.mxu0 0.0
        %576 = vmatpush1.msra.mxu0 0.0
        %577 = vmatprep.subr.mxu0 0.0
        %578 = vmatpush1.msra.mxu0 0.0
        %579 = vmatprep.subr.mxu0 0.0
        %580 = vmatpush1.msra.mxu0 0.0
        %581 = vmatprep.subr.mxu0 0.0
        %582 = vmatpush1.msra.mxu0 0.0
        %583 = vmatprep.subr.mxu0 0.0
        %584 = vmatpush1.msra.mxu0 0.0
        %585 = vmatprep.subr.mxu0 0.0
        %586 = vmatpush1.msra.mxu0 0.0
        %587 = vmatprep.subr.mxu0 0.0
        %588 = vmatpush1.msra.mxu0 0.0
        %589 = vmatprep.mubr.f32.mxu0 0.0
        %v590 = vand.u32 %v359, 4294901760
        %v591 = vsub.f32 %v359, %v590
        %v592 = vand.u32 %v591, 4294901760
        %v593 = vsub.f32 %v591, %v592
        %v594 = vand.u32 %v593, 4294901760
        %595 = vmatmul.mubr.f32.gmra.mrb[0].mxu0 %v594
        %v596 = vpop.f32.mrb[0].mxu0
        %v597 = vadd.f32 %v355, %v596
        %v598 = vpop.f32.mrb[0].mxu0
        %599 = vmatprep.mubr.f32.mxu0 0.0
        %v600 = vand.u32 %v362, 4294901760
        %v601 = vsub.f32 %v362, %v600
        %v602 = vand.u32 %v601, 4294901760
        %v603 = vsub.f32 %v601, %v602
        %v604 = vand.u32 %v603, 4294901760
        %605 = vmatmul.mubr.f32.gmra.mrb[0].mxu0 %v604
        %v606 = vpop.f32.mrb[0].mxu0
        %v607 = vadd.f32 %v355, %v606
        %v608 = vpop.f32.mrb[0].mxu0
        %609 = vmatprep.mubr.f32.mxu0 0.0
        %v610 = vand.u32 %v365, 4294901760
        %v611 = vsub.f32 %v365, %v610
        %v612 = vand.u32 %v611, 4294901760
        %v613 = vsub.f32 %v611, %v612
        %v614 = vand.u32 %v613, 4294901760
        %615 = vmatmul.mubr.f32.gmra.mrb[0].mxu0 %v614
        %v616 = vpop.f32.mrb[0].mxu0
        %v617 = vadd.f32 %v355, %v616
        %v618 = vpop.f32.mrb[0].mxu0
        %619 = vmatprep.mubr.f32.mxu0 0.0
        %v620 = vand.u32 %v368, 4294901760
        %v621 = vsub.f32 %v368, %v620
        %v622 = vand.u32 %v621, 4294901760
        %v623 = vsub.f32 %v621, %v622
        %v624 = vand.u32 %v623, 4294901760
        %625 = vmatmul.mubr.f32.gmra.mrb[0].mxu0 %v624
        %v626 = vpop.f32.mrb[0].mxu0
        %v627 = vadd.f32 %v355, %v626
        %v628 = vpop.f32.mrb[0].mxu0
        %629 = vmatprep.mubr.f32.mxu0 0.0
        %v630 = vand.u32 %v371, 4294901760
        %v631 = vsub.f32 %v371, %v630
        %v632 = vand.u32 %v631, 4294901760
        %v633 = vsub.f32 %v631, %v632
        %v634 = vand.u32 %v633, 4294901760
        %635 = vmatmul.mubr.f32.gmra.mrb[0].mxu0 %v634
        %v636 = vpop.f32.mrb[0].mxu0
        %v637 = vadd.f32 %v355, %v636
        %v638 = vpop.f32.mrb[0].mxu0
        %639 = vmatprep.mubr.f32.mxu0 0.0
        %v640 = vand.u32 %v374, 4294901760
        %v641 = vsub.f32 %v374, %v640
        %v642 = vand.u32 %v641, 4294901760
        %v643 = vsub.f32 %v641, %v642
        %v644 = vand.u32 %v643, 4294901760
        %645 = vmatmul.mubr.f32.gmra.mrb[0].mxu0 %v644
        %v646 = vpop.f32.mrb[0].mxu0
        %v647 = vadd.f32 %v355, %v646
        %v648 = vpop.f32.mrb[0].mxu0
        %649 = vmatprep.mubr.f32.mxu0 0.0
        %v650 = vand.u32 %v377, 4294901760
        %v651 = vsub.f32 %v377, %v650
        %v652 = vand.u32 %v651, 4294901760
        %v653 = vsub.f32 %v651, %v652
        %v654 = vand.u32 %v653, 4294901760
        %655 = vmatmul.mubr.f32.gmra.mrb[0].mxu0 %v654
        %v656 = vpop.f32.mrb[0].mxu0
        %v657 = vadd.f32 %v355, %v656
        %v658 = vpop.f32.mrb[0].mxu0
        %659 = vmatprep.mubr.f32.mxu0 0.0
        %v660 = vand.u32 %v380, 4294901760
        %v661 = vsub.f32 %v380, %v660
        %v662 = vand.u32 %v661, 4294901760
        %v663 = vsub.f32 %v661, %v662
        %v664 = vand.u32 %v663, 4294901760
        %665 = vmatmul.mubr.f32.gmra.mrb[0].mxu0 %v664
        %v666 = vpop.f32.mrb[0].mxu0
        %v667 = vadd.f32 %v355, %v666
        %v668 = vpop.f32.mrb[0].mxu0
        %669 = vmatprep.mubr.f32.mxu0 0.0
        %v670 = vand.u32 %v383, 4294901760
        %v671 = vsub.f32 %v383, %v670
        %v672 = vand.u32 %v671, 4294901760
        %v673 = vsub.f32 %v671, %v672
        %v674 = vand.u32 %v673, 4294901760
        %675 = vmatmul.mubr.f32.gmra.mrb[0].mxu0 %v674
        %v676 = vpop.f32.mrb[0].mxu0
        %v677 = vadd.f32 %v355, %v676
        %v678 = vpop.f32.mrb[0].mxu0
        %679 = vmatprep.mubr.f32.mxu0 0.0
        %v680 = vand.u32 %v386, 4294901760
        %v681 = vsub.f32 %v386, %v680
        %v682 = vand.u32 %v681, 4294901760
        %v683 = vsub.f32 %v681, %v682
        %v684 = vand.u32 %v683, 4294901760
        %685 = vmatmul.mubr.f32.gmra.mrb[0].mxu0 %v684
        %v686 = vpop.f32.mrb[0].mxu0
        %v687 = vadd.f32 %v355, %v686
        %v688 = vpop.f32.mrb[0].mxu0
        %689 = vmatprep.mubr.f32.mxu0 0.0
        %v690 = vand.u32 %v389, 4294901760
        %v691 = vsub.f32 %v389, %v690
        %v692 = vand.u32 %v691, 4294901760
        %v693 = vsub.f32 %v691, %v692
        %v694 = vand.u32 %v693, 4294901760
        %695 = vmatmul.mubr.f32.gmra.mrb[0].mxu0 %v694
        %v696 = vpop.f32.mrb[0].mxu0
        %v697 = vadd.f32 %v355, %v696
        %v698 = vpop.f32.mrb[0].mxu0
        %699 = vmatprep.mubr.f32.mxu0 0.0
        %v700 = vand.u32 %v392, 4294901760
        %v701 = vsub.f32 %v392, %v700
        %v702 = vand.u32 %v701, 4294901760
        %v703 = vsub.f32 %v701, %v702
        %v704 = vand.u32 %v703, 4294901760
        %705 = vmatmul.mubr.f32.gmra.mrb[0].mxu0 %v704
        %v706 = vpop.f32.mrb[0].mxu0
        %v707 = vadd.f32 %v355, %v706
        %v708 = vpop.f32.mrb[0].mxu0
        %709 = vmatprep.mubr.f32.mxu0 0.0
        %v710 = vand.u32 %v395, 4294901760
        %v711 = vsub.f32 %v395, %v710
        %v712 = vand.u32 %v711, 4294901760
        %v713 = vsub.f32 %v711, %v712
        %v714 = vand.u32 %v713, 4294901760
        %715 = vmatmul.mubr.f32.gmra.mrb[0].mxu0 %v714
        %v716 = vpop.f32.mrb[0].mxu0
        %v717 = vadd.f32 %v355, %v716
        %v718 = vpop.f32.mrb[0].mxu0
        %719 = vmatprep.mubr.f32.mxu0 0.0
        %v720 = vand.u32 %v398, 4294901760
        %v721 = vsub.f32 %v398, %v720
        %v722 = vand.u32 %v721, 4294901760
        %v723 = vsub.f32 %v721, %v722
        %v724 = vand.u32 %v723, 4294901760
        %725 = vmatmul.mubr.f32.gmra.mrb[0].mxu0 %v724
        %v726 = vpop.f32.mrb[0].mxu0
        %v727 = vadd.f32 %v355, %v726
        %v728 = vpop.f32.mrb[0].mxu0
        %729 = vmatprep.mubr.f32.mxu0 0.0
        %v730 = vand.u32 %v401, 4294901760
        %v731 = vsub.f32 %v401, %v730
        %v732 = vand.u32 %v731, 4294901760
        %v733 = vsub.f32 %v731, %v732
        %v734 = vand.u32 %v733, 4294901760
        %735 = vmatmul.mubr.f32.gmra.mrb[0].mxu0 %v734
        %v736 = vpop.f32.mrb[0].mxu0
        %v737 = vadd.f32 %v355, %v736
        %v738 = vpop.f32.mrb[0].mxu0
        %739 = vmatprep.mubr.f32.mxu0 0.0
        %v740 = vand.u32 %v404, 4294901760
        %v741 = vsub.f32 %v404, %v740
        %v742 = vand.u32 %v741, 4294901760
        %v743 = vsub.f32 %v741, %v742
        %v744 = vand.u32 %v743, 4294901760
        %745 = vmatmul.mubr.f32.gmra.mrb[0].mxu0 %v744
        %v746 = vpop.f32.mrb[0].mxu0
        %v747 = vadd.f32 %v355, %v746
        %v748 = vpop.f32.mrb[0].mxu0
        %749 = vmatprep.mubr.f32.mxu0 0.0
        %v750 = vand.u32 %v407, 4294901760
        %v751 = vsub.f32 %v407, %v750
        %v752 = vand.u32 %v751, 4294901760
        %v753 = vsub.f32 %v751, %v752
        %v754 = vand.u32 %v753, 4294901760
        %755 = vmatmul.mubr.f32.gmra.mrb[0].mxu0 %v754
        %v756 = vpop.f32.mrb[0].mxu0
        %v757 = vadd.f32 %v355, %v756
        %v758 = vpop.f32.mrb[0].mxu0
        %759 = vmatprep.mubr.f32.mxu0 0.0
        %v760 = vand.u32 %v410, 4294901760
        %v761 = vsub.f32 %v410, %v760
        %v762 = vand.u32 %v761, 4294901760
        %v763 = vsub.f32 %v761, %v762
        %v764 = vand.u32 %v763, 4294901760
        %765 = vmatmul.mubr.f32.gmra.mrb[0].mxu0 %v764
        %v766 = vpop.f32.mrb[0].mxu0
        %v767 = vadd.f32 %v355, %v766
        %v768 = vpop.f32.mrb[0].mxu0
        %769 = vmatprep.mubr.f32.mxu0 0.0
        %v770 = vand.u32 %v413, 4294901760
        %v771 = vsub.f32 %v413, %v770
        %v772 = vand.u32 %v771, 4294901760
        %v773 = vsub.f32 %v771, %v772
        %v774 = vand.u32 %v773, 4294901760
        %775 = vmatmul.mubr.f32.gmra.mrb[0].mxu0 %v774
        %v776 = vpop.f32.mrb[0].mxu0
        %v777 = vadd.f32 %v355, %v776
        %v778 = vpop.f32.mrb[0].mxu0
        %779 = vmatprep.mubr.f32.mxu0 0.0
        %v780 = vand.u32 %v416, 4294901760
        %v781 = vsub.f32 %v416, %v780
        %v782 = vand.u32 %v781, 4294901760
        %v783 = vsub.f32 %v781, %v782
        %v784 = vand.u32 %v783, 4294901760
        %785 = vmatmul.mubr.f32.gmra.mrb[0].mxu0 %v784
        %v786 = vpop.f32.mrb[0].mxu0
        %v787 = vadd.f32 %v355, %v786
        %v788 = vpop.f32.mrb[0].mxu0
        %789 = vmatprep.mubr.f32.mxu0 0.0
        %v790 = vand.u32 %v419, 4294901760
        %v791 = vsub.f32 %v419, %v790
        %v792 = vand.u32 %v791, 4294901760
        %v793 = vsub.f32 %v791, %v792
        %v794 = vand.u32 %v793, 4294901760
        %795 = vmatmul.mubr.f32.gmra.mrb[0].mxu0 %v794
        %v796 = vpop.f32.mrb[0].mxu0
        %v797 = vadd.f32 %v355, %v796
        %v798 = vpop.f32.mrb[0].mxu0
        %799 = vmatprep.mubr.f32.mxu0 0.0
        %v800 = vand.u32 %v422, 4294901760
        %v801 = vsub.f32 %v422, %v800
        %v802 = vand.u32 %v801, 4294901760
        %v803 = vsub.f32 %v801, %v802
        %v804 = vand.u32 %v803, 4294901760
        %805 = vmatmul.mubr.f32.gmra.mrb[0].mxu0 %v804
        %v806 = vpop.f32.mrb[0].mxu0
        %v807 = vadd.f32 %v355, %v806
        %v808 = vpop.f32.mrb[0].mxu0
        %809 = vmatprep.mubr.f32.mxu0 0.0
        %v810 = vand.u32 %v425, 4294901760
        %v811 = vsub.f32 %v425, %v810
        %v812 = vand.u32 %v811, 4294901760
        %v813 = vsub.f32 %v811, %v812
        %v814 = vand.u32 %v813, 4294901760
        %815 = vmatmul.mubr.f32.gmra.mrb[0].mxu0 %v814
        %v816 = vpop.f32.mrb[0].mxu0
        %v817 = vadd.f32 %v355, %v816
        %v818 = vpop.f32.mrb[0].mxu0
        %819 = vmatprep.mubr.f32.mxu0 0.0
        %v820 = vand.u32 %v428, 4294901760
        %v821 = vsub.f32 %v428, %v820
        %v822 = vand.u32 %v821, 4294901760
        %v823 = vsub.f32 %v821, %v822
        %v824 = vand.u32 %v823, 4294901760
        %825 = vmatmul.mubr.f32.gmra.mrb[0].mxu0 %v824
        %v826 = vpop.f32.mrb[0].mxu0
        %v827 = vadd.f32 %v355, %v826
        %v828 = vpop.f32.mrb[0].mxu0
        %829 = vmatprep.mubr.f32.mxu0 0.0
        %v830 = vand.u32 %v431, 4294901760
        %v831 = vsub.f32 %v431, %v830
        %v832 = vand.u32 %v831, 4294901760
        %v833 = vsub.f32 %v831, %v832
        %v834 = vand.u32 %v833, 4294901760
        %835 = vmatmul.mubr.f32.gmra.mrb[0].mxu0 %v834
        %v836 = vpop.f32.mrb[0].mxu0
        %v837 = vadd.f32 %v355, %v836
        %v838 = vpop.f32.mrb[0].mxu0
        %839 = vmatprep.mubr.f32.mxu0 0.0
        %v840 = vand.u32 %v434, 4294901760
        %v841 = vsub.f32 %v434, %v840
        %v842 = vand.u32 %v841, 4294901760
        %v843 = vsub.f32 %v841, %v842
        %v844 = vand.u32 %v843, 4294901760
        %845 = vmatmul.mubr.f32.gmra.mrb[0].mxu0 %v844
        %v846 = vpop.f32.mrb[0].mxu0
        %v847 = vadd.f32 %v355, %v846
        %v848 = vpop.f32.mrb[0].mxu0
        %849 = vmatprep.mubr.f32.mxu0 0.0
        %v850 = vand.u32 %v437, 4294901760
        %v851 = vsub.f32 %v437, %v850
        %v852 = vand.u32 %v851, 4294901760
        %v853 = vsub.f32 %v851, %v852
        %v854 = vand.u32 %v853, 4294901760
        %855 = vmatmul.mubr.f32.gmra.mrb[0].mxu0 %v854
        %v856 = vpop.f32.mrb[0].mxu0
        %v857 = vadd.f32 %v355, %v856
        %v858 = vpop.f32.mrb[0].mxu0
        %859 = vmatprep.mubr.f32.mxu0 0.0
        %v860 = vand.u32 %v440, 4294901760
        %v861 = vsub.f32 %v440, %v860
        %v862 = vand.u32 %v861, 4294901760
        %v863 = vsub.f32 %v861, %v862
        %v864 = vand.u32 %v863, 4294901760
        %865 = vmatmul.mubr.f32.gmra.mrb[0].mxu0 %v864
        %v866 = vpop.f32.mrb[0].mxu0
        %v867 = vadd.f32 %v355, %v866
        %v868 = vpop.f32.mrb[0].mxu0
        %869 = vmatprep.mubr.f32.mxu0 0.0
        %v870 = vand.u32 %v443, 4294901760
        %v871 = vsub.f32 %v443, %v870
        %v872 = vand.u32 %v871, 4294901760
        %v873 = vsub.f32 %v871, %v872
        %v874 = vand.u32 %v873, 4294901760
        %875 = vmatmul.mubr.f32.gmra.mrb[0].mxu0 %v874
        %v876 = vpop.f32.mrb[0].mxu0
        %v877 = vadd.f32 %v355, %v876
        %v878 = vpop.f32.mrb[0].mxu0
        %879 = vmatprep.mubr.f32.mxu0 0.0
        %v880 = vand.u32 %v446, 4294901760
        %v881 = vsub.f32 %v446, %v880
        %v882 = vand.u32 %v881, 4294901760
        %v883 = vsub.f32 %v881, %v882
        %v884 = vand.u32 %v883, 4294901760
        %885 = vmatmul.mubr.f32.gmra.mrb[0].mxu0 %v884
        %v886 = vpop.f32.mrb[0].mxu0
        %v887 = vadd.f32 %v355, %v886
        %v888 = vpop.f32.mrb[0].mxu0
        %889 = vmatprep.mubr.f32.mxu0 0.0
        %v890 = vand.u32 %v449, 4294901760
        %v891 = vsub.f32 %v449, %v890
        %v892 = vand.u32 %v891, 4294901760
        %v893 = vsub.f32 %v891, %v892
        %v894 = vand.u32 %v893, 4294901760
        %895 = vmatmul.mubr.f32.gmra.mrb[0].mxu0 %v894
        %v896 = vpop.f32.mrb[0].mxu0
        %v897 = vadd.f32 %v355, %v896
        %v898 = vpop.f32.mrb[0].mxu0
        %899 = vmatprep.mubr.f32.mxu0 0.0
        %v900 = vand.u32 %v452, 4294901760
        %v901 = vsub.f32 %v452, %v900
        %v902 = vand.u32 %v901, 4294901760
        %v903 = vsub.f32 %v901, %v902
        %v904 = vand.u32 %v903, 4294901760
        %905 = vmatmul.mubr.f32.gmra.mrb[0].mxu0 %v904
        %v906 = vpop.f32.mrb[0].mxu0
        %v907 = vadd.f32 %v355, %v906
        %v908 = vpop.f32.mrb[0].mxu0
        %909 = vmatprep.mubr.f32.mxu0 0.0
        %v910 = vand.u32 %v455, 4294901760
        %v911 = vsub.f32 %v455, %v910
        %v912 = vand.u32 %v911, 4294901760
        %v913 = vsub.f32 %v911, %v912
        %v914 = vand.u32 %v913, 4294901760
        %915 = vmatmul.mubr.f32.gmra.mrb[0].mxu0 %v914
        %v916 = vpop.f32.mrb[0].mxu0
        %v917 = vadd.f32 %v355, %v916
        %v918 = vpop.f32.mrb[0].mxu0
        %919 = vmatprep.mubr.f32.mxu0 0.0
        %v920 = vand.u32 %v458, 4294901760
        %v921 = vsub.f32 %v458, %v920
        %v922 = vand.u32 %v921, 4294901760
        %v923 = vsub.f32 %v921, %v922
        %v924 = vand.u32 %v923, 4294901760
        %925 = vmatmul.mubr.f32.gmra.mrb[0].mxu0 %v924
        %v926 = vpop.f32.mrb[0].mxu0
        %v927 = vadd.f32 %v355, %v926
        %v928 = vpop.f32.mrb[0].mxu0
        %929 = vmatprep.mubr.f32.mxu0 0.0
        %v930 = vand.u32 %v461, 4294901760
        %v931 = vsub.f32 %v461, %v930
        %v932 = vand.u32 %v931, 4294901760
        %v933 = vsub.f32 %v931, %v932
        %v934 = vand.u32 %v933, 4294901760
        %935 = vmatmul.mubr.f32.gmra.mrb[0].mxu0 %v934
        %v936 = vpop.f32.mrb[0].mxu0
        %v937 = vadd.f32 %v355, %v936
        %v938 = vpop.f32.mrb[0].mxu0
        %939 = vmatprep.mubr.f32.mxu0 0.0
        %v940 = vand.u32 %v464, 4294901760
        %v941 = vsub.f32 %v464, %v940
        %v942 = vand.u32 %v941, 4294901760
        %v943 = vsub.f32 %v941, %v942
        %v944 = vand.u32 %v943, 4294901760
        %945 = vmatmul.mubr.f32.gmra.mrb[0].mxu0 %v944
        %v946 = vpop.f32.mrb[0].mxu0
        %v947 = vadd.f32 %v355, %v946
        %v948 = vpop.f32.mrb[0].mxu0
        %949 = vmatprep.mubr.f32.mxu0 0.0
        %v950 = vand.u32 %v467, 4294901760
        %v951 = vsub.f32 %v467, %v950
        %v952 = vand.u32 %v951, 4294901760
        %v953 = vsub.f32 %v951, %v952
        %v954 = vand.u32 %v953, 4294901760
        %955 = vmatmul.mubr.f32.gmra.mrb[0].mxu0 %v954
        %v956 = vpop.f32.mrb[0].mxu0
        %v957 = vadd.f32 %v355, %v956
        %v958 = vpop.f32.mrb[0].mxu0
        %959 = vmatprep.mubr.f32.mxu0 0.0
        %v960 = vand.u32 %v470, 4294901760
        %v961 = vsub.f32 %v470, %v960
        %v962 = vand.u32 %v961, 4294901760
        %v963 = vsub.f32 %v961, %v962
        %v964 = vand.u32 %v963, 4294901760
        %965 = vmatmul.mubr.f32.gmra.mrb[0].mxu0 %v964
        %v966 = vpop.f32.mrb[0].mxu0
        %v967 = vadd.f32 %v355, %v966
        %v968 = vpop.f32.mrb[0].mxu0
        %969 = vmatprep.mubr.f32.mxu0 0.0
        %v970 = vand.u32 %v473, 4294901760
        %v971 = vsub.f32 %v473, %v970
        %v972 = vand.u32 %v971, 4294901760
        %v973 = vsub.f32 %v971, %v972
        %v974 = vand.u32 %v973, 4294901760
        %975 = vmatmul.mubr.f32.gmra.mrb[0].mxu0 %v974
        %v976 = vpop.f32.mrb[0].mxu0
        %v977 = vadd.f32 %v355, %v976
        %v978 = vpop.f32.mrb[0].mxu0
        %979 = vmatprep.mubr.f32.mxu0 0.0
        %v980 = vand.u32 %v476, 4294901760
        %v981 = vsub.f32 %v476, %v980
        %v982 = vand.u32 %v981, 4294901760
        %v983 = vsub.f32 %v981, %v982
        %v984 = vand.u32 %v983, 4294901760
        %985 = vmatmul.mubr.f32.gmra.mrb[0].mxu0 %v984
        %v986 = vpop.f32.mrb[0].mxu0
        %v987 = vadd.f32 %v355, %v986
        %v988 = vpop.f32.mrb[0].mxu0
        %989 = vmatprep.mubr.f32.mxu0 0.0
        %v990 = vand.u32 %v479, 4294901760
        %v991 = vsub.f32 %v479, %v990
        %v992 = vand.u32 %v991, 4294901760
        %v993 = vsub.f32 %v991, %v992
        %v994 = vand.u32 %v993, 4294901760
        %995 = vmatmul.mubr.f32.gmra.mrb[0].mxu0 %v994
        %v996 = vpop.f32.mrb[0].mxu0
        %v997 = vadd.f32 %v355, %v996
        %v998 = vpop.f32.mrb[0].mxu0
        %999 = vmatprep.mubr.f32.mxu0 0.0
        %v1000 = vand.u32 %v482, 4294901760
        %v1001 = vsub.f32 %v482, %v1000
        %v1002 = vand.u32 %v1001, 4294901760
        %v1003 = vsub.f32 %v1001, %v1002
        %v1004 = vand.u32 %v1003, 4294901760
        %1005 = vmatmul.mubr.f32.gmra.mrb[0].mxu0 %v1004
        %v1006 = vpop.f32.mrb[0].mxu0
        %v1007 = vadd.f32 %v355, %v1006
        %v1008 = vpop.f32.mrb[0].mxu0
        %1009 = vmatprep.mubr.f32.mxu0 0.0
        %v1010 = vand.u32 %v485, 4294901760
        %v1011 = vsub.f32 %v485, %v1010
        %v1012 = vand.u32 %v1011, 4294901760
        %v1013 = vsub.f32 %v1011, %v1012
        %v1014 = vand.u32 %v1013, 4294901760
        %1015 = vmatmul.mubr.f32.gmra.mrb[0].mxu0 %v1014
        %v1016 = vpop.f32.mrb[0].mxu0
        %v1017 = vadd.f32 %v355, %v1016
        %v1018 = vpop.f32.mrb[0].mxu0
        %1019 = vmatprep.mubr.f32.mxu0 0.0
        %v1020 = vand.u32 %v488, 4294901760
        %v1021 = vsub.f32 %v488, %v1020
        %v1022 = vand.u32 %v1021, 4294901760
        %v1023 = vsub.f32 %v1021, %v1022
        %v1024 = vand.u32 %v1023, 4294901760
        %1025 = vmatmul.mubr.f32.gmra.mrb[0].mxu0 %v1024
        %v1026 = vpop.f32.mrb[0].mxu0
        %v1027 = vadd.f32 %v355, %v1026
        %v1028 = vpop.f32.mrb[0].mxu0
        %1029 = vmatprep.mubr.f32.mxu0 0.0
        %v1030 = vand.u32 %v491, 4294901760
        %v1031 = vsub.f32 %v491, %v1030
        %v1032 = vand.u32 %v1031, 4294901760
        %v1033 = vsub.f32 %v1031, %v1032
        %v1034 = vand.u32 %v1033, 4294901760
        %1035 = vmatmul.mubr.f32.gmra.mrb[0].mxu0 %v1034
        %v1036 = vpop.f32.mrb[0].mxu0
        %v1037 = vadd.f32 %v355, %v1036
        %v1038 = vpop.f32.mrb[0].mxu0
        %1039 = vmatprep.mubr.f32.mxu0 0.0
        %v1040 = vand.u32 %v494, 4294901760
        %v1041 = vsub.f32 %v494, %v1040
        %v1042 = vand.u32 %v1041, 4294901760
        %v1043 = vsub.f32 %v1041, %v1042
        %v1044 = vand.u32 %v1043, 4294901760
        %1045 = vmatmul.mubr.f32.gmra.mrb[0].mxu0 %v1044
        %v1046 = vpop.f32.mrb[0].mxu0
        %v1047 = vadd.f32 %v355, %v1046
        %v1048 = vpop.f32.mrb[0].mxu0
        %1049 = vmatprep.mubr.f32.mxu0 0.0
        %v1050 = vand.u32 %v497, 4294901760
        %v1051 = vsub.f32 %v497, %v1050
        %v1052 = vand.u32 %v1051, 4294901760
        %v1053 = vsub.f32 %v1051, %v1052
        %v1054 = vand.u32 %v1053, 4294901760
        %1055 = vmatmul.mubr.f32.gmra.mrb[0].mxu0 %v1054
        %v1056 = vpop.f32.mrb[0].mxu0
        %v1057 = vadd.f32 %v355, %v1056
        %v1058 = vpop.f32.mrb[0].mxu0
        %1059 = vmatprep.mubr.f32.mxu0 0.0
        %v1060 = vand.u32 %v500, 4294901760
        %v1061 = vsub.f32 %v500, %v1060
        %v1062 = vand.u32 %v1061, 4294901760
        %v1063 = vsub.f32 %v1061, %v1062
        %v1064 = vand.u32 %v1063, 4294901760
        %1065 = vmatmul.mubr.f32.gmra.mrb[0].mxu0 %v1064
        %v1066 = vpop.f32.mrb[0].mxu0
        %v1067 = vadd.f32 %v355, %v1066
        %v1068 = vpop.f32.mrb[0].mxu0
        %1069 = vmatprep.mubr.f32.mxu0 0.0
        %v1070 = vand.u32 %v503, 4294901760
        %v1071 = vsub.f32 %v503, %v1070
        %v1072 = vand.u32 %v1071, 4294901760
        %v1073 = vsub.f32 %v1071, %v1072
        %v1074 = vand.u32 %v1073, 4294901760
        %1075 = vmatmul.mubr.f32.gmra.mrb[0].mxu0 %v1074
        %v1076 = vpop.f32.mrb[0].mxu0
        %v1077 = vadd.f32 %v355, %v1076
        %v1078 = vpop.f32.mrb[0].mxu0
        %1079 = vmatprep.mubr.f32.mxu0 0.0
        %v1080 = vand.u32 %v506, 4294901760
        %v1081 = vsub.f32 %v506, %v1080
        %v1082 = vand.u32 %v1081, 4294901760
        %v1083 = vsub.f32 %v1081, %v1082
        %v1084 = vand.u32 %v1083, 4294901760
        %1085 = vmatmul.mubr.f32.gmra.mrb[0].mxu0 %v1084
        %v1086 = vpop.f32.mrb[0].mxu0
        %v1087 = vadd.f32 %v355, %v1086
        %v1088 = vpop.f32.mrb[0].mxu0
        %1089 = vmatprep.mubr.f32.mxu0 0.0
        %v1090 = vand.u32 %v509, 4294901760
        %v1091 = vsub.f32 %v509, %v1090
        %v1092 = vand.u32 %v1091, 4294901760
        %v1093 = vsub.f32 %v1091, %v1092
        %v1094 = vand.u32 %v1093, 4294901760
        %1095 = vmatmul.mubr.f32.gmra.mrb[0].mxu0 %v1094
        %v1096 = vpop.f32.mrb[0].mxu0
        %v1097 = vadd.f32 %v355, %v1096
        %v1098 = vpop.f32.mrb[0].mxu0
        %1099 = vmatprep.mubr.f32.mxu0 0.0
        %v1100 = vand.u32 %v512, 4294901760
        %v1101 = vsub.f32 %v512, %v1100
        %v1102 = vand.u32 %v1101, 4294901760
        %v1103 = vsub.f32 %v1101, %v1102
        %v1104 = vand.u32 %v1103, 4294901760
        %1105 = vmatmul.mubr.f32.gmra.mrb[0].mxu0 %v1104
        %v1106 = vpop.f32.mrb[0].mxu0
        %v1107 = vadd.f32 %v355, %v1106
        %v1108 = vpop.f32.mrb[0].mxu0
        %1109 = vmatprep.mubr.f32.mxu0 0.0
        %v1110 = vand.u32 %v515, 4294901760
        %v1111 = vsub.f32 %v515, %v1110
        %v1112 = vand.u32 %v1111, 4294901760
        %v1113 = vsub.f32 %v1111, %v1112
        %v1114 = vand.u32 %v1113, 4294901760
        %1115 = vmatmul.mubr.f32.gmra.mrb[0].mxu0 %v1114
        %v1116 = vpop.f32.mrb[0].mxu0
        %v1117 = vadd.f32 %v355, %v1116
        %v1118 = vpop.f32.mrb[0].mxu0
        %1119 = vmatprep.mubr.f32.mxu0 0.0
        %v1120 = vand.u32 %v518, 4294901760
        %v1121 = vsub.f32 %v518, %v1120
        %v1122 = vand.u32 %v1121, 4294901760
        %v1123 = vsub.f32 %v1121, %v1122
        %v1124 = vand.u32 %v1123, 4294901760
        %1125 = vmatmul.mubr.f32.gmra.mrb[0].mxu0 %v1124
        %v1126 = vpop.f32.mrb[0].mxu0
        %v1127 = vadd.f32 %v355, %v1126
        %v1128 = vpop.f32.mrb[0].mxu0
        %1129 = vdwg.mxu0
        %1130 = vmatprep.subr.mxu0 0.0
        %v1131 = vand.u32 %v522, 4294901760
        %v1132 = vsub.f32 %v522, %v1131
        %v1133 = vand.u32 %v1132, 4294901760
        %v1134 = vsub.f32 %v1132, %v1133
        %v1135 = vand.u32 %v1134, 4294901760
        %1136 = vmatpush1.msra.mxu0 %v1135
        %1137 = vmatprep.subr.mxu0 0.0
        %1138 = vmatpush1.msra.mxu0 0.0
        %1139 = vmatprep.subr.mxu0 0.0
        %1140 = vmatpush1.msra.mxu0 0.0
        %1141 = vmatprep.subr.mxu0 0.0
        %1142 = vmatpush1.msra.mxu0 0.0
        %1143 = vmatprep.subr.mxu0 0.0
        %1144 = vmatpush1.msra.mxu0 0.0
        %1145 = vmatprep.subr.mxu0 0.0
        %1146 = vmatpush1.msra.mxu0 0.0
        %1147 = vmatprep.subr.mxu0 0.0
        %1148 = vmatpush1.msra.mxu0 0.0
        %1149 = vmatprep.subr.mxu0 0.0
        %1150 = vmatpush1.msra.mxu0 0.0
        %1151 = vmatprep.subr.mxu0 0.0
        %1152 = vmatpush1.msra.mxu0 0.0
        %1153 = vmatprep.subr.mxu0 0.0
        %1154 = vmatpush1.msra.mxu0 0.0
        %1155 = vmatprep.subr.mxu0 0.0
        %1156 = vmatpush1.msra.mxu0 0.0
        %1157 = vmatprep.subr.mxu0 0.0
        %1158 = vmatpush1.msra.mxu0 0.0
        %1159 = vmatprep.subr.mxu0 0.0
        %1160 = vmatpush1.msra.mxu0 0.0
        %1161 = vmatprep.subr.mxu0 0.0
        %1162 = vmatpush1.msra.mxu0 0.0
        %1163 = vmatprep.subr.mxu0 0.0
        %1164 = vmatpush1.msra.mxu0 0.0
        %1165 = vmatprep.subr.mxu0 0.0
        %1166 = vmatpush1.msra.mxu0 0.0
        %1167 = vmatprep.subr.mxu0 0.0
        %1168 = vmatpush1.msra.mxu0 0.0
        %1169 = vmatprep.subr.mxu0 0.0
        %1170 = vmatpush1.msra.mxu0 0.0
        %1171 = vmatprep.subr.mxu0 0.0
        %1172 = vmatpush1.msra.mxu0 0.0
        %1173 = vmatprep.subr.mxu0 0.0
        %1174 = vmatpush1.msra.mxu0 0.0
        %1175 = vmatprep.subr.mxu0 0.0
        %1176 = vmatpush1.msra.mxu0 0.0
        %1177 = vmatprep.subr.mxu0 0.0
        %1178 = vmatpush1.msra.mxu0 0.0
        %1179 = vmatprep.subr.mxu0 0.0
        %1180 = vmatpush1.msra.mxu0 0.0
        %1181 = vmatprep.subr.mxu0 0.0
        %1182 = vmatpush1.msra.mxu0 0.0
        %1183 = vmatprep.subr.mxu0 0.0
        %1184 = vmatpush1.msra.mxu0 0.0
        %1185 = vmatprep.subr.mxu0 0.0
        %1186 = vmatpush1.msra.mxu0 0.0
        %1187 = vmatprep.subr.mxu0 0.0
        %1188 = vmatpush1.msra.mxu0 0.0
        %1189 = vmatprep.subr.mxu0 0.0
        %1190 = vmatpush1.msra.mxu0 0.0
        %1191 = vmatprep.subr.mxu0 0.0
        %1192 = vmatpush1.msra.mxu0 0.0
        %1193 = vmatprep.subr.mxu0 0.0
        %1194 = vmatpush1.msra.mxu0 0.0
        %1195 = vmatprep.subr.mxu0 0.0
        %1196 = vmatpush1.msra.mxu0 0.0
        %1197 = vmatprep.subr.mxu0 0.0
        %1198 = vmatpush1.msra.mxu0 0.0
        %1199 = vmatprep.mubr.f32.mxu0 0.0
        %v1200 = vand.u32 %v359, 4294901760
        %1201 = vmatmul.mubr.f32.gmra.mrb[0].mxu0 %v1200
        %v1202 = vpop.f32.mrb[0].mxu0
        %v1203 = vadd.f32 %v597, %v1202
        %v1204 = vpop.f32.mrb[0].mxu0
        %1205 = vmatprep.mubr.f32.mxu0 0.0
        %v1206 = vand.u32 %v362, 4294901760
        %1207 = vmatmul.mubr.f32.gmra.mrb[0].mxu0 %v1206
        %v1208 = vpop.f32.mrb[0].mxu0
        %v1209 = vadd.f32 %v607, %v1208
        %v1210 = vpop.f32.mrb[0].mxu0
        %1211 = vmatprep.mubr.f32.mxu0 0.0
        %v1212 = vand.u32 %v365, 4294901760
        %1213 = vmatmul.mubr.f32.gmra.mrb[0].mxu0 %v1212
        %v1214 = vpop.f32.mrb[0].mxu0
        %v1215 = vadd.f32 %v617, %v1214
        %v1216 = vpop.f32.mrb[0].mxu0
        %1217 = vmatprep.mubr.f32.mxu0 0.0
        %v1218 = vand.u32 %v368, 4294901760
        %1219 = vmatmul.mubr.f32.gmra.mrb[0].mxu0 %v1218
        %v1220 = vpop.f32.mrb[0].mxu0
        %v1221 = vadd.f32 %v627, %v1220
        %v1222 = vpop.f32.mrb[0].mxu0
        %1223 = vmatprep.mubr.f32.mxu0 0.0
        %v1224 = vand.u32 %v371, 4294901760
        %1225 = vmatmul.mubr.f32.gmra.mrb[0].mxu0 %v1224
        %v1226 = vpop.f32.mrb[0].mxu0
        %v1227 = vadd.f32 %v637, %v1226
        %v1228 = vpop.f32.mrb[0].mxu0
        %1229 = vmatprep.mubr.f32.mxu0 0.0
        %v1230 = vand.u32 %v374, 4294901760
        %1231 = vmatmul.mubr.f32.gmra.mrb[0].mxu0 %v1230
        %v1232 = vpop.f32.mrb[0].mxu0
        %v1233 = vadd.f32 %v647, %v1232
        %v1234 = vpop.f32.mrb[0].mxu0
        %1235 = vmatprep.mubr.f32.mxu0 0.0
        %v1236 = vand.u32 %v377, 4294901760
        %1237 = vmatmul.mubr.f32.gmra.mrb[0].mxu0 %v1236
        %v1238 = vpop.f32.mrb[0].mxu0
        %v1239 = vadd.f32 %v657, %v1238
        %v1240 = vpop.f32.mrb[0].mxu0
        %1241 = vmatprep.mubr.f32.mxu0 0.0
        %v1242 = vand.u32 %v380, 4294901760
        %1243 = vmatmul.mubr.f32.gmra.mrb[0].mxu0 %v1242
        %v1244 = vpop.f32.mrb[0].mxu0
        %v1245 = vadd.f32 %v667, %v1244
        %v1246 = vpop.f32.mrb[0].mxu0
        %1247 = vmatprep.mubr.f32.mxu0 0.0
        %v1248 = vand.u32 %v383, 4294901760
        %1249 = vmatmul.mubr.f32.gmra.mrb[0].mxu0 %v1248
        %v1250 = vpop.f32.mrb[0].mxu0
        %v1251 = vadd.f32 %v677, %v1250
        %v1252 = vpop.f32.mrb[0].mxu0
        %1253 = vmatprep.mubr.f32.mxu0 0.0
        %v1254 = vand.u32 %v386, 4294901760
        %1255 = vmatmul.mubr.f32.gmra.mrb[0].mxu0 %v1254
        %v1256 = vpop.f32.mrb[0].mxu0
        %v1257 = vadd.f32 %v687, %v1256
        %v1258 = vpop.f32.mrb[0].mxu0
        %1259 = vmatprep.mubr.f32.mxu0 0.0
        %v1260 = vand.u32 %v389, 4294901760
        %1261 = vmatmul.mubr.f32.gmra.mrb[0].mxu0 %v1260
        %v1262 = vpop.f32.mrb[0].mxu0
        %v1263 = vadd.f32 %v697, %v1262
        %v1264 = vpop.f32.mrb[0].mxu0
        %1265 = vmatprep.mubr.f32.mxu0 0.0
        %v1266 = vand.u32 %v392, 4294901760
        %1267 = vmatmul.mubr.f32.gmra.mrb[0].mxu0 %v1266
        %v1268 = vpop.f32.mrb[0].mxu0
        %v1269 = vadd.f32 %v707, %v1268
        %v1270 = vpop.f32.mrb[0].mxu0
        %1271 = vmatprep.mubr.f32.mxu0 0.0
        %v1272 = vand.u32 %v395, 4294901760
        %1273 = vmatmul.mubr.f32.gmra.mrb[0].mxu0 %v1272
        %v1274 = vpop.f32.mrb[0].mxu0
        %v1275 = vadd.f32 %v717, %v1274
        %v1276 = vpop.f32.mrb[0].mxu0
        %1277 = vmatprep.mubr.f32.mxu0 0.0
        %v1278 = vand.u32 %v398, 4294901760
        %1279 = vmatmul.mubr.f32.gmra.mrb[0].mxu0 %v1278
        %v1280 = vpop.f32.mrb[0].mxu0
        %v1281 = vadd.f32 %v727, %v1280
        %v1282 = vpop.f32.mrb[0].mxu0
        %1283 = vmatprep.mubr.f32.mxu0 0.0
        %v1284 = vand.u32 %v401, 4294901760
        %1285 = vmatmul.mubr.f32.gmra.mrb[0].mxu0 %v1284
        %v1286 = vpop.f32.mrb[0].mxu0
        %v1287 = vadd.f32 %v737, %v1286
        %v1288 = vpop.f32.mrb[0].mxu0
        %1289 = vmatprep.mubr.f32.mxu0 0.0
        %v1290 = vand.u32 %v404, 4294901760
        %1291 = vmatmul.mubr.f32.gmra.mrb[0].mxu0 %v1290
        %v1292 = vpop.f32.mrb[0].mxu0
        %v1293 = vadd.f32 %v747, %v1292
        %v1294 = vpop.f32.mrb[0].mxu0
        %1295 = vmatprep.mubr.f32.mxu0 0.0
        %v1296 = vand.u32 %v407, 4294901760
        %1297 = vmatmul.mubr.f32.gmra.mrb[0].mxu0 %v1296
        %v1298 = vpop.f32.mrb[0].mxu0
        %v1299 = vadd.f32 %v757, %v1298
        %v1300 = vpop.f32.mrb[0].mxu0
        %1301 = vmatprep.mubr.f32.mxu0 0.0
        %v1302 = vand.u32 %v410, 4294901760
        %1303 = vmatmul.mubr.f32.gmra.mrb[0].mxu0 %v1302
        %v1304 = vpop.f32.mrb[0].mxu0
        %v1305 = vadd.f32 %v767, %v1304
        %v1306 = vpop.f32.mrb[0].mxu0
        %1307 = vmatprep.mubr.f32.mxu0 0.0
        %v1308 = vand.u32 %v413, 4294901760
        %1309 = vmatmul.mubr.f32.gmra.mrb[0].mxu0 %v1308
        %v1310 = vpop.f32.mrb[0].mxu0
        %v1311 = vadd.f32 %v777, %v1310
        %v1312 = vpop.f32.mrb[0].mxu0
        %1313 = vmatprep.mubr.f32.mxu0 0.0
        %v1314 = vand.u32 %v416, 4294901760
        %1315 = vmatmul.mubr.f32.gmra.mrb[0].mxu0 %v1314
        %v1316 = vpop.f32.mrb[0].mxu0
        %v1317 = vadd.f32 %v787, %v1316
        %v1318 = vpop.f32.mrb[0].mxu0
        %1319 = vmatprep.mubr.f32.mxu0 0.0
        %v1320 = vand.u32 %v419, 4294901760
        %1321 = vmatmul.mubr.f32.gmra.mrb[0].mxu0 %v1320
        %v1322 = vpop.f32.mrb[0].mxu0
        %v1323 = vadd.f32 %v797, %v1322
        %v1324 = vpop.f32.mrb[0].mxu0
        %1325 = vmatprep.mubr.f32.mxu0 0.0
        %v1326 = vand.u32 %v422, 4294901760
        %1327 = vmatmul.mubr.f32.gmra.mrb[0].mxu0 %v1326
        %v1328 = vpop.f32.mrb[0].mxu0
        %v1329 = vadd.f32 %v807, %v1328
        %v1330 = vpop.f32.mrb[0].mxu0
        %1331 = vmatprep.mubr.f32.mxu0 0.0
        %v1332 = vand.u32 %v425, 4294901760
        %1333 = vmatmul.mubr.f32.gmra.mrb[0].mxu0 %v1332
        %v1334 = vpop.f32.mrb[0].mxu0
        %v1335 = vadd.f32 %v817, %v1334
        %v1336 = vpop.f32.mrb[0].mxu0
        %1337 = vmatprep.mubr.f32.mxu0 0.0
        %v1338 = vand.u32 %v428, 4294901760
        %1339 = vmatmul.mubr.f32.gmra.mrb[0].mxu0 %v1338
        %v1340 = vpop.f32.mrb[0].mxu0
        %v1341 = vadd.f32 %v827, %v1340
        %v1342 = vpop.f32.mrb[0].mxu0
        %1343 = vmatprep.mubr.f32.mxu0 0.0
        %v1344 = vand.u32 %v431, 4294901760
        %1345 = vmatmul.mubr.f32.gmra.mrb[0].mxu0 %v1344
        %v1346 = vpop.f32.mrb[0].mxu0
        %v1347 = vadd.f32 %v837, %v1346
        %v1348 = vpop.f32.mrb[0].mxu0
        %1349 = vmatprep.mubr.f32.mxu0 0.0
        %v1350 = vand.u32 %v434, 4294901760
        %1351 = vmatmul.mubr.f32.gmra.mrb[0].mxu0 %v1350
        %v1352 = vpop.f32.mrb[0].mxu0
        %v1353 = vadd.f32 %v847, %v1352
        %v1354 = vpop.f32.mrb[0].mxu0
        %1355 = vmatprep.mubr.f32.mxu0 0.0
        %v1356 = vand.u32 %v437, 4294901760
        %1357 = vmatmul.mubr.f32.gmra.mrb[0].mxu0 %v1356
        %v1358 = vpop.f32.mrb[0].mxu0
        %v1359 = vadd.f32 %v857, %v1358
        %v1360 = vpop.f32.mrb[0].mxu0
        %1361 = vmatprep.mubr.f32.mxu0 0.0
        %v1362 = vand.u32 %v440, 4294901760
        %1363 = vmatmul.mubr.f32.gmra.mrb[0].mxu0 %v1362
        %v1364 = vpop.f32.mrb[0].mxu0
        %v1365 = vadd.f32 %v867, %v1364
        %v1366 = vpop.f32.mrb[0].mxu0
        %1367 = vmatprep.mubr.f32.mxu0 0.0
        %v1368 = vand.u32 %v443, 4294901760
        %1369 = vmatmul.mubr.f32.gmra.mrb[0].mxu0 %v1368
        %v1370 = vpop.f32.mrb[0].mxu0
        %v1371 = vadd.f32 %v877, %v1370
        %v1372 = vpop.f32.mrb[0].mxu0
        %1373 = vmatprep.mubr.f32.mxu0 0.0
        %v1374 = vand.u32 %v446, 4294901760
        %1375 = vmatmul.mubr.f32.gmra.mrb[0].mxu0 %v1374
        %v1376 = vpop.f32.mrb[0].mxu0
        %v1377 = vadd.f32 %v887, %v1376
        %v1378 = vpop.f32.mrb[0].mxu0
        %1379 = vmatprep.mubr.f32.mxu0 0.0
        %v1380 = vand.u32 %v449, 4294901760
        %1381 = vmatmul.mubr.f32.gmra.mrb[0].mxu0 %v1380
        %v1382 = vpop.f32.mrb[0].mxu0
        %v1383 = vadd.f32 %v897, %v1382
        %v1384 = vpop.f32.mrb[0].mxu0
        %1385 = vmatprep.mubr.f32.mxu0 0.0
        %v1386 = vand.u32 %v452, 4294901760
        %1387 = vmatmul.mubr.f32.gmra.mrb[0].mxu0 %v1386
        %v1388 = vpop.f32.mrb[0].mxu0
        %v1389 = vadd.f32 %v907, %v1388
        %v1390 = vpop.f32.mrb[0].mxu0
        %1391 = vmatprep.mubr.f32.mxu0 0.0
        %v1392 = vand.u32 %v455, 4294901760
        %1393 = vmatmul.mubr.f32.gmra.mrb[0].mxu0 %v1392
        %v1394 = vpop.f32.mrb[0].mxu0
        %v1395 = vadd.f32 %v917, %v1394
        %v1396 = vpop.f32.mrb[0].mxu0
        %1397 = vmatprep.mubr.f32.mxu0 0.0
        %v1398 = vand.u32 %v458, 4294901760
        %1399 = vmatmul.mubr.f32.gmra.mrb[0].mxu0 %v1398
        %v1400 = vpop.f32.mrb[0].mxu0
        %v1401 = vadd.f32 %v927, %v1400
        %v1402 = vpop.f32.mrb[0].mxu0
        %1403 = vmatprep.mubr.f32.mxu0 0.0
        %v1404 = vand.u32 %v461, 4294901760
        %1405 = vmatmul.mubr.f32.gmra.mrb[0].mxu0 %v1404
        %v1406 = vpop.f32.mrb[0].mxu0
        %v1407 = vadd.f32 %v937, %v1406
        %v1408 = vpop.f32.mrb[0].mxu0
        %1409 = vmatprep.mubr.f32.mxu0 0.0
        %v1410 = vand.u32 %v464, 4294901760
        %1411 = vmatmul.mubr.f32.gmra.mrb[0].mxu0 %v1410
        %v1412 = vpop.f32.mrb[0].mxu0
        %v1413 = vadd.f32 %v947, %v1412
        %v1414 = vpop.f32.mrb[0].mxu0
        %1415 = vmatprep.mubr.f32.mxu0 0.0
        %v1416 = vand.u32 %v467, 4294901760
        %1417 = vmatmul.mubr.f32.gmra.mrb[0].mxu0 %v1416
        %v1418 = vpop.f32.mrb[0].mxu0
        %v1419 = vadd.f32 %v957, %v1418
        %v1420 = vpop.f32.mrb[0].mxu0
        %1421 = vmatprep.mubr.f32.mxu0 0.0
        %v1422 = vand.u32 %v470, 4294901760
        %1423 = vmatmul.mubr.f32.gmra.mrb[0].mxu0 %v1422
        %v1424 = vpop.f32.mrb[0].mxu0
        %v1425 = vadd.f32 %v967, %v1424
        %v1426 = vpop.f32.mrb[0].mxu0
        %1427 = vmatprep.mubr.f32.mxu0 0.0
        %v1428 = vand.u32 %v473, 4294901760
        %1429 = vmatmul.mubr.f32.gmra.mrb[0].mxu0 %v1428
        %v1430 = vpop.f32.mrb[0].mxu0
        %v1431 = vadd.f32 %v977, %v1430
        %v1432 = vpop.f32.mrb[0].mxu0
        %1433 = vmatprep.mubr.f32.mxu0 0.0
        %v1434 = vand.u32 %v476, 4294901760
        %1435 = vmatmul.mubr.f32.gmra.mrb[0].mxu0 %v1434
        %v1436 = vpop.f32.mrb[0].mxu0
        %v1437 = vadd.f32 %v987, %v1436
        %v1438 = vpop.f32.mrb[0].mxu0
        %1439 = vmatprep.mubr.f32.mxu0 0.0
        %v1440 = vand.u32 %v479, 4294901760
        %1441 = vmatmul.mubr.f32.gmra.mrb[0].mxu0 %v1440
        %v1442 = vpop.f32.mrb[0].mxu0
        %v1443 = vadd.f32 %v997, %v1442
        %v1444 = vpop.f32.mrb[0].mxu0
        %1445 = vmatprep.mubr.f32.mxu0 0.0
        %v1446 = vand.u32 %v482, 4294901760
        %1447 = vmatmul.mubr.f32.gmra.mrb[0].mxu0 %v1446
        %v1448 = vpop.f32.mrb[0].mxu0
        %v1449 = vadd.f32 %v1007, %v1448
        %v1450 = vpop.f32.mrb[0].mxu0
        %1451 = vmatprep.mubr.f32.mxu0 0.0
        %v1452 = vand.u32 %v485, 4294901760
        %1453 = vmatmul.mubr.f32.gmra.mrb[0].mxu0 %v1452
        %v1454 = vpop.f32.mrb[0].mxu0
        %v1455 = vadd.f32 %v1017, %v1454
        %v1456 = vpop.f32.mrb[0].mxu0
        %1457 = vmatprep.mubr.f32.mxu0 0.0
        %v1458 = vand.u32 %v488, 4294901760
        %1459 = vmatmul.mubr.f32.gmra.mrb[0].mxu0 %v1458
        %v1460 = vpop.f32.mrb[0].mxu0
        %v1461 = vadd.f32 %v1027, %v1460
        %v1462 = vpop.f32.mrb[0].mxu0
        %1463 = vmatprep.mubr.f32.mxu0 0.0
        %v1464 = vand.u32 %v491, 4294901760
        %1465 = vmatmul.mubr.f32.gmra.mrb[0].mxu0 %v1464
        %v1466 = vpop.f32.mrb[0].mxu0
        %v1467 = vadd.f32 %v1037, %v1466
        %v1468 = vpop.f32.mrb[0].mxu0
        %1469 = vmatprep.mubr.f32.mxu0 0.0
        %v1470 = vand.u32 %v494, 4294901760
        %1471 = vmatmul.mubr.f32.gmra.mrb[0].mxu0 %v1470
        %v1472 = vpop.f32.mrb[0].mxu0
        %v1473 = vadd.f32 %v1047, %v1472
        %v1474 = vpop.f32.mrb[0].mxu0
        %1475 = vmatprep.mubr.f32.mxu0 0.0
        %v1476 = vand.u32 %v497, 4294901760
        %1477 = vmatmul.mubr.f32.gmra.mrb[0].mxu0 %v1476
        %v1478 = vpop.f32.mrb[0].mxu0
        %v1479 = vadd.f32 %v1057, %v1478
        %v1480 = vpop.f32.mrb[0].mxu0
        %1481 = vmatprep.mubr.f32.mxu0 0.0
        %v1482 = vand.u32 %v500, 4294901760
        %1483 = vmatmul.mubr.f32.gmra.mrb[0].mxu0 %v1482
        %v1484 = vpop.f32.mrb[0].mxu0
        %v1485 = vadd.f32 %v1067, %v1484
        %v1486 = vpop.f32.mrb[0].mxu0
        %1487 = vmatprep.mubr.f32.mxu0 0.0
        %v1488 = vand.u32 %v503, 4294901760
        %1489 = vmatmul.mubr.f32.gmra.mrb[0].mxu0 %v1488
        %v1490 = vpop.f32.mrb[0].mxu0
        %v1491 = vadd.f32 %v1077, %v1490
        %v1492 = vpop.f32.mrb[0].mxu0
        %1493 = vmatprep.mubr.f32.mxu0 0.0
        %v1494 = vand.u32 %v506, 4294901760
        %1495 = vmatmul.mubr.f32.gmra.mrb[0].mxu0 %v1494
        %v1496 = vpop.f32.mrb[0].mxu0
        %v1497 = vadd.f32 %v1087, %v1496
        %v1498 = vpop.f32.mrb[0].mxu0
        %1499 = vmatprep.mubr.f32.mxu0 0.0
        %v1500 = vand.u32 %v509, 4294901760
        %1501 = vmatmul.mubr.f32.gmra.mrb[0].mxu0 %v1500
        %v1502 = vpop.f32.mrb[0].mxu0
        %v1503 = vadd.f32 %v1097, %v1502
        %v1504 = vpop.f32.mrb[0].mxu0
        %1505 = vmatprep.mubr.f32.mxu0 0.0
        %v1506 = vand.u32 %v512, 4294901760
        %1507 = vmatmul.mubr.f32.gmra.mrb[0].mxu0 %v1506
        %v1508 = vpop.f32.mrb[0].mxu0
        %v1509 = vadd.f32 %v1107, %v1508
        %v1510 = vpop.f32.mrb[0].mxu0
        %1511 = vmatprep.mubr.f32.mxu0 0.0
        %v1512 = vand.u32 %v515, 4294901760
        %1513 = vmatmul.mubr.f32.gmra.mrb[0].mxu0 %v1512
        %v1514 = vpop.f32.mrb[0].mxu0
        %v1515 = vadd.f32 %v1117, %v1514
        %v1516 = vpop.f32.mrb[0].mxu0
        %1517 = vmatprep.mubr.f32.mxu0 0.0
        %v1518 = vand.u32 %v518, 4294901760
        %1519 = vmatmul.mubr.f32.gmra.mrb[0].mxu0 %v1518
        %v1520 = vpop.f32.mrb[0].mxu0
        %v1521 = vadd.f32 %v1127, %v1520
        %v1522 = vpop.f32.mrb[0].mxu0
        %1523 = vdwg.mxu0
        %1524 = vmatprep.subr.mxu0 0.0
        %v1525 = vand.u32 %v522, 4294901760
        %v1526 = vsub.f32 %v522, %v1525
        %1527 = vmatpush1.msra.mxu0 %v1526
        %1528 = vmatprep.subr.mxu0 0.0
        %1529 = vmatpush1.msra.mxu0 0.0
        %1530 = vmatprep.subr.mxu0 0.0
        %1531 = vmatpush1.msra.mxu0 0.0
        %1532 = vmatprep.subr.mxu0 0.0
        %1533 = vmatpush1.msra.mxu0 0.0
        %1534 = vmatprep.subr.mxu0 0.0
        %1535 = vmatpush1.msra.mxu0 0.0
        %1536 = vmatprep.subr.mxu0 0.0
        %1537 = vmatpush1.msra.mxu0 0.0
        %1538 = vmatprep.subr.mxu0 0.0
        %1539 = vmatpush1.msra.mxu0 0.0
        %1540 = vmatprep.subr.mxu0 0.0
        %1541 = vmatpush1.msra.mxu0 0.0
        %1542 = vmatprep.subr.mxu0 0.0
        %1543 = vmatpush1.msra.mxu0 0.0
        %1544 = vmatprep.subr.mxu0 0.0
        %1545 = vmatpush1.msra.mxu0 0.0
        %1546 = vmatprep.subr.mxu0 0.0
        %1547 = vmatpush1.msra.mxu0 0.0
        %1548 = vmatprep.subr.mxu0 0.0
        %1549 = vmatpush1.msra.mxu0 0.0
        %1550 = vmatprep.subr.mxu0 0.0
        %1551 = vmatpush1.msra.mxu0 0.0
        %1552 = vmatprep.subr.mxu0 0.0
        %1553 = vmatpush1.msra.mxu0 0.0
        %1554 = vmatprep.subr.mxu0 0.0
        %1555 = vmatpush1.msra.mxu0 0.0
        %1556 = vmatprep.subr.mxu0 0.0
        %1557 = vmatpush1.msra.mxu0 0.0
        %1558 = vmatprep.subr.mxu0 0.0
        %1559 = vmatpush1.msra.mxu0 0.0
        %1560 = vmatprep.subr.mxu0 0.0
        %1561 = vmatpush1.msra.mxu0 0.0
        %1562 = vmatprep.subr.mxu0 0.0
        %1563 = vmatpush1.msra.mxu0 0.0
        %1564 = vmatprep.subr.mxu0 0.0
        %1565 = vmatpush1.msra.mxu0 0.0
        %1566 = vmatprep.subr.mxu0 0.0
        %1567 = vmatpush1.msra.mxu0 0.0
        %1568 = vmatprep.subr.mxu0 0.0
        %1569 = vmatpush1.msra.mxu0 0.0
        %1570 = vmatprep.subr.mxu0 0.0
        %1571 = vmatpush1.msra.mxu0 0.0
        %1572 = vmatprep.subr.mxu0 0.0
        %1573 = vmatpush1.msra.mxu0 0.0
        %1574 = vmatprep.subr.mxu0 0.0
        %1575 = vmatpush1.msra.mxu0 0.0
        %1576 = vmatprep.subr.mxu0 0.0
        %1577 = vmatpush1.msra.mxu0 0.0
        %1578 = vmatprep.subr.mxu0 0.0
        %1579 = vmatpush1.msra.mxu0 0.0
        %1580 = vmatprep.subr.mxu0 0.0
        %1581 = vmatpush1.msra.mxu0 0.0
        %1582 = vmatprep.subr.mxu0 0.0
        %1583 = vmatpush1.msra.mxu0 0.0
        %1584 = vmatprep.subr.mxu0 0.0
        %1585 = vmatpush1.msra.mxu0 0.0
        %1586 = vmatprep.subr.mxu0 0.0
        %1587 = vmatpush1.msra.mxu0 0.0
        %1588 = vmatprep.subr.mxu0 0.0
        %1589 = vmatpush1.msra.mxu0 0.0
        %1590 = vmatprep.mubr.f32.mxu0 0.0
        %v1591 = vand.u32 %v359, 4294901760
        %v1592 = vsub.f32 %v359, %v1591
        %1593 = vmatmul.mubr.f32.gmra.mrb[0].mxu0 %v1592
        %v1594 = vpop.f32.mrb[0].mxu0
        %v1595 = vadd.f32 %v1203, %v1594
        %v1596 = vpop.f32.mrb[0].mxu0
        %1597 = vmatprep.mubr.f32.mxu0 0.0
        %v1598 = vand.u32 %v362, 4294901760
        %v1599 = vsub.f32 %v362, %v1598
        %1600 = vmatmul.mubr.f32.gmra.mrb[0].mxu0 %v1599
        %v1601 = vpop.f32.mrb[0].mxu0
        %v1602 = vadd.f32 %v1209, %v1601
        %v1603 = vpop.f32.mrb[0].mxu0
        %1604 = vmatprep.mubr.f32.mxu0 0.0
        %v1605 = vand.u32 %v365, 4294901760
        %v1606 = vsub.f32 %v365, %v1605
        %1607 = vmatmul.mubr.f32.gmra.mrb[0].mxu0 %v1606
        %v1608 = vpop.f32.mrb[0].mxu0
        %v1609 = vadd.f32 %v1215, %v1608
        %v1610 = vpop.f32.mrb[0].mxu0
        %1611 = vmatprep.mubr.f32.mxu0 0.0
        %v1612 = vand.u32 %v368, 4294901760
        %v1613 = vsub.f32 %v368, %v1612
        %1614 = vmatmul.mubr.f32.gmra.mrb[0].mxu0 %v1613
        %v1615 = vpop.f32.mrb[0].mxu0
        %v1616 = vadd.f32 %v1221, %v1615
        %v1617 = vpop.f32.mrb[0].mxu0
        %1618 = vmatprep.mubr.f32.mxu0 0.0
        %v1619 = vand.u32 %v371, 4294901760
        %v1620 = vsub.f32 %v371, %v1619
        %1621 = vmatmul.mubr.f32.gmra.mrb[0].mxu0 %v1620
        %v1622 = vpop.f32.mrb[0].mxu0
        %v1623 = vadd.f32 %v1227, %v1622
        %v1624 = vpop.f32.mrb[0].mxu0
        %1625 = vmatprep.mubr.f32.mxu0 0.0
        %v1626 = vand.u32 %v374, 4294901760
        %v1627 = vsub.f32 %v374, %v1626
        %1628 = vmatmul.mubr.f32.gmra.mrb[0].mxu0 %v1627
        %v1629 = vpop.f32.mrb[0].mxu0
        %v1630 = vadd.f32 %v1233, %v1629
        %v1631 = vpop.f32.mrb[0].mxu0
        %1632 = vmatprep.mubr.f32.mxu0 0.0
        %v1633 = vand.u32 %v377, 4294901760
        %v1634 = vsub.f32 %v377, %v1633
        %1635 = vmatmul.mubr.f32.gmra.mrb[0].mxu0 %v1634
        %v1636 = vpop.f32.mrb[0].mxu0
        %v1637 = vadd.f32 %v1239, %v1636
        %v1638 = vpop.f32.mrb[0].mxu0
        %1639 = vmatprep.mubr.f32.mxu0 0.0
        %v1640 = vand.u32 %v380, 4294901760
        %v1641 = vsub.f32 %v380, %v1640
        %1642 = vmatmul.mubr.f32.gmra.mrb[0].mxu0 %v1641
        %v1643 = vpop.f32.mrb[0].mxu0
        %v1644 = vadd.f32 %v1245, %v1643
        %v1645 = vpop.f32.mrb[0].mxu0
        %1646 = vmatprep.mubr.f32.mxu0 0.0
        %v1647 = vand.u32 %v383, 4294901760
        %v1648 = vsub.f32 %v383, %v1647
        %1649 = vmatmul.mubr.f32.gmra.mrb[0].mxu0 %v1648
        %v1650 = vpop.f32.mrb[0].mxu0
        %v1651 = vadd.f32 %v1251, %v1650
        %v1652 = vpop.f32.mrb[0].mxu0
        %1653 = vmatprep.mubr.f32.mxu0 0.0
        %v1654 = vand.u32 %v386, 4294901760
        %v1655 = vsub.f32 %v386, %v1654
        %1656 = vmatmul.mubr.f32.gmra.mrb[0].mxu0 %v1655
        %v1657 = vpop.f32.mrb[0].mxu0
        %v1658 = vadd.f32 %v1257, %v1657
        %v1659 = vpop.f32.mrb[0].mxu0
        %1660 = vmatprep.mubr.f32.mxu0 0.0
        %v1661 = vand.u32 %v389, 4294901760
        %v1662 = vsub.f32 %v389, %v1661
        %1663 = vmatmul.mubr.f32.gmra.mrb[0].mxu0 %v1662
        %v1664 = vpop.f32.mrb[0].mxu0
        %v1665 = vadd.f32 %v1263, %v1664
        %v1666 = vpop.f32.mrb[0].mxu0
        %1667 = vmatprep.mubr.f32.mxu0 0.0
        %v1668 = vand.u32 %v392, 4294901760
        %v1669 = vsub.f32 %v392, %v1668
        %1670 = vmatmul.mubr.f32.gmra.mrb[0].mxu0 %v1669
        %v1671 = vpop.f32.mrb[0].mxu0
        %v1672 = vadd.f32 %v1269, %v1671
        %v1673 = vpop.f32.mrb[0].mxu0
        %1674 = vmatprep.mubr.f32.mxu0 0.0
        %v1675 = vand.u32 %v395, 4294901760
        %v1676 = vsub.f32 %v395, %v1675
        %1677 = vmatmul.mubr.f32.gmra.mrb[0].mxu0 %v1676
        %v1678 = vpop.f32.mrb[0].mxu0
        %v1679 = vadd.f32 %v1275, %v1678
        %v1680 = vpop.f32.mrb[0].mxu0
        %1681 = vmatprep.mubr.f32.mxu0 0.0
        %v1682 = vand.u32 %v398, 4294901760
        %v1683 = vsub.f32 %v398, %v1682
        %1684 = vmatmul.mubr.f32.gmra.mrb[0].mxu0 %v1683
        %v1685 = vpop.f32.mrb[0].mxu0
        %v1686 = vadd.f32 %v1281, %v1685
        %v1687 = vpop.f32.mrb[0].mxu0
        %1688 = vmatprep.mubr.f32.mxu0 0.0
        %v1689 = vand.u32 %v401, 4294901760
        %v1690 = vsub.f32 %v401, %v1689
        %1691 = vmatmul.mubr.f32.gmra.mrb[0].mxu0 %v1690
        %v1692 = vpop.f32.mrb[0].mxu0
        %v1693 = vadd.f32 %v1287, %v1692
        %v1694 = vpop.f32.mrb[0].mxu0
        %1695 = vmatprep.mubr.f32.mxu0 0.0
        %v1696 = vand.u32 %v404, 4294901760
        %v1697 = vsub.f32 %v404, %v1696
        %1698 = vmatmul.mubr.f32.gmra.mrb[0].mxu0 %v1697
        %v1699 = vpop.f32.mrb[0].mxu0
        %v1700 = vadd.f32 %v1293, %v1699
        %v1701 = vpop.f32.mrb[0].mxu0
        %1702 = vmatprep.mubr.f32.mxu0 0.0
        %v1703 = vand.u32 %v407, 4294901760
        %v1704 = vsub.f32 %v407, %v1703
        %1705 = vmatmul.mubr.f32.gmra.mrb[0].mxu0 %v1704
        %v1706 = vpop.f32.mrb[0].mxu0
        %v1707 = vadd.f32 %v1299, %v1706
        %v1708 = vpop.f32.mrb[0].mxu0
        %1709 = vmatprep.mubr.f32.mxu0 0.0
        %v1710 = vand.u32 %v410, 4294901760
        %v1711 = vsub.f32 %v410, %v1710
        %1712 = vmatmul.mubr.f32.gmra.mrb[0].mxu0 %v1711
        %v1713 = vpop.f32.mrb[0].mxu0
        %v1714 = vadd.f32 %v1305, %v1713
        %v1715 = vpop.f32.mrb[0].mxu0
        %1716 = vmatprep.mubr.f32.mxu0 0.0
        %v1717 = vand.u32 %v413, 4294901760
        %v1718 = vsub.f32 %v413, %v1717
        %1719 = vmatmul.mubr.f32.gmra.mrb[0].mxu0 %v1718
        %v1720 = vpop.f32.mrb[0].mxu0
        %v1721 = vadd.f32 %v1311, %v1720
        %v1722 = vpop.f32.mrb[0].mxu0
        %1723 = vmatprep.mubr.f32.mxu0 0.0
        %v1724 = vand.u32 %v416, 4294901760
        %v1725 = vsub.f32 %v416, %v1724
        %1726 = vmatmul.mubr.f32.gmra.mrb[0].mxu0 %v1725
        %v1727 = vpop.f32.mrb[0].mxu0
        %v1728 = vadd.f32 %v1317, %v1727
        %v1729 = vpop.f32.mrb[0].mxu0
        %1730 = vmatprep.mubr.f32.mxu0 0.0
        %v1731 = vand.u32 %v419, 4294901760
        %v1732 = vsub.f32 %v419, %v1731
        %1733 = vmatmul.mubr.f32.gmra.mrb[0].mxu0 %v1732
        %v1734 = vpop.f32.mrb[0].mxu0
        %v1735 = vadd.f32 %v1323, %v1734
        %v1736 = vpop.f32.mrb[0].mxu0
        %1737 = vmatprep.mubr.f32.mxu0 0.0
        %v1738 = vand.u32 %v422, 4294901760
        %v1739 = vsub.f32 %v422, %v1738
        %1740 = vmatmul.mubr.f32.gmra.mrb[0].mxu0 %v1739
        %v1741 = vpop.f32.mrb[0].mxu0
        %v1742 = vadd.f32 %v1329, %v1741
        %v1743 = vpop.f32.mrb[0].mxu0
        %1744 = vmatprep.mubr.f32.mxu0 0.0
        %v1745 = vand.u32 %v425, 4294901760
        %v1746 = vsub.f32 %v425, %v1745
        %1747 = vmatmul.mubr.f32.gmra.mrb[0].mxu0 %v1746
        %v1748 = vpop.f32.mrb[0].mxu0
        %v1749 = vadd.f32 %v1335, %v1748
        %v1750 = vpop.f32.mrb[0].mxu0
        %1751 = vmatprep.mubr.f32.mxu0 0.0
        %v1752 = vand.u32 %v428, 4294901760
        %v1753 = vsub.f32 %v428, %v1752
        %1754 = vmatmul.mubr.f32.gmra.mrb[0].mxu0 %v1753
        %v1755 = vpop.f32.mrb[0].mxu0
        %v1756 = vadd.f32 %v1341, %v1755
        %v1757 = vpop.f32.mrb[0].mxu0
        %1758 = vmatprep.mubr.f32.mxu0 0.0
        %v1759 = vand.u32 %v431, 4294901760
        %v1760 = vsub.f32 %v431, %v1759
        %1761 = vmatmul.mubr.f32.gmra.mrb[0].mxu0 %v1760
        %v1762 = vpop.f32.mrb[0].mxu0
        %v1763 = vadd.f32 %v1347, %v1762
        %v1764 = vpop.f32.mrb[0].mxu0
        %1765 = vmatprep.mubr.f32.mxu0 0.0
        %v1766 = vand.u32 %v434, 4294901760
        %v1767 = vsub.f32 %v434, %v1766
        %1768 = vmatmul.mubr.f32.gmra.mrb[0].mxu0 %v1767
        %v1769 = vpop.f32.mrb[0].mxu0
        %v1770 = vadd.f32 %v1353, %v1769
        %v1771 = vpop.f32.mrb[0].mxu0
        %1772 = vmatprep.mubr.f32.mxu0 0.0
        %v1773 = vand.u32 %v437, 4294901760
        %v1774 = vsub.f32 %v437, %v1773
        %1775 = vmatmul.mubr.f32.gmra.mrb[0].mxu0 %v1774
        %v1776 = vpop.f32.mrb[0].mxu0
        %v1777 = vadd.f32 %v1359, %v1776
        %v1778 = vpop.f32.mrb[0].mxu0
        %1779 = vmatprep.mubr.f32.mxu0 0.0
        %v1780 = vand.u32 %v440, 4294901760
        %v1781 = vsub.f32 %v440, %v1780
        %1782 = vmatmul.mubr.f32.gmra.mrb[0].mxu0 %v1781
        %v1783 = vpop.f32.mrb[0].mxu0
        %v1784 = vadd.f32 %v1365, %v1783
        %v1785 = vpop.f32.mrb[0].mxu0
        %1786 = vmatprep.mubr.f32.mxu0 0.0
        %v1787 = vand.u32 %v443, 4294901760
        %v1788 = vsub.f32 %v443, %v1787
        %1789 = vmatmul.mubr.f32.gmra.mrb[0].mxu0 %v1788
        %v1790 = vpop.f32.mrb[0].mxu0
        %v1791 = vadd.f32 %v1371, %v1790
        %v1792 = vpop.f32.mrb[0].mxu0
        %1793 = vmatprep.mubr.f32.mxu0 0.0
        %v1794 = vand.u32 %v446, 4294901760
        %v1795 = vsub.f32 %v446, %v1794
        %1796 = vmatmul.mubr.f32.gmra.mrb[0].mxu0 %v1795
        %v1797 = vpop.f32.mrb[0].mxu0
        %v1798 = vadd.f32 %v1377, %v1797
        %v1799 = vpop.f32.mrb[0].mxu0
        %1800 = vmatprep.mubr.f32.mxu0 0.0
        %v1801 = vand.u32 %v449, 4294901760
        %v1802 = vsub.f32 %v449, %v1801
        %1803 = vmatmul.mubr.f32.gmra.mrb[0].mxu0 %v1802
        %v1804 = vpop.f32.mrb[0].mxu0
        %v1805 = vadd.f32 %v1383, %v1804
        %v1806 = vpop.f32.mrb[0].mxu0
        %1807 = vmatprep.mubr.f32.mxu0 0.0
        %v1808 = vand.u32 %v452, 4294901760
        %v1809 = vsub.f32 %v452, %v1808
        %1810 = vmatmul.mubr.f32.gmra.mrb[0].mxu0 %v1809
        %v1811 = vpop.f32.mrb[0].mxu0
        %v1812 = vadd.f32 %v1389, %v1811
        %v1813 = vpop.f32.mrb[0].mxu0
        %1814 = vmatprep.mubr.f32.mxu0 0.0
        %v1815 = vand.u32 %v455, 4294901760
        %v1816 = vsub.f32 %v455, %v1815
        %1817 = vmatmul.mubr.f32.gmra.mrb[0].mxu0 %v1816
        %v1818 = vpop.f32.mrb[0].mxu0
        %v1819 = vadd.f32 %v1395, %v1818
        %v1820 = vpop.f32.mrb[0].mxu0
        %1821 = vmatprep.mubr.f32.mxu0 0.0
        %v1822 = vand.u32 %v458, 4294901760
        %v1823 = vsub.f32 %v458, %v1822
        %1824 = vmatmul.mubr.f32.gmra.mrb[0].mxu0 %v1823
        %v1825 = vpop.f32.mrb[0].mxu0
        %v1826 = vadd.f32 %v1401, %v1825
        %v1827 = vpop.f32.mrb[0].mxu0
        %1828 = vmatprep.mubr.f32.mxu0 0.0
        %v1829 = vand.u32 %v461, 4294901760
        %v1830 = vsub.f32 %v461, %v1829
        %1831 = vmatmul.mubr.f32.gmra.mrb[0].mxu0 %v1830
        %v1832 = vpop.f32.mrb[0].mxu0
        %v1833 = vadd.f32 %v1407, %v1832
        %v1834 = vpop.f32.mrb[0].mxu0
        %1835 = vmatprep.mubr.f32.mxu0 0.0
        %v1836 = vand.u32 %v464, 4294901760
        %v1837 = vsub.f32 %v464, %v1836
        %1838 = vmatmul.mubr.f32.gmra.mrb[0].mxu0 %v1837
        %v1839 = vpop.f32.mrb[0].mxu0
        %v1840 = vadd.f32 %v1413, %v1839
        %v1841 = vpop.f32.mrb[0].mxu0
        %1842 = vmatprep.mubr.f32.mxu0 0.0
        %v1843 = vand.u32 %v467, 4294901760
        %v1844 = vsub.f32 %v467, %v1843
        %1845 = vmatmul.mubr.f32.gmra.mrb[0].mxu0 %v1844
        %v1846 = vpop.f32.mrb[0].mxu0
        %v1847 = vadd.f32 %v1419, %v1846
        %v1848 = vpop.f32.mrb[0].mxu0
        %1849 = vmatprep.mubr.f32.mxu0 0.0
        %v1850 = vand.u32 %v470, 4294901760
        %v1851 = vsub.f32 %v470, %v1850
        %1852 = vmatmul.mubr.f32.gmra.mrb[0].mxu0 %v1851
        %v1853 = vpop.f32.mrb[0].mxu0
        %v1854 = vadd.f32 %v1425, %v1853
        %v1855 = vpop.f32.mrb[0].mxu0
        %1856 = vmatprep.mubr.f32.mxu0 0.0
        %v1857 = vand.u32 %v473, 4294901760
        %v1858 = vsub.f32 %v473, %v1857
        %1859 = vmatmul.mubr.f32.gmra.mrb[0].mxu0 %v1858
        %v1860 = vpop.f32.mrb[0].mxu0
        %v1861 = vadd.f32 %v1431, %v1860
        %v1862 = vpop.f32.mrb[0].mxu0
        %1863 = vmatprep.mubr.f32.mxu0 0.0
        %v1864 = vand.u32 %v476, 4294901760
        %v1865 = vsub.f32 %v476, %v1864
        %1866 = vmatmul.mubr.f32.gmra.mrb[0].mxu0 %v1865
        %v1867 = vpop.f32.mrb[0].mxu0
        %v1868 = vadd.f32 %v1437, %v1867
        %v1869 = vpop.f32.mrb[0].mxu0
        %1870 = vmatprep.mubr.f32.mxu0 0.0
        %v1871 = vand.u32 %v479, 4294901760
        %v1872 = vsub.f32 %v479, %v1871
        %1873 = vmatmul.mubr.f32.gmra.mrb[0].mxu0 %v1872
        %v1874 = vpop.f32.mrb[0].mxu0
        %v1875 = vadd.f32 %v1443, %v1874
        %v1876 = vpop.f32.mrb[0].mxu0
        %1877 = vmatprep.mubr.f32.mxu0 0.0
        %v1878 = vand.u32 %v482, 4294901760
        %v1879 = vsub.f32 %v482, %v1878
        %1880 = vmatmul.mubr.f32.gmra.mrb[0].mxu0 %v1879
        %v1881 = vpop.f32.mrb[0].mxu0
        %v1882 = vadd.f32 %v1449, %v1881
        %v1883 = vpop.f32.mrb[0].mxu0
        %1884 = vmatprep.mubr.f32.mxu0 0.0
        %v1885 = vand.u32 %v485, 4294901760
        %v1886 = vsub.f32 %v485, %v1885
        %1887 = vmatmul.mubr.f32.gmra.mrb[0].mxu0 %v1886
        %v1888 = vpop.f32.mrb[0].mxu0
        %v1889 = vadd.f32 %v1455, %v1888
        %v1890 = vpop.f32.mrb[0].mxu0
        %1891 = vmatprep.mubr.f32.mxu0 0.0
        %v1892 = vand.u32 %v488, 4294901760
        %v1893 = vsub.f32 %v488, %v1892
        %1894 = vmatmul.mubr.f32.gmra.mrb[0].mxu0 %v1893
        %v1895 = vpop.f32.mrb[0].mxu0
        %v1896 = vadd.f32 %v1461, %v1895
        %v1897 = vpop.f32.mrb[0].mxu0
        %1898 = vmatprep.mubr.f32.mxu0 0.0
        %v1899 = vand.u32 %v491, 4294901760
        %v1900 = vsub.f32 %v491, %v1899
        %1901 = vmatmul.mubr.f32.gmra.mrb[0].mxu0 %v1900
        %v1902 = vpop.f32.mrb[0].mxu0
        %v1903 = vadd.f32 %v1467, %v1902
        %v1904 = vpop.f32.mrb[0].mxu0
        %1905 = vmatprep.mubr.f32.mxu0 0.0
        %v1906 = vand.u32 %v494, 4294901760
        %v1907 = vsub.f32 %v494, %v1906
        %1908 = vmatmul.mubr.f32.gmra.mrb[0].mxu0 %v1907
        %v1909 = vpop.f32.mrb[0].mxu0
        %v1910 = vadd.f32 %v1473, %v1909
        %v1911 = vpop.f32.mrb[0].mxu0
        %1912 = vmatprep.mubr.f32.mxu0 0.0
        %v1913 = vand.u32 %v497, 4294901760
        %v1914 = vsub.f32 %v497, %v1913
        %1915 = vmatmul.mubr.f32.gmra.mrb[0].mxu0 %v1914
        %v1916 = vpop.f32.mrb[0].mxu0
        %v1917 = vadd.f32 %v1479, %v1916
        %v1918 = vpop.f32.mrb[0].mxu0
        %1919 = vmatprep.mubr.f32.mxu0 0.0
        %v1920 = vand.u32 %v500, 4294901760
        %v1921 = vsub.f32 %v500, %v1920
        %1922 = vmatmul.mubr.f32.gmra.mrb[0].mxu0 %v1921
        %v1923 = vpop.f32.mrb[0].mxu0
        %v1924 = vadd.f32 %v1485, %v1923
        %v1925 = vpop.f32.mrb[0].mxu0
        %1926 = vmatprep.mubr.f32.mxu0 0.0
        %v1927 = vand.u32 %v503, 4294901760
        %v1928 = vsub.f32 %v503, %v1927
        %1929 = vmatmul.mubr.f32.gmra.mrb[0].mxu0 %v1928
        %v1930 = vpop.f32.mrb[0].mxu0
        %v1931 = vadd.f32 %v1491, %v1930
        %v1932 = vpop.f32.mrb[0].mxu0
        %1933 = vmatprep.mubr.f32.mxu0 0.0
        %v1934 = vand.u32 %v506, 4294901760
        %v1935 = vsub.f32 %v506, %v1934
        %1936 = vmatmul.mubr.f32.gmra.mrb[0].mxu0 %v1935
        %v1937 = vpop.f32.mrb[0].mxu0
        %v1938 = vadd.f32 %v1497, %v1937
        %v1939 = vpop.f32.mrb[0].mxu0
        %1940 = vmatprep.mubr.f32.mxu0 0.0
        %v1941 = vand.u32 %v509, 4294901760
        %v1942 = vsub.f32 %v509, %v1941
        %1943 = vmatmul.mubr.f32.gmra.mrb[0].mxu0 %v1942
        %v1944 = vpop.f32.mrb[0].mxu0
        %v1945 = vadd.f32 %v1503, %v1944
        %v1946 = vpop.f32.mrb[0].mxu0
        %1947 = vmatprep.mubr.f32.mxu0 0.0
        %v1948 = vand.u32 %v512, 4294901760
        %v1949 = vsub.f32 %v512, %v1948
        %1950 = vmatmul.mubr.f32.gmra.mrb[0].mxu0 %v1949
        %v1951 = vpop.f32.mrb[0].mxu0
        %v1952 = vadd.f32 %v1509, %v1951
        %v1953 = vpop.f32.mrb[0].mxu0
        %1954 = vmatprep.mubr.f32.mxu0 0.0
        %v1955 = vand.u32 %v515, 4294901760
        %v1956 = vsub.f32 %v515, %v1955
        %1957 = vmatmul.mubr.f32.gmra.mrb[0].mxu0 %v1956
        %v1958 = vpop.f32.mrb[0].mxu0
        %v1959 = vadd.f32 %v1515, %v1958
        %v1960 = vpop.f32.mrb[0].mxu0
        %1961 = vmatprep.mubr.f32.mxu0 0.0
        %v1962 = vand.u32 %v518, 4294901760
        %v1963 = vsub.f32 %v518, %v1962
        %1964 = vmatmul.mubr.f32.gmra.mrb[0].mxu0 %v1963
        %v1965 = vpop.f32.mrb[0].mxu0
        %v1966 = vadd.f32 %v1521, %v1965
        %v1967 = vpop.f32.mrb[0].mxu0
        %1968 = vdwg.mxu0
        %1969 = vmatprep.subr.mxu0 0.0
        %v1970 = vand.u32 %v522, 4294901760
        %1971 = vmatpush1.msra.mxu0 %v1970
        %1972 = vmatprep.subr.mxu0 0.0
        %1973 = vmatpush1.msra.mxu0 0.0
        %1974 = vmatprep.subr.mxu0 0.0
        %1975 = vmatpush1.msra.mxu0 0.0
        %1976 = vmatprep.subr.mxu0 0.0
        %1977 = vmatpush1.msra.mxu0 0.0
        %1978 = vmatprep.subr.mxu0 0.0
        %1979 = vmatpush1.msra.mxu0 0.0
        %1980 = vmatprep.subr.mxu0 0.0
        %1981 = vmatpush1.msra.mxu0 0.0
        %1982 = vmatprep.subr.mxu0 0.0
        %1983 = vmatpush1.msra.mxu0 0.0
        %1984 = vmatprep.subr.mxu0 0.0
        %1985 = vmatpush1.msra.mxu0 0.0
        %1986 = vmatprep.subr.mxu0 0.0
        %1987 = vmatpush1.msra.mxu0 0.0
        %1988 = vmatprep.subr.mxu0 0.0
        %1989 = vmatpush1.msra.mxu0 0.0
        %1990 = vmatprep.subr.mxu0 0.0
        %1991 = vmatpush1.msra.mxu0 0.0
        %1992 = vmatprep.subr.mxu0 0.0
        %1993 = vmatpush1.msra.mxu0 0.0
        %1994 = vmatprep.subr.mxu0 0.0
        %1995 = vmatpush1.msra.mxu0 0.0
        %1996 = vmatprep.subr.mxu0 0.0
        %1997 = vmatpush1.msra.mxu0 0.0
        %1998 = vmatprep.subr.mxu0 0.0
        %1999 = vmatpush1.msra.mxu0 0.0
        %2000 = vmatprep.subr.mxu0 0.0
        %2001 = vmatpush1.msra.mxu0 0.0
        %2002 = vmatprep.subr.mxu0 0.0
        %2003 = vmatpush1.msra.mxu0 0.0
        %2004 = vmatprep.subr.mxu0 0.0
        %2005 = vmatpush1.msra.mxu0 0.0
        %2006 = vmatprep.subr.mxu0 0.0
        %2007 = vmatpush1.msra.mxu0 0.0
        %2008 = vmatprep.subr.mxu0 0.0
        %2009 = vmatpush1.msra.mxu0 0.0
        %2010 = vmatprep.subr.mxu0 0.0
        %2011 = vmatpush1.msra.mxu0 0.0
        %2012 = vmatprep.subr.mxu0 0.0
        %2013 = vmatpush1.msra.mxu0 0.0
        %2014 = vmatprep.subr.mxu0 0.0
        %2015 = vmatpush1.msra.mxu0 0.0
        %2016 = vmatprep.subr.mxu0 0.0
        %2017 = vmatpush1.msra.mxu0 0.0
        %2018 = vmatprep.subr.mxu0 0.0
        %2019 = vmatpush1.msra.mxu0 0.0
        %2020 = vmatprep.subr.mxu0 0.0
        %2021 = vmatpush1.msra.mxu0 0.0
        %2022 = vmatprep.subr.mxu0 0.0
        %2023 = vmatpush1.msra.mxu0 0.0
        %2024 = vmatprep.subr.mxu0 0.0
        %2025 = vmatpush1.msra.mxu0 0.0
        %2026 = vmatprep.subr.mxu0 0.0
        %2027 = vmatpush1.msra.mxu0 0.0
        %2028 = vmatprep.subr.mxu0 0.0
        %2029 = vmatpush1.msra.mxu0 0.0
        %2030 = vmatprep.subr.mxu0 0.0
        %2031 = vmatpush1.msra.mxu0 0.0
        %2032 = vmatprep.subr.mxu0 0.0
        %2033 = vmatpush1.msra.mxu0 0.0
        %2034 = vmatprep.mubr.f32.mxu0 0.0
        %v2035 = vand.u32 %v359, 4294901760
        %v2036 = vsub.f32 %v359, %v2035
        %v2037 = vand.u32 %v2036, 4294901760
        %2038 = vmatmul.mubr.f32.gmra.mrb[0].mxu0 %v2037
        %v2039 = vpop.f32.mrb[0].mxu0
        %v2040 = vadd.f32 %v1595, %v2039
        %v2041 = vpop.f32.mrb[0].mxu0
        %2042 = vmatprep.mubr.f32.mxu0 0.0
        %v2043 = vand.u32 %v362, 4294901760
        %v2044 = vsub.f32 %v362, %v2043
        %v2045 = vand.u32 %v2044, 4294901760
        %2046 = vmatmul.mubr.f32.gmra.mrb[0].mxu0 %v2045
        %v2047 = vpop.f32.mrb[0].mxu0
        %v2048 = vadd.f32 %v1602, %v2047
        %v2049 = vpop.f32.mrb[0].mxu0
        %2050 = vmatprep.mubr.f32.mxu0 0.0
        %v2051 = vand.u32 %v365, 4294901760
        %v2052 = vsub.f32 %v365, %v2051
        %v2053 = vand.u32 %v2052, 4294901760
        %2054 = vmatmul.mubr.f32.gmra.mrb[0].mxu0 %v2053
        %v2055 = vpop.f32.mrb[0].mxu0
        %v2056 = vadd.f32 %v1609, %v2055
        %v2057 = vpop.f32.mrb[0].mxu0
        %2058 = vmatprep.mubr.f32.mxu0 0.0
        %v2059 = vand.u32 %v368, 4294901760
        %v2060 = vsub.f32 %v368, %v2059
        %v2061 = vand.u32 %v2060, 4294901760
        %2062 = vmatmul.mubr.f32.gmra.mrb[0].mxu0 %v2061
        %v2063 = vpop.f32.mrb[0].mxu0
        %v2064 = vadd.f32 %v1616, %v2063
        %v2065 = vpop.f32.mrb[0].mxu0
        %2066 = vmatprep.mubr.f32.mxu0 0.0
        %v2067 = vand.u32 %v371, 4294901760
        %v2068 = vsub.f32 %v371, %v2067
        %v2069 = vand.u32 %v2068, 4294901760
        %2070 = vmatmul.mubr.f32.gmra.mrb[0].mxu0 %v2069
        %v2071 = vpop.f32.mrb[0].mxu0
        %v2072 = vadd.f32 %v1623, %v2071
        %v2073 = vpop.f32.mrb[0].mxu0
        %2074 = vmatprep.mubr.f32.mxu0 0.0
        %v2075 = vand.u32 %v374, 4294901760
        %v2076 = vsub.f32 %v374, %v2075
        %v2077 = vand.u32 %v2076, 4294901760
        %2078 = vmatmul.mubr.f32.gmra.mrb[0].mxu0 %v2077
        %v2079 = vpop.f32.mrb[0].mxu0
        %v2080 = vadd.f32 %v1630, %v2079
        %v2081 = vpop.f32.mrb[0].mxu0
        %2082 = vmatprep.mubr.f32.mxu0 0.0
        %v2083 = vand.u32 %v377, 4294901760
        %v2084 = vsub.f32 %v377, %v2083
        %v2085 = vand.u32 %v2084, 4294901760
        %2086 = vmatmul.mubr.f32.gmra.mrb[0].mxu0 %v2085
        %v2087 = vpop.f32.mrb[0].mxu0
        %v2088 = vadd.f32 %v1637, %v2087
        %v2089 = vpop.f32.mrb[0].mxu0
        %2090 = vmatprep.mubr.f32.mxu0 0.0
        %v2091 = vand.u32 %v380, 4294901760
        %v2092 = vsub.f32 %v380, %v2091
        %v2093 = vand.u32 %v2092, 4294901760
        %2094 = vmatmul.mubr.f32.gmra.mrb[0].mxu0 %v2093
        %v2095 = vpop.f32.mrb[0].mxu0
        %v2096 = vadd.f32 %v1644, %v2095
        %v2097 = vpop.f32.mrb[0].mxu0
        %2098 = vmatprep.mubr.f32.mxu0 0.0
        %v2099 = vand.u32 %v383, 4294901760
        %v2100 = vsub.f32 %v383, %v2099
        %v2101 = vand.u32 %v2100, 4294901760
        %2102 = vmatmul.mubr.f32.gmra.mrb[0].mxu0 %v2101
        %v2103 = vpop.f32.mrb[0].mxu0
        %v2104 = vadd.f32 %v1651, %v2103
        %v2105 = vpop.f32.mrb[0].mxu0
        %2106 = vmatprep.mubr.f32.mxu0 0.0
        %v2107 = vand.u32 %v386, 4294901760
        %v2108 = vsub.f32 %v386, %v2107
        %v2109 = vand.u32 %v2108, 4294901760
        %2110 = vmatmul.mubr.f32.gmra.mrb[0].mxu0 %v2109
        %v2111 = vpop.f32.mrb[0].mxu0
        %v2112 = vadd.f32 %v1658, %v2111
        %v2113 = vpop.f32.mrb[0].mxu0
        %2114 = vmatprep.mubr.f32.mxu0 0.0
        %v2115 = vand.u32 %v389, 4294901760
        %v2116 = vsub.f32 %v389, %v2115
        %v2117 = vand.u32 %v2116, 4294901760
        %2118 = vmatmul.mubr.f32.gmra.mrb[0].mxu0 %v2117
        %v2119 = vpop.f32.mrb[0].mxu0
        %v2120 = vadd.f32 %v1665, %v2119
        %v2121 = vpop.f32.mrb[0].mxu0
        %2122 = vmatprep.mubr.f32.mxu0 0.0
        %v2123 = vand.u32 %v392, 4294901760
        %v2124 = vsub.f32 %v392, %v2123
        %v2125 = vand.u32 %v2124, 4294901760
        %2126 = vmatmul.mubr.f32.gmra.mrb[0].mxu0 %v2125
        %v2127 = vpop.f32.mrb[0].mxu0
        %v2128 = vadd.f32 %v1672, %v2127
        %v2129 = vpop.f32.mrb[0].mxu0
        %2130 = vmatprep.mubr.f32.mxu0 0.0
        %v2131 = vand.u32 %v395, 4294901760
        %v2132 = vsub.f32 %v395, %v2131
        %v2133 = vand.u32 %v2132, 4294901760
        %2134 = vmatmul.mubr.f32.gmra.mrb[0].mxu0 %v2133
        %v2135 = vpop.f32.mrb[0].mxu0
        %v2136 = vadd.f32 %v1679, %v2135
        %v2137 = vpop.f32.mrb[0].mxu0
        %2138 = vmatprep.mubr.f32.mxu0 0.0
        %v2139 = vand.u32 %v398, 4294901760
        %v2140 = vsub.f32 %v398, %v2139
        %v2141 = vand.u32 %v2140, 4294901760
        %2142 = vmatmul.mubr.f32.gmra.mrb[0].mxu0 %v2141
        %v2143 = vpop.f32.mrb[0].mxu0
        %v2144 = vadd.f32 %v1686, %v2143
        %v2145 = vpop.f32.mrb[0].mxu0
        %2146 = vmatprep.mubr.f32.mxu0 0.0
        %v2147 = vand.u32 %v401, 4294901760
        %v2148 = vsub.f32 %v401, %v2147
        %v2149 = vand.u32 %v2148, 4294901760
        %2150 = vmatmul.mubr.f32.gmra.mrb[0].mxu0 %v2149
        %v2151 = vpop.f32.mrb[0].mxu0
        %v2152 = vadd.f32 %v1693, %v2151
        %v2153 = vpop.f32.mrb[0].mxu0
        %2154 = vmatprep.mubr.f32.mxu0 0.0
        %v2155 = vand.u32 %v404, 4294901760
        %v2156 = vsub.f32 %v404, %v2155
        %v2157 = vand.u32 %v2156, 4294901760
        %2158 = vmatmul.mubr.f32.gmra.mrb[0].mxu0 %v2157
        %v2159 = vpop.f32.mrb[0].mxu0
        %v2160 = vadd.f32 %v1700, %v2159
        %v2161 = vpop.f32.mrb[0].mxu0
        %2162 = vmatprep.mubr.f32.mxu0 0.0
        %v2163 = vand.u32 %v407, 4294901760
        %v2164 = vsub.f32 %v407, %v2163
        %v2165 = vand.u32 %v2164, 4294901760
        %2166 = vmatmul.mubr.f32.gmra.mrb[0].mxu0 %v2165
        %v2167 = vpop.f32.mrb[0].mxu0
        %v2168 = vadd.f32 %v1707, %v2167
        %v2169 = vpop.f32.mrb[0].mxu0
        %2170 = vmatprep.mubr.f32.mxu0 0.0
        %v2171 = vand.u32 %v410, 4294901760
        %v2172 = vsub.f32 %v410, %v2171
        %v2173 = vand.u32 %v2172, 4294901760
        %2174 = vmatmul.mubr.f32.gmra.mrb[0].mxu0 %v2173
        %v2175 = vpop.f32.mrb[0].mxu0
        %v2176 = vadd.f32 %v1714, %v2175
        %v2177 = vpop.f32.mrb[0].mxu0
        %2178 = vmatprep.mubr.f32.mxu0 0.0
        %v2179 = vand.u32 %v413, 4294901760
        %v2180 = vsub.f32 %v413, %v2179
        %v2181 = vand.u32 %v2180, 4294901760
        %2182 = vmatmul.mubr.f32.gmra.mrb[0].mxu0 %v2181
        %v2183 = vpop.f32.mrb[0].mxu0
        %v2184 = vadd.f32 %v1721, %v2183
        %v2185 = vpop.f32.mrb[0].mxu0
        %2186 = vmatprep.mubr.f32.mxu0 0.0
        %v2187 = vand.u32 %v416, 4294901760
        %v2188 = vsub.f32 %v416, %v2187
        %v2189 = vand.u32 %v2188, 4294901760
        %2190 = vmatmul.mubr.f32.gmra.mrb[0].mxu0 %v2189
        %v2191 = vpop.f32.mrb[0].mxu0
        %v2192 = vadd.f32 %v1728, %v2191
        %v2193 = vpop.f32.mrb[0].mxu0
        %2194 = vmatprep.mubr.f32.mxu0 0.0
        %v2195 = vand.u32 %v419, 4294901760
        %v2196 = vsub.f32 %v419, %v2195
        %v2197 = vand.u32 %v2196, 4294901760
        %2198 = vmatmul.mubr.f32.gmra.mrb[0].mxu0 %v2197
        %v2199 = vpop.f32.mrb[0].mxu0
        %v2200 = vadd.f32 %v1735, %v2199
        %v2201 = vpop.f32.mrb[0].mxu0
        %2202 = vmatprep.mubr.f32.mxu0 0.0
        %v2203 = vand.u32 %v422, 4294901760
        %v2204 = vsub.f32 %v422, %v2203
        %v2205 = vand.u32 %v2204, 4294901760
        %2206 = vmatmul.mubr.f32.gmra.mrb[0].mxu0 %v2205
        %v2207 = vpop.f32.mrb[0].mxu0
        %v2208 = vadd.f32 %v1742, %v2207
        %v2209 = vpop.f32.mrb[0].mxu0
        %2210 = vmatprep.mubr.f32.mxu0 0.0
        %v2211 = vand.u32 %v425, 4294901760
        %v2212 = vsub.f32 %v425, %v2211
        %v2213 = vand.u32 %v2212, 4294901760
        %2214 = vmatmul.mubr.f32.gmra.mrb[0].mxu0 %v2213
        %v2215 = vpop.f32.mrb[0].mxu0
        %v2216 = vadd.f32 %v1749, %v2215
        %v2217 = vpop.f32.mrb[0].mxu0
        %2218 = vmatprep.mubr.f32.mxu0 0.0
        %v2219 = vand.u32 %v428, 4294901760
        %v2220 = vsub.f32 %v428, %v2219
        %v2221 = vand.u32 %v2220, 4294901760
        %2222 = vmatmul.mubr.f32.gmra.mrb[0].mxu0 %v2221
        %v2223 = vpop.f32.mrb[0].mxu0
        %v2224 = vadd.f32 %v1756, %v2223
        %v2225 = vpop.f32.mrb[0].mxu0
        %2226 = vmatprep.mubr.f32.mxu0 0.0
        %v2227 = vand.u32 %v431, 4294901760
        %v2228 = vsub.f32 %v431, %v2227
        %v2229 = vand.u32 %v2228, 4294901760
        %2230 = vmatmul.mubr.f32.gmra.mrb[0].mxu0 %v2229
        %v2231 = vpop.f32.mrb[0].mxu0
        %v2232 = vadd.f32 %v1763, %v2231
        %v2233 = vpop.f32.mrb[0].mxu0
        %2234 = vmatprep.mubr.f32.mxu0 0.0
        %v2235 = vand.u32 %v434, 4294901760
        %v2236 = vsub.f32 %v434, %v2235
        %v2237 = vand.u32 %v2236, 4294901760
        %2238 = vmatmul.mubr.f32.gmra.mrb[0].mxu0 %v2237
        %v2239 = vpop.f32.mrb[0].mxu0
        %v2240 = vadd.f32 %v1770, %v2239
        %v2241 = vpop.f32.mrb[0].mxu0
        %2242 = vmatprep.mubr.f32.mxu0 0.0
        %v2243 = vand.u32 %v437, 4294901760
        %v2244 = vsub.f32 %v437, %v2243
        %v2245 = vand.u32 %v2244, 4294901760
        %2246 = vmatmul.mubr.f32.gmra.mrb[0].mxu0 %v2245
        %v2247 = vpop.f32.mrb[0].mxu0
        %v2248 = vadd.f32 %v1777, %v2247
        %v2249 = vpop.f32.mrb[0].mxu0
        %2250 = vmatprep.mubr.f32.mxu0 0.0
        %v2251 = vand.u32 %v440, 4294901760
        %v2252 = vsub.f32 %v440, %v2251
        %v2253 = vand.u32 %v2252, 4294901760
        %2254 = vmatmul.mubr.f32.gmra.mrb[0].mxu0 %v2253
        %v2255 = vpop.f32.mrb[0].mxu0
        %v2256 = vadd.f32 %v1784, %v2255
        %v2257 = vpop.f32.mrb[0].mxu0
        %2258 = vmatprep.mubr.f32.mxu0 0.0
        %v2259 = vand.u32 %v443, 4294901760
        %v2260 = vsub.f32 %v443, %v2259
        %v2261 = vand.u32 %v2260, 4294901760
        %2262 = vmatmul.mubr.f32.gmra.mrb[0].mxu0 %v2261
        %v2263 = vpop.f32.mrb[0].mxu0
        %v2264 = vadd.f32 %v1791, %v2263
        %v2265 = vpop.f32.mrb[0].mxu0
        %2266 = vmatprep.mubr.f32.mxu0 0.0
        %v2267 = vand.u32 %v446, 4294901760
        %v2268 = vsub.f32 %v446, %v2267
        %v2269 = vand.u32 %v2268, 4294901760
        %2270 = vmatmul.mubr.f32.gmra.mrb[0].mxu0 %v2269
        %v2271 = vpop.f32.mrb[0].mxu0
        %v2272 = vadd.f32 %v1798, %v2271
        %v2273 = vpop.f32.mrb[0].mxu0
        %2274 = vmatprep.mubr.f32.mxu0 0.0
        %v2275 = vand.u32 %v449, 4294901760
        %v2276 = vsub.f32 %v449, %v2275
        %v2277 = vand.u32 %v2276, 4294901760
        %2278 = vmatmul.mubr.f32.gmra.mrb[0].mxu0 %v2277
        %v2279 = vpop.f32.mrb[0].mxu0
        %v2280 = vadd.f32 %v1805, %v2279
        %v2281 = vpop.f32.mrb[0].mxu0
        %2282 = vmatprep.mubr.f32.mxu0 0.0
        %v2283 = vand.u32 %v452, 4294901760
        %v2284 = vsub.f32 %v452, %v2283
        %v2285 = vand.u32 %v2284, 4294901760
        %2286 = vmatmul.mubr.f32.gmra.mrb[0].mxu0 %v2285
        %v2287 = vpop.f32.mrb[0].mxu0
        %v2288 = vadd.f32 %v1812, %v2287
        %v2289 = vpop.f32.mrb[0].mxu0
        %2290 = vmatprep.mubr.f32.mxu0 0.0
        %v2291 = vand.u32 %v455, 4294901760
        %v2292 = vsub.f32 %v455, %v2291
        %v2293 = vand.u32 %v2292, 4294901760
        %2294 = vmatmul.mubr.f32.gmra.mrb[0].mxu0 %v2293
        %v2295 = vpop.f32.mrb[0].mxu0
        %v2296 = vadd.f32 %v1819, %v2295
        %v2297 = vpop.f32.mrb[0].mxu0
        %2298 = vmatprep.mubr.f32.mxu0 0.0
        %v2299 = vand.u32 %v458, 4294901760
        %v2300 = vsub.f32 %v458, %v2299
        %v2301 = vand.u32 %v2300, 4294901760
        %2302 = vmatmul.mubr.f32.gmra.mrb[0].mxu0 %v2301
        %v2303 = vpop.f32.mrb[0].mxu0
        %v2304 = vadd.f32 %v1826, %v2303
        %v2305 = vpop.f32.mrb[0].mxu0
        %2306 = vmatprep.mubr.f32.mxu0 0.0
        %v2307 = vand.u32 %v461, 4294901760
        %v2308 = vsub.f32 %v461, %v2307
        %v2309 = vand.u32 %v2308, 4294901760
        %2310 = vmatmul.mubr.f32.gmra.mrb[0].mxu0 %v2309
        %v2311 = vpop.f32.mrb[0].mxu0
        %v2312 = vadd.f32 %v1833, %v2311
        %v2313 = vpop.f32.mrb[0].mxu0
        %2314 = vmatprep.mubr.f32.mxu0 0.0
        %v2315 = vand.u32 %v464, 4294901760
        %v2316 = vsub.f32 %v464, %v2315
        %v2317 = vand.u32 %v2316, 4294901760
        %2318 = vmatmul.mubr.f32.gmra.mrb[0].mxu0 %v2317
        %v2319 = vpop.f32.mrb[0].mxu0
        %v2320 = vadd.f32 %v1840, %v2319
        %v2321 = vpop.f32.mrb[0].mxu0
        %2322 = vmatprep.mubr.f32.mxu0 0.0
        %v2323 = vand.u32 %v467, 4294901760
        %v2324 = vsub.f32 %v467, %v2323
        %v2325 = vand.u32 %v2324, 4294901760
        %2326 = vmatmul.mubr.f32.gmra.mrb[0].mxu0 %v2325
        %v2327 = vpop.f32.mrb[0].mxu0
        %v2328 = vadd.f32 %v1847, %v2327
        %v2329 = vpop.f32.mrb[0].mxu0
        %2330 = vmatprep.mubr.f32.mxu0 0.0
        %v2331 = vand.u32 %v470, 4294901760
        %v2332 = vsub.f32 %v470, %v2331
        %v2333 = vand.u32 %v2332, 4294901760
        %2334 = vmatmul.mubr.f32.gmra.mrb[0].mxu0 %v2333
        %v2335 = vpop.f32.mrb[0].mxu0
        %v2336 = vadd.f32 %v1854, %v2335
        %v2337 = vpop.f32.mrb[0].mxu0
        %2338 = vmatprep.mubr.f32.mxu0 0.0
        %v2339 = vand.u32 %v473, 4294901760
        %v2340 = vsub.f32 %v473, %v2339
        %v2341 = vand.u32 %v2340, 4294901760
        %2342 = vmatmul.mubr.f32.gmra.mrb[0].mxu0 %v2341
        %v2343 = vpop.f32.mrb[0].mxu0
        %v2344 = vadd.f32 %v1861, %v2343
        %v2345 = vpop.f32.mrb[0].mxu0
        %2346 = vmatprep.mubr.f32.mxu0 0.0
        %v2347 = vand.u32 %v476, 4294901760
        %v2348 = vsub.f32 %v476, %v2347
        %v2349 = vand.u32 %v2348, 4294901760
        %2350 = vmatmul.mubr.f32.gmra.mrb[0].mxu0 %v2349
        %v2351 = vpop.f32.mrb[0].mxu0
        %v2352 = vadd.f32 %v1868, %v2351
        %v2353 = vpop.f32.mrb[0].mxu0
        %2354 = vmatprep.mubr.f32.mxu0 0.0
        %v2355 = vand.u32 %v479, 4294901760
        %v2356 = vsub.f32 %v479, %v2355
        %v2357 = vand.u32 %v2356, 4294901760
        %2358 = vmatmul.mubr.f32.gmra.mrb[0].mxu0 %v2357
        %v2359 = vpop.f32.mrb[0].mxu0
        %v2360 = vadd.f32 %v1875, %v2359
        %v2361 = vpop.f32.mrb[0].mxu0
        %2362 = vmatprep.mubr.f32.mxu0 0.0
        %v2363 = vand.u32 %v482, 4294901760
        %v2364 = vsub.f32 %v482, %v2363
        %v2365 = vand.u32 %v2364, 4294901760
        %2366 = vmatmul.mubr.f32.gmra.mrb[0].mxu0 %v2365
        %v2367 = vpop.f32.mrb[0].mxu0
        %v2368 = vadd.f32 %v1882, %v2367
        %v2369 = vpop.f32.mrb[0].mxu0
        %2370 = vmatprep.mubr.f32.mxu0 0.0
        %v2371 = vand.u32 %v485, 4294901760
        %v2372 = vsub.f32 %v485, %v2371
        %v2373 = vand.u32 %v2372, 4294901760
        %2374 = vmatmul.mubr.f32.gmra.mrb[0].mxu0 %v2373
        %v2375 = vpop.f32.mrb[0].mxu0
        %v2376 = vadd.f32 %v1889, %v2375
        %v2377 = vpop.f32.mrb[0].mxu0
        %2378 = vmatprep.mubr.f32.mxu0 0.0
        %v2379 = vand.u32 %v488, 4294901760
        %v2380 = vsub.f32 %v488, %v2379
        %v2381 = vand.u32 %v2380, 4294901760
        %2382 = vmatmul.mubr.f32.gmra.mrb[0].mxu0 %v2381
        %v2383 = vpop.f32.mrb[0].mxu0
        %v2384 = vadd.f32 %v1896, %v2383
        %v2385 = vpop.f32.mrb[0].mxu0
        %2386 = vmatprep.mubr.f32.mxu0 0.0
        %v2387 = vand.u32 %v491, 4294901760
        %v2388 = vsub.f32 %v491, %v2387
        %v2389 = vand.u32 %v2388, 4294901760
        %2390 = vmatmul.mubr.f32.gmra.mrb[0].mxu0 %v2389
        %v2391 = vpop.f32.mrb[0].mxu0
        %v2392 = vadd.f32 %v1903, %v2391
        %v2393 = vpop.f32.mrb[0].mxu0
        %2394 = vmatprep.mubr.f32.mxu0 0.0
        %v2395 = vand.u32 %v494, 4294901760
        %v2396 = vsub.f32 %v494, %v2395
        %v2397 = vand.u32 %v2396, 4294901760
        %2398 = vmatmul.mubr.f32.gmra.mrb[0].mxu0 %v2397
        %v2399 = vpop.f32.mrb[0].mxu0
        %v2400 = vadd.f32 %v1910, %v2399
        %v2401 = vpop.f32.mrb[0].mxu0
        %2402 = vmatprep.mubr.f32.mxu0 0.0
        %v2403 = vand.u32 %v497, 4294901760
        %v2404 = vsub.f32 %v497, %v2403
        %v2405 = vand.u32 %v2404, 4294901760
        %2406 = vmatmul.mubr.f32.gmra.mrb[0].mxu0 %v2405
        %v2407 = vpop.f32.mrb[0].mxu0
        %v2408 = vadd.f32 %v1917, %v2407
        %v2409 = vpop.f32.mrb[0].mxu0
        %2410 = vmatprep.mubr.f32.mxu0 0.0
        %v2411 = vand.u32 %v500, 4294901760
        %v2412 = vsub.f32 %v500, %v2411
        %v2413 = vand.u32 %v2412, 4294901760
        %2414 = vmatmul.mubr.f32.gmra.mrb[0].mxu0 %v2413
        %v2415 = vpop.f32.mrb[0].mxu0
        %v2416 = vadd.f32 %v1924, %v2415
        %v2417 = vpop.f32.mrb[0].mxu0
        %2418 = vmatprep.mubr.f32.mxu0 0.0
        %v2419 = vand.u32 %v503, 4294901760
        %v2420 = vsub.f32 %v503, %v2419
        %v2421 = vand.u32 %v2420, 4294901760
        %2422 = vmatmul.mubr.f32.gmra.mrb[0].mxu0 %v2421
        %v2423 = vpop.f32.mrb[0].mxu0
        %v2424 = vadd.f32 %v1931, %v2423
        %v2425 = vpop.f32.mrb[0].mxu0
        %2426 = vmatprep.mubr.f32.mxu0 0.0
        %v2427 = vand.u32 %v506, 4294901760
        %v2428 = vsub.f32 %v506, %v2427
        %v2429 = vand.u32 %v2428, 4294901760
        %2430 = vmatmul.mubr.f32.gmra.mrb[0].mxu0 %v2429
        %v2431 = vpop.f32.mrb[0].mxu0
        %v2432 = vadd.f32 %v1938, %v2431
        %v2433 = vpop.f32.mrb[0].mxu0
        %2434 = vmatprep.mubr.f32.mxu0 0.0
        %v2435 = vand.u32 %v509, 4294901760
        %v2436 = vsub.f32 %v509, %v2435
        %v2437 = vand.u32 %v2436, 4294901760
        %2438 = vmatmul.mubr.f32.gmra.mrb[0].mxu0 %v2437
        %v2439 = vpop.f32.mrb[0].mxu0
        %v2440 = vadd.f32 %v1945, %v2439
        %v2441 = vpop.f32.mrb[0].mxu0
        %2442 = vmatprep.mubr.f32.mxu0 0.0
        %v2443 = vand.u32 %v512, 4294901760
        %v2444 = vsub.f32 %v512, %v2443
        %v2445 = vand.u32 %v2444, 4294901760
        %2446 = vmatmul.mubr.f32.gmra.mrb[0].mxu0 %v2445
        %v2447 = vpop.f32.mrb[0].mxu0
        %v2448 = vadd.f32 %v1952, %v2447
        %v2449 = vpop.f32.mrb[0].mxu0
        %2450 = vmatprep.mubr.f32.mxu0 0.0
        %v2451 = vand.u32 %v515, 4294901760
        %v2452 = vsub.f32 %v515, %v2451
        %v2453 = vand.u32 %v2452, 4294901760
        %2454 = vmatmul.mubr.f32.gmra.mrb[0].mxu0 %v2453
        %v2455 = vpop.f32.mrb[0].mxu0
        %v2456 = vadd.f32 %v1959, %v2455
        %v2457 = vpop.f32.mrb[0].mxu0
        %2458 = vmatprep.mubr.f32.mxu0 0.0
        %v2459 = vand.u32 %v518, 4294901760
        %v2460 = vsub.f32 %v518, %v2459
        %v2461 = vand.u32 %v2460, 4294901760
        %2462 = vmatmul.mubr.f32.gmra.mrb[0].mxu0 %v2461
        %v2463 = vpop.f32.mrb[0].mxu0
        %v2464 = vadd.f32 %v1966, %v2463
        %v2465 = vpop.f32.mrb[0].mxu0
        %2466 = vdwg.mxu0
        %2467 = vmatprep.subr.mxu0 0.0
        %v2468 = vand.u32 %v522, 4294901760
        %v2469 = vsub.f32 %v522, %v2468
        %v2470 = vand.u32 %v2469, 4294901760
        %2471 = vmatpush1.msra.mxu0 %v2470
        %2472 = vmatprep.subr.mxu0 0.0
        %2473 = vmatpush1.msra.mxu0 0.0
        %2474 = vmatprep.subr.mxu0 0.0
        %2475 = vmatpush1.msra.mxu0 0.0
        %2476 = vmatprep.subr.mxu0 0.0
        %2477 = vmatpush1.msra.mxu0 0.0
        %2478 = vmatprep.subr.mxu0 0.0
        %2479 = vmatpush1.msra.mxu0 0.0
        %2480 = vmatprep.subr.mxu0 0.0
        %2481 = vmatpush1.msra.mxu0 0.0
        %2482 = vmatprep.subr.mxu0 0.0
        %2483 = vmatpush1.msra.mxu0 0.0
        %2484 = vmatprep.subr.mxu0 0.0
        %2485 = vmatpush1.msra.mxu0 0.0
        %2486 = vmatprep.subr.mxu0 0.0
        %2487 = vmatpush1.msra.mxu0 0.0
        %2488 = vmatprep.subr.mxu0 0.0
        %2489 = vmatpush1.msra.mxu0 0.0
        %2490 = vmatprep.subr.mxu0 0.0
        %2491 = vmatpush1.msra.mxu0 0.0
        %2492 = vmatprep.subr.mxu0 0.0
        %2493 = vmatpush1.msra.mxu0 0.0
        %2494 = vmatprep.subr.mxu0 0.0
        %2495 = vmatpush1.msra.mxu0 0.0
        %2496 = vmatprep.subr.mxu0 0.0
        %2497 = vmatpush1.msra.mxu0 0.0
        %2498 = vmatprep.subr.mxu0 0.0
        %2499 = vmatpush1.msra.mxu0 0.0
        %2500 = vmatprep.subr.mxu0 0.0
        %2501 = vmatpush1.msra.mxu0 0.0
        %2502 = vmatprep.subr.mxu0 0.0
        %2503 = vmatpush1.msra.mxu0 0.0
        %2504 = vmatprep.subr.mxu0 0.0
        %2505 = vmatpush1.msra.mxu0 0.0
        %2506 = vmatprep.subr.mxu0 0.0
        %2507 = vmatpush1.msra.mxu0 0.0
        %2508 = vmatprep.subr.mxu0 0.0
        %2509 = vmatpush1.msra.mxu0 0.0
        %2510 = vmatprep.subr.mxu0 0.0
        %2511 = vmatpush1.msra.mxu0 0.0
        %2512 = vmatprep.subr.mxu0 0.0
        %2513 = vmatpush1.msra.mxu0 0.0
        %2514 = vmatprep.subr.mxu0 0.0
        %2515 = vmatpush1.msra.mxu0 0.0
        %2516 = vmatprep.subr.mxu0 0.0
        %2517 = vmatpush1.msra.mxu0 0.0
        %2518 = vmatprep.subr.mxu0 0.0
        %2519 = vmatpush1.msra.mxu0 0.0
        %2520 = vmatprep.subr.mxu0 0.0
        %2521 = vmatpush1.msra.mxu0 0.0
        %2522 = vmatprep.subr.mxu0 0.0
        %2523 = vmatpush1.msra.mxu0 0.0
        %2524 = vmatprep.subr.mxu0 0.0
        %2525 = vmatpush1.msra.mxu0 0.0
        %2526 = vmatprep.subr.mxu0 0.0
        %2527 = vmatpush1.msra.mxu0 0.0
        %2528 = vmatprep.subr.mxu0 0.0
        %2529 = vmatpush1.msra.mxu0 0.0
        %2530 = vmatprep.subr.mxu0 0.0
        %2531 = vmatpush1.msra.mxu0 0.0
        %2532 = vmatprep.subr.mxu0 0.0
        %2533 = vmatpush1.msra.mxu0 0.0
        %2534 = vmatprep.mubr.f32.mxu0 0.0
        %v2535 = vand.u32 %v359, 4294901760
        %2536 = vmatmul.mubr.f32.gmra.mrb[0].mxu0 %v2535
        %v2537 = vpop.f32.mrb[0].mxu0
        %v2538 = vadd.f32 %v2040, %v2537
        %v2539 = vpop.f32.mrb[0].mxu0
        %2540 = vmatprep.mubr.f32.mxu0 0.0
        %v2541 = vand.u32 %v362, 4294901760
        %2542 = vmatmul.mubr.f32.gmra.mrb[0].mxu0 %v2541
        %v2543 = vpop.f32.mrb[0].mxu0
        %v2544 = vadd.f32 %v2048, %v2543
        %v2545 = vpop.f32.mrb[0].mxu0
        %2546 = vmatprep.mubr.f32.mxu0 0.0
        %v2547 = vand.u32 %v365, 4294901760
        %2548 = vmatmul.mubr.f32.gmra.mrb[0].mxu0 %v2547
        %v2549 = vpop.f32.mrb[0].mxu0
        %v2550 = vadd.f32 %v2056, %v2549
        %v2551 = vpop.f32.mrb[0].mxu0
        %2552 = vmatprep.mubr.f32.mxu0 0.0
        %v2553 = vand.u32 %v368, 4294901760
        %2554 = vmatmul.mubr.f32.gmra.mrb[0].mxu0 %v2553
        %v2555 = vpop.f32.mrb[0].mxu0
        %v2556 = vadd.f32 %v2064, %v2555
        %v2557 = vpop.f32.mrb[0].mxu0
        %2558 = vmatprep.mubr.f32.mxu0 0.0
        %v2559 = vand.u32 %v371, 4294901760
        %2560 = vmatmul.mubr.f32.gmra.mrb[0].mxu0 %v2559
        %v2561 = vpop.f32.mrb[0].mxu0
        %v2562 = vadd.f32 %v2072, %v2561
        %v2563 = vpop.f32.mrb[0].mxu0
        %2564 = vmatprep.mubr.f32.mxu0 0.0
        %v2565 = vand.u32 %v374, 4294901760
        %2566 = vmatmul.mubr.f32.gmra.mrb[0].mxu0 %v2565
        %v2567 = vpop.f32.mrb[0].mxu0
        %v2568 = vadd.f32 %v2080, %v2567
        %v2569 = vpop.f32.mrb[0].mxu0
        %2570 = vmatprep.mubr.f32.mxu0 0.0
        %v2571 = vand.u32 %v377, 4294901760
        %2572 = vmatmul.mubr.f32.gmra.mrb[0].mxu0 %v2571
        %v2573 = vpop.f32.mrb[0].mxu0
        %v2574 = vadd.f32 %v2088, %v2573
        %v2575 = vpop.f32.mrb[0].mxu0
        %2576 = vmatprep.mubr.f32.mxu0 0.0
        %v2577 = vand.u32 %v380, 4294901760
        %2578 = vmatmul.mubr.f32.gmra.mrb[0].mxu0 %v2577
        %v2579 = vpop.f32.mrb[0].mxu0
        %v2580 = vadd.f32 %v2096, %v2579
        %v2581 = vpop.f32.mrb[0].mxu0
        %2582 = vmatprep.mubr.f32.mxu0 0.0
        %v2583 = vand.u32 %v383, 4294901760
        %2584 = vmatmul.mubr.f32.gmra.mrb[0].mxu0 %v2583
        %v2585 = vpop.f32.mrb[0].mxu0
        %v2586 = vadd.f32 %v2104, %v2585
        %v2587 = vpop.f32.mrb[0].mxu0
        %2588 = vmatprep.mubr.f32.mxu0 0.0
        %v2589 = vand.u32 %v386, 4294901760
        %2590 = vmatmul.mubr.f32.gmra.mrb[0].mxu0 %v2589
        %v2591 = vpop.f32.mrb[0].mxu0
        %v2592 = vadd.f32 %v2112, %v2591
        %v2593 = vpop.f32.mrb[0].mxu0
        %2594 = vmatprep.mubr.f32.mxu0 0.0
        %v2595 = vand.u32 %v389, 4294901760
        %2596 = vmatmul.mubr.f32.gmra.mrb[0].mxu0 %v2595
        %v2597 = vpop.f32.mrb[0].mxu0
        %v2598 = vadd.f32 %v2120, %v2597
        %v2599 = vpop.f32.mrb[0].mxu0
        %2600 = vmatprep.mubr.f32.mxu0 0.0
        %v2601 = vand.u32 %v392, 4294901760
        %2602 = vmatmul.mubr.f32.gmra.mrb[0].mxu0 %v2601
        %v2603 = vpop.f32.mrb[0].mxu0
        %v2604 = vadd.f32 %v2128, %v2603
        %v2605 = vpop.f32.mrb[0].mxu0
        %2606 = vmatprep.mubr.f32.mxu0 0.0
        %v2607 = vand.u32 %v395, 4294901760
        %2608 = vmatmul.mubr.f32.gmra.mrb[0].mxu0 %v2607
        %v2609 = vpop.f32.mrb[0].mxu0
        %v2610 = vadd.f32 %v2136, %v2609
        %v2611 = vpop.f32.mrb[0].mxu0
        %2612 = vmatprep.mubr.f32.mxu0 0.0
        %v2613 = vand.u32 %v398, 4294901760
        %2614 = vmatmul.mubr.f32.gmra.mrb[0].mxu0 %v2613
        %v2615 = vpop.f32.mrb[0].mxu0
        %v2616 = vadd.f32 %v2144, %v2615
        %v2617 = vpop.f32.mrb[0].mxu0
        %2618 = vmatprep.mubr.f32.mxu0 0.0
        %v2619 = vand.u32 %v401, 4294901760
        %2620 = vmatmul.mubr.f32.gmra.mrb[0].mxu0 %v2619
        %v2621 = vpop.f32.mrb[0].mxu0
        %v2622 = vadd.f32 %v2152, %v2621
        %v2623 = vpop.f32.mrb[0].mxu0
        %2624 = vmatprep.mubr.f32.mxu0 0.0
        %v2625 = vand.u32 %v404, 4294901760
        %2626 = vmatmul.mubr.f32.gmra.mrb[0].mxu0 %v2625
        %v2627 = vpop.f32.mrb[0].mxu0
        %v2628 = vadd.f32 %v2160, %v2627
        %v2629 = vpop.f32.mrb[0].mxu0
        %2630 = vmatprep.mubr.f32.mxu0 0.0
        %v2631 = vand.u32 %v407, 4294901760
        %2632 = vmatmul.mubr.f32.gmra.mrb[0].mxu0 %v2631
        %v2633 = vpop.f32.mrb[0].mxu0
        %v2634 = vadd.f32 %v2168, %v2633
        %v2635 = vpop.f32.mrb[0].mxu0
        %2636 = vmatprep.mubr.f32.mxu0 0.0
        %v2637 = vand.u32 %v410, 4294901760
        %2638 = vmatmul.mubr.f32.gmra.mrb[0].mxu0 %v2637
        %v2639 = vpop.f32.mrb[0].mxu0
        %v2640 = vadd.f32 %v2176, %v2639
        %v2641 = vpop.f32.mrb[0].mxu0
        %2642 = vmatprep.mubr.f32.mxu0 0.0
        %v2643 = vand.u32 %v413, 4294901760
        %2644 = vmatmul.mubr.f32.gmra.mrb[0].mxu0 %v2643
        %v2645 = vpop.f32.mrb[0].mxu0
        %v2646 = vadd.f32 %v2184, %v2645
        %v2647 = vpop.f32.mrb[0].mxu0
        %2648 = vmatprep.mubr.f32.mxu0 0.0
        %v2649 = vand.u32 %v416, 4294901760
        %2650 = vmatmul.mubr.f32.gmra.mrb[0].mxu0 %v2649
        %v2651 = vpop.f32.mrb[0].mxu0
        %v2652 = vadd.f32 %v2192, %v2651
        %v2653 = vpop.f32.mrb[0].mxu0
        %2654 = vmatprep.mubr.f32.mxu0 0.0
        %v2655 = vand.u32 %v419, 4294901760
        %2656 = vmatmul.mubr.f32.gmra.mrb[0].mxu0 %v2655
        %v2657 = vpop.f32.mrb[0].mxu0
        %v2658 = vadd.f32 %v2200, %v2657
        %v2659 = vpop.f32.mrb[0].mxu0
        %2660 = vmatprep.mubr.f32.mxu0 0.0
        %v2661 = vand.u32 %v422, 4294901760
        %2662 = vmatmul.mubr.f32.gmra.mrb[0].mxu0 %v2661
        %v2663 = vpop.f32.mrb[0].mxu0
        %v2664 = vadd.f32 %v2208, %v2663
        %v2665 = vpop.f32.mrb[0].mxu0
        %2666 = vmatprep.mubr.f32.mxu0 0.0
        %v2667 = vand.u32 %v425, 4294901760
        %2668 = vmatmul.mubr.f32.gmra.mrb[0].mxu0 %v2667
        %v2669 = vpop.f32.mrb[0].mxu0
        %v2670 = vadd.f32 %v2216, %v2669
        %v2671 = vpop.f32.mrb[0].mxu0
        %2672 = vmatprep.mubr.f32.mxu0 0.0
        %v2673 = vand.u32 %v428, 4294901760
        %2674 = vmatmul.mubr.f32.gmra.mrb[0].mxu0 %v2673
        %v2675 = vpop.f32.mrb[0].mxu0
        %v2676 = vadd.f32 %v2224, %v2675
        %v2677 = vpop.f32.mrb[0].mxu0
        %2678 = vmatprep.mubr.f32.mxu0 0.0
        %v2679 = vand.u32 %v431, 4294901760
        %2680 = vmatmul.mubr.f32.gmra.mrb[0].mxu0 %v2679
        %v2681 = vpop.f32.mrb[0].mxu0
        %v2682 = vadd.f32 %v2232, %v2681
        %v2683 = vpop.f32.mrb[0].mxu0
        %2684 = vmatprep.mubr.f32.mxu0 0.0
        %v2685 = vand.u32 %v434, 4294901760
        %2686 = vmatmul.mubr.f32.gmra.mrb[0].mxu0 %v2685
        %v2687 = vpop.f32.mrb[0].mxu0
        %v2688 = vadd.f32 %v2240, %v2687
        %v2689 = vpop.f32.mrb[0].mxu0
        %2690 = vmatprep.mubr.f32.mxu0 0.0
        %v2691 = vand.u32 %v437, 4294901760
        %2692 = vmatmul.mubr.f32.gmra.mrb[0].mxu0 %v2691
        %v2693 = vpop.f32.mrb[0].mxu0
        %v2694 = vadd.f32 %v2248, %v2693
        %v2695 = vpop.f32.mrb[0].mxu0
        %2696 = vmatprep.mubr.f32.mxu0 0.0
        %v2697 = vand.u32 %v440, 4294901760
        %2698 = vmatmul.mubr.f32.gmra.mrb[0].mxu0 %v2697
        %v2699 = vpop.f32.mrb[0].mxu0
        %v2700 = vadd.f32 %v2256, %v2699
        %v2701 = vpop.f32.mrb[0].mxu0
        %2702 = vmatprep.mubr.f32.mxu0 0.0
        %v2703 = vand.u32 %v443, 4294901760
        %2704 = vmatmul.mubr.f32.gmra.mrb[0].mxu0 %v2703
        %v2705 = vpop.f32.mrb[0].mxu0
        %v2706 = vadd.f32 %v2264, %v2705
        %v2707 = vpop.f32.mrb[0].mxu0
        %2708 = vmatprep.mubr.f32.mxu0 0.0
        %v2709 = vand.u32 %v446, 4294901760
        %2710 = vmatmul.mubr.f32.gmra.mrb[0].mxu0 %v2709
        %v2711 = vpop.f32.mrb[0].mxu0
        %v2712 = vadd.f32 %v2272, %v2711
        %v2713 = vpop.f32.mrb[0].mxu0
        %2714 = vmatprep.mubr.f32.mxu0 0.0
        %v2715 = vand.u32 %v449, 4294901760
        %2716 = vmatmul.mubr.f32.gmra.mrb[0].mxu0 %v2715
        %v2717 = vpop.f32.mrb[0].mxu0
        %v2718 = vadd.f32 %v2280, %v2717
        %v2719 = vpop.f32.mrb[0].mxu0
        %2720 = vmatprep.mubr.f32.mxu0 0.0
        %v2721 = vand.u32 %v452, 4294901760
        %2722 = vmatmul.mubr.f32.gmra.mrb[0].mxu0 %v2721
        %v2723 = vpop.f32.mrb[0].mxu0
        %v2724 = vadd.f32 %v2288, %v2723
        %v2725 = vpop.f32.mrb[0].mxu0
        %2726 = vmatprep.mubr.f32.mxu0 0.0
        %v2727 = vand.u32 %v455, 4294901760
        %2728 = vmatmul.mubr.f32.gmra.mrb[0].mxu0 %v2727
        %v2729 = vpop.f32.mrb[0].mxu0
        %v2730 = vadd.f32 %v2296, %v2729
        %v2731 = vpop.f32.mrb[0].mxu0
        %2732 = vmatprep.mubr.f32.mxu0 0.0
        %v2733 = vand.u32 %v458, 4294901760
        %2734 = vmatmul.mubr.f32.gmra.mrb[0].mxu0 %v2733
        %v2735 = vpop.f32.mrb[0].mxu0
        %v2736 = vadd.f32 %v2304, %v2735
        %v2737 = vpop.f32.mrb[0].mxu0
        %2738 = vmatprep.mubr.f32.mxu0 0.0
        %v2739 = vand.u32 %v461, 4294901760
        %2740 = vmatmul.mubr.f32.gmra.mrb[0].mxu0 %v2739
        %v2741 = vpop.f32.mrb[0].mxu0
        %v2742 = vadd.f32 %v2312, %v2741
        %v2743 = vpop.f32.mrb[0].mxu0
        %2744 = vmatprep.mubr.f32.mxu0 0.0
        %v2745 = vand.u32 %v464, 4294901760
        %2746 = vmatmul.mubr.f32.gmra.mrb[0].mxu0 %v2745
        %v2747 = vpop.f32.mrb[0].mxu0
        %v2748 = vadd.f32 %v2320, %v2747
        %v2749 = vpop.f32.mrb[0].mxu0
        %2750 = vmatprep.mubr.f32.mxu0 0.0
        %v2751 = vand.u32 %v467, 4294901760
        %2752 = vmatmul.mubr.f32.gmra.mrb[0].mxu0 %v2751
        %v2753 = vpop.f32.mrb[0].mxu0
        %v2754 = vadd.f32 %v2328, %v2753
        %v2755 = vpop.f32.mrb[0].mxu0
        %2756 = vmatprep.mubr.f32.mxu0 0.0
        %v2757 = vand.u32 %v470, 4294901760
        %2758 = vmatmul.mubr.f32.gmra.mrb[0].mxu0 %v2757
        %v2759 = vpop.f32.mrb[0].mxu0
        %v2760 = vadd.f32 %v2336, %v2759
        %v2761 = vpop.f32.mrb[0].mxu0
        %2762 = vmatprep.mubr.f32.mxu0 0.0
        %v2763 = vand.u32 %v473, 4294901760
        %2764 = vmatmul.mubr.f32.gmra.mrb[0].mxu0 %v2763
        %v2765 = vpop.f32.mrb[0].mxu0
        %v2766 = vadd.f32 %v2344, %v2765
        %v2767 = vpop.f32.mrb[0].mxu0
        %2768 = vmatprep.mubr.f32.mxu0 0.0
        %v2769 = vand.u32 %v476, 4294901760
        %2770 = vmatmul.mubr.f32.gmra.mrb[0].mxu0 %v2769
        %v2771 = vpop.f32.mrb[0].mxu0
        %v2772 = vadd.f32 %v2352, %v2771
        %v2773 = vpop.f32.mrb[0].mxu0
        %2774 = vmatprep.mubr.f32.mxu0 0.0
        %v2775 = vand.u32 %v479, 4294901760
        %2776 = vmatmul.mubr.f32.gmra.mrb[0].mxu0 %v2775
        %v2777 = vpop.f32.mrb[0].mxu0
        %v2778 = vadd.f32 %v2360, %v2777
        %v2779 = vpop.f32.mrb[0].mxu0
        %2780 = vmatprep.mubr.f32.mxu0 0.0
        %v2781 = vand.u32 %v482, 4294901760
        %2782 = vmatmul.mubr.f32.gmra.mrb[0].mxu0 %v2781
        %v2783 = vpop.f32.mrb[0].mxu0
        %v2784 = vadd.f32 %v2368, %v2783
        %v2785 = vpop.f32.mrb[0].mxu0
        %2786 = vmatprep.mubr.f32.mxu0 0.0
        %v2787 = vand.u32 %v485, 4294901760
        %2788 = vmatmul.mubr.f32.gmra.mrb[0].mxu0 %v2787
        %v2789 = vpop.f32.mrb[0].mxu0
        %v2790 = vadd.f32 %v2376, %v2789
        %v2791 = vpop.f32.mrb[0].mxu0
        %2792 = vmatprep.mubr.f32.mxu0 0.0
        %v2793 = vand.u32 %v488, 4294901760
        %2794 = vmatmul.mubr.f32.gmra.mrb[0].mxu0 %v2793
        %v2795 = vpop.f32.mrb[0].mxu0
        %v2796 = vadd.f32 %v2384, %v2795
        %v2797 = vpop.f32.mrb[0].mxu0
        %2798 = vmatprep.mubr.f32.mxu0 0.0
        %v2799 = vand.u32 %v491, 4294901760
        %2800 = vmatmul.mubr.f32.gmra.mrb[0].mxu0 %v2799
        %v2801 = vpop.f32.mrb[0].mxu0
        %v2802 = vadd.f32 %v2392, %v2801
        %v2803 = vpop.f32.mrb[0].mxu0
        %2804 = vmatprep.mubr.f32.mxu0 0.0
        %v2805 = vand.u32 %v494, 4294901760
        %2806 = vmatmul.mubr.f32.gmra.mrb[0].mxu0 %v2805
        %v2807 = vpop.f32.mrb[0].mxu0
        %v2808 = vadd.f32 %v2400, %v2807
        %v2809 = vpop.f32.mrb[0].mxu0
        %2810 = vmatprep.mubr.f32.mxu0 0.0
        %v2811 = vand.u32 %v497, 4294901760
        %2812 = vmatmul.mubr.f32.gmra.mrb[0].mxu0 %v2811
        %v2813 = vpop.f32.mrb[0].mxu0
        %v2814 = vadd.f32 %v2408, %v2813
        %v2815 = vpop.f32.mrb[0].mxu0
        %2816 = vmatprep.mubr.f32.mxu0 0.0
        %v2817 = vand.u32 %v500, 4294901760
        %2818 = vmatmul.mubr.f32.gmra.mrb[0].mxu0 %v2817
        %v2819 = vpop.f32.mrb[0].mxu0
        %v2820 = vadd.f32 %v2416, %v2819
        %v2821 = vpop.f32.mrb[0].mxu0
        %2822 = vmatprep.mubr.f32.mxu0 0.0
        %v2823 = vand.u32 %v503, 4294901760
        %2824 = vmatmul.mubr.f32.gmra.mrb[0].mxu0 %v2823
        %v2825 = vpop.f32.mrb[0].mxu0
        %v2826 = vadd.f32 %v2424, %v2825
        %v2827 = vpop.f32.mrb[0].mxu0
        %2828 = vmatprep.mubr.f32.mxu0 0.0
        %v2829 = vand.u32 %v506, 4294901760
        %2830 = vmatmul.mubr.f32.gmra.mrb[0].mxu0 %v2829
        %v2831 = vpop.f32.mrb[0].mxu0
        %v2832 = vadd.f32 %v2432, %v2831
        %v2833 = vpop.f32.mrb[0].mxu0
        %2834 = vmatprep.mubr.f32.mxu0 0.0
        %v2835 = vand.u32 %v509, 4294901760
        %2836 = vmatmul.mubr.f32.gmra.mrb[0].mxu0 %v2835
        %v2837 = vpop.f32.mrb[0].mxu0
        %v2838 = vadd.f32 %v2440, %v2837
        %v2839 = vpop.f32.mrb[0].mxu0
        %2840 = vmatprep.mubr.f32.mxu0 0.0
        %v2841 = vand.u32 %v512, 4294901760
        %2842 = vmatmul.mubr.f32.gmra.mrb[0].mxu0 %v2841
        %v2843 = vpop.f32.mrb[0].mxu0
        %v2844 = vadd.f32 %v2448, %v2843
        %v2845 = vpop.f32.mrb[0].mxu0
        %2846 = vmatprep.mubr.f32.mxu0 0.0
        %v2847 = vand.u32 %v515, 4294901760
        %2848 = vmatmul.mubr.f32.gmra.mrb[0].mxu0 %v2847
        %v2849 = vpop.f32.mrb[0].mxu0
        %v2850 = vadd.f32 %v2456, %v2849
        %v2851 = vpop.f32.mrb[0].mxu0
        %2852 = vmatprep.mubr.f32.mxu0 0.0
        %v2853 = vand.u32 %v518, 4294901760
        %2854 = vmatmul.mubr.f32.gmra.mrb[0].mxu0 %v2853
        %v2855 = vpop.f32.mrb[0].mxu0
        %v2856 = vadd.f32 %v2464, %v2855
        %v2857 = vpop.f32.mrb[0].mxu0
        %2858 = vdwg.mxu0
        %2859 = vmatprep.subr.mxu0 0.0
        %v2860 = vand.u32 %v522, 4294901760
        %2861 = vmatpush1.msra.mxu0 %v2860
        %2862 = vmatprep.subr.mxu0 0.0
        %2863 = vmatpush1.msra.mxu0 0.0
        %2864 = vmatprep.subr.mxu0 0.0
        %2865 = vmatpush1.msra.mxu0 0.0
        %2866 = vmatprep.subr.mxu0 0.0
        %2867 = vmatpush1.msra.mxu0 0.0
        %2868 = vmatprep.subr.mxu0 0.0
        %2869 = vmatpush1.msra.mxu0 0.0
        %2870 = vmatprep.subr.mxu0 0.0
        %2871 = vmatpush1.msra.mxu0 0.0
        %2872 = vmatprep.subr.mxu0 0.0
        %2873 = vmatpush1.msra.mxu0 0.0
        %2874 = vmatprep.subr.mxu0 0.0
        %2875 = vmatpush1.msra.mxu0 0.0
        %2876 = vmatprep.subr.mxu0 0.0
        %2877 = vmatpush1.msra.mxu0 0.0
        %2878 = vmatprep.subr.mxu0 0.0
        %2879 = vmatpush1.msra.mxu0 0.0
        %2880 = vmatprep.subr.mxu0 0.0
        %2881 = vmatpush1.msra.mxu0 0.0
        %2882 = vmatprep.subr.mxu0 0.0
        %2883 = vmatpush1.msra.mxu0 0.0
        %2884 = vmatprep.subr.mxu0 0.0
        %2885 = vmatpush1.msra.mxu0 0.0
        %2886 = vmatprep.subr.mxu0 0.0
        %2887 = vmatpush1.msra.mxu0 0.0
        %2888 = vmatprep.subr.mxu0 0.0
        %2889 = vmatpush1.msra.mxu0 0.0
        %2890 = vmatprep.subr.mxu0 0.0
        %2891 = vmatpush1.msra.mxu0 0.0
        %2892 = vmatprep.subr.mxu0 0.0
        %2893 = vmatpush1.msra.mxu0 0.0
        %2894 = vmatprep.subr.mxu0 0.0
        %2895 = vmatpush1.msra.mxu0 0.0
        %2896 = vmatprep.subr.mxu0 0.0
        %2897 = vmatpush1.msra.mxu0 0.0
        %2898 = vmatprep.subr.mxu0 0.0
        %2899 = vmatpush1.msra.mxu0 0.0
        %2900 = vmatprep.subr.mxu0 0.0
        %2901 = vmatpush1.msra.mxu0 0.0
        %2902 = vmatprep.subr.mxu0 0.0
        %2903 = vmatpush1.msra.mxu0 0.0
        %2904 = vmatprep.subr.mxu0 0.0
        %2905 = vmatpush1.msra.mxu0 0.0
        %2906 = vmatprep.subr.mxu0 0.0
        %2907 = vmatpush1.msra.mxu0 0.0
        %2908 = vmatprep.subr.mxu0 0.0
        %2909 = vmatpush1.msra.mxu0 0.0
        %2910 = vmatprep.subr.mxu0 0.0
        %2911 = vmatpush1.msra.mxu0 0.0
        %2912 = vmatprep.subr.mxu0 0.0
        %2913 = vmatpush1.msra.mxu0 0.0
        %2914 = vmatprep.subr.mxu0 0.0
        %2915 = vmatpush1.msra.mxu0 0.0
        %2916 = vmatprep.subr.mxu0 0.0
        %2917 = vmatpush1.msra.mxu0 0.0
        %2918 = vmatprep.subr.mxu0 0.0
        %2919 = vmatpush1.msra.mxu0 0.0
        %2920 = vmatprep.subr.mxu0 0.0
        %2921 = vmatpush1.msra.mxu0 0.0
        %2922 = vmatprep.subr.mxu0 0.0
        %2923 = vmatpush1.msra.mxu0 0.0
        %2924 = vmatprep.mubr.f32.mxu0 0.0
        %v2925 = vand.u32 %v359, 4294901760
        %2926 = vmatmul.mubr.f32.gmra.mrb[0].mxu0 %v2925
        %v2927 = vpop.f32.mrb[0].mxu0
        %v2928 = vadd.f32 %v2538, %v2927
        %v2929 = vpop.f32.mrb[0].mxu0
        %2930 = vmatprep.mubr.f32.mxu0 0.0
        %v2931 = vand.u32 %v362, 4294901760
        %2932 = vmatmul.mubr.f32.gmra.mrb[0].mxu0 %v2931
        %v2933 = vpop.f32.mrb[0].mxu0
        %v2934 = vadd.f32 %v2544, %v2933
        %v2935 = vpop.f32.mrb[0].mxu0
        %2936 = vmatprep.mubr.f32.mxu0 0.0
        %v2937 = vand.u32 %v365, 4294901760
        %2938 = vmatmul.mubr.f32.gmra.mrb[0].mxu0 %v2937
        %v2939 = vpop.f32.mrb[0].mxu0
        %v2940 = vadd.f32 %v2550, %v2939
        %v2941 = vpop.f32.mrb[0].mxu0
        %2942 = vmatprep.mubr.f32.mxu0 0.0
        %v2943 = vand.u32 %v368, 4294901760
        %2944 = vmatmul.mubr.f32.gmra.mrb[0].mxu0 %v2943
        %v2945 = vpop.f32.mrb[0].mxu0
        %v2946 = vadd.f32 %v2556, %v2945
        %v2947 = vpop.f32.mrb[0].mxu0
        %2948 = vmatprep.mubr.f32.mxu0 0.0
        %v2949 = vand.u32 %v371, 4294901760
        %2950 = vmatmul.mubr.f32.gmra.mrb[0].mxu0 %v2949
        %v2951 = vpop.f32.mrb[0].mxu0
        %v2952 = vadd.f32 %v2562, %v2951
        %v2953 = vpop.f32.mrb[0].mxu0
        %2954 = vmatprep.mubr.f32.mxu0 0.0
        %v2955 = vand.u32 %v374, 4294901760
        %2956 = vmatmul.mubr.f32.gmra.mrb[0].mxu0 %v2955
        %v2957 = vpop.f32.mrb[0].mxu0
        %v2958 = vadd.f32 %v2568, %v2957
        %v2959 = vpop.f32.mrb[0].mxu0
        %2960 = vmatprep.mubr.f32.mxu0 0.0
        %v2961 = vand.u32 %v377, 4294901760
        %2962 = vmatmul.mubr.f32.gmra.mrb[0].mxu0 %v2961
        %v2963 = vpop.f32.mrb[0].mxu0
        %v2964 = vadd.f32 %v2574, %v2963
        %v2965 = vpop.f32.mrb[0].mxu0
        %2966 = vmatprep.mubr.f32.mxu0 0.0
        %v2967 = vand.u32 %v380, 4294901760
        %2968 = vmatmul.mubr.f32.gmra.mrb[0].mxu0 %v2967
        %v2969 = vpop.f32.mrb[0].mxu0
        %v2970 = vadd.f32 %v2580, %v2969
        %v2971 = vpop.f32.mrb[0].mxu0
        %2972 = vmatprep.mubr.f32.mxu0 0.0
        %v2973 = vand.u32 %v383, 4294901760
        %2974 = vmatmul.mubr.f32.gmra.mrb[0].mxu0 %v2973
        %v2975 = vpop.f32.mrb[0].mxu0
        %v2976 = vadd.f32 %v2586, %v2975
        %v2977 = vpop.f32.mrb[0].mxu0
        %2978 = vmatprep.mubr.f32.mxu0 0.0
        %v2979 = vand.u32 %v386, 4294901760
        %2980 = vmatmul.mubr.f32.gmra.mrb[0].mxu0 %v2979
        %v2981 = vpop.f32.mrb[0].mxu0
        %v2982 = vadd.f32 %v2592, %v2981
        %v2983 = vpop.f32.mrb[0].mxu0
        %2984 = vmatprep.mubr.f32.mxu0 0.0
        %v2985 = vand.u32 %v389, 4294901760
        %2986 = vmatmul.mubr.f32.gmra.mrb[0].mxu0 %v2985
        %v2987 = vpop.f32.mrb[0].mxu0
        %v2988 = vadd.f32 %v2598, %v2987
        %v2989 = vpop.f32.mrb[0].mxu0
        %2990 = vmatprep.mubr.f32.mxu0 0.0
        %v2991 = vand.u32 %v392, 4294901760
        %2992 = vmatmul.mubr.f32.gmra.mrb[0].mxu0 %v2991
        %v2993 = vpop.f32.mrb[0].mxu0
        %v2994 = vadd.f32 %v2604, %v2993
        %v2995 = vpop.f32.mrb[0].mxu0
        %2996 = vmatprep.mubr.f32.mxu0 0.0
        %v2997 = vand.u32 %v395, 4294901760
        %2998 = vmatmul.mubr.f32.gmra.mrb[0].mxu0 %v2997
        %v2999 = vpop.f32.mrb[0].mxu0
        %v3000 = vadd.f32 %v2610, %v2999
        %v3001 = vpop.f32.mrb[0].mxu0
        %3002 = vmatprep.mubr.f32.mxu0 0.0
        %v3003 = vand.u32 %v398, 4294901760
        %3004 = vmatmul.mubr.f32.gmra.mrb[0].mxu0 %v3003
        %v3005 = vpop.f32.mrb[0].mxu0
        %v3006 = vadd.f32 %v2616, %v3005
        %v3007 = vpop.f32.mrb[0].mxu0
        %3008 = vmatprep.mubr.f32.mxu0 0.0
        %v3009 = vand.u32 %v401, 4294901760
        %3010 = vmatmul.mubr.f32.gmra.mrb[0].mxu0 %v3009
        %v3011 = vpop.f32.mrb[0].mxu0
        %v3012 = vadd.f32 %v2622, %v3011
        %v3013 = vpop.f32.mrb[0].mxu0
        %3014 = vmatprep.mubr.f32.mxu0 0.0
        %v3015 = vand.u32 %v404, 4294901760
        %3016 = vmatmul.mubr.f32.gmra.mrb[0].mxu0 %v3015
        %v3017 = vpop.f32.mrb[0].mxu0
        %v3018 = vadd.f32 %v2628, %v3017
        %v3019 = vpop.f32.mrb[0].mxu0
        %3020 = vmatprep.mubr.f32.mxu0 0.0
        %v3021 = vand.u32 %v407, 4294901760
        %3022 = vmatmul.mubr.f32.gmra.mrb[0].mxu0 %v3021
        %v3023 = vpop.f32.mrb[0].mxu0
        %v3024 = vadd.f32 %v2634, %v3023
        %v3025 = vpop.f32.mrb[0].mxu0
        %3026 = vmatprep.mubr.f32.mxu0 0.0
        %v3027 = vand.u32 %v410, 4294901760
        %3028 = vmatmul.mubr.f32.gmra.mrb[0].mxu0 %v3027
        %v3029 = vpop.f32.mrb[0].mxu0
        %v3030 = vadd.f32 %v2640, %v3029
        %v3031 = vpop.f32.mrb[0].mxu0
        %3032 = vmatprep.mubr.f32.mxu0 0.0
        %v3033 = vand.u32 %v413, 4294901760
        %3034 = vmatmul.mubr.f32.gmra.mrb[0].mxu0 %v3033
        %v3035 = vpop.f32.mrb[0].mxu0
        %v3036 = vadd.f32 %v2646, %v3035
        %v3037 = vpop.f32.mrb[0].mxu0
        %3038 = vmatprep.mubr.f32.mxu0 0.0
        %v3039 = vand.u32 %v416, 4294901760
        %3040 = vmatmul.mubr.f32.gmra.mrb[0].mxu0 %v3039
        %v3041 = vpop.f32.mrb[0].mxu0
        %v3042 = vadd.f32 %v2652, %v3041
        %v3043 = vpop.f32.mrb[0].mxu0
        %3044 = vmatprep.mubr.f32.mxu0 0.0
        %v3045 = vand.u32 %v419, 4294901760
        %3046 = vmatmul.mubr.f32.gmra.mrb[0].mxu0 %v3045
        %v3047 = vpop.f32.mrb[0].mxu0
        %v3048 = vadd.f32 %v2658, %v3047
        %v3049 = vpop.f32.mrb[0].mxu0
        %3050 = vmatprep.mubr.f32.mxu0 0.0
        %v3051 = vand.u32 %v422, 4294901760
        %3052 = vmatmul.mubr.f32.gmra.mrb[0].mxu0 %v3051
        %v3053 = vpop.f32.mrb[0].mxu0
        %v3054 = vadd.f32 %v2664, %v3053
        %v3055 = vpop.f32.mrb[0].mxu0
        %3056 = vmatprep.mubr.f32.mxu0 0.0
        %v3057 = vand.u32 %v425, 4294901760
        %3058 = vmatmul.mubr.f32.gmra.mrb[0].mxu0 %v3057
        %v3059 = vpop.f32.mrb[0].mxu0
        %v3060 = vadd.f32 %v2670, %v3059
        %v3061 = vpop.f32.mrb[0].mxu0
        %3062 = vmatprep.mubr.f32.mxu0 0.0
        %v3063 = vand.u32 %v428, 4294901760
        %3064 = vmatmul.mubr.f32.gmra.mrb[0].mxu0 %v3063
        %v3065 = vpop.f32.mrb[0].mxu0
        %v3066 = vadd.f32 %v2676, %v3065
        %v3067 = vpop.f32.mrb[0].mxu0
        %3068 = vmatprep.mubr.f32.mxu0 0.0
        %v3069 = vand.u32 %v431, 4294901760
        %3070 = vmatmul.mubr.f32.gmra.mrb[0].mxu0 %v3069
        %v3071 = vpop.f32.mrb[0].mxu0
        %v3072 = vadd.f32 %v2682, %v3071
        %v3073 = vpop.f32.mrb[0].mxu0
        %3074 = vmatprep.mubr.f32.mxu0 0.0
        %v3075 = vand.u32 %v434, 4294901760
        %3076 = vmatmul.mubr.f32.gmra.mrb[0].mxu0 %v3075
        %v3077 = vpop.f32.mrb[0].mxu0
        %v3078 = vadd.f32 %v2688, %v3077
        %v3079 = vpop.f32.mrb[0].mxu0
        %3080 = vmatprep.mubr.f32.mxu0 0.0
        %v3081 = vand.u32 %v437, 4294901760
        %3082 = vmatmul.mubr.f32.gmra.mrb[0].mxu0 %v3081
        %v3083 = vpop.f32.mrb[0].mxu0
        %v3084 = vadd.f32 %v2694, %v3083
        %v3085 = vpop.f32.mrb[0].mxu0
        %3086 = vmatprep.mubr.f32.mxu0 0.0
        %v3087 = vand.u32 %v440, 4294901760
        %3088 = vmatmul.mubr.f32.gmra.mrb[0].mxu0 %v3087
        %v3089 = vpop.f32.mrb[0].mxu0
        %v3090 = vadd.f32 %v2700, %v3089
        %v3091 = vpop.f32.mrb[0].mxu0
        %3092 = vmatprep.mubr.f32.mxu0 0.0
        %v3093 = vand.u32 %v443, 4294901760
        %3094 = vmatmul.mubr.f32.gmra.mrb[0].mxu0 %v3093
        %v3095 = vpop.f32.mrb[0].mxu0
        %v3096 = vadd.f32 %v2706, %v3095
        %v3097 = vpop.f32.mrb[0].mxu0
        %3098 = vmatprep.mubr.f32.mxu0 0.0
        %v3099 = vand.u32 %v446, 4294901760
        %3100 = vmatmul.mubr.f32.gmra.mrb[0].mxu0 %v3099
        %v3101 = vpop.f32.mrb[0].mxu0
        %v3102 = vadd.f32 %v2712, %v3101
        %v3103 = vpop.f32.mrb[0].mxu0
        %3104 = vmatprep.mubr.f32.mxu0 0.0
        %v3105 = vand.u32 %v449, 4294901760
        %3106 = vmatmul.mubr.f32.gmra.mrb[0].mxu0 %v3105
        %v3107 = vpop.f32.mrb[0].mxu0
        %v3108 = vadd.f32 %v2718, %v3107
        %v3109 = vpop.f32.mrb[0].mxu0
        %3110 = vmatprep.mubr.f32.mxu0 0.0
        %v3111 = vand.u32 %v452, 4294901760
        %3112 = vmatmul.mubr.f32.gmra.mrb[0].mxu0 %v3111
        %v3113 = vpop.f32.mrb[0].mxu0
        %v3114 = vadd.f32 %v2724, %v3113
        %v3115 = vpop.f32.mrb[0].mxu0
        %3116 = vmatprep.mubr.f32.mxu0 0.0
        %v3117 = vand.u32 %v455, 4294901760
        %3118 = vmatmul.mubr.f32.gmra.mrb[0].mxu0 %v3117
        %v3119 = vpop.f32.mrb[0].mxu0
        %v3120 = vadd.f32 %v2730, %v3119
        %v3121 = vpop.f32.mrb[0].mxu0
        %3122 = vmatprep.mubr.f32.mxu0 0.0
        %v3123 = vand.u32 %v458, 4294901760
        %3124 = vmatmul.mubr.f32.gmra.mrb[0].mxu0 %v3123
        %v3125 = vpop.f32.mrb[0].mxu0
        %v3126 = vadd.f32 %v2736, %v3125
        %v3127 = vpop.f32.mrb[0].mxu0
        %3128 = vmatprep.mubr.f32.mxu0 0.0
        %v3129 = vand.u32 %v461, 4294901760
        %3130 = vmatmul.mubr.f32.gmra.mrb[0].mxu0 %v3129
        %v3131 = vpop.f32.mrb[0].mxu0
        %v3132 = vadd.f32 %v2742, %v3131
        %v3133 = vpop.f32.mrb[0].mxu0
        %3134 = vmatprep.mubr.f32.mxu0 0.0
        %v3135 = vand.u32 %v464, 4294901760
        %3136 = vmatmul.mubr.f32.gmra.mrb[0].mxu0 %v3135
        %v3137 = vpop.f32.mrb[0].mxu0
        %v3138 = vadd.f32 %v2748, %v3137
        %v3139 = vpop.f32.mrb[0].mxu0
        %3140 = vmatprep.mubr.f32.mxu0 0.0
        %v3141 = vand.u32 %v467, 4294901760
        %3142 = vmatmul.mubr.f32.gmra.mrb[0].mxu0 %v3141
        %v3143 = vpop.f32.mrb[0].mxu0
        %v3144 = vadd.f32 %v2754, %v3143
        %v3145 = vpop.f32.mrb[0].mxu0
        %3146 = vmatprep.mubr.f32.mxu0 0.0
        %v3147 = vand.u32 %v470, 4294901760
        %3148 = vmatmul.mubr.f32.gmra.mrb[0].mxu0 %v3147
        %v3149 = vpop.f32.mrb[0].mxu0
        %v3150 = vadd.f32 %v2760, %v3149
        %v3151 = vpop.f32.mrb[0].mxu0
        %3152 = vmatprep.mubr.f32.mxu0 0.0
        %v3153 = vand.u32 %v473, 4294901760
        %3154 = vmatmul.mubr.f32.gmra.mrb[0].mxu0 %v3153
        %v3155 = vpop.f32.mrb[0].mxu0
        %v3156 = vadd.f32 %v2766, %v3155
        %v3157 = vpop.f32.mrb[0].mxu0
        %3158 = vmatprep.mubr.f32.mxu0 0.0
        %v3159 = vand.u32 %v476, 4294901760
        %3160 = vmatmul.mubr.f32.gmra.mrb[0].mxu0 %v3159
        %v3161 = vpop.f32.mrb[0].mxu0
        %v3162 = vadd.f32 %v2772, %v3161
        %v3163 = vpop.f32.mrb[0].mxu0
        %3164 = vmatprep.mubr.f32.mxu0 0.0
        %v3165 = vand.u32 %v479, 4294901760
        %3166 = vmatmul.mubr.f32.gmra.mrb[0].mxu0 %v3165
        %v3167 = vpop.f32.mrb[0].mxu0
        %v3168 = vadd.f32 %v2778, %v3167
        %v3169 = vpop.f32.mrb[0].mxu0
        %3170 = vmatprep.mubr.f32.mxu0 0.0
        %v3171 = vand.u32 %v482, 4294901760
        %3172 = vmatmul.mubr.f32.gmra.mrb[0].mxu0 %v3171
        %v3173 = vpop.f32.mrb[0].mxu0
        %v3174 = vadd.f32 %v2784, %v3173
        %v3175 = vpop.f32.mrb[0].mxu0
        %3176 = vmatprep.mubr.f32.mxu0 0.0
        %v3177 = vand.u32 %v485, 4294901760
        %3178 = vmatmul.mubr.f32.gmra.mrb[0].mxu0 %v3177
        %v3179 = vpop.f32.mrb[0].mxu0
        %v3180 = vadd.f32 %v2790, %v3179
        %v3181 = vpop.f32.mrb[0].mxu0
        %3182 = vmatprep.mubr.f32.mxu0 0.0
        %v3183 = vand.u32 %v488, 4294901760
        %3184 = vmatmul.mubr.f32.gmra.mrb[0].mxu0 %v3183
        %v3185 = vpop.f32.mrb[0].mxu0
        %v3186 = vadd.f32 %v2796, %v3185
        %v3187 = vpop.f32.mrb[0].mxu0
        %3188 = vmatprep.mubr.f32.mxu0 0.0
        %v3189 = vand.u32 %v491, 4294901760
        %3190 = vmatmul.mubr.f32.gmra.mrb[0].mxu0 %v3189
        %v3191 = vpop.f32.mrb[0].mxu0
        %v3192 = vadd.f32 %v2802, %v3191
        %v3193 = vpop.f32.mrb[0].mxu0
        %3194 = vmatprep.mubr.f32.mxu0 0.0
        %v3195 = vand.u32 %v494, 4294901760
        %3196 = vmatmul.mubr.f32.gmra.mrb[0].mxu0 %v3195
        %v3197 = vpop.f32.mrb[0].mxu0
        %v3198 = vadd.f32 %v2808, %v3197
        %v3199 = vpop.f32.mrb[0].mxu0
        %3200 = vmatprep.mubr.f32.mxu0 0.0
        %v3201 = vand.u32 %v497, 4294901760
        %3202 = vmatmul.mubr.f32.gmra.mrb[0].mxu0 %v3201
        %v3203 = vpop.f32.mrb[0].mxu0
        %v3204 = vadd.f32 %v2814, %v3203
        %v3205 = vpop.f32.mrb[0].mxu0
        %3206 = vmatprep.mubr.f32.mxu0 0.0
        %v3207 = vand.u32 %v500, 4294901760
        %3208 = vmatmul.mubr.f32.gmra.mrb[0].mxu0 %v3207
        %v3209 = vpop.f32.mrb[0].mxu0
        %v3210 = vadd.f32 %v2820, %v3209
        %v3211 = vpop.f32.mrb[0].mxu0
        %3212 = vmatprep.mubr.f32.mxu0 0.0
        %v3213 = vand.u32 %v503, 4294901760
        %3214 = vmatmul.mubr.f32.gmra.mrb[0].mxu0 %v3213
        %v3215 = vpop.f32.mrb[0].mxu0
        %v3216 = vadd.f32 %v2826, %v3215
        %v3217 = vpop.f32.mrb[0].mxu0
        %3218 = vmatprep.mubr.f32.mxu0 0.0
        %v3219 = vand.u32 %v506, 4294901760
        %3220 = vmatmul.mubr.f32.gmra.mrb[0].mxu0 %v3219
        %v3221 = vpop.f32.mrb[0].mxu0
        %v3222 = vadd.f32 %v2832, %v3221
        %v3223 = vpop.f32.mrb[0].mxu0
        %3224 = vmatprep.mubr.f32.mxu0 0.0
        %v3225 = vand.u32 %v509, 4294901760
        %3226 = vmatmul.mubr.f32.gmra.mrb[0].mxu0 %v3225
        %v3227 = vpop.f32.mrb[0].mxu0
        %v3228 = vadd.f32 %v2838, %v3227
        %v3229 = vpop.f32.mrb[0].mxu0
        %3230 = vmatprep.mubr.f32.mxu0 0.0
        %v3231 = vand.u32 %v512, 4294901760
        %3232 = vmatmul.mubr.f32.gmra.mrb[0].mxu0 %v3231
        %v3233 = vpop.f32.mrb[0].mxu0
        %v3234 = vadd.f32 %v2844, %v3233
        %v3235 = vpop.f32.mrb[0].mxu0
        %3236 = vmatprep.mubr.f32.mxu0 0.0
        %v3237 = vand.u32 %v515, 4294901760
        %3238 = vmatmul.mubr.f32.gmra.mrb[0].mxu0 %v3237
        %v3239 = vpop.f32.mrb[0].mxu0
        %v3240 = vadd.f32 %v2850, %v3239
        %v3241 = vpop.f32.mrb[0].mxu0
        %3242 = vmatprep.mubr.f32.mxu0 0.0
        %v3243 = vand.u32 %v518, 4294901760
        %3244 = vmatmul.mubr.f32.gmra.mrb[0].mxu0 %v3243
        %v3245 = vpop.f32.mrb[0].mxu0
        %v3246 = vadd.f32 %v2856, %v3245
        %v3247 = vpop.f32.mrb[0].mxu0
        %3248 = vdwg.mxu0
        %v3249 = vmax.f32 %v2928, 0.0
        %v3250 = vmax.f32 %v2934, 0.0
        %v3251 = vmax.f32 %v2940, 0.0
        %v3252 = vmax.f32 %v2946, 0.0
        %v3253 = vmax.f32 %v2952, 0.0
        %v3254 = vmax.f32 %v2958, 0.0
        %v3255 = vmax.f32 %v2964, 0.0
        %v3256 = vmax.f32 %v2970, 0.0
        %v3257 = vmax.f32 %v2976, 0.0
        %v3258 = vmax.f32 %v2982, 0.0
        %v3259 = vmax.f32 %v2988, 0.0
        %v3260 = vmax.f32 %v2994, 0.0
        %v3261 = vmax.f32 %v3000, 0.0
        %v3262 = vmax.f32 %v3006, 0.0
        %v3263 = vmax.f32 %v3012, 0.0
        %v3264 = vmax.f32 %v3018, 0.0
        %v3265 = vmax.f32 %v3024, 0.0
        %v3266 = vmax.f32 %v3030, 0.0
        %v3267 = vmax.f32 %v3036, 0.0
        %v3268 = vmax.f32 %v3042, 0.0
        %v3269 = vmax.f32 %v3048, 0.0
        %v3270 = vmax.f32 %v3054, 0.0
        %v3271 = vmax.f32 %v3060, 0.0
        %v3272 = vmax.f32 %v3066, 0.0
        %v3273 = vmax.f32 %v3072, 0.0
        %v3274 = vmax.f32 %v3078, 0.0
        %v3275 = vmax.f32 %v3084, 0.0
        %v3276 = vmax.f32 %v3090, 0.0
        %v3277 = vmax.f32 %v3096, 0.0
        %v3278 = vmax.f32 %v3102, 0.0
        %v3279 = vmax.f32 %v3108, 0.0
        %v3280 = vmax.f32 %v3114, 0.0
        %v3281 = vmax.f32 %v3120, 0.0
        %v3282 = vmax.f32 %v3126, 0.0
        %v3283 = vmax.f32 %v3132, 0.0
        %v3284 = vmax.f32 %v3138, 0.0
        %v3285 = vmax.f32 %v3144, 0.0
        %v3286 = vmax.f32 %v3150, 0.0
        %v3287 = vmax.f32 %v3156, 0.0
        %v3288 = vmax.f32 %v3162, 0.0
        %v3289 = vmax.f32 %v3168, 0.0
        %v3290 = vmax.f32 %v3174, 0.0
        %v3291 = vmax.f32 %v3180, 0.0
        %v3292 = vmax.f32 %v3186, 0.0
        %v3293 = vmax.f32 %v3192, 0.0
        %v3294 = vmax.f32 %v3198, 0.0
        %v3295 = vmax.f32 %v3204, 0.0
        %v3296 = vmax.f32 %v3210, 0.0
        %v3297 = vmax.f32 %v3216, 0.0
        %v3298 = vmax.f32 %v3222, 0.0
        %v3299 = vmax.f32 %v3228, 0.0
        %v3300 = vmax.f32 %v3234, 0.0
        %v3301 = vmax.f32 %v3240, 0.0
        %v3302 = vmax.f32 %v3246, 0.0
        %v3303 = vmin.f32 %v3249, 6.0
        %v3304 = vmin.f32 %v3250, 6.0
        %v3305 = vmin.f32 %v3251, 6.0
        %v3306 = vmin.f32 %v3252, 6.0
        %v3307 = vmin.f32 %v3253, 6.0
        %v3308 = vmin.f32 %v3254, 6.0
        %v3309 = vmin.f32 %v3255, 6.0
        %v3310 = vmin.f32 %v3256, 6.0
        %v3311 = vmin.f32 %v3257, 6.0
        %v3312 = vmin.f32 %v3258, 6.0
        %v3313 = vmin.f32 %v3259, 6.0
        %v3314 = vmin.f32 %v3260, 6.0
        %v3315 = vmin.f32 %v3261, 6.0
        %v3316 = vmin.f32 %v3262, 6.0
        %v3317 = vmin.f32 %v3263, 6.0
        %v3318 = vmin.f32 %v3264, 6.0
        %v3319 = vmin.f32 %v3265, 6.0
        %v3320 = vmin.f32 %v3266, 6.0
        %v3321 = vmin.f32 %v3267, 6.0
        %v3322 = vmin.f32 %v3268, 6.0
        %v3323 = vmin.f32 %v3269, 6.0
        %v3324 = vmin.f32 %v3270, 6.0
        %v3325 = vmin.f32 %v3271, 6.0
        %v3326 = vmin.f32 %v3272, 6.0
        %v3327 = vmin.f32 %v3273, 6.0
        %v3328 = vmin.f32 %v3274, 6.0
        %v3329 = vmin.f32 %v3275, 6.0
        %v3330 = vmin.f32 %v3276, 6.0
        %v3331 = vmin.f32 %v3277, 6.0
        %v3332 = vmin.f32 %v3278, 6.0
        %v3333 = vmin.f32 %v3279, 6.0
        %v3334 = vmin.f32 %v3280, 6.0
        %v3335 = vmin.f32 %v3281, 6.0
        %v3336 = vmin.f32 %v3282, 6.0
        %v3337 = vmin.f32 %v3283, 6.0
        %v3338 = vmin.f32 %v3284, 6.0
        %v3339 = vmin.f32 %v3285, 6.0
        %v3340 = vmin.f32 %v3286, 6.0
        %v3341 = vmin.f32 %v3287, 6.0
        %v3342 = vmin.f32 %v3288, 6.0
        %v3343 = vmin.f32 %v3289, 6.0
        %v3344 = vmin.f32 %v3290, 6.0
        %v3345 = vmin.f32 %v3291, 6.0
        %v3346 = vmin.f32 %v3292, 6.0
        %v3347 = vmin.f32 %v3293, 6.0
        %v3348 = vmin.f32 %v3294, 6.0
        %v3349 = vmin.f32 %v3295, 6.0
        %v3350 = vmin.f32 %v3296, 6.0
        %v3351 = vmin.f32 %v3297, 6.0
        %v3352 = vmin.f32 %v3298, 6.0
        %v3353 = vmin.f32 %v3299, 6.0
        %v3354 = vmin.f32 %v3300, 6.0
        %v3355 = vmin.f32 %v3301, 6.0
        %v3356 = vmin.f32 %v3302, 6.0
        %3357 = vst [vmem:[#allocation2] sm:$0xff] %v3303
        %3358 = vst [vmem:[#allocation2 + $0x8] sm:$0xff] %v3304
        %3359 = vst [vmem:[#allocation2 + $0x10] sm:$0xff] %v3305
        %3360 = vst [vmem:[#allocation2 + $0x18] sm:$0xff] %v3306
        %3361 = vst [vmem:[#allocation2 + $0x20] sm:$0xff] %v3307
        %3362 = vst [vmem:[#allocation2 + $0x28] sm:$0xff] %v3308
        %3363 = vst [vmem:[#allocation2 + $0x30] sm:$0xff] %v3309
        %3364 = vst [vmem:[#allocation2 + $0x38] sm:$0xff] %v3310
        %3365 = vst [vmem:[#allocation2 + $0x40] sm:$0xff] %v3311
        %3366 = vst [vmem:[#allocation2 + $0x48] sm:$0xff] %v3312
        %3367 = vst [vmem:[#allocation2 + $0x50] sm:$0xff] %v3313
        %3368 = vst [vmem:[#allocation2 + $0x58] sm:$0xff] %v3314
        %3369 = vst [vmem:[#allocation2 + $0x60] sm:$0xff] %v3315
        %3370 = vst [vmem:[#allocation2 + $0x68] sm:$0xff] %v3316
        %3371 = vst [vmem:[#allocation2 + $0x70] sm:$0xff] %v3317
        %3372 = vst [vmem:[#allocation2 + $0x78] sm:$0xff] %v3318
        %3373 = vst [vmem:[#allocation2 + $0x80] sm:$0xff] %v3319
        %3374 = vst [vmem:[#allocation2 + $0x88] sm:$0xff] %v3320
        %3375 = vst [vmem:[#allocation2 + $0x90] sm:$0xff] %v3321
        %3376 = vst [vmem:[#allocation2 + $0x98] sm:$0xff] %v3322
        %3377 = vst [vmem:[#allocation2 + $0xa0] sm:$0xff] %v3323
        %3378 = vst [vmem:[#allocation2 + $0xa8] sm:$0xff] %v3324
        %3379 = vst [vmem:[#allocation2 + $0xb0] sm:$0xff] %v3325
        %3380 = vst [vmem:[#allocation2 + $0xb8] sm:$0xff] %v3326
        %3381 = vst [vmem:[#allocation2 + $0xc0] sm:$0xff] %v3327
        %3382 = vst [vmem:[#allocation2 + $0xc8] sm:$0xff] %v3328
        %3383 = vst [vmem:[#allocation2 + $0xd0] sm:$0xff] %v3329
        %3384 = vst [vmem:[#allocation2 + $0xd8] sm:$0xff] %v3330
        %3385 = vst [vmem:[#allocation2 + $0xe0] sm:$0xff] %v3331
        %3386 = vst [vmem:[#allocation2 + $0xe8] sm:$0xff] %v3332
        %3387 = vst [vmem:[#allocation2 + $0xf0] sm:$0xff] %v3333
        %3388 = vst [vmem:[#allocation2 + $0xf8] sm:$0xff] %v3334
        %3389 = vst [vmem:[#allocation2 + $0x100] sm:$0xff] %v3335
        %3390 = vst [vmem:[#allocation2 + $0x108] sm:$0xff] %v3336
        %3391 = vst [vmem:[#allocation2 + $0x110] sm:$0xff] %v3337
        %3392 = vst [vmem:[#allocation2 + $0x118] sm:$0xff] %v3338
        %3393 = vst [vmem:[#allocation2 + $0x120] sm:$0xff] %v3339
        %3394 = vst [vmem:[#allocation2 + $0x128] sm:$0xff] %v3340
        %3395 = vst [vmem:[#allocation2 + $0x130] sm:$0xff] %v3341
        %3396 = vst [vmem:[#allocation2 + $0x138] sm:$0xff] %v3342
        %3397 = vst [vmem:[#allocation2 + $0x140] sm:$0xff] %v3343
        %3398 = vst [vmem:[#allocation2 + $0x148] sm:$0xff] %v3344
        %3399 = vst [vmem:[#allocation2 + $0x150] sm:$0xff] %v3345
        %3400 = vst [vmem:[#allocation2 + $0x158] sm:$0xff] %v3346
        %3401 = vst [vmem:[#allocation2 + $0x160] sm:$0xff] %v3347
        %3402 = vst [vmem:[#allocation2 + $0x168] sm:$0xff] %v3348
        %3403 = vst [vmem:[#allocation2 + $0x170] sm:$0xff] %v3349
        %3404 = vst [vmem:[#allocation2 + $0x178] sm:$0xff] %v3350
        %3405 = vst [vmem:[#allocation2 + $0x180] sm:$0xff] %v3351
        %3406 = vst [vmem:[#allocation2 + $0x188] sm:$0xff] %v3352
        %3407 = vst [vmem:[#allocation2 + $0x190] sm:$0xff] %v3353
        %3408 = vst [vmem:[#allocation2 + $0x198] sm:$0xff] %v3354
        %3409 = vst [vmem:[#allocation2 + $0x1a0] sm:$0xff] %v3355
        %3410 = vst [vmem:[#allocation2 + $0x1a8] sm:$0xff] %v3356
        %3411 = vst [vmem:[#allocation2] sm:$0x1] 0.0
        %3412 = vst [vmem:[#allocation2 + $0x18] sm:$0x1] 0.0
        %3413 = vst [vmem:[#allocation2 + $0x30] sm:$0x1] 0.0
        %3414 = vst [vmem:[#allocation2 + $0x48] sm:$0x1] 0.0
        %3415 = vst [vmem:[#allocation2 + $0x60] sm:$0x1] 0.0
        %3416 = vst [vmem:[#allocation2 + $0x78] sm:$0x1] 0.0
        %3417 = vst [vmem:[#allocation2 + $0x90] sm:$0x1] 0.0
        %3418 = vst [vmem:[#allocation2 + $0xa8] sm:$0x1] 0.0
        %3419 = vst [vmem:[#allocation2 + $0xc0] sm:$0x1] 0.0
        %3420 = vst [vmem:[#allocation2 + $0xd8] sm:$0x1] 0.0
        %3421 = vst [vmem:[#allocation2 + $0xf0] sm:$0x1] 0.0
        %3422 = vst [vmem:[#allocation2 + $0x108] sm:$0x1] 0.0
        %3423 = vst [vmem:[#allocation2 + $0x120] sm:$0x1] 0.0
        %3424 = vst [vmem:[#allocation2 + $0x138] sm:$0x1] 0.0
        %3425 = vst [vmem:[#allocation2 + $0x150] sm:$0x1] 0.0
        %3426 = vst [vmem:[#allocation2 + $0x168] sm:$0x1] 0.0
        %3427 = vst [vmem:[#allocation2 + $0x180] sm:$0x1] 0.0
        %3428 = vst [vmem:[#allocation2 + $0x198] sm:$0x1] 0.0
        %3429 = vst [vmem:[#allocation2 + $0x11] sm:$0x7f] 0.0
        %3430 = vst [vmem:[#allocation2 + $0x29] sm:$0x7f] 0.0
        %3431 = vst [vmem:[#allocation2 + $0x41] sm:$0x7f] 0.0
        %3432 = vst [vmem:[#allocation2 + $0x59] sm:$0x7f] 0.0
        %3433 = vst [vmem:[#allocation2 + $0x71] sm:$0x7f] 0.0
        %3434 = vst [vmem:[#allocation2 + $0x89] sm:$0x7f] 0.0
        %3435 = vst [vmem:[#allocation2 + $0xa1] sm:$0x7f] 0.0
        %3436 = vst [vmem:[#allocation2 + $0xb9] sm:$0x7f] 0.0
        %3437 = vst [vmem:[#allocation2 + $0xd1] sm:$0x7f] 0.0
        %3438 = vst [vmem:[#allocation2 + $0xe9] sm:$0x7f] 0.0
        %3439 = vst [vmem:[#allocation2 + $0x101] sm:$0x7f] 0.0
        %3440 = vst [vmem:[#allocation2 + $0x119] sm:$0x7f] 0.0
        %3441 = vst [vmem:[#allocation2 + $0x131] sm:$0x7f] 0.0
        %3442 = vst [vmem:[#allocation2 + $0x149] sm:$0x7f] 0.0
        %3443 = vst [vmem:[#allocation2 + $0x161] sm:$0x7f] 0.0
        %3444 = vst [vmem:[#allocation2 + $0x179] sm:$0x7f] 0.0
        %3445 = vst [vmem:[#allocation2 + $0x191] sm:$0x7f] 0.0
        %3446 = vst [vmem:[#allocation2 + $0x1a9] sm:$0x7f] 0.0
        %p3447 = scmp.eq.s32.totalorder %s26, 0
        // Predicated region
        $region49: #{tpu_custom_call.1} parent=47 // pred_check
          %p3448 = pneg %p3447
        $region50: #{tpu_custom_call.1} parent=47 // pred_check_branch
          %3450 = sbr.rel (%p3448) target = $region52
        $region51: #{tpu_custom_call.1} parent=47 // pred_region
          %3451 = vst [vmem:[#allocation2] sm:$0xff] 0.0
          %3452 = vst [vmem:[#allocation2 + $0x8] sm:$0xff] 0.0
          %3453 = vst [vmem:[#allocation2 + $0x10] sm:$0xff] 0.0
          %s3454 = scalar_lea.vmem [#allocation2], 408
          %3455 = vst [vmem:[%s3454] sm:$0xff] 0.0
          %3456 = vst [vmem:[%s3454 + $0x8] sm:$0xff] 0.0
          %3457 = vst [vmem:[%s3454 + $0x10] sm:$0xff] 0.0
        $region52: #{tpu_custom_call.1} parent=47 // pred_fallthru
          _
        %v3458 = vld [vmem:[#allocation2] sm:$0xff]
        %v3459 = vld [vmem:[#allocation2 + $0x8] sm:$0xff]
        %v3460 = vld [vmem:[#allocation2 + $0x18] sm:$0xff]
        %v3461 = vld [vmem:[#allocation2 + $0x20] sm:$0xff]
        %v3462 = vld [vmem:[#allocation2 + $0x30] sm:$0xff]
        %v3463 = vld [vmem:[#allocation2 + $0x38] sm:$0xff]
        %v3464 = vld [vmem:[#allocation2 + $0x48] sm:$0xff]
        %v3465 = vld [vmem:[#allocation2 + $0x50] sm:$0xff]
        %v3466 = vld [vmem:[#allocation2 + $0x60] sm:$0xff]
        %v3467 = vld [vmem:[#allocation2 + $0x68] sm:$0xff]
        %v3468 = vld [vmem:[#allocation2 + $0x78] sm:$0xff]
        %v3469 = vld [vmem:[#allocation2 + $0x80] sm:$0xff]
        %v3470 = vld [vmem:[#allocation2 + $0x90] sm:$0xff]
        %v3471 = vld [vmem:[#allocation2 + $0x98] sm:$0xff]
        %v3472 = vld [vmem:[#allocation2 + $0xa8] sm:$0xff]
        %v3473 = vld [vmem:[#allocation2 + $0xb0] sm:$0xff]
        %v3474 = vld [vmem:[#allocation2 + $0xc0] sm:$0xff]
        %v3475 = vld [vmem:[#allocation2 + $0xc8] sm:$0xff]
        %v3476 = vld [vmem:[#allocation2 + $0xd8] sm:$0xff]
        %v3477 = vld [vmem:[#allocation2 + $0xe0] sm:$0xff]
        %v3478 = vld [vmem:[#allocation2 + $0xf0] sm:$0xff]
        %v3479 = vld [vmem:[#allocation2 + $0xf8] sm:$0xff]
        %v3480 = vld [vmem:[#allocation2 + $0x108] sm:$0xff]
        %v3481 = vld [vmem:[#allocation2 + $0x110] sm:$0xff]
        %v3482 = vld [vmem:[#allocation2 + $0x120] sm:$0xff]
        %v3483 = vld [vmem:[#allocation2 + $0x128] sm:$0xff]
        %v3484 = vld [vmem:[#allocation2 + $0x138] sm:$0xff]
        %v3485 = vld [vmem:[#allocation2 + $0x140] sm:$0xff]
        %v3486 = vld [vmem:[#allocation2 + $0x150] sm:$0xff]
        %v3487 = vld [vmem:[#allocation2 + $0x158] sm:$0xff]
        %v3488 = vld [vmem:[#allocation2 + $0x168] sm:$0xff]
        %v3489 = vld [vmem:[#allocation2 + $0x170] sm:$0xff]
        %v3490 = vld [vmem:[%s3] sm:$0x1]
        %v3491 = vlaneseq
        %v3492 = vshrl.u32 %v3491, 7
        %v3493 = vsub.s32 0, %v3492
        %v3494 = vrot.slane %v3490, %v3493
        %v3495 = vmul.f32 %v3458, %v3494
        %v3496 = vmul.f32 %v3459, %v3494
        %v3497 = vmul.f32 %v3460, %v3494
        %v3498 = vmul.f32 %v3461, %v3494
        %v3499 = vmul.f32 %v3462, %v3494
        %v3500 = vmul.f32 %v3463, %v3494
        %v3501 = vmul.f32 %v3464, %v3494
        %v3502 = vmul.f32 %v3465, %v3494
        %v3503 = vmul.f32 %v3466, %v3494
        %v3504 = vmul.f32 %v3467, %v3494
        %v3505 = vmul.f32 %v3468, %v3494
        %v3506 = vmul.f32 %v3469, %v3494
        %v3507 = vmul.f32 %v3470, %v3494
        %v3508 = vmul.f32 %v3471, %v3494
        %v3509 = vmul.f32 %v3472, %v3494
        %v3510 = vmul.f32 %v3473, %v3494
        %v3511 = vmul.f32 %v3474, %v3494
        %v3512 = vmul.f32 %v3475, %v3494
        %v3513 = vmul.f32 %v3476, %v3494
        %v3514 = vmul.f32 %v3477, %v3494
        %v3515 = vmul.f32 %v3478, %v3494
        %v3516 = vmul.f32 %v3479, %v3494
        %v3517 = vmul.f32 %v3480, %v3494
        %v3518 = vmul.f32 %v3481, %v3494
        %v3519 = vmul.f32 %v3482, %v3494
        %v3520 = vmul.f32 %v3483, %v3494
        %v3521 = vmul.f32 %v3484, %v3494
        %v3522 = vmul.f32 %v3485, %v3494
        %v3523 = vmul.f32 %v3486, %v3494
        %v3524 = vmul.f32 %v3487, %v3494
        %v3525 = vmul.f32 %v3488, %v3494
        %v3526 = vmul.f32 %v3489, %v3494
        %v3527 = vadd.f32 %v3495, 0.0
        %v3528 = vadd.f32 %v3496, 0.0
        %v3529 = vadd.f32 %v3497, 0.0
        %v3530 = vadd.f32 %v3498, 0.0
        %v3531 = vadd.f32 %v3499, 0.0
        %v3532 = vadd.f32 %v3500, 0.0
        %v3533 = vadd.f32 %v3501, 0.0
        %v3534 = vadd.f32 %v3502, 0.0
        %v3535 = vadd.f32 %v3503, 0.0
        %v3536 = vadd.f32 %v3504, 0.0
        %v3537 = vadd.f32 %v3505, 0.0
        %v3538 = vadd.f32 %v3506, 0.0
        %v3539 = vadd.f32 %v3507, 0.0
        %v3540 = vadd.f32 %v3508, 0.0
        %v3541 = vadd.f32 %v3509, 0.0
        %v3542 = vadd.f32 %v3510, 0.0
        %v3543 = vadd.f32 %v3511, 0.0
        %v3544 = vadd.f32 %v3512, 0.0
        %v3545 = vadd.f32 %v3513, 0.0
        %v3546 = vadd.f32 %v3514, 0.0
        %v3547 = vadd.f32 %v3515, 0.0
        %v3548 = vadd.f32 %v3516, 0.0
        %v3549 = vadd.f32 %v3517, 0.0
        %v3550 = vadd.f32 %v3518, 0.0
        %v3551 = vadd.f32 %v3519, 0.0
        %v3552 = vadd.f32 %v3520, 0.0
        %v3553 = vadd.f32 %v3521, 0.0
        %v3554 = vadd.f32 %v3522, 0.0
        %v3555 = vadd.f32 %v3523, 0.0
        %v3556 = vadd.f32 %v3524, 0.0
        %v3557 = vadd.f32 %v3525, 0.0
        %v3558 = vadd.f32 %v3526, 0.0
        %v3559 = vld [vmem:[#allocation2 + $0x1] sm:$0xff]
        %v3560 = vld [vmem:[#allocation2 + $0x9] sm:$0xff]
        %v3561 = vld [vmem:[#allocation2 + $0x19] sm:$0xff]
        %v3562 = vld [vmem:[#allocation2 + $0x21] sm:$0xff]
        %v3563 = vld [vmem:[#allocation2 + $0x31] sm:$0xff]
        %v3564 = vld [vmem:[#allocation2 + $0x39] sm:$0xff]
        %v3565 = vld [vmem:[#allocation2 + $0x49] sm:$0xff]
        %v3566 = vld [vmem:[#allocation2 + $0x51] sm:$0xff]
        %v3567 = vld [vmem:[#allocation2 + $0x61] sm:$0xff]
        %v3568 = vld [vmem:[#allocation2 + $0x69] sm:$0xff]
        %v3569 = vld [vmem:[#allocation2 + $0x79] sm:$0xff]
        %v3570 = vld [vmem:[#allocation2 + $0x81] sm:$0xff]
        %v3571 = vld [vmem:[#allocation2 + $0x91] sm:$0xff]
        %v3572 = vld [vmem:[#allocation2 + $0x99] sm:$0xff]
        %v3573 = vld [vmem:[#allocation2 + $0xa9] sm:$0xff]
        %v3574 = vld [vmem:[#allocation2 + $0xb1] sm:$0xff]
        %v3575 = vld [vmem:[#allocation2 + $0xc1] sm:$0xff]
        %v3576 = vld [vmem:[#allocation2 + $0xc9] sm:$0xff]
        %v3577 = vld [vmem:[#allocation2 + $0xd9] sm:$0xff]
        %v3578 = vld [vmem:[#allocation2 + $0xe1] sm:$0xff]
        %v3579 = vld [vmem:[#allocation2 + $0xf1] sm:$0xff]
        %v3580 = vld [vmem:[#allocation2 + $0xf9] sm:$0xff]
        %v3581 = vld [vmem:[#allocation2 + $0x109] sm:$0xff]
        %v3582 = vld [vmem:[#allocation2 + $0x111] sm:$0xff]
        %v3583 = vld [vmem:[#allocation2 + $0x121] sm:$0xff]
        %v3584 = vld [vmem:[#allocation2 + $0x129] sm:$0xff]
        %v3585 = vld [vmem:[#allocation2 + $0x139] sm:$0xff]
        %v3586 = vld [vmem:[#allocation2 + $0x141] sm:$0xff]
        %v3587 = vld [vmem:[#allocation2 + $0x151] sm:$0xff]
        %v3588 = vld [vmem:[#allocation2 + $0x159] sm:$0xff]
        %v3589 = vld [vmem:[#allocation2 + $0x169] sm:$0xff]
        %v3590 = vld [vmem:[#allocation2 + $0x171] sm:$0xff]
        %v3591 = vld [vmem:[%s3 + $0x1] sm:$0x1]
        %v3592 = vlaneseq
        %v3593 = vshrl.u32 %v3592, 7
        %v3594 = vsub.s32 0, %v3593
        %v3595 = vrot.slane %v3591, %v3594
        %v3596 = vmul.f32 %v3559, %v3595
        %v3597 = vmul.f32 %v3560, %v3595
        %v3598 = vmul.f32 %v3561, %v3595
        %v3599 = vmul.f32 %v3562, %v3595
        %v3600 = vmul.f32 %v3563, %v3595
        %v3601 = vmul.f32 %v3564, %v3595
        %v3602 = vmul.f32 %v3565, %v3595
        %v3603 = vmul.f32 %v3566, %v3595
        %v3604 = vmul.f32 %v3567, %v3595
        %v3605 = vmul.f32 %v3568, %v3595
        %v3606 = vmul.f32 %v3569, %v3595
        %v3607 = vmul.f32 %v3570, %v3595
        %v3608 = vmul.f32 %v3571, %v3595
        %v3609 = vmul.f32 %v3572, %v3595
        %v3610 = vmul.f32 %v3573, %v3595
        %v3611 = vmul.f32 %v3574, %v3595
        %v3612 = vmul.f32 %v3575, %v3595
        %v3613 = vmul.f32 %v3576, %v3595
        %v3614 = vmul.f32 %v3577, %v3595
        %v3615 = vmul.f32 %v3578, %v3595
        %v3616 = vmul.f32 %v3579, %v3595
        %v3617 = vmul.f32 %v3580, %v3595
        %v3618 = vmul.f32 %v3581, %v3595
        %v3619 = vmul.f32 %v3582, %v3595
        %v3620 = vmul.f32 %v3583, %v3595
        %v3621 = vmul.f32 %v3584, %v3595
        %v3622 = vmul.f32 %v3585, %v3595
        %v3623 = vmul.f32 %v3586, %v3595
        %v3624 = vmul.f32 %v3587, %v3595
        %v3625 = vmul.f32 %v3588, %v3595
        %v3626 = vmul.f32 %v3589, %v3595
        %v3627 = vmul.f32 %v3590, %v3595
        %v3628 = vadd.f32 %v3527, %v3596
        %v3629 = vadd.f32 %v3528, %v3597
        %v3630 = vadd.f32 %v3529, %v3598
        %v3631 = vadd.f32 %v3530, %v3599
        %v3632 = vadd.f32 %v3531, %v3600
        %v3633 = vadd.f32 %v3532, %v3601
        %v3634 = vadd.f32 %v3533, %v3602
        %v3635 = vadd.f32 %v3534, %v3603
        %v3636 = vadd.f32 %v3535, %v3604
        %v3637 = vadd.f32 %v3536, %v3605
        %v3638 = vadd.f32 %v3537, %v3606
        %v3639 = vadd.f32 %v3538, %v3607
        %v3640 = vadd.f32 %v3539, %v3608
        %v3641 = vadd.f32 %v3540, %v3609
        %v3642 = vadd.f32 %v3541, %v3610
        %v3643 = vadd.f32 %v3542, %v3611
        %v3644 = vadd.f32 %v3543, %v3612
        %v3645 = vadd.f32 %v3544, %v3613
        %v3646 = vadd.f32 %v3545, %v3614
        %v3647 = vadd.f32 %v3546, %v3615
        %v3648 = vadd.f32 %v3547, %v3616
        %v3649 = vadd.f32 %v3548, %v3617
        %v3650 = vadd.f32 %v3549, %v3618
        %v3651 = vadd.f32 %v3550, %v3619
        %v3652 = vadd.f32 %v3551, %v3620
        %v3653 = vadd.f32 %v3552, %v3621
        %v3654 = vadd.f32 %v3553, %v3622
        %v3655 = vadd.f32 %v3554, %v3623
        %v3656 = vadd.f32 %v3555, %v3624
        %v3657 = vadd.f32 %v3556, %v3625
        %v3658 = vadd.f32 %v3557, %v3626
        %v3659 = vadd.f32 %v3558, %v3627
        %v3660 = vld [vmem:[#allocation2 + $0x2] sm:$0xff]
        %v3661 = vld [vmem:[#allocation2 + $0xa] sm:$0xff]
        %v3662 = vld [vmem:[#allocation2 + $0x1a] sm:$0xff]
        %v3663 = vld [vmem:[#allocation2 + $0x22] sm:$0xff]
        %v3664 = vld [vmem:[#allocation2 + $0x32] sm:$0xff]
        %v3665 = vld [vmem:[#allocation2 + $0x3a] sm:$0xff]
        %v3666 = vld [vmem:[#allocation2 + $0x4a] sm:$0xff]
        %v3667 = vld [vmem:[#allocation2 + $0x52] sm:$0xff]
        %v3668 = vld [vmem:[#allocation2 + $0x62] sm:$0xff]
        %v3669 = vld [vmem:[#allocation2 + $0x6a] sm:$0xff]
        %v3670 = vld [vmem:[#allocation2 + $0x7a] sm:$0xff]
        %v3671 = vld [vmem:[#allocation2 + $0x82] sm:$0xff]
        %v3672 = vld [vmem:[#allocation2 + $0x92] sm:$0xff]
        %v3673 = vld [vmem:[#allocation2 + $0x9a] sm:$0xff]
        %v3674 = vld [vmem:[#allocation2 + $0xaa] sm:$0xff]
        %v3675 = vld [vmem:[#allocation2 + $0xb2] sm:$0xff]
        %v3676 = vld [vmem:[#allocation2 + $0xc2] sm:$0xff]
        %v3677 = vld [vmem:[#allocation2 + $0xca] sm:$0xff]
        %v3678 = vld [vmem:[#allocation2 + $0xda] sm:$0xff]
        %v3679 = vld [vmem:[#allocation2 + $0xe2] sm:$0xff]
        %v3680 = vld [vmem:[#allocation2 + $0xf2] sm:$0xff]
        %v3681 = vld [vmem:[#allocation2 + $0xfa] sm:$0xff]
        %v3682 = vld [vmem:[#allocation2 + $0x10a] sm:$0xff]
        %v3683 = vld [vmem:[#allocation2 + $0x112] sm:$0xff]
        %v3684 = vld [vmem:[#allocation2 + $0x122] sm:$0xff]
        %v3685 = vld [vmem:[#allocation2 + $0x12a] sm:$0xff]
        %v3686 = vld [vmem:[#allocation2 + $0x13a] sm:$0xff]
        %v3687 = vld [vmem:[#allocation2 + $0x142] sm:$0xff]
        %v3688 = vld [vmem:[#allocation2 + $0x152] sm:$0xff]
        %v3689 = vld [vmem:[#allocation2 + $0x15a] sm:$0xff]
        %v3690 = vld [vmem:[#allocation2 + $0x16a] sm:$0xff]
        %v3691 = vld [vmem:[#allocation2 + $0x172] sm:$0xff]
        %v3692 = vld [vmem:[%s3 + $0x2] sm:$0x1]
        %v3693 = vlaneseq
        %v3694 = vshrl.u32 %v3693, 7
        %v3695 = vsub.s32 0, %v3694
        %v3696 = vrot.slane %v3692, %v3695
        %v3697 = vmul.f32 %v3660, %v3696
        %v3698 = vmul.f32 %v3661, %v3696
        %v3699 = vmul.f32 %v3662, %v3696
        %v3700 = vmul.f32 %v3663, %v3696
        %v3701 = vmul.f32 %v3664, %v3696
        %v3702 = vmul.f32 %v3665, %v3696
        %v3703 = vmul.f32 %v3666, %v3696
        %v3704 = vmul.f32 %v3667, %v3696
        %v3705 = vmul.f32 %v3668, %v3696
        %v3706 = vmul.f32 %v3669, %v3696
        %v3707 = vmul.f32 %v3670, %v3696
        %v3708 = vmul.f32 %v3671, %v3696
        %v3709 = vmul.f32 %v3672, %v3696
        %v3710 = vmul.f32 %v3673, %v3696
        %v3711 = vmul.f32 %v3674, %v3696
        %v3712 = vmul.f32 %v3675, %v3696
        %v3713 = vmul.f32 %v3676, %v3696
        %v3714 = vmul.f32 %v3677, %v3696
        %v3715 = vmul.f32 %v3678, %v3696
        %v3716 = vmul.f32 %v3679, %v3696
        %v3717 = vmul.f32 %v3680, %v3696
        %v3718 = vmul.f32 %v3681, %v3696
        %v3719 = vmul.f32 %v3682, %v3696
        %v3720 = vmul.f32 %v3683, %v3696
        %v3721 = vmul.f32 %v3684, %v3696
        %v3722 = vmul.f32 %v3685, %v3696
        %v3723 = vmul.f32 %v3686, %v3696
        %v3724 = vmul.f32 %v3687, %v3696
        %v3725 = vmul.f32 %v3688, %v3696
        %v3726 = vmul.f32 %v3689, %v3696
        %v3727 = vmul.f32 %v3690, %v3696
        %v3728 = vmul.f32 %v3691, %v3696
        %v3729 = vadd.f32 %v3628, %v3697
        %v3730 = vadd.f32 %v3629, %v3698
        %v3731 = vadd.f32 %v3630, %v3699
        %v3732 = vadd.f32 %v3631, %v3700
        %v3733 = vadd.f32 %v3632, %v3701
        %v3734 = vadd.f32 %v3633, %v3702
        %v3735 = vadd.f32 %v3634, %v3703
        %v3736 = vadd.f32 %v3635, %v3704
        %v3737 = vadd.f32 %v3636, %v3705
        %v3738 = vadd.f32 %v3637, %v3706
        %v3739 = vadd.f32 %v3638, %v3707
        %v3740 = vadd.f32 %v3639, %v3708
        %v3741 = vadd.f32 %v3640, %v3709
        %v3742 = vadd.f32 %v3641, %v3710
        %v3743 = vadd.f32 %v3642, %v3711
        %v3744 = vadd.f32 %v3643, %v3712
        %v3745 = vadd.f32 %v3644, %v3713
        %v3746 = vadd.f32 %v3645, %v3714
        %v3747 = vadd.f32 %v3646, %v3715
        %v3748 = vadd.f32 %v3647, %v3716
        %v3749 = vadd.f32 %v3648, %v3717
        %v3750 = vadd.f32 %v3649, %v3718
        %v3751 = vadd.f32 %v3650, %v3719
        %v3752 = vadd.f32 %v3651, %v3720
        %v3753 = vadd.f32 %v3652, %v3721
        %v3754 = vadd.f32 %v3653, %v3722
        %v3755 = vadd.f32 %v3654, %v3723
        %v3756 = vadd.f32 %v3655, %v3724
        %v3757 = vadd.f32 %v3656, %v3725
        %v3758 = vadd.f32 %v3657, %v3726
        %v3759 = vadd.f32 %v3658, %v3727
        %v3760 = vadd.f32 %v3659, %v3728
        %s3761 = scalar_lea.vmem [#allocation2], 24
        %v3762 = vld [vmem:[%s3761] sm:$0xff]
        %v3763 = vld [vmem:[%s3761 + $0x8] sm:$0xff]
        %v3764 = vld [vmem:[%s3761 + $0x18] sm:$0xff]
        %v3765 = vld [vmem:[%s3761 + $0x20] sm:$0xff]
        %v3766 = vld [vmem:[%s3761 + $0x30] sm:$0xff]
        %v3767 = vld [vmem:[%s3761 + $0x38] sm:$0xff]
        %v3768 = vld [vmem:[%s3761 + $0x48] sm:$0xff]
        %v3769 = vld [vmem:[%s3761 + $0x50] sm:$0xff]
        %v3770 = vld [vmem:[%s3761 + $0x60] sm:$0xff]
        %v3771 = vld [vmem:[%s3761 + $0x68] sm:$0xff]
        %v3772 = vld [vmem:[%s3761 + $0x78] sm:$0xff]
        %v3773 = vld [vmem:[%s3761 + $0x80] sm:$0xff]
        %v3774 = vld [vmem:[%s3761 + $0x90] sm:$0xff]
        %v3775 = vld [vmem:[%s3761 + $0x98] sm:$0xff]
        %v3776 = vld [vmem:[%s3761 + $0xa8] sm:$0xff]
        %v3777 = vld [vmem:[%s3761 + $0xb0] sm:$0xff]
        %v3778 = vld [vmem:[%s3761 + $0xc0] sm:$0xff]
        %v3779 = vld [vmem:[%s3761 + $0xc8] sm:$0xff]
        %v3780 = vld [vmem:[%s3761 + $0xd8] sm:$0xff]
        %v3781 = vld [vmem:[%s3761 + $0xe0] sm:$0xff]
        %v3782 = vld [vmem:[%s3761 + $0xf0] sm:$0xff]
        %v3783 = vld [vmem:[%s3761 + $0xf8] sm:$0xff]
        %v3784 = vld [vmem:[%s3761 + $0x108] sm:$0xff]
        %v3785 = vld [vmem:[%s3761 + $0x110] sm:$0xff]
        %v3786 = vld [vmem:[%s3761 + $0x120] sm:$0xff]
        %v3787 = vld [vmem:[%s3761 + $0x128] sm:$0xff]
        %v3788 = vld [vmem:[%s3761 + $0x138] sm:$0xff]
        %v3789 = vld [vmem:[%s3761 + $0x140] sm:$0xff]
        %v3790 = vld [vmem:[%s3761 + $0x150] sm:$0xff]
        %v3791 = vld [vmem:[%s3761 + $0x158] sm:$0xff]
        %v3792 = vld [vmem:[%s3761 + $0x168] sm:$0xff]
        %v3793 = vld [vmem:[%s3761 + $0x170] sm:$0xff]
        %v3794 = vld [vmem:[%s3 + $0x3] sm:$0x1]
        %v3795 = vlaneseq
        %v3796 = vshrl.u32 %v3795, 7
        %v3797 = vsub.s32 0, %v3796
        %v3798 = vrot.slane %v3794, %v3797
        %v3799 = vmul.f32 %v3762, %v3798
        %v3800 = vmul.f32 %v3763, %v3798
        %v3801 = vmul.f32 %v3764, %v3798
        %v3802 = vmul.f32 %v3765, %v3798
        %v3803 = vmul.f32 %v3766, %v3798
        %v3804 = vmul.f32 %v3767, %v3798
        %v3805 = vmul.f32 %v3768, %v3798
        %v3806 = vmul.f32 %v3769, %v3798
        %v3807 = vmul.f32 %v3770, %v3798
        %v3808 = vmul.f32 %v3771, %v3798
        %v3809 = vmul.f32 %v3772, %v3798
        %v3810 = vmul.f32 %v3773, %v3798
        %v3811 = vmul.f32 %v3774, %v3798
        %v3812 = vmul.f32 %v3775, %v3798
        %v3813 = vmul.f32 %v3776, %v3798
        %v3814 = vmul.f32 %v3777, %v3798
        %v3815 = vmul.f32 %v3778, %v3798
        %v3816 = vmul.f32 %v3779, %v3798
        %v3817 = vmul.f32 %v3780, %v3798
        %v3818 = vmul.f32 %v3781, %v3798
        %v3819 = vmul.f32 %v3782, %v3798
        %v3820 = vmul.f32 %v3783, %v3798
        %v3821 = vmul.f32 %v3784, %v3798
        %v3822 = vmul.f32 %v3785, %v3798
        %v3823 = vmul.f32 %v3786, %v3798
        %v3824 = vmul.f32 %v3787, %v3798
        %v3825 = vmul.f32 %v3788, %v3798
        %v3826 = vmul.f32 %v3789, %v3798
        %v3827 = vmul.f32 %v3790, %v3798
        %v3828 = vmul.f32 %v3791, %v3798
        %v3829 = vmul.f32 %v3792, %v3798
        %v3830 = vmul.f32 %v3793, %v3798
        %v3831 = vadd.f32 %v3729, %v3799
        %v3832 = vadd.f32 %v3730, %v3800
        %v3833 = vadd.f32 %v3731, %v3801
        %v3834 = vadd.f32 %v3732, %v3802
        %v3835 = vadd.f32 %v3733, %v3803
        %v3836 = vadd.f32 %v3734, %v3804
        %v3837 = vadd.f32 %v3735, %v3805
        %v3838 = vadd.f32 %v3736, %v3806
        %v3839 = vadd.f32 %v3737, %v3807
        %v3840 = vadd.f32 %v3738, %v3808
        %v3841 = vadd.f32 %v3739, %v3809
        %v3842 = vadd.f32 %v3740, %v3810
        %v3843 = vadd.f32 %v3741, %v3811
        %v3844 = vadd.f32 %v3742, %v3812
        %v3845 = vadd.f32 %v3743, %v3813
        %v3846 = vadd.f32 %v3744, %v3814
        %v3847 = vadd.f32 %v3745, %v3815
        %v3848 = vadd.f32 %v3746, %v3816
        %v3849 = vadd.f32 %v3747, %v3817
        %v3850 = vadd.f32 %v3748, %v3818
        %v3851 = vadd.f32 %v3749, %v3819
        %v3852 = vadd.f32 %v3750, %v3820
        %v3853 = vadd.f32 %v3751, %v3821
        %v3854 = vadd.f32 %v3752, %v3822
        %v3855 = vadd.f32 %v3753, %v3823
        %v3856 = vadd.f32 %v3754, %v3824
        %v3857 = vadd.f32 %v3755, %v3825
        %v3858 = vadd.f32 %v3756, %v3826
        %v3859 = vadd.f32 %v3757, %v3827
        %v3860 = vadd.f32 %v3758, %v3828
        %v3861 = vadd.f32 %v3759, %v3829
        %v3862 = vadd.f32 %v3760, %v3830
        %v3863 = vld [vmem:[%s3761 + $0x1] sm:$0xff]
        %v3864 = vld [vmem:[%s3761 + $0x9] sm:$0xff]
        %v3865 = vld [vmem:[%s3761 + $0x19] sm:$0xff]
        %v3866 = vld [vmem:[%s3761 + $0x21] sm:$0xff]
        %v3867 = vld [vmem:[%s3761 + $0x31] sm:$0xff]
        %v3868 = vld [vmem:[%s3761 + $0x39] sm:$0xff]
        %v3869 = vld [vmem:[%s3761 + $0x49] sm:$0xff]
        %v3870 = vld [vmem:[%s3761 + $0x51] sm:$0xff]
        %v3871 = vld [vmem:[%s3761 + $0x61] sm:$0xff]
        %v3872 = vld [vmem:[%s3761 + $0x69] sm:$0xff]
        %v3873 = vld [vmem:[%s3761 + $0x79] sm:$0xff]
        %v3874 = vld [vmem:[%s3761 + $0x81] sm:$0xff]
        %v3875 = vld [vmem:[%s3761 + $0x91] sm:$0xff]
        %v3876 = vld [vmem:[%s3761 + $0x99] sm:$0xff]
        %v3877 = vld [vmem:[%s3761 + $0xa9] sm:$0xff]
        %v3878 = vld [vmem:[%s3761 + $0xb1] sm:$0xff]
        %v3879 = vld [vmem:[%s3761 + $0xc1] sm:$0xff]
        %v3880 = vld [vmem:[%s3761 + $0xc9] sm:$0xff]
        %v3881 = vld [vmem:[%s3761 + $0xd9] sm:$0xff]
        %v3882 = vld [vmem:[%s3761 + $0xe1] sm:$0xff]
        %v3883 = vld [vmem:[%s3761 + $0xf1] sm:$0xff]
        %v3884 = vld [vmem:[%s3761 + $0xf9] sm:$0xff]
        %v3885 = vld [vmem:[%s3761 + $0x109] sm:$0xff]
        %v3886 = vld [vmem:[%s3761 + $0x111] sm:$0xff]
        %v3887 = vld [vmem:[%s3761 + $0x121] sm:$0xff]
        %v3888 = vld [vmem:[%s3761 + $0x129] sm:$0xff]
        %v3889 = vld [vmem:[%s3761 + $0x139] sm:$0xff]
        %v3890 = vld [vmem:[%s3761 + $0x141] sm:$0xff]
        %v3891 = vld [vmem:[%s3761 + $0x151] sm:$0xff]
        %v3892 = vld [vmem:[%s3761 + $0x159] sm:$0xff]
        %v3893 = vld [vmem:[%s3761 + $0x169] sm:$0xff]
        %v3894 = vld [vmem:[%s3761 + $0x171] sm:$0xff]
        %v3895 = vld [vmem:[%s3 + $0x4] sm:$0x1]
        %v3896 = vlaneseq
        %v3897 = vshrl.u32 %v3896, 7
        %v3898 = vsub.s32 0, %v3897
        %v3899 = vrot.slane %v3895, %v3898
        %v3900 = vmul.f32 %v3863, %v3899
        %v3901 = vmul.f32 %v3864, %v3899
        %v3902 = vmul.f32 %v3865, %v3899
        %v3903 = vmul.f32 %v3866, %v3899
        %v3904 = vmul.f32 %v3867, %v3899
        %v3905 = vmul.f32 %v3868, %v3899
        %v3906 = vmul.f32 %v3869, %v3899
        %v3907 = vmul.f32 %v3870, %v3899
        %v3908 = vmul.f32 %v3871, %v3899
        %v3909 = vmul.f32 %v3872, %v3899
        %v3910 = vmul.f32 %v3873, %v3899
        %v3911 = vmul.f32 %v3874, %v3899
        %v3912 = vmul.f32 %v3875, %v3899
        %v3913 = vmul.f32 %v3876, %v3899
        %v3914 = vmul.f32 %v3877, %v3899
        %v3915 = vmul.f32 %v3878, %v3899
        %v3916 = vmul.f32 %v3879, %v3899
        %v3917 = vmul.f32 %v3880, %v3899
        %v3918 = vmul.f32 %v3881, %v3899
        %v3919 = vmul.f32 %v3882, %v3899
        %v3920 = vmul.f32 %v3883, %v3899
        %v3921 = vmul.f32 %v3884, %v3899
        %v3922 = vmul.f32 %v3885, %v3899
        %v3923 = vmul.f32 %v3886, %v3899
        %v3924 = vmul.f32 %v3887, %v3899
        %v3925 = vmul.f32 %v3888, %v3899
        %v3926 = vmul.f32 %v3889, %v3899
        %v3927 = vmul.f32 %v3890, %v3899
        %v3928 = vmul.f32 %v3891, %v3899
        %v3929 = vmul.f32 %v3892, %v3899
        %v3930 = vmul.f32 %v3893, %v3899
        %v3931 = vmul.f32 %v3894, %v3899
        %v3932 = vadd.f32 %v3831, %v3900
        %v3933 = vadd.f32 %v3832, %v3901
        %v3934 = vadd.f32 %v3833, %v3902
        %v3935 = vadd.f32 %v3834, %v3903
        %v3936 = vadd.f32 %v3835, %v3904
        %v3937 = vadd.f32 %v3836, %v3905
        %v3938 = vadd.f32 %v3837, %v3906
        %v3939 = vadd.f32 %v3838, %v3907
        %v3940 = vadd.f32 %v3839, %v3908
        %v3941 = vadd.f32 %v3840, %v3909
        %v3942 = vadd.f32 %v3841, %v3910
        %v3943 = vadd.f32 %v3842, %v3911
        %v3944 = vadd.f32 %v3843, %v3912
        %v3945 = vadd.f32 %v3844, %v3913
        %v3946 = vadd.f32 %v3845, %v3914
        %v3947 = vadd.f32 %v3846, %v3915
        %v3948 = vadd.f32 %v3847, %v3916
        %v3949 = vadd.f32 %v3848, %v3917
        %v3950 = vadd.f32 %v3849, %v3918
        %v3951 = vadd.f32 %v3850, %v3919
        %v3952 = vadd.f32 %v3851, %v3920
        %v3953 = vadd.f32 %v3852, %v3921
        %v3954 = vadd.f32 %v3853, %v3922
        %v3955 = vadd.f32 %v3854, %v3923
        %v3956 = vadd.f32 %v3855, %v3924
        %v3957 = vadd.f32 %v3856, %v3925
        %v3958 = vadd.f32 %v3857, %v3926
        %v3959 = vadd.f32 %v3858, %v3927
        %v3960 = vadd.f32 %v3859, %v3928
        %v3961 = vadd.f32 %v3860, %v3929
        %v3962 = vadd.f32 %v3861, %v3930
        %v3963 = vadd.f32 %v3862, %v3931
        %v3964 = vld [vmem:[%s3761 + $0x2] sm:$0xff]
        %v3965 = vld [vmem:[%s3761 + $0xa] sm:$0xff]
        %v3966 = vld [vmem:[%s3761 + $0x1a] sm:$0xff]
        %v3967 = vld [vmem:[%s3761 + $0x22] sm:$0xff]
        %v3968 = vld [vmem:[%s3761 + $0x32] sm:$0xff]
        %v3969 = vld [vmem:[%s3761 + $0x3a] sm:$0xff]
        %v3970 = vld [vmem:[%s3761 + $0x4a] sm:$0xff]
        %v3971 = vld [vmem:[%s3761 + $0x52] sm:$0xff]
        %v3972 = vld [vmem:[%s3761 + $0x62] sm:$0xff]
        %v3973 = vld [vmem:[%s3761 + $0x6a] sm:$0xff]
        %v3974 = vld [vmem:[%s3761 + $0x7a] sm:$0xff]
        %v3975 = vld [vmem:[%s3761 + $0x82] sm:$0xff]
        %v3976 = vld [vmem:[%s3761 + $0x92] sm:$0xff]
        %v3977 = vld [vmem:[%s3761 + $0x9a] sm:$0xff]
        %v3978 = vld [vmem:[%s3761 + $0xaa] sm:$0xff]
        %v3979 = vld [vmem:[%s3761 + $0xb2] sm:$0xff]
        %v3980 = vld [vmem:[%s3761 + $0xc2] sm:$0xff]
        %v3981 = vld [vmem:[%s3761 + $0xca] sm:$0xff]
        %v3982 = vld [vmem:[%s3761 + $0xda] sm:$0xff]
        %v3983 = vld [vmem:[%s3761 + $0xe2] sm:$0xff]
        %v3984 = vld [vmem:[%s3761 + $0xf2] sm:$0xff]
        %v3985 = vld [vmem:[%s3761 + $0xfa] sm:$0xff]
        %v3986 = vld [vmem:[%s3761 + $0x10a] sm:$0xff]
        %v3987 = vld [vmem:[%s3761 + $0x112] sm:$0xff]
        %v3988 = vld [vmem:[%s3761 + $0x122] sm:$0xff]
        %v3989 = vld [vmem:[%s3761 + $0x12a] sm:$0xff]
        %v3990 = vld [vmem:[%s3761 + $0x13a] sm:$0xff]
        %v3991 = vld [vmem:[%s3761 + $0x142] sm:$0xff]
        %v3992 = vld [vmem:[%s3761 + $0x152] sm:$0xff]
        %v3993 = vld [vmem:[%s3761 + $0x15a] sm:$0xff]
        %v3994 = vld [vmem:[%s3761 + $0x16a] sm:$0xff]
        %v3995 = vld [vmem:[%s3761 + $0x172] sm:$0xff]
        %v3996 = vld [vmem:[%s3 + $0x5] sm:$0x1]
        %v3997 = vlaneseq
        %v3998 = vshrl.u32 %v3997, 7
        %v3999 = vsub.s32 0, %v3998
        %v4000 = vrot.slane %v3996, %v3999
        %v4001 = vmul.f32 %v3964, %v4000
        %v4002 = vmul.f32 %v3965, %v4000
        %v4003 = vmul.f32 %v3966, %v4000
        %v4004 = vmul.f32 %v3967, %v4000
        %v4005 = vmul.f32 %v3968, %v4000
        %v4006 = vmul.f32 %v3969, %v4000
        %v4007 = vmul.f32 %v3970, %v4000
        %v4008 = vmul.f32 %v3971, %v4000
        %v4009 = vmul.f32 %v3972, %v4000
        %v4010 = vmul.f32 %v3973, %v4000
        %v4011 = vmul.f32 %v3974, %v4000
        %v4012 = vmul.f32 %v3975, %v4000
        %v4013 = vmul.f32 %v3976, %v4000
        %v4014 = vmul.f32 %v3977, %v4000
        %v4015 = vmul.f32 %v3978, %v4000
        %v4016 = vmul.f32 %v3979, %v4000
        %v4017 = vmul.f32 %v3980, %v4000
        %v4018 = vmul.f32 %v3981, %v4000
        %v4019 = vmul.f32 %v3982, %v4000
        %v4020 = vmul.f32 %v3983, %v4000
        %v4021 = vmul.f32 %v3984, %v4000
        %v4022 = vmul.f32 %v3985, %v4000
        %v4023 = vmul.f32 %v3986, %v4000
        %v4024 = vmul.f32 %v3987, %v4000
        %v4025 = vmul.f32 %v3988, %v4000
        %v4026 = vmul.f32 %v3989, %v4000
        %v4027 = vmul.f32 %v3990, %v4000
        %v4028 = vmul.f32 %v3991, %v4000
        %v4029 = vmul.f32 %v3992, %v4000
        %v4030 = vmul.f32 %v3993, %v4000
        %v4031 = vmul.f32 %v3994, %v4000
        %v4032 = vmul.f32 %v3995, %v4000
        %v4033 = vadd.f32 %v3932, %v4001
        %v4034 = vadd.f32 %v3933, %v4002
        %v4035 = vadd.f32 %v3934, %v4003
        %v4036 = vadd.f32 %v3935, %v4004
        %v4037 = vadd.f32 %v3936, %v4005
        %v4038 = vadd.f32 %v3937, %v4006
        %v4039 = vadd.f32 %v3938, %v4007
        %v4040 = vadd.f32 %v3939, %v4008
        %v4041 = vadd.f32 %v3940, %v4009
        %v4042 = vadd.f32 %v3941, %v4010
        %v4043 = vadd.f32 %v3942, %v4011
        %v4044 = vadd.f32 %v3943, %v4012
        %v4045 = vadd.f32 %v3944, %v4013
        %v4046 = vadd.f32 %v3945, %v4014
        %v4047 = vadd.f32 %v3946, %v4015
        %v4048 = vadd.f32 %v3947, %v4016
        %v4049 = vadd.f32 %v3948, %v4017
        %v4050 = vadd.f32 %v3949, %v4018
        %v4051 = vadd.f32 %v3950, %v4019
        %v4052 = vadd.f32 %v3951, %v4020
        %v4053 = vadd.f32 %v3952, %v4021
        %v4054 = vadd.f32 %v3953, %v4022
        %v4055 = vadd.f32 %v3954, %v4023
        %v4056 = vadd.f32 %v3955, %v4024
        %v4057 = vadd.f32 %v3956, %v4025
        %v4058 = vadd.f32 %v3957, %v4026
        %v4059 = vadd.f32 %v3958, %v4027
        %v4060 = vadd.f32 %v3959, %v4028
        %v4061 = vadd.f32 %v3960, %v4029
        %v4062 = vadd.f32 %v3961, %v4030
        %v4063 = vadd.f32 %v3962, %v4031
        %v4064 = vadd.f32 %v3963, %v4032
        %s4065 = scalar_lea.vmem [#allocation2], 48
        %v4066 = vld [vmem:[%s4065] sm:$0xff]
        %v4067 = vld [vmem:[%s4065 + $0x8] sm:$0xff]
        %v4068 = vld [vmem:[%s4065 + $0x18] sm:$0xff]
        %v4069 = vld [vmem:[%s4065 + $0x20] sm:$0xff]
        %v4070 = vld [vmem:[%s4065 + $0x30] sm:$0xff]
        %v4071 = vld [vmem:[%s4065 + $0x38] sm:$0xff]
        %v4072 = vld [vmem:[%s4065 + $0x48] sm:$0xff]
        %v4073 = vld [vmem:[%s4065 + $0x50] sm:$0xff]
        %v4074 = vld [vmem:[%s4065 + $0x60] sm:$0xff]
        %v4075 = vld [vmem:[%s4065 + $0x68] sm:$0xff]
        %v4076 = vld [vmem:[%s4065 + $0x78] sm:$0xff]
        %v4077 = vld [vmem:[%s4065 + $0x80] sm:$0xff]
        %v4078 = vld [vmem:[%s4065 + $0x90] sm:$0xff]
        %v4079 = vld [vmem:[%s4065 + $0x98] sm:$0xff]
        %v4080 = vld [vmem:[%s4065 + $0xa8] sm:$0xff]
        %v4081 = vld [vmem:[%s4065 + $0xb0] sm:$0xff]
        %v4082 = vld [vmem:[%s4065 + $0xc0] sm:$0xff]
        %v4083 = vld [vmem:[%s4065 + $0xc8] sm:$0xff]
        %v4084 = vld [vmem:[%s4065 + $0xd8] sm:$0xff]
        %v4085 = vld [vmem:[%s4065 + $0xe0] sm:$0xff]
        %v4086 = vld [vmem:[%s4065 + $0xf0] sm:$0xff]
        %v4087 = vld [vmem:[%s4065 + $0xf8] sm:$0xff]
        %v4088 = vld [vmem:[%s4065 + $0x108] sm:$0xff]
        %v4089 = vld [vmem:[%s4065 + $0x110] sm:$0xff]
        %v4090 = vld [vmem:[%s4065 + $0x120] sm:$0xff]
        %v4091 = vld [vmem:[%s4065 + $0x128] sm:$0xff]
        %v4092 = vld [vmem:[%s4065 + $0x138] sm:$0xff]
        %v4093 = vld [vmem:[%s4065 + $0x140] sm:$0xff]
        %v4094 = vld [vmem:[%s4065 + $0x150] sm:$0xff]
        %v4095 = vld [vmem:[%s4065 + $0x158] sm:$0xff]
        %v4096 = vld [vmem:[%s4065 + $0x168] sm:$0xff]
        %v4097 = vld [vmem:[%s4065 + $0x170] sm:$0xff]
        %v4098 = vld [vmem:[%s3 + $0x6] sm:$0x1]
        %v4099 = vlaneseq
        %v4100 = vshrl.u32 %v4099, 7
        %v4101 = vsub.s32 0, %v4100
        %v4102 = vrot.slane %v4098, %v4101
        %v4103 = vmul.f32 %v4066, %v4102
        %v4104 = vmul.f32 %v4067, %v4102
        %v4105 = vmul.f32 %v4068, %v4102
        %v4106 = vmul.f32 %v4069, %v4102
        %v4107 = vmul.f32 %v4070, %v4102
        %v4108 = vmul.f32 %v4071, %v4102
        %v4109 = vmul.f32 %v4072, %v4102
        %v4110 = vmul.f32 %v4073, %v4102
        %v4111 = vmul.f32 %v4074, %v4102
        %v4112 = vmul.f32 %v4075, %v4102
        %v4113 = vmul.f32 %v4076, %v4102
        %v4114 = vmul.f32 %v4077, %v4102
        %v4115 = vmul.f32 %v4078, %v4102
        %v4116 = vmul.f32 %v4079, %v4102
        %v4117 = vmul.f32 %v4080, %v4102
        %v4118 = vmul.f32 %v4081, %v4102
        %v4119 = vmul.f32 %v4082, %v4102
        %v4120 = vmul.f32 %v4083, %v4102
        %v4121 = vmul.f32 %v4084, %v4102
        %v4122 = vmul.f32 %v4085, %v4102
        %v4123 = vmul.f32 %v4086, %v4102
        %v4124 = vmul.f32 %v4087, %v4102
        %v4125 = vmul.f32 %v4088, %v4102
        %v4126 = vmul.f32 %v4089, %v4102
        %v4127 = vmul.f32 %v4090, %v4102
        %v4128 = vmul.f32 %v4091, %v4102
        %v4129 = vmul.f32 %v4092, %v4102
        %v4130 = vmul.f32 %v4093, %v4102
        %v4131 = vmul.f32 %v4094, %v4102
        %v4132 = vmul.f32 %v4095, %v4102
        %v4133 = vmul.f32 %v4096, %v4102
        %v4134 = vmul.f32 %v4097, %v4102
        %v4135 = vadd.f32 %v4033, %v4103
        %v4136 = vadd.f32 %v4034, %v4104
        %v4137 = vadd.f32 %v4035, %v4105
        %v4138 = vadd.f32 %v4036, %v4106
        %v4139 = vadd.f32 %v4037, %v4107
        %v4140 = vadd.f32 %v4038, %v4108
        %v4141 = vadd.f32 %v4039, %v4109
        %v4142 = vadd.f32 %v4040, %v4110
        %v4143 = vadd.f32 %v4041, %v4111
        %v4144 = vadd.f32 %v4042, %v4112
        %v4145 = vadd.f32 %v4043, %v4113
        %v4146 = vadd.f32 %v4044, %v4114
        %v4147 = vadd.f32 %v4045, %v4115
        %v4148 = vadd.f32 %v4046, %v4116
        %v4149 = vadd.f32 %v4047, %v4117
        %v4150 = vadd.f32 %v4048, %v4118
        %v4151 = vadd.f32 %v4049, %v4119
        %v4152 = vadd.f32 %v4050, %v4120
        %v4153 = vadd.f32 %v4051, %v4121
        %v4154 = vadd.f32 %v4052, %v4122
        %v4155 = vadd.f32 %v4053, %v4123
        %v4156 = vadd.f32 %v4054, %v4124
        %v4157 = vadd.f32 %v4055, %v4125
        %v4158 = vadd.f32 %v4056, %v4126
        %v4159 = vadd.f32 %v4057, %v4127
        %v4160 = vadd.f32 %v4058, %v4128
        %v4161 = vadd.f32 %v4059, %v4129
        %v4162 = vadd.f32 %v4060, %v4130
        %v4163 = vadd.f32 %v4061, %v4131
        %v4164 = vadd.f32 %v4062, %v4132
        %v4165 = vadd.f32 %v4063, %v4133
        %v4166 = vadd.f32 %v4064, %v4134
        %v4167 = vld [vmem:[%s4065 + $0x1] sm:$0xff]
        %v4168 = vld [vmem:[%s4065 + $0x9] sm:$0xff]
        %v4169 = vld [vmem:[%s4065 + $0x19] sm:$0xff]
        %v4170 = vld [vmem:[%s4065 + $0x21] sm:$0xff]
        %v4171 = vld [vmem:[%s4065 + $0x31] sm:$0xff]
        %v4172 = vld [vmem:[%s4065 + $0x39] sm:$0xff]
        %v4173 = vld [vmem:[%s4065 + $0x49] sm:$0xff]
        %v4174 = vld [vmem:[%s4065 + $0x51] sm:$0xff]
        %v4175 = vld [vmem:[%s4065 + $0x61] sm:$0xff]
        %v4176 = vld [vmem:[%s4065 + $0x69] sm:$0xff]
        %v4177 = vld [vmem:[%s4065 + $0x79] sm:$0xff]
        %v4178 = vld [vmem:[%s4065 + $0x81] sm:$0xff]
        %v4179 = vld [vmem:[%s4065 + $0x91] sm:$0xff]
        %v4180 = vld [vmem:[%s4065 + $0x99] sm:$0xff]
        %v4181 = vld [vmem:[%s4065 + $0xa9] sm:$0xff]
        %v4182 = vld [vmem:[%s4065 + $0xb1] sm:$0xff]
        %v4183 = vld [vmem:[%s4065 + $0xc1] sm:$0xff]
        %v4184 = vld [vmem:[%s4065 + $0xc9] sm:$0xff]
        %v4185 = vld [vmem:[%s4065 + $0xd9] sm:$0xff]
        %v4186 = vld [vmem:[%s4065 + $0xe1] sm:$0xff]
        %v4187 = vld [vmem:[%s4065 + $0xf1] sm:$0xff]
        %v4188 = vld [vmem:[%s4065 + $0xf9] sm:$0xff]
        %v4189 = vld [vmem:[%s4065 + $0x109] sm:$0xff]
        %v4190 = vld [vmem:[%s4065 + $0x111] sm:$0xff]
        %v4191 = vld [vmem:[%s4065 + $0x121] sm:$0xff]
        %v4192 = vld [vmem:[%s4065 + $0x129] sm:$0xff]
        %v4193 = vld [vmem:[%s4065 + $0x139] sm:$0xff]
        %v4194 = vld [vmem:[%s4065 + $0x141] sm:$0xff]
        %v4195 = vld [vmem:[%s4065 + $0x151] sm:$0xff]
        %v4196 = vld [vmem:[%s4065 + $0x159] sm:$0xff]
        %v4197 = vld [vmem:[%s4065 + $0x169] sm:$0xff]
        %v4198 = vld [vmem:[%s4065 + $0x171] sm:$0xff]
        %v4199 = vld [vmem:[%s3 + $0x7] sm:$0x1]
        %v4200 = vlaneseq
        %v4201 = vshrl.u32 %v4200, 7
        %v4202 = vsub.s32 0, %v4201
        %v4203 = vrot.slane %v4199, %v4202
        %v4204 = vmul.f32 %v4167, %v4203
        %v4205 = vmul.f32 %v4168, %v4203
        %v4206 = vmul.f32 %v4169, %v4203
        %v4207 = vmul.f32 %v4170, %v4203
        %v4208 = vmul.f32 %v4171, %v4203
        %v4209 = vmul.f32 %v4172, %v4203
        %v4210 = vmul.f32 %v4173, %v4203
        %v4211 = vmul.f32 %v4174, %v4203
        %v4212 = vmul.f32 %v4175, %v4203
        %v4213 = vmul.f32 %v4176, %v4203
        %v4214 = vmul.f32 %v4177, %v4203
        %v4215 = vmul.f32 %v4178, %v4203
        %v4216 = vmul.f32 %v4179, %v4203
        %v4217 = vmul.f32 %v4180, %v4203
        %v4218 = vmul.f32 %v4181, %v4203
        %v4219 = vmul.f32 %v4182, %v4203
        %v4220 = vmul.f32 %v4183, %v4203
        %v4221 = vmul.f32 %v4184, %v4203
        %v4222 = vmul.f32 %v4185, %v4203
        %v4223 = vmul.f32 %v4186, %v4203
        %v4224 = vmul.f32 %v4187, %v4203
        %v4225 = vmul.f32 %v4188, %v4203
        %v4226 = vmul.f32 %v4189, %v4203
        %v4227 = vmul.f32 %v4190, %v4203
        %v4228 = vmul.f32 %v4191, %v4203
        %v4229 = vmul.f32 %v4192, %v4203
        %v4230 = vmul.f32 %v4193, %v4203
        %v4231 = vmul.f32 %v4194, %v4203
        %v4232 = vmul.f32 %v4195, %v4203
        %v4233 = vmul.f32 %v4196, %v4203
        %v4234 = vmul.f32 %v4197, %v4203
        %v4235 = vmul.f32 %v4198, %v4203
        %v4236 = vadd.f32 %v4135, %v4204
        %v4237 = vadd.f32 %v4136, %v4205
        %v4238 = vadd.f32 %v4137, %v4206
        %v4239 = vadd.f32 %v4138, %v4207
        %v4240 = vadd.f32 %v4139, %v4208
        %v4241 = vadd.f32 %v4140, %v4209
        %v4242 = vadd.f32 %v4141, %v4210
        %v4243 = vadd.f32 %v4142, %v4211
        %v4244 = vadd.f32 %v4143, %v4212
        %v4245 = vadd.f32 %v4144, %v4213
        %v4246 = vadd.f32 %v4145, %v4214
        %v4247 = vadd.f32 %v4146, %v4215
        %v4248 = vadd.f32 %v4147, %v4216
        %v4249 = vadd.f32 %v4148, %v4217
        %v4250 = vadd.f32 %v4149, %v4218
        %v4251 = vadd.f32 %v4150, %v4219
        %v4252 = vadd.f32 %v4151, %v4220
        %v4253 = vadd.f32 %v4152, %v4221
        %v4254 = vadd.f32 %v4153, %v4222
        %v4255 = vadd.f32 %v4154, %v4223
        %v4256 = vadd.f32 %v4155, %v4224
        %v4257 = vadd.f32 %v4156, %v4225
        %v4258 = vadd.f32 %v4157, %v4226
        %v4259 = vadd.f32 %v4158, %v4227
        %v4260 = vadd.f32 %v4159, %v4228
        %v4261 = vadd.f32 %v4160, %v4229
        %v4262 = vadd.f32 %v4161, %v4230
        %v4263 = vadd.f32 %v4162, %v4231
        %v4264 = vadd.f32 %v4163, %v4232
        %v4265 = vadd.f32 %v4164, %v4233
        %v4266 = vadd.f32 %v4165, %v4234
        %v4267 = vadd.f32 %v4166, %v4235
        %v4268 = vld [vmem:[%s4065 + $0x2] sm:$0xff]
        %v4269 = vld [vmem:[%s4065 + $0xa] sm:$0xff]
        %v4270 = vld [vmem:[%s4065 + $0x1a] sm:$0xff]
        %v4271 = vld [vmem:[%s4065 + $0x22] sm:$0xff]
        %v4272 = vld [vmem:[%s4065 + $0x32] sm:$0xff]
        %v4273 = vld [vmem:[%s4065 + $0x3a] sm:$0xff]
        %v4274 = vld [vmem:[%s4065 + $0x4a] sm:$0xff]
        %v4275 = vld [vmem:[%s4065 + $0x52] sm:$0xff]
        %v4276 = vld [vmem:[%s4065 + $0x62] sm:$0xff]
        %v4277 = vld [vmem:[%s4065 + $0x6a] sm:$0xff]
        %v4278 = vld [vmem:[%s4065 + $0x7a] sm:$0xff]
        %v4279 = vld [vmem:[%s4065 + $0x82] sm:$0xff]
        %v4280 = vld [vmem:[%s4065 + $0x92] sm:$0xff]
        %v4281 = vld [vmem:[%s4065 + $0x9a] sm:$0xff]
        %v4282 = vld [vmem:[%s4065 + $0xaa] sm:$0xff]
        %v4283 = vld [vmem:[%s4065 + $0xb2] sm:$0xff]
        %v4284 = vld [vmem:[%s4065 + $0xc2] sm:$0xff]
        %v4285 = vld [vmem:[%s4065 + $0xca] sm:$0xff]
        %v4286 = vld [vmem:[%s4065 + $0xda] sm:$0xff]
        %v4287 = vld [vmem:[%s4065 + $0xe2] sm:$0xff]
        %v4288 = vld [vmem:[%s4065 + $0xf2] sm:$0xff]
        %v4289 = vld [vmem:[%s4065 + $0xfa] sm:$0xff]
        %v4290 = vld [vmem:[%s4065 + $0x10a] sm:$0xff]
        %v4291 = vld [vmem:[%s4065 + $0x112] sm:$0xff]
        %v4292 = vld [vmem:[%s4065 + $0x122] sm:$0xff]
        %v4293 = vld [vmem:[%s4065 + $0x12a] sm:$0xff]
        %v4294 = vld [vmem:[%s4065 + $0x13a] sm:$0xff]
        %v4295 = vld [vmem:[%s4065 + $0x142] sm:$0xff]
        %v4296 = vld [vmem:[%s4065 + $0x152] sm:$0xff]
        %v4297 = vld [vmem:[%s4065 + $0x15a] sm:$0xff]
        %v4298 = vld [vmem:[%s4065 + $0x16a] sm:$0xff]
        %v4299 = vld [vmem:[%s4065 + $0x172] sm:$0xff]
        %v4300 = vld [vmem:[%s3 + $0x8] sm:$0x1]
        %v4301 = vlaneseq
        %v4302 = vshrl.u32 %v4301, 7
        %v4303 = vsub.s32 0, %v4302
        %v4304 = vrot.slane %v4300, %v4303
        %v4305 = vmul.f32 %v4268, %v4304
        %v4306 = vmul.f32 %v4269, %v4304
        %v4307 = vmul.f32 %v4270, %v4304
        %v4308 = vmul.f32 %v4271, %v4304
        %v4309 = vmul.f32 %v4272, %v4304
        %v4310 = vmul.f32 %v4273, %v4304
        %v4311 = vmul.f32 %v4274, %v4304
        %v4312 = vmul.f32 %v4275, %v4304
        %v4313 = vmul.f32 %v4276, %v4304
        %v4314 = vmul.f32 %v4277, %v4304
        %v4315 = vmul.f32 %v4278, %v4304
        %v4316 = vmul.f32 %v4279, %v4304
        %v4317 = vmul.f32 %v4280, %v4304
        %v4318 = vmul.f32 %v4281, %v4304
        %v4319 = vmul.f32 %v4282, %v4304
        %v4320 = vmul.f32 %v4283, %v4304
        %v4321 = vmul.f32 %v4284, %v4304
        %v4322 = vmul.f32 %v4285, %v4304
        %v4323 = vmul.f32 %v4286, %v4304
        %v4324 = vmul.f32 %v4287, %v4304
        %v4325 = vmul.f32 %v4288, %v4304
        %v4326 = vmul.f32 %v4289, %v4304
        %v4327 = vmul.f32 %v4290, %v4304
        %v4328 = vmul.f32 %v4291, %v4304
        %v4329 = vmul.f32 %v4292, %v4304
        %v4330 = vmul.f32 %v4293, %v4304
        %v4331 = vmul.f32 %v4294, %v4304
        %v4332 = vmul.f32 %v4295, %v4304
        %v4333 = vmul.f32 %v4296, %v4304
        %v4334 = vmul.f32 %v4297, %v4304
        %v4335 = vmul.f32 %v4298, %v4304
        %v4336 = vmul.f32 %v4299, %v4304
        %v4337 = vadd.f32 %v4236, %v4305
        %v4338 = vadd.f32 %v4237, %v4306
        %v4339 = vadd.f32 %v4238, %v4307
        %v4340 = vadd.f32 %v4239, %v4308
        %v4341 = vadd.f32 %v4240, %v4309
        %v4342 = vadd.f32 %v4241, %v4310
        %v4343 = vadd.f32 %v4242, %v4311
        %v4344 = vadd.f32 %v4243, %v4312
        %v4345 = vadd.f32 %v4244, %v4313
        %v4346 = vadd.f32 %v4245, %v4314
        %v4347 = vadd.f32 %v4246, %v4315
        %v4348 = vadd.f32 %v4247, %v4316
        %v4349 = vadd.f32 %v4248, %v4317
        %v4350 = vadd.f32 %v4249, %v4318
        %v4351 = vadd.f32 %v4250, %v4319
        %v4352 = vadd.f32 %v4251, %v4320
        %v4353 = vadd.f32 %v4252, %v4321
        %v4354 = vadd.f32 %v4253, %v4322
        %v4355 = vadd.f32 %v4254, %v4323
        %v4356 = vadd.f32 %v4255, %v4324
        %v4357 = vadd.f32 %v4256, %v4325
        %v4358 = vadd.f32 %v4257, %v4326
        %v4359 = vadd.f32 %v4258, %v4327
        %v4360 = vadd.f32 %v4259, %v4328
        %v4361 = vadd.f32 %v4260, %v4329
        %v4362 = vadd.f32 %v4261, %v4330
        %v4363 = vadd.f32 %v4262, %v4331
        %v4364 = vadd.f32 %v4263, %v4332
        %v4365 = vadd.f32 %v4264, %v4333
        %v4366 = vadd.f32 %v4265, %v4334
        %v4367 = vadd.f32 %v4266, %v4335
        %v4368 = vadd.f32 %v4267, %v4336
        %v4369 = vld [vmem:[%s4] sm:$0x1]
        %v4371 = vlaneseq
        %v4372 = vshrl.u32 %v4371, 7
        %v4373 = vsub.s32 0, %v4372
        %v4374 = vrot.slane %v4369, %v4373
        %v4376 = vadd.f32 %v4337, %v4374
        %v4377 = vadd.f32 %v4338, %v4374
        %v4378 = vadd.f32 %v4339, %v4374
        %v4379 = vadd.f32 %v4340, %v4374
        %v4380 = vadd.f32 %v4341, %v4374
        %v4381 = vadd.f32 %v4342, %v4374
        %v4382 = vadd.f32 %v4343, %v4374
        %v4383 = vadd.f32 %v4344, %v4374
        %v4384 = vadd.f32 %v4345, %v4374
        %v4385 = vadd.f32 %v4346, %v4374
        %v4386 = vadd.f32 %v4347, %v4374
        %v4387 = vadd.f32 %v4348, %v4374
        %v4388 = vadd.f32 %v4349, %v4374
        %v4389 = vadd.f32 %v4350, %v4374
        %v4390 = vadd.f32 %v4351, %v4374
        %v4391 = vadd.f32 %v4352, %v4374
        %v4392 = vadd.f32 %v4353, %v4374
        %v4393 = vadd.f32 %v4354, %v4374
        %v4394 = vadd.f32 %v4355, %v4374
        %v4395 = vadd.f32 %v4356, %v4374
        %v4396 = vadd.f32 %v4357, %v4374
        %v4397 = vadd.f32 %v4358, %v4374
        %v4398 = vadd.f32 %v4359, %v4374
        %v4399 = vadd.f32 %v4360, %v4374
        %v4400 = vadd.f32 %v4361, %v4374
        %v4401 = vadd.f32 %v4362, %v4374
        %v4402 = vadd.f32 %v4363, %v4374
        %v4403 = vadd.f32 %v4364, %v4374
        %v4404 = vadd.f32 %v4365, %v4374
        %v4405 = vadd.f32 %v4366, %v4374
        %v4406 = vadd.f32 %v4367, %v4374
        %v4407 = vadd.f32 %v4368, %v4374
        %v4408 = vmax.f32 %v4376, 0.0
        %v4409 = vmax.f32 %v4377, 0.0
        %v4410 = vmax.f32 %v4378, 0.0
        %v4411 = vmax.f32 %v4379, 0.0
        %v4412 = vmax.f32 %v4380, 0.0
        %v4413 = vmax.f32 %v4381, 0.0
        %v4414 = vmax.f32 %v4382, 0.0
        %v4415 = vmax.f32 %v4383, 0.0
        %v4416 = vmax.f32 %v4384, 0.0
        %v4417 = vmax.f32 %v4385, 0.0
        %v4418 = vmax.f32 %v4386, 0.0
        %v4419 = vmax.f32 %v4387, 0.0
        %v4420 = vmax.f32 %v4388, 0.0
        %v4421 = vmax.f32 %v4389, 0.0
        %v4422 = vmax.f32 %v4390, 0.0
        %v4423 = vmax.f32 %v4391, 0.0
        %v4424 = vmax.f32 %v4392, 0.0
        %v4425 = vmax.f32 %v4393, 0.0
        %v4426 = vmax.f32 %v4394, 0.0
        %v4427 = vmax.f32 %v4395, 0.0
        %v4428 = vmax.f32 %v4396, 0.0
        %v4429 = vmax.f32 %v4397, 0.0
        %v4430 = vmax.f32 %v4398, 0.0
        %v4431 = vmax.f32 %v4399, 0.0
        %v4432 = vmax.f32 %v4400, 0.0
        %v4433 = vmax.f32 %v4401, 0.0
        %v4434 = vmax.f32 %v4402, 0.0
        %v4435 = vmax.f32 %v4403, 0.0
        %v4436 = vmax.f32 %v4404, 0.0
        %v4437 = vmax.f32 %v4405, 0.0
        %v4438 = vmax.f32 %v4406, 0.0
        %v4439 = vmax.f32 %v4407, 0.0
        %v4440 = vmin.f32 %v4408, 6.0
        %v4441 = vmin.f32 %v4409, 6.0
        %v4442 = vmin.f32 %v4410, 6.0
        %v4443 = vmin.f32 %v4411, 6.0
        %v4444 = vmin.f32 %v4412, 6.0
        %v4445 = vmin.f32 %v4413, 6.0
        %v4446 = vmin.f32 %v4414, 6.0
        %v4447 = vmin.f32 %v4415, 6.0
        %v4448 = vmin.f32 %v4416, 6.0
        %v4449 = vmin.f32 %v4417, 6.0
        %v4450 = vmin.f32 %v4418, 6.0
        %v4451 = vmin.f32 %v4419, 6.0
        %v4452 = vmin.f32 %v4420, 6.0
        %v4453 = vmin.f32 %v4421, 6.0
        %v4454 = vmin.f32 %v4422, 6.0
        %v4455 = vmin.f32 %v4423, 6.0
        %v4456 = vmin.f32 %v4424, 6.0
        %v4457 = vmin.f32 %v4425, 6.0
        %v4458 = vmin.f32 %v4426, 6.0
        %v4459 = vmin.f32 %v4427, 6.0
        %v4460 = vmin.f32 %v4428, 6.0
        %v4461 = vmin.f32 %v4429, 6.0
        %v4462 = vmin.f32 %v4430, 6.0
        %v4463 = vmin.f32 %v4431, 6.0
        %v4464 = vmin.f32 %v4432, 6.0
        %v4465 = vmin.f32 %v4433, 6.0
        %v4466 = vmin.f32 %v4434, 6.0
        %v4467 = vmin.f32 %v4435, 6.0
        %v4468 = vmin.f32 %v4436, 6.0
        %v4469 = vmin.f32 %v4437, 6.0
        %v4470 = vmin.f32 %v4438, 6.0
        %v4471 = vmin.f32 %v4439, 6.0
        %v4472 = vld [vmem:[%s5] sm:$0xff]
        %v4473 = vld [vmem:[%s5 + $0x8] sm:$0xff]
        %v4474 = vld [vmem:[%s5 + $0x10] sm:$0xff]
        %v4475 = vld [vmem:[%s5 + $0x18] sm:$0xff]
        %v4476 = vld [vmem:[%s5 + $0x20] sm:$0xff]
        %v4477 = vld [vmem:[%s5 + $0x28] sm:$0xff]
        %v4478 = vld [vmem:[%s5 + $0x30] sm:$0xff]
        %v4479 = vld [vmem:[%s5 + $0x38] sm:$0xff]
        %v4480 = vld [vmem:[%s5 + $0x40] sm:$0xff]
        %v4481 = vld [vmem:[%s5 + $0x48] sm:$0xff]
        %v4482 = vld [vmem:[%s5 + $0x50] sm:$0xff]
        %v4483 = vld [vmem:[%s5 + $0x58] sm:$0xff]
        %v4484 = vld [vmem:[%s5 + $0x60] sm:$0xff]
        %v4485 = vld [vmem:[%s5 + $0x68] sm:$0xff]
        %v4486 = vld [vmem:[%s5 + $0x70] sm:$0xff]
        %v4487 = vld [vmem:[%s5 + $0x78] sm:$0xff]
        %v4488 = vld [vmem:[%s6] sm:$0x1]
        %v4490 = vlaneseq
        %v4491 = vshrl.u32 %v4490, 7
        %v4492 = vsub.s32 0, %v4491
        %v4493 = vrot.slane %v4488, %v4492
        %4495 = vmatprep.subr.mxu0 0.0
        %v4496 = vand.u32 %v4472, 4294901760
        %4497 = vmatpush1.msra.mxu0 %v4496
        %4498 = vmatprep.subr.mxu0 0.0
        %v4499 = vand.u32 %v4473, 4294901760
        %4500 = vmatpush1.msra.mxu0 %v4499
        %4501 = vmatprep.subr.mxu0 0.0
        %v4502 = vand.u32 %v4474, 4294901760
        %4503 = vmatpush1.msra.mxu0 %v4502
        %4504 = vmatprep.subr.mxu0 0.0
        %v4505 = vand.u32 %v4475, 4294901760
        %4506 = vmatpush1.msra.mxu0 %v4505
        %4507 = vmatprep.subr.mxu0 0.0
        %v4508 = vand.u32 %v4476, 4294901760
        %4509 = vmatpush1.msra.mxu0 %v4508
        %4510 = vmatprep.subr.mxu0 0.0
        %v4511 = vand.u32 %v4477, 4294901760
        %4512 = vmatpush1.msra.mxu0 %v4511
        %4513 = vmatprep.subr.mxu0 0.0
        %v4514 = vand.u32 %v4478, 4294901760
        %4515 = vmatpush1.msra.mxu0 %v4514
        %4516 = vmatprep.subr.mxu0 0.0
        %v4517 = vand.u32 %v4479, 4294901760
        %4518 = vmatpush1.msra.mxu0 %v4517
        %4519 = vmatprep.subr.mxu0 0.0
        %v4520 = vand.u32 %v4480, 4294901760
        %4521 = vmatpush1.msra.mxu0 %v4520
        %4522 = vmatprep.subr.mxu0 0.0
        %v4523 = vand.u32 %v4481, 4294901760
        %4524 = vmatpush1.msra.mxu0 %v4523
        %4525 = vmatprep.subr.mxu0 0.0
        %v4526 = vand.u32 %v4482, 4294901760
        %4527 = vmatpush1.msra.mxu0 %v4526
        %4528 = vmatprep.subr.mxu0 0.0
        %v4529 = vand.u32 %v4483, 4294901760
        %4530 = vmatpush1.msra.mxu0 %v4529
        %4531 = vmatprep.subr.mxu0 0.0
        %v4532 = vand.u32 %v4484, 4294901760
        %4533 = vmatpush1.msra.mxu0 %v4532
        %4534 = vmatprep.subr.mxu0 0.0
        %v4535 = vand.u32 %v4485, 4294901760
        %4536 = vmatpush1.msra.mxu0 %v4535
        %4537 = vmatprep.subr.mxu0 0.0
        %v4538 = vand.u32 %v4486, 4294901760
        %4539 = vmatpush1.msra.mxu0 %v4538
        %4540 = vmatprep.subr.mxu0 0.0
        %v4541 = vand.u32 %v4487, 4294901760
        %4542 = vmatpush1.msra.mxu0 %v4541
        %4543 = vmatprep.subr.mxu0 0.0
        %4544 = vmatpush1.msra.mxu0 0.0
        %4545 = vmatprep.subr.mxu0 0.0
        %4546 = vmatpush1.msra.mxu0 0.0
        %4547 = vmatprep.subr.mxu0 0.0
        %4548 = vmatpush1.msra.mxu0 0.0
        %4549 = vmatprep.subr.mxu0 0.0
        %4550 = vmatpush1.msra.mxu0 0.0
        %4551 = vmatprep.subr.mxu0 0.0
        %4552 = vmatpush1.msra.mxu0 0.0
        %4553 = vmatprep.subr.mxu0 0.0
        %4554 = vmatpush1.msra.mxu0 0.0
        %4555 = vmatprep.subr.mxu0 0.0
        %4556 = vmatpush1.msra.mxu0 0.0
        %4557 = vmatprep.subr.mxu0 0.0
        %4558 = vmatpush1.msra.mxu0 0.0
        %4559 = vmatprep.subr.mxu0 0.0
        %4560 = vmatpush1.msra.mxu0 0.0
        %4561 = vmatprep.subr.mxu0 0.0
        %4562 = vmatpush1.msra.mxu0 0.0
        %4563 = vmatprep.subr.mxu0 0.0
        %4564 = vmatpush1.msra.mxu0 0.0
        %4565 = vmatprep.subr.mxu0 0.0
        %4566 = vmatpush1.msra.mxu0 0.0
        %4567 = vmatprep.subr.mxu0 0.0
        %4568 = vmatpush1.msra.mxu0 0.0
        %4569 = vmatprep.subr.mxu0 0.0
        %4570 = vmatpush1.msra.mxu0 0.0
        %4571 = vmatprep.subr.mxu0 0.0
        %4572 = vmatpush1.msra.mxu0 0.0
        %4573 = vmatprep.subr.mxu0 0.0
        %4574 = vmatpush1.msra.mxu0 0.0
        %4575 = vmatprep.mubr.f32.mxu0 0.0
        %v4576 = vand.u32 %v4440, 4294901760
        %v4577 = vsub.f32 %v4440, %v4576
        %v4578 = vand.u32 %v4577, 4294901760
        %v4579 = vsub.f32 %v4577, %v4578
        %v4580 = vand.u32 %v4579, 4294901760
        %4581 = vmatmul.mubr.f32.gmra.mrb[0].mxu0 %v4580
        %v4582 = vpop.f32.mrb[0].mxu0
        %v4583 = vadd.f32 %v4493, %v4582
        %v4584 = vpop.f32.mrb[0].mxu0
        %4585 = vmatprep.mubr.f32.mxu0 0.0
        %v4586 = vand.u32 %v4441, 4294901760
        %v4587 = vsub.f32 %v4441, %v4586
        %v4588 = vand.u32 %v4587, 4294901760
        %v4589 = vsub.f32 %v4587, %v4588
        %v4590 = vand.u32 %v4589, 4294901760
        %4591 = vmatmul.mubr.f32.gmra.mrb[0].mxu0 %v4590
        %v4592 = vpop.f32.mrb[0].mxu0
        %v4593 = vadd.f32 %v4493, %v4592
        %v4594 = vpop.f32.mrb[0].mxu0
        %4595 = vmatprep.mubr.f32.mxu0 0.0
        %v4596 = vand.u32 %v4442, 4294901760
        %v4597 = vsub.f32 %v4442, %v4596
        %v4598 = vand.u32 %v4597, 4294901760
        %v4599 = vsub.f32 %v4597, %v4598
        %v4600 = vand.u32 %v4599, 4294901760
        %4601 = vmatmul.mubr.f32.gmra.mrb[0].mxu0 %v4600
        %v4602 = vpop.f32.mrb[0].mxu0
        %v4603 = vadd.f32 %v4493, %v4602
        %v4604 = vpop.f32.mrb[0].mxu0
        %4605 = vmatprep.mubr.f32.mxu0 0.0
        %v4606 = vand.u32 %v4443, 4294901760
        %v4607 = vsub.f32 %v4443, %v4606
        %v4608 = vand.u32 %v4607, 4294901760
        %v4609 = vsub.f32 %v4607, %v4608
        %v4610 = vand.u32 %v4609, 4294901760
        %4611 = vmatmul.mubr.f32.gmra.mrb[0].mxu0 %v4610
        %v4612 = vpop.f32.mrb[0].mxu0
        %v4613 = vadd.f32 %v4493, %v4612
        %v4614 = vpop.f32.mrb[0].mxu0
        %4615 = vmatprep.mubr.f32.mxu0 0.0
        %v4616 = vand.u32 %v4444, 4294901760
        %v4617 = vsub.f32 %v4444, %v4616
        %v4618 = vand.u32 %v4617, 4294901760
        %v4619 = vsub.f32 %v4617, %v4618
        %v4620 = vand.u32 %v4619, 4294901760
        %4621 = vmatmul.mubr.f32.gmra.mrb[0].mxu0 %v4620
        %v4622 = vpop.f32.mrb[0].mxu0
        %v4623 = vadd.f32 %v4493, %v4622
        %v4624 = vpop.f32.mrb[0].mxu0
        %4625 = vmatprep.mubr.f32.mxu0 0.0
        %v4626 = vand.u32 %v4445, 4294901760
        %v4627 = vsub.f32 %v4445, %v4626
        %v4628 = vand.u32 %v4627, 4294901760
        %v4629 = vsub.f32 %v4627, %v4628
        %v4630 = vand.u32 %v4629, 4294901760
        %4631 = vmatmul.mubr.f32.gmra.mrb[0].mxu0 %v4630
        %v4632 = vpop.f32.mrb[0].mxu0
        %v4633 = vadd.f32 %v4493, %v4632
        %v4634 = vpop.f32.mrb[0].mxu0
        %4635 = vmatprep.mubr.f32.mxu0 0.0
        %v4636 = vand.u32 %v4446, 4294901760
        %v4637 = vsub.f32 %v4446, %v4636
        %v4638 = vand.u32 %v4637, 4294901760
        %v4639 = vsub.f32 %v4637, %v4638
        %v4640 = vand.u32 %v4639, 4294901760
        %4641 = vmatmul.mubr.f32.gmra.mrb[0].mxu0 %v4640
        %v4642 = vpop.f32.mrb[0].mxu0
        %v4643 = vadd.f32 %v4493, %v4642
        %v4644 = vpop.f32.mrb[0].mxu0
        %4645 = vmatprep.mubr.f32.mxu0 0.0
        %v4646 = vand.u32 %v4447, 4294901760
        %v4647 = vsub.f32 %v4447, %v4646
        %v4648 = vand.u32 %v4647, 4294901760
        %v4649 = vsub.f32 %v4647, %v4648
        %v4650 = vand.u32 %v4649, 4294901760
        %4651 = vmatmul.mubr.f32.gmra.mrb[0].mxu0 %v4650
        %v4652 = vpop.f32.mrb[0].mxu0
        %v4653 = vadd.f32 %v4493, %v4652
        %v4654 = vpop.f32.mrb[0].mxu0
        %4655 = vmatprep.mubr.f32.mxu0 0.0
        %v4656 = vand.u32 %v4448, 4294901760
        %v4657 = vsub.f32 %v4448, %v4656
        %v4658 = vand.u32 %v4657, 4294901760
        %v4659 = vsub.f32 %v4657, %v4658
        %v4660 = vand.u32 %v4659, 4294901760
        %4661 = vmatmul.mubr.f32.gmra.mrb[0].mxu0 %v4660
        %v4662 = vpop.f32.mrb[0].mxu0
        %v4663 = vadd.f32 %v4493, %v4662
        %v4664 = vpop.f32.mrb[0].mxu0
        %4665 = vmatprep.mubr.f32.mxu0 0.0
        %v4666 = vand.u32 %v4449, 4294901760
        %v4667 = vsub.f32 %v4449, %v4666
        %v4668 = vand.u32 %v4667, 4294901760
        %v4669 = vsub.f32 %v4667, %v4668
        %v4670 = vand.u32 %v4669, 4294901760
        %4671 = vmatmul.mubr.f32.gmra.mrb[0].mxu0 %v4670
        %v4672 = vpop.f32.mrb[0].mxu0
        %v4673 = vadd.f32 %v4493, %v4672
        %v4674 = vpop.f32.mrb[0].mxu0
        %4675 = vmatprep.mubr.f32.mxu0 0.0
        %v4676 = vand.u32 %v4450, 4294901760
        %v4677 = vsub.f32 %v4450, %v4676
        %v4678 = vand.u32 %v4677, 4294901760
        %v4679 = vsub.f32 %v4677, %v4678
        %v4680 = vand.u32 %v4679, 4294901760
        %4681 = vmatmul.mubr.f32.gmra.mrb[0].mxu0 %v4680
        %v4682 = vpop.f32.mrb[0].mxu0
        %v4683 = vadd.f32 %v4493, %v4682
        %v4684 = vpop.f32.mrb[0].mxu0
        %4685 = vmatprep.mubr.f32.mxu0 0.0
        %v4686 = vand.u32 %v4451, 4294901760
        %v4687 = vsub.f32 %v4451, %v4686
        %v4688 = vand.u32 %v4687, 4294901760
        %v4689 = vsub.f32 %v4687, %v4688
        %v4690 = vand.u32 %v4689, 4294901760
        %4691 = vmatmul.mubr.f32.gmra.mrb[0].mxu0 %v4690
        %v4692 = vpop.f32.mrb[0].mxu0
        %v4693 = vadd.f32 %v4493, %v4692
        %v4694 = vpop.f32.mrb[0].mxu0
        %4695 = vmatprep.mubr.f32.mxu0 0.0
        %v4696 = vand.u32 %v4452, 4294901760
        %v4697 = vsub.f32 %v4452, %v4696
        %v4698 = vand.u32 %v4697, 4294901760
        %v4699 = vsub.f32 %v4697, %v4698
        %v4700 = vand.u32 %v4699, 4294901760
        %4701 = vmatmul.mubr.f32.gmra.mrb[0].mxu0 %v4700
        %v4702 = vpop.f32.mrb[0].mxu0
        %v4703 = vadd.f32 %v4493, %v4702
        %v4704 = vpop.f32.mrb[0].mxu0
        %4705 = vmatprep.mubr.f32.mxu0 0.0
        %v4706 = vand.u32 %v4453, 4294901760
        %v4707 = vsub.f32 %v4453, %v4706
        %v4708 = vand.u32 %v4707, 4294901760
        %v4709 = vsub.f32 %v4707, %v4708
        %v4710 = vand.u32 %v4709, 4294901760
        %4711 = vmatmul.mubr.f32.gmra.mrb[0].mxu0 %v4710
        %v4712 = vpop.f32.mrb[0].mxu0
        %v4713 = vadd.f32 %v4493, %v4712
        %v4714 = vpop.f32.mrb[0].mxu0
        %4715 = vmatprep.mubr.f32.mxu0 0.0
        %v4716 = vand.u32 %v4454, 4294901760
        %v4717 = vsub.f32 %v4454, %v4716
        %v4718 = vand.u32 %v4717, 4294901760
        %v4719 = vsub.f32 %v4717, %v4718
        %v4720 = vand.u32 %v4719, 4294901760
        %4721 = vmatmul.mubr.f32.gmra.mrb[0].mxu0 %v4720
        %v4722 = vpop.f32.mrb[0].mxu0
        %v4723 = vadd.f32 %v4493, %v4722
        %v4724 = vpop.f32.mrb[0].mxu0
        %4725 = vmatprep.mubr.f32.mxu0 0.0
        %v4726 = vand.u32 %v4455, 4294901760
        %v4727 = vsub.f32 %v4455, %v4726
        %v4728 = vand.u32 %v4727, 4294901760
        %v4729 = vsub.f32 %v4727, %v4728
        %v4730 = vand.u32 %v4729, 4294901760
        %4731 = vmatmul.mubr.f32.gmra.mrb[0].mxu0 %v4730
        %v4732 = vpop.f32.mrb[0].mxu0
        %v4733 = vadd.f32 %v4493, %v4732
        %v4734 = vpop.f32.mrb[0].mxu0
        %4735 = vmatprep.mubr.f32.mxu0 0.0
        %v4736 = vand.u32 %v4456, 4294901760
        %v4737 = vsub.f32 %v4456, %v4736
        %v4738 = vand.u32 %v4737, 4294901760
        %v4739 = vsub.f32 %v4737, %v4738
        %v4740 = vand.u32 %v4739, 4294901760
        %4741 = vmatmul.mubr.f32.gmra.mrb[0].mxu0 %v4740
        %v4742 = vpop.f32.mrb[0].mxu0
        %v4743 = vadd.f32 %v4493, %v4742
        %v4744 = vpop.f32.mrb[0].mxu0
        %4745 = vmatprep.mubr.f32.mxu0 0.0
        %v4746 = vand.u32 %v4457, 4294901760
        %v4747 = vsub.f32 %v4457, %v4746
        %v4748 = vand.u32 %v4747, 4294901760
        %v4749 = vsub.f32 %v4747, %v4748
        %v4750 = vand.u32 %v4749, 4294901760
        %4751 = vmatmul.mubr.f32.gmra.mrb[0].mxu0 %v4750
        %v4752 = vpop.f32.mrb[0].mxu0
        %v4753 = vadd.f32 %v4493, %v4752
        %v4754 = vpop.f32.mrb[0].mxu0
        %4755 = vmatprep.mubr.f32.mxu0 0.0
        %v4756 = vand.u32 %v4458, 4294901760
        %v4757 = vsub.f32 %v4458, %v4756
        %v4758 = vand.u32 %v4757, 4294901760
        %v4759 = vsub.f32 %v4757, %v4758
        %v4760 = vand.u32 %v4759, 4294901760
        %4761 = vmatmul.mubr.f32.gmra.mrb[0].mxu0 %v4760
        %v4762 = vpop.f32.mrb[0].mxu0
        %v4763 = vadd.f32 %v4493, %v4762
        %v4764 = vpop.f32.mrb[0].mxu0
        %4765 = vmatprep.mubr.f32.mxu0 0.0
        %v4766 = vand.u32 %v4459, 4294901760
        %v4767 = vsub.f32 %v4459, %v4766
        %v4768 = vand.u32 %v4767, 4294901760
        %v4769 = vsub.f32 %v4767, %v4768
        %v4770 = vand.u32 %v4769, 4294901760
        %4771 = vmatmul.mubr.f32.gmra.mrb[0].mxu0 %v4770
        %v4772 = vpop.f32.mrb[0].mxu0
        %v4773 = vadd.f32 %v4493, %v4772
        %v4774 = vpop.f32.mrb[0].mxu0
        %4775 = vmatprep.mubr.f32.mxu0 0.0
        %v4776 = vand.u32 %v4460, 4294901760
        %v4777 = vsub.f32 %v4460, %v4776
        %v4778 = vand.u32 %v4777, 4294901760
        %v4779 = vsub.f32 %v4777, %v4778
        %v4780 = vand.u32 %v4779, 4294901760
        %4781 = vmatmul.mubr.f32.gmra.mrb[0].mxu0 %v4780
        %v4782 = vpop.f32.mrb[0].mxu0
        %v4783 = vadd.f32 %v4493, %v4782
        %v4784 = vpop.f32.mrb[0].mxu0
        %4785 = vmatprep.mubr.f32.mxu0 0.0
        %v4786 = vand.u32 %v4461, 4294901760
        %v4787 = vsub.f32 %v4461, %v4786
        %v4788 = vand.u32 %v4787, 4294901760
        %v4789 = vsub.f32 %v4787, %v4788
        %v4790 = vand.u32 %v4789, 4294901760
        %4791 = vmatmul.mubr.f32.gmra.mrb[0].mxu0 %v4790
        %v4792 = vpop.f32.mrb[0].mxu0
        %v4793 = vadd.f32 %v4493, %v4792
        %v4794 = vpop.f32.mrb[0].mxu0
        %4795 = vmatprep.mubr.f32.mxu0 0.0
        %v4796 = vand.u32 %v4462, 4294901760
        %v4797 = vsub.f32 %v4462, %v4796
        %v4798 = vand.u32 %v4797, 4294901760
        %v4799 = vsub.f32 %v4797, %v4798
        %v4800 = vand.u32 %v4799, 4294901760
        %4801 = vmatmul.mubr.f32.gmra.mrb[0].mxu0 %v4800
        %v4802 = vpop.f32.mrb[0].mxu0
        %v4803 = vadd.f32 %v4493, %v4802
        %v4804 = vpop.f32.mrb[0].mxu0
        %4805 = vmatprep.mubr.f32.mxu0 0.0
        %v4806 = vand.u32 %v4463, 4294901760
        %v4807 = vsub.f32 %v4463, %v4806
        %v4808 = vand.u32 %v4807, 4294901760
        %v4809 = vsub.f32 %v4807, %v4808
        %v4810 = vand.u32 %v4809, 4294901760
        %4811 = vmatmul.mubr.f32.gmra.mrb[0].mxu0 %v4810
        %v4812 = vpop.f32.mrb[0].mxu0
        %v4813 = vadd.f32 %v4493, %v4812
        %v4814 = vpop.f32.mrb[0].mxu0
        %4815 = vmatprep.mubr.f32.mxu0 0.0
        %v4816 = vand.u32 %v4464, 4294901760
        %v4817 = vsub.f32 %v4464, %v4816
        %v4818 = vand.u32 %v4817, 4294901760
        %v4819 = vsub.f32 %v4817, %v4818
        %v4820 = vand.u32 %v4819, 4294901760
        %4821 = vmatmul.mubr.f32.gmra.mrb[0].mxu0 %v4820
        %v4822 = vpop.f32.mrb[0].mxu0
        %v4823 = vadd.f32 %v4493, %v4822
        %v4824 = vpop.f32.mrb[0].mxu0
        %4825 = vmatprep.mubr.f32.mxu0 0.0
        %v4826 = vand.u32 %v4465, 4294901760
        %v4827 = vsub.f32 %v4465, %v4826
        %v4828 = vand.u32 %v4827, 4294901760
        %v4829 = vsub.f32 %v4827, %v4828
        %v4830 = vand.u32 %v4829, 4294901760
        %4831 = vmatmul.mubr.f32.gmra.mrb[0].mxu0 %v4830
        %v4832 = vpop.f32.mrb[0].mxu0
        %v4833 = vadd.f32 %v4493, %v4832
        %v4834 = vpop.f32.mrb[0].mxu0
        %4835 = vmatprep.mubr.f32.mxu0 0.0
        %v4836 = vand.u32 %v4466, 4294901760
        %v4837 = vsub.f32 %v4466, %v4836
        %v4838 = vand.u32 %v4837, 4294901760
        %v4839 = vsub.f32 %v4837, %v4838
        %v4840 = vand.u32 %v4839, 4294901760
        %4841 = vmatmul.mubr.f32.gmra.mrb[0].mxu0 %v4840
        %v4842 = vpop.f32.mrb[0].mxu0
        %v4843 = vadd.f32 %v4493, %v4842
        %v4844 = vpop.f32.mrb[0].mxu0
        %4845 = vmatprep.mubr.f32.mxu0 0.0
        %v4846 = vand.u32 %v4467, 4294901760
        %v4847 = vsub.f32 %v4467, %v4846
        %v4848 = vand.u32 %v4847, 4294901760
        %v4849 = vsub.f32 %v4847, %v4848
        %v4850 = vand.u32 %v4849, 4294901760
        %4851 = vmatmul.mubr.f32.gmra.mrb[0].mxu0 %v4850
        %v4852 = vpop.f32.mrb[0].mxu0
        %v4853 = vadd.f32 %v4493, %v4852
        %v4854 = vpop.f32.mrb[0].mxu0
        %4855 = vmatprep.mubr.f32.mxu0 0.0
        %v4856 = vand.u32 %v4468, 4294901760
        %v4857 = vsub.f32 %v4468, %v4856
        %v4858 = vand.u32 %v4857, 4294901760
        %v4859 = vsub.f32 %v4857, %v4858
        %v4860 = vand.u32 %v4859, 4294901760
        %4861 = vmatmul.mubr.f32.gmra.mrb[0].mxu0 %v4860
        %v4862 = vpop.f32.mrb[0].mxu0
        %v4863 = vadd.f32 %v4493, %v4862
        %v4864 = vpop.f32.mrb[0].mxu0
        %4865 = vmatprep.mubr.f32.mxu0 0.0
        %v4866 = vand.u32 %v4469, 4294901760
        %v4867 = vsub.f32 %v4469, %v4866
        %v4868 = vand.u32 %v4867, 4294901760
        %v4869 = vsub.f32 %v4867, %v4868
        %v4870 = vand.u32 %v4869, 4294901760
        %4871 = vmatmul.mubr.f32.gmra.mrb[0].mxu0 %v4870
        %v4872 = vpop.f32.mrb[0].mxu0
        %v4873 = vadd.f32 %v4493, %v4872
        %v4874 = vpop.f32.mrb[0].mxu0
        %4875 = vmatprep.mubr.f32.mxu0 0.0
        %v4876 = vand.u32 %v4470, 4294901760
        %v4877 = vsub.f32 %v4470, %v4876
        %v4878 = vand.u32 %v4877, 4294901760
        %v4879 = vsub.f32 %v4877, %v4878
        %v4880 = vand.u32 %v4879, 4294901760
        %4881 = vmatmul.mubr.f32.gmra.mrb[0].mxu0 %v4880
        %v4882 = vpop.f32.mrb[0].mxu0
        %v4883 = vadd.f32 %v4493, %v4882
        %v4884 = vpop.f32.mrb[0].mxu0
        %4885 = vmatprep.mubr.f32.mxu0 0.0
        %v4886 = vand.u32 %v4471, 4294901760
        %v4887 = vsub.f32 %v4471, %v4886
        %v4888 = vand.u32 %v4887, 4294901760
        %v4889 = vsub.f32 %v4887, %v4888
        %v4890 = vand.u32 %v4889, 4294901760
        %4891 = vmatmul.mubr.f32.gmra.mrb[0].mxu0 %v4890
        %v4892 = vpop.f32.mrb[0].mxu0
        %v4893 = vadd.f32 %v4493, %v4892
        %v4894 = vpop.f32.mrb[0].mxu0
        %4895 = vdwg.mxu0
        %4896 = vmatprep.subr.mxu0 0.0
        %v4897 = vand.u32 %v4472, 4294901760
        %v4898 = vsub.f32 %v4472, %v4897
        %v4899 = vand.u32 %v4898, 4294901760
        %v4900 = vsub.f32 %v4898, %v4899
        %v4901 = vand.u32 %v4900, 4294901760
        %4902 = vmatpush1.msra.mxu0 %v4901
        %4903 = vmatprep.subr.mxu0 0.0
        %v4904 = vand.u32 %v4473, 4294901760
        %v4905 = vsub.f32 %v4473, %v4904
        %v4906 = vand.u32 %v4905, 4294901760
        %v4907 = vsub.f32 %v4905, %v4906
        %v4908 = vand.u32 %v4907, 4294901760
        %4909 = vmatpush1.msra.mxu0 %v4908
        %4910 = vmatprep.subr.mxu0 0.0
        %v4911 = vand.u32 %v4474, 4294901760
        %v4912 = vsub.f32 %v4474, %v4911
        %v4913 = vand.u32 %v4912, 4294901760
        %v4914 = vsub.f32 %v4912, %v4913
        %v4915 = vand.u32 %v4914, 4294901760
        %4916 = vmatpush1.msra.mxu0 %v4915
        %4917 = vmatprep.subr.mxu0 0.0
        %v4918 = vand.u32 %v4475, 4294901760
        %v4919 = vsub.f32 %v4475, %v4918
        %v4920 = vand.u32 %v4919, 4294901760
        %v4921 = vsub.f32 %v4919, %v4920
        %v4922 = vand.u32 %v4921, 4294901760
        %4923 = vmatpush1.msra.mxu0 %v4922
        %4924 = vmatprep.subr.mxu0 0.0
        %v4925 = vand.u32 %v4476, 4294901760
        %v4926 = vsub.f32 %v4476, %v4925
        %v4927 = vand.u32 %v4926, 4294901760
        %v4928 = vsub.f32 %v4926, %v4927
        %v4929 = vand.u32 %v4928, 4294901760
        %4930 = vmatpush1.msra.mxu0 %v4929
        %4931 = vmatprep.subr.mxu0 0.0
        %v4932 = vand.u32 %v4477, 4294901760
        %v4933 = vsub.f32 %v4477, %v4932
        %v4934 = vand.u32 %v4933, 4294901760
        %v4935 = vsub.f32 %v4933, %v4934
        %v4936 = vand.u32 %v4935, 4294901760
        %4937 = vmatpush1.msra.mxu0 %v4936
        %4938 = vmatprep.subr.mxu0 0.0
        %v4939 = vand.u32 %v4478, 4294901760
        %v4940 = vsub.f32 %v4478, %v4939
        %v4941 = vand.u32 %v4940, 4294901760
        %v4942 = vsub.f32 %v4940, %v4941
        %v4943 = vand.u32 %v4942, 4294901760
        %4944 = vmatpush1.msra.mxu0 %v4943
        %4945 = vmatprep.subr.mxu0 0.0
        %v4946 = vand.u32 %v4479, 4294901760
        %v4947 = vsub.f32 %v4479, %v4946
        %v4948 = vand.u32 %v4947, 4294901760
        %v4949 = vsub.f32 %v4947, %v4948
        %v4950 = vand.u32 %v4949, 4294901760
        %4951 = vmatpush1.msra.mxu0 %v4950
        %4952 = vmatprep.subr.mxu0 0.0
        %v4953 = vand.u32 %v4480, 4294901760
        %v4954 = vsub.f32 %v4480, %v4953
        %v4955 = vand.u32 %v4954, 4294901760
        %v4956 = vsub.f32 %v4954, %v4955
        %v4957 = vand.u32 %v4956, 4294901760
        %4958 = vmatpush1.msra.mxu0 %v4957
        %4959 = vmatprep.subr.mxu0 0.0
        %v4960 = vand.u32 %v4481, 4294901760
        %v4961 = vsub.f32 %v4481, %v4960
        %v4962 = vand.u32 %v4961, 4294901760
        %v4963 = vsub.f32 %v4961, %v4962
        %v4964 = vand.u32 %v4963, 4294901760
        %4965 = vmatpush1.msra.mxu0 %v4964
        %4966 = vmatprep.subr.mxu0 0.0
        %v4967 = vand.u32 %v4482, 4294901760
        %v4968 = vsub.f32 %v4482, %v4967
        %v4969 = vand.u32 %v4968, 4294901760
        %v4970 = vsub.f32 %v4968, %v4969
        %v4971 = vand.u32 %v4970, 4294901760
        %4972 = vmatpush1.msra.mxu0 %v4971
        %4973 = vmatprep.subr.mxu0 0.0
        %v4974 = vand.u32 %v4483, 4294901760
        %v4975 = vsub.f32 %v4483, %v4974
        %v4976 = vand.u32 %v4975, 4294901760
        %v4977 = vsub.f32 %v4975, %v4976
        %v4978 = vand.u32 %v4977, 4294901760
        %4979 = vmatpush1.msra.mxu0 %v4978
        %4980 = vmatprep.subr.mxu0 0.0
        %v4981 = vand.u32 %v4484, 4294901760
        %v4982 = vsub.f32 %v4484, %v4981
        %v4983 = vand.u32 %v4982, 4294901760
        %v4984 = vsub.f32 %v4982, %v4983
        %v4985 = vand.u32 %v4984, 4294901760
        %4986 = vmatpush1.msra.mxu0 %v4985
        %4987 = vmatprep.subr.mxu0 0.0
        %v4988 = vand.u32 %v4485, 4294901760
        %v4989 = vsub.f32 %v4485, %v4988
        %v4990 = vand.u32 %v4989, 4294901760
        %v4991 = vsub.f32 %v4989, %v4990
        %v4992 = vand.u32 %v4991, 4294901760
        %4993 = vmatpush1.msra.mxu0 %v4992
        %4994 = vmatprep.subr.mxu0 0.0
        %v4995 = vand.u32 %v4486, 4294901760
        %v4996 = vsub.f32 %v4486, %v4995
        %v4997 = vand.u32 %v4996, 4294901760
        %v4998 = vsub.f32 %v4996, %v4997
        %v4999 = vand.u32 %v4998, 4294901760
        %5000 = vmatpush1.msra.mxu0 %v4999
        %5001 = vmatprep.subr.mxu0 0.0
        %v5002 = vand.u32 %v4487, 4294901760
        %v5003 = vsub.f32 %v4487, %v5002
        %v5004 = vand.u32 %v5003, 4294901760
        %v5005 = vsub.f32 %v5003, %v5004
        %v5006 = vand.u32 %v5005, 4294901760
        %5007 = vmatpush1.msra.mxu0 %v5006
        %5008 = vmatprep.subr.mxu0 0.0
        %5009 = vmatpush1.msra.mxu0 0.0
        %5010 = vmatprep.subr.mxu0 0.0
        %5011 = vmatpush1.msra.mxu0 0.0
        %5012 = vmatprep.subr.mxu0 0.0
        %5013 = vmatpush1.msra.mxu0 0.0
        %5014 = vmatprep.subr.mxu0 0.0
        %5015 = vmatpush1.msra.mxu0 0.0
        %5016 = vmatprep.subr.mxu0 0.0
        %5017 = vmatpush1.msra.mxu0 0.0
        %5018 = vmatprep.subr.mxu0 0.0
        %5019 = vmatpush1.msra.mxu0 0.0
        %5020 = vmatprep.subr.mxu0 0.0
        %5021 = vmatpush1.msra.mxu0 0.0
        %5022 = vmatprep.subr.mxu0 0.0
        %5023 = vmatpush1.msra.mxu0 0.0
        %5024 = vmatprep.subr.mxu0 0.0
        %5025 = vmatpush1.msra.mxu0 0.0
        %5026 = vmatprep.subr.mxu0 0.0
        %5027 = vmatpush1.msra.mxu0 0.0
        %5028 = vmatprep.subr.mxu0 0.0
        %5029 = vmatpush1.msra.mxu0 0.0
        %5030 = vmatprep.subr.mxu0 0.0
        %5031 = vmatpush1.msra.mxu0 0.0
        %5032 = vmatprep.subr.mxu0 0.0
        %5033 = vmatpush1.msra.mxu0 0.0
        %5034 = vmatprep.subr.mxu0 0.0
        %5035 = vmatpush1.msra.mxu0 0.0
        %5036 = vmatprep.subr.mxu0 0.0
        %5037 = vmatpush1.msra.mxu0 0.0
        %5038 = vmatprep.subr.mxu0 0.0
        %5039 = vmatpush1.msra.mxu0 0.0
        %5040 = vmatprep.mubr.f32.mxu0 0.0
        %v5041 = vand.u32 %v4440, 4294901760
        %5042 = vmatmul.mubr.f32.gmra.mrb[0].mxu0 %v5041
        %v5043 = vpop.f32.mrb[0].mxu0
        %v5044 = vadd.f32 %v4583, %v5043
        %v5045 = vpop.f32.mrb[0].mxu0
        %5046 = vmatprep.mubr.f32.mxu0 0.0
        %v5047 = vand.u32 %v4441, 4294901760
        %5048 = vmatmul.mubr.f32.gmra.mrb[0].mxu0 %v5047
        %v5049 = vpop.f32.mrb[0].mxu0
        %v5050 = vadd.f32 %v4593, %v5049
        %v5051 = vpop.f32.mrb[0].mxu0
        %5052 = vmatprep.mubr.f32.mxu0 0.0
        %v5053 = vand.u32 %v4442, 4294901760
        %5054 = vmatmul.mubr.f32.gmra.mrb[0].mxu0 %v5053
        %v5055 = vpop.f32.mrb[0].mxu0
        %v5056 = vadd.f32 %v4603, %v5055
        %v5057 = vpop.f32.mrb[0].mxu0
        %5058 = vmatprep.mubr.f32.mxu0 0.0
        %v5059 = vand.u32 %v4443, 4294901760
        %5060 = vmatmul.mubr.f32.gmra.mrb[0].mxu0 %v5059
        %v5061 = vpop.f32.mrb[0].mxu0
        %v5062 = vadd.f32 %v4613, %v5061
        %v5063 = vpop.f32.mrb[0].mxu0
        %5064 = vmatprep.mubr.f32.mxu0 0.0
        %v5065 = vand.u32 %v4444, 4294901760
        %5066 = vmatmul.mubr.f32.gmra.mrb[0].mxu0 %v5065
        %v5067 = vpop.f32.mrb[0].mxu0
        %v5068 = vadd.f32 %v4623, %v5067
        %v5069 = vpop.f32.mrb[0].mxu0
        %5070 = vmatprep.mubr.f32.mxu0 0.0
        %v5071 = vand.u32 %v4445, 4294901760
        %5072 = vmatmul.mubr.f32.gmra.mrb[0].mxu0 %v5071
        %v5073 = vpop.f32.mrb[0].mxu0
        %v5074 = vadd.f32 %v4633, %v5073
        %v5075 = vpop.f32.mrb[0].mxu0
        %5076 = vmatprep.mubr.f32.mxu0 0.0
        %v5077 = vand.u32 %v4446, 4294901760
        %5078 = vmatmul.mubr.f32.gmra.mrb[0].mxu0 %v5077
        %v5079 = vpop.f32.mrb[0].mxu0
        %v5080 = vadd.f32 %v4643, %v5079
        %v5081 = vpop.f32.mrb[0].mxu0
        %5082 = vmatprep.mubr.f32.mxu0 0.0
        %v5083 = vand.u32 %v4447, 4294901760
        %5084 = vmatmul.mubr.f32.gmra.mrb[0].mxu0 %v5083
        %v5085 = vpop.f32.mrb[0].mxu0
        %v5086 = vadd.f32 %v4653, %v5085
        %v5087 = vpop.f32.mrb[0].mxu0
        %5088 = vmatprep.mubr.f32.mxu0 0.0
        %v5089 = vand.u32 %v4448, 4294901760
        %5090 = vmatmul.mubr.f32.gmra.mrb[0].mxu0 %v5089
        %v5091 = vpop.f32.mrb[0].mxu0
        %v5092 = vadd.f32 %v4663, %v5091
        %v5093 = vpop.f32.mrb[0].mxu0
        %5094 = vmatprep.mubr.f32.mxu0 0.0
        %v5095 = vand.u32 %v4449, 4294901760
        %5096 = vmatmul.mubr.f32.gmra.mrb[0].mxu0 %v5095
        %v5097 = vpop.f32.mrb[0].mxu0
        %v5098 = vadd.f32 %v4673, %v5097
        %v5099 = vpop.f32.mrb[0].mxu0
        %5100 = vmatprep.mubr.f32.mxu0 0.0
        %v5101 = vand.u32 %v4450, 4294901760
        %5102 = vmatmul.mubr.f32.gmra.mrb[0].mxu0 %v5101
        %v5103 = vpop.f32.mrb[0].mxu0
        %v5104 = vadd.f32 %v4683, %v5103
        %v5105 = vpop.f32.mrb[0].mxu0
        %5106 = vmatprep.mubr.f32.mxu0 0.0
        %v5107 = vand.u32 %v4451, 4294901760
        %5108 = vmatmul.mubr.f32.gmra.mrb[0].mxu0 %v5107
        %v5109 = vpop.f32.mrb[0].mxu0
        %v5110 = vadd.f32 %v4693, %v5109
        %v5111 = vpop.f32.mrb[0].mxu0
        %5112 = vmatprep.mubr.f32.mxu0 0.0
        %v5113 = vand.u32 %v4452, 4294901760
        %5114 = vmatmul.mubr.f32.gmra.mrb[0].mxu0 %v5113
        %v5115 = vpop.f32.mrb[0].mxu0
        %v5116 = vadd.f32 %v4703, %v5115
        %v5117 = vpop.f32.mrb[0].mxu0
        %5118 = vmatprep.mubr.f32.mxu0 0.0
        %v5119 = vand.u32 %v4453, 4294901760
        %5120 = vmatmul.mubr.f32.gmra.mrb[0].mxu0 %v5119
        %v5121 = vpop.f32.mrb[0].mxu0
        %v5122 = vadd.f32 %v4713, %v5121
        %v5123 = vpop.f32.mrb[0].mxu0
        %5124 = vmatprep.mubr.f32.mxu0 0.0
        %v5125 = vand.u32 %v4454, 4294901760
        %5126 = vmatmul.mubr.f32.gmra.mrb[0].mxu0 %v5125
        %v5127 = vpop.f32.mrb[0].mxu0
        %v5128 = vadd.f32 %v4723, %v5127
        %v5129 = vpop.f32.mrb[0].mxu0
        %5130 = vmatprep.mubr.f32.mxu0 0.0
        %v5131 = vand.u32 %v4455, 4294901760
        %5132 = vmatmul.mubr.f32.gmra.mrb[0].mxu0 %v5131
        %v5133 = vpop.f32.mrb[0].mxu0
        %v5134 = vadd.f32 %v4733, %v5133
        %v5135 = vpop.f32.mrb[0].mxu0
        %5136 = vmatprep.mubr.f32.mxu0 0.0
        %v5137 = vand.u32 %v4456, 4294901760
        %5138 = vmatmul.mubr.f32.gmra.mrb[0].mxu0 %v5137
        %v5139 = vpop.f32.mrb[0].mxu0
        %v5140 = vadd.f32 %v4743, %v5139
        %v5141 = vpop.f32.mrb[0].mxu0
        %5142 = vmatprep.mubr.f32.mxu0 0.0
        %v5143 = vand.u32 %v4457, 4294901760
        %5144 = vmatmul.mubr.f32.gmra.mrb[0].mxu0 %v5143
        %v5145 = vpop.f32.mrb[0].mxu0
        %v5146 = vadd.f32 %v4753, %v5145
        %v5147 = vpop.f32.mrb[0].mxu0
        %5148 = vmatprep.mubr.f32.mxu0 0.0
        %v5149 = vand.u32 %v4458, 4294901760
        %5150 = vmatmul.mubr.f32.gmra.mrb[0].mxu0 %v5149
        %v5151 = vpop.f32.mrb[0].mxu0
        %v5152 = vadd.f32 %v4763, %v5151
        %v5153 = vpop.f32.mrb[0].mxu0
        %5154 = vmatprep.mubr.f32.mxu0 0.0
        %v5155 = vand.u32 %v4459, 4294901760
        %5156 = vmatmul.mubr.f32.gmra.mrb[0].mxu0 %v5155
        %v5157 = vpop.f32.mrb[0].mxu0
        %v5158 = vadd.f32 %v4773, %v5157
        %v5159 = vpop.f32.mrb[0].mxu0
        %5160 = vmatprep.mubr.f32.mxu0 0.0
        %v5161 = vand.u32 %v4460, 4294901760
        %5162 = vmatmul.mubr.f32.gmra.mrb[0].mxu0 %v5161
        %v5163 = vpop.f32.mrb[0].mxu0
        %v5164 = vadd.f32 %v4783, %v5163
        %v5165 = vpop.f32.mrb[0].mxu0
        %5166 = vmatprep.mubr.f32.mxu0 0.0
        %v5167 = vand.u32 %v4461, 4294901760
        %5168 = vmatmul.mubr.f32.gmra.mrb[0].mxu0 %v5167
        %v5169 = vpop.f32.mrb[0].mxu0
        %v5170 = vadd.f32 %v4793, %v5169
        %v5171 = vpop.f32.mrb[0].mxu0
        %5172 = vmatprep.mubr.f32.mxu0 0.0
        %v5173 = vand.u32 %v4462, 4294901760
        %5174 = vmatmul.mubr.f32.gmra.mrb[0].mxu0 %v5173
        %v5175 = vpop.f32.mrb[0].mxu0
        %v5176 = vadd.f32 %v4803, %v5175
        %v5177 = vpop.f32.mrb[0].mxu0
        %5178 = vmatprep.mubr.f32.mxu0 0.0
        %v5179 = vand.u32 %v4463, 4294901760
        %5180 = vmatmul.mubr.f32.gmra.mrb[0].mxu0 %v5179
        %v5181 = vpop.f32.mrb[0].mxu0
        %v5182 = vadd.f32 %v4813, %v5181
        %v5183 = vpop.f32.mrb[0].mxu0
        %5184 = vmatprep.mubr.f32.mxu0 0.0
        %v5185 = vand.u32 %v4464, 4294901760
        %5186 = vmatmul.mubr.f32.gmra.mrb[0].mxu0 %v5185
        %v5187 = vpop.f32.mrb[0].mxu0
        %v5188 = vadd.f32 %v4823, %v5187
        %v5189 = vpop.f32.mrb[0].mxu0
        %5190 = vmatprep.mubr.f32.mxu0 0.0
        %v5191 = vand.u32 %v4465, 4294901760
        %5192 = vmatmul.mubr.f32.gmra.mrb[0].mxu0 %v5191
        %v5193 = vpop.f32.mrb[0].mxu0
        %v5194 = vadd.f32 %v4833, %v5193
        %v5195 = vpop.f32.mrb[0].mxu0
        %5196 = vmatprep.mubr.f32.mxu0 0.0
        %v5197 = vand.u32 %v4466, 4294901760
        %5198 = vmatmul.mubr.f32.gmra.mrb[0].mxu0 %v5197
        %v5199 = vpop.f32.mrb[0].mxu0
        %v5200 = vadd.f32 %v4843, %v5199
        %v5201 = vpop.f32.mrb[0].mxu0
        %5202 = vmatprep.mubr.f32.mxu0 0.0
        %v5203 = vand.u32 %v4467, 4294901760
        %5204 = vmatmul.mubr.f32.gmra.mrb[0].mxu0 %v5203
        %v5205 = vpop.f32.mrb[0].mxu0
        %v5206 = vadd.f32 %v4853, %v5205
        %v5207 = vpop.f32.mrb[0].mxu0
        %5208 = vmatprep.mubr.f32.mxu0 0.0
        %v5209 = vand.u32 %v4468, 4294901760
        %5210 = vmatmul.mubr.f32.gmra.mrb[0].mxu0 %v5209
        %v5211 = vpop.f32.mrb[0].mxu0
        %v5212 = vadd.f32 %v4863, %v5211
        %v5213 = vpop.f32.mrb[0].mxu0
        %5214 = vmatprep.mubr.f32.mxu0 0.0
        %v5215 = vand.u32 %v4469, 4294901760
        %5216 = vmatmul.mubr.f32.gmra.mrb[0].mxu0 %v5215
        %v5217 = vpop.f32.mrb[0].mxu0
        %v5218 = vadd.f32 %v4873, %v5217
        %v5219 = vpop.f32.mrb[0].mxu0
        %5220 = vmatprep.mubr.f32.mxu0 0.0
        %v5221 = vand.u32 %v4470, 4294901760
        %5222 = vmatmul.mubr.f32.gmra.mrb[0].mxu0 %v5221
        %v5223 = vpop.f32.mrb[0].mxu0
        %v5224 = vadd.f32 %v4883, %v5223
        %v5225 = vpop.f32.mrb[0].mxu0
        %5226 = vmatprep.mubr.f32.mxu0 0.0
        %v5227 = vand.u32 %v4471, 4294901760
        %5228 = vmatmul.mubr.f32.gmra.mrb[0].mxu0 %v5227
        %v5229 = vpop.f32.mrb[0].mxu0
        %v5230 = vadd.f32 %v4893, %v5229
        %v5231 = vpop.f32.mrb[0].mxu0
        %5232 = vdwg.mxu0
        %5233 = vmatprep.subr.mxu0 0.0
        %v5234 = vand.u32 %v4472, 4294901760
        %v5235 = vsub.f32 %v4472, %v5234
        %5236 = vmatpush1.msra.mxu0 %v5235
        %5237 = vmatprep.subr.mxu0 0.0
        %v5238 = vand.u32 %v4473, 4294901760
        %v5239 = vsub.f32 %v4473, %v5238
        %5240 = vmatpush1.msra.mxu0 %v5239
        %5241 = vmatprep.subr.mxu0 0.0
        %v5242 = vand.u32 %v4474, 4294901760
        %v5243 = vsub.f32 %v4474, %v5242
        %5244 = vmatpush1.msra.mxu0 %v5243
        %5245 = vmatprep.subr.mxu0 0.0
        %v5246 = vand.u32 %v4475, 4294901760
        %v5247 = vsub.f32 %v4475, %v5246
        %5248 = vmatpush1.msra.mxu0 %v5247
        %5249 = vmatprep.subr.mxu0 0.0
        %v5250 = vand.u32 %v4476, 4294901760
        %v5251 = vsub.f32 %v4476, %v5250
        %5252 = vmatpush1.msra.mxu0 %v5251
        %5253 = vmatprep.subr.mxu0 0.0
        %v5254 = vand.u32 %v4477, 4294901760
        %v5255 = vsub.f32 %v4477, %v5254
        %5256 = vmatpush1.msra.mxu0 %v5255
        %5257 = vmatprep.subr.mxu0 0.0
        %v5258 = vand.u32 %v4478, 4294901760
        %v5259 = vsub.f32 %v4478, %v5258
        %5260 = vmatpush1.msra.mxu0 %v5259
        %5261 = vmatprep.subr.mxu0 0.0
        %v5262 = vand.u32 %v4479, 4294901760
        %v5263 = vsub.f32 %v4479, %v5262
        %5264 = vmatpush1.msra.mxu0 %v5263
        %5265 = vmatprep.subr.mxu0 0.0
        %v5266 = vand.u32 %v4480, 4294901760
        %v5267 = vsub.f32 %v4480, %v5266
        %5268 = vmatpush1.msra.mxu0 %v5267
        %5269 = vmatprep.subr.mxu0 0.0
        %v5270 = vand.u32 %v4481, 4294901760
        %v5271 = vsub.f32 %v4481, %v5270
        %5272 = vmatpush1.msra.mxu0 %v5271
        %5273 = vmatprep.subr.mxu0 0.0
        %v5274 = vand.u32 %v4482, 4294901760
        %v5275 = vsub.f32 %v4482, %v5274
        %5276 = vmatpush1.msra.mxu0 %v5275
        %5277 = vmatprep.subr.mxu0 0.0
        %v5278 = vand.u32 %v4483, 4294901760
        %v5279 = vsub.f32 %v4483, %v5278
        %5280 = vmatpush1.msra.mxu0 %v5279
        %5281 = vmatprep.subr.mxu0 0.0
        %v5282 = vand.u32 %v4484, 4294901760
        %v5283 = vsub.f32 %v4484, %v5282
        %5284 = vmatpush1.msra.mxu0 %v5283
        %5285 = vmatprep.subr.mxu0 0.0
        %v5286 = vand.u32 %v4485, 4294901760
        %v5287 = vsub.f32 %v4485, %v5286
        %5288 = vmatpush1.msra.mxu0 %v5287
        %5289 = vmatprep.subr.mxu0 0.0
        %v5290 = vand.u32 %v4486, 4294901760
        %v5291 = vsub.f32 %v4486, %v5290
        %5292 = vmatpush1.msra.mxu0 %v5291
        %5293 = vmatprep.subr.mxu0 0.0
        %v5294 = vand.u32 %v4487, 4294901760
        %v5295 = vsub.f32 %v4487, %v5294
        %5296 = vmatpush1.msra.mxu0 %v5295
        %5297 = vmatprep.subr.mxu0 0.0
        %5298 = vmatpush1.msra.mxu0 0.0
        %5299 = vmatprep.subr.mxu0 0.0
        %5300 = vmatpush1.msra.mxu0 0.0
        %5301 = vmatprep.subr.mxu0 0.0
        %5302 = vmatpush1.msra.mxu0 0.0
        %5303 = vmatprep.subr.mxu0 0.0
        %5304 = vmatpush1.msra.mxu0 0.0
        %5305 = vmatprep.subr.mxu0 0.0
        %5306 = vmatpush1.msra.mxu0 0.0
        %5307 = vmatprep.subr.mxu0 0.0
        %5308 = vmatpush1.msra.mxu0 0.0
        %5309 = vmatprep.subr.mxu0 0.0
        %5310 = vmatpush1.msra.mxu0 0.0
        %5311 = vmatprep.subr.mxu0 0.0
        %5312 = vmatpush1.msra.mxu0 0.0
        %5313 = vmatprep.subr.mxu0 0.0
        %5314 = vmatpush1.msra.mxu0 0.0
        %5315 = vmatprep.subr.mxu0 0.0
        %5316 = vmatpush1.msra.mxu0 0.0
        %5317 = vmatprep.subr.mxu0 0.0
        %5318 = vmatpush1.msra.mxu0 0.0
        %5319 = vmatprep.subr.mxu0 0.0
        %5320 = vmatpush1.msra.mxu0 0.0
        %5321 = vmatprep.subr.mxu0 0.0
        %5322 = vmatpush1.msra.mxu0 0.0
        %5323 = vmatprep.subr.mxu0 0.0
        %5324 = vmatpush1.msra.mxu0 0.0
        %5325 = vmatprep.subr.mxu0 0.0
        %5326 = vmatpush1.msra.mxu0 0.0
        %5327 = vmatprep.subr.mxu0 0.0
        %5328 = vmatpush1.msra.mxu0 0.0
        %5329 = vmatprep.mubr.f32.mxu0 0.0
        %v5330 = vand.u32 %v4440, 4294901760
        %v5331 = vsub.f32 %v4440, %v5330
        %5332 = vmatmul.mubr.f32.gmra.mrb[0].mxu0 %v5331
        %v5333 = vpop.f32.mrb[0].mxu0
        %v5334 = vadd.f32 %v5044, %v5333
        %v5335 = vpop.f32.mrb[0].mxu0
        %5336 = vmatprep.mubr.f32.mxu0 0.0
        %v5337 = vand.u32 %v4441, 4294901760
        %v5338 = vsub.f32 %v4441, %v5337
        %5339 = vmatmul.mubr.f32.gmra.mrb[0].mxu0 %v5338
        %v5340 = vpop.f32.mrb[0].mxu0
        %v5341 = vadd.f32 %v5050, %v5340
        %v5342 = vpop.f32.mrb[0].mxu0
        %5343 = vmatprep.mubr.f32.mxu0 0.0
        %v5344 = vand.u32 %v4442, 4294901760
        %v5345 = vsub.f32 %v4442, %v5344
        %5346 = vmatmul.mubr.f32.gmra.mrb[0].mxu0 %v5345
        %v5347 = vpop.f32.mrb[0].mxu0
        %v5348 = vadd.f32 %v5056, %v5347
        %v5349 = vpop.f32.mrb[0].mxu0
        %5350 = vmatprep.mubr.f32.mxu0 0.0
        %v5351 = vand.u32 %v4443, 4294901760
        %v5352 = vsub.f32 %v4443, %v5351
        %5353 = vmatmul.mubr.f32.gmra.mrb[0].mxu0 %v5352
        %v5354 = vpop.f32.mrb[0].mxu0
        %v5355 = vadd.f32 %v5062, %v5354
        %v5356 = vpop.f32.mrb[0].mxu0
        %5357 = vmatprep.mubr.f32.mxu0 0.0
        %v5358 = vand.u32 %v4444, 4294901760
        %v5359 = vsub.f32 %v4444, %v5358
        %5360 = vmatmul.mubr.f32.gmra.mrb[0].mxu0 %v5359
        %v5361 = vpop.f32.mrb[0].mxu0
        %v5362 = vadd.f32 %v5068, %v5361
        %v5363 = vpop.f32.mrb[0].mxu0
        %5364 = vmatprep.mubr.f32.mxu0 0.0
        %v5365 = vand.u32 %v4445, 4294901760
        %v5366 = vsub.f32 %v4445, %v5365
        %5367 = vmatmul.mubr.f32.gmra.mrb[0].mxu0 %v5366
        %v5368 = vpop.f32.mrb[0].mxu0
        %v5369 = vadd.f32 %v5074, %v5368
        %v5370 = vpop.f32.mrb[0].mxu0
        %5371 = vmatprep.mubr.f32.mxu0 0.0
        %v5372 = vand.u32 %v4446, 4294901760
        %v5373 = vsub.f32 %v4446, %v5372
        %5374 = vmatmul.mubr.f32.gmra.mrb[0].mxu0 %v5373
        %v5375 = vpop.f32.mrb[0].mxu0
        %v5376 = vadd.f32 %v5080, %v5375
        %v5377 = vpop.f32.mrb[0].mxu0
        %5378 = vmatprep.mubr.f32.mxu0 0.0
        %v5379 = vand.u32 %v4447, 4294901760
        %v5380 = vsub.f32 %v4447, %v5379
        %5381 = vmatmul.mubr.f32.gmra.mrb[0].mxu0 %v5380
        %v5382 = vpop.f32.mrb[0].mxu0
        %v5383 = vadd.f32 %v5086, %v5382
        %v5384 = vpop.f32.mrb[0].mxu0
        %5385 = vmatprep.mubr.f32.mxu0 0.0
        %v5386 = vand.u32 %v4448, 4294901760
        %v5387 = vsub.f32 %v4448, %v5386
        %5388 = vmatmul.mubr.f32.gmra.mrb[0].mxu0 %v5387
        %v5389 = vpop.f32.mrb[0].mxu0
        %v5390 = vadd.f32 %v5092, %v5389
        %v5391 = vpop.f32.mrb[0].mxu0
        %5392 = vmatprep.mubr.f32.mxu0 0.0
        %v5393 = vand.u32 %v4449, 4294901760
        %v5394 = vsub.f32 %v4449, %v5393
        %5395 = vmatmul.mubr.f32.gmra.mrb[0].mxu0 %v5394
        %v5396 = vpop.f32.mrb[0].mxu0
        %v5397 = vadd.f32 %v5098, %v5396
        %v5398 = vpop.f32.mrb[0].mxu0
        %5399 = vmatprep.mubr.f32.mxu0 0.0
        %v5400 = vand.u32 %v4450, 4294901760
        %v5401 = vsub.f32 %v4450, %v5400
        %5402 = vmatmul.mubr.f32.gmra.mrb[0].mxu0 %v5401
        %v5403 = vpop.f32.mrb[0].mxu0
        %v5404 = vadd.f32 %v5104, %v5403
        %v5405 = vpop.f32.mrb[0].mxu0
        %5406 = vmatprep.mubr.f32.mxu0 0.0
        %v5407 = vand.u32 %v4451, 4294901760
        %v5408 = vsub.f32 %v4451, %v5407
        %5409 = vmatmul.mubr.f32.gmra.mrb[0].mxu0 %v5408
        %v5410 = vpop.f32.mrb[0].mxu0
        %v5411 = vadd.f32 %v5110, %v5410
        %v5412 = vpop.f32.mrb[0].mxu0
        %5413 = vmatprep.mubr.f32.mxu0 0.0
        %v5414 = vand.u32 %v4452, 4294901760
        %v5415 = vsub.f32 %v4452, %v5414
        %5416 = vmatmul.mubr.f32.gmra.mrb[0].mxu0 %v5415
        %v5417 = vpop.f32.mrb[0].mxu0
        %v5418 = vadd.f32 %v5116, %v5417
        %v5419 = vpop.f32.mrb[0].mxu0
        %5420 = vmatprep.mubr.f32.mxu0 0.0
        %v5421 = vand.u32 %v4453, 4294901760
        %v5422 = vsub.f32 %v4453, %v5421
        %5423 = vmatmul.mubr.f32.gmra.mrb[0].mxu0 %v5422
        %v5424 = vpop.f32.mrb[0].mxu0
        %v5425 = vadd.f32 %v5122, %v5424
        %v5426 = vpop.f32.mrb[0].mxu0
        %5427 = vmatprep.mubr.f32.mxu0 0.0
        %v5428 = vand.u32 %v4454, 4294901760
        %v5429 = vsub.f32 %v4454, %v5428
        %5430 = vmatmul.mubr.f32.gmra.mrb[0].mxu0 %v5429
        %v5431 = vpop.f32.mrb[0].mxu0
        %v5432 = vadd.f32 %v5128, %v5431
        %v5433 = vpop.f32.mrb[0].mxu0
        %5434 = vmatprep.mubr.f32.mxu0 0.0
        %v5435 = vand.u32 %v4455, 4294901760
        %v5436 = vsub.f32 %v4455, %v5435
        %5437 = vmatmul.mubr.f32.gmra.mrb[0].mxu0 %v5436
        %v5438 = vpop.f32.mrb[0].mxu0
        %v5439 = vadd.f32 %v5134, %v5438
        %v5440 = vpop.f32.mrb[0].mxu0
        %5441 = vmatprep.mubr.f32.mxu0 0.0
        %v5442 = vand.u32 %v4456, 4294901760
        %v5443 = vsub.f32 %v4456, %v5442
        %5444 = vmatmul.mubr.f32.gmra.mrb[0].mxu0 %v5443
        %v5445 = vpop.f32.mrb[0].mxu0
        %v5446 = vadd.f32 %v5140, %v5445
        %v5447 = vpop.f32.mrb[0].mxu0
        %5448 = vmatprep.mubr.f32.mxu0 0.0
        %v5449 = vand.u32 %v4457, 4294901760
        %v5450 = vsub.f32 %v4457, %v5449
        %5451 = vmatmul.mubr.f32.gmra.mrb[0].mxu0 %v5450
        %v5452 = vpop.f32.mrb[0].mxu0
        %v5453 = vadd.f32 %v5146, %v5452
        %v5454 = vpop.f32.mrb[0].mxu0
        %5455 = vmatprep.mubr.f32.mxu0 0.0
        %v5456 = vand.u32 %v4458, 4294901760
        %v5457 = vsub.f32 %v4458, %v5456
        %5458 = vmatmul.mubr.f32.gmra.mrb[0].mxu0 %v5457
        %v5459 = vpop.f32.mrb[0].mxu0
        %v5460 = vadd.f32 %v5152, %v5459
        %v5461 = vpop.f32.mrb[0].mxu0
        %5462 = vmatprep.mubr.f32.mxu0 0.0
        %v5463 = vand.u32 %v4459, 4294901760
        %v5464 = vsub.f32 %v4459, %v5463
        %5465 = vmatmul.mubr.f32.gmra.mrb[0].mxu0 %v5464
        %v5466 = vpop.f32.mrb[0].mxu0
        %v5467 = vadd.f32 %v5158, %v5466
        %v5468 = vpop.f32.mrb[0].mxu0
        %5469 = vmatprep.mubr.f32.mxu0 0.0
        %v5470 = vand.u32 %v4460, 4294901760
        %v5471 = vsub.f32 %v4460, %v5470
        %5472 = vmatmul.mubr.f32.gmra.mrb[0].mxu0 %v5471
        %v5473 = vpop.f32.mrb[0].mxu0
        %v5474 = vadd.f32 %v5164, %v5473
        %v5475 = vpop.f32.mrb[0].mxu0
        %5476 = vmatprep.mubr.f32.mxu0 0.0
        %v5477 = vand.u32 %v4461, 4294901760
        %v5478 = vsub.f32 %v4461, %v5477
        %5479 = vmatmul.mubr.f32.gmra.mrb[0].mxu0 %v5478
        %v5480 = vpop.f32.mrb[0].mxu0
        %v5481 = vadd.f32 %v5170, %v5480
        %v5482 = vpop.f32.mrb[0].mxu0
        %5483 = vmatprep.mubr.f32.mxu0 0.0
        %v5484 = vand.u32 %v4462, 4294901760
        %v5485 = vsub.f32 %v4462, %v5484
        %5486 = vmatmul.mubr.f32.gmra.mrb[0].mxu0 %v5485
        %v5487 = vpop.f32.mrb[0].mxu0
        %v5488 = vadd.f32 %v5176, %v5487
        %v5489 = vpop.f32.mrb[0].mxu0
        %5490 = vmatprep.mubr.f32.mxu0 0.0
        %v5491 = vand.u32 %v4463, 4294901760
        %v5492 = vsub.f32 %v4463, %v5491
        %5493 = vmatmul.mubr.f32.gmra.mrb[0].mxu0 %v5492
        %v5494 = vpop.f32.mrb[0].mxu0
        %v5495 = vadd.f32 %v5182, %v5494
        %v5496 = vpop.f32.mrb[0].mxu0
        %5497 = vmatprep.mubr.f32.mxu0 0.0
        %v5498 = vand.u32 %v4464, 4294901760
        %v5499 = vsub.f32 %v4464, %v5498
        %5500 = vmatmul.mubr.f32.gmra.mrb[0].mxu0 %v5499
        %v5501 = vpop.f32.mrb[0].mxu0
        %v5502 = vadd.f32 %v5188, %v5501
        %v5503 = vpop.f32.mrb[0].mxu0
        %5504 = vmatprep.mubr.f32.mxu0 0.0
        %v5505 = vand.u32 %v4465, 4294901760
        %v5506 = vsub.f32 %v4465, %v5505
        %5507 = vmatmul.mubr.f32.gmra.mrb[0].mxu0 %v5506
        %v5508 = vpop.f32.mrb[0].mxu0
        %v5509 = vadd.f32 %v5194, %v5508
        %v5510 = vpop.f32.mrb[0].mxu0
        %5511 = vmatprep.mubr.f32.mxu0 0.0
        %v5512 = vand.u32 %v4466, 4294901760
        %v5513 = vsub.f32 %v4466, %v5512
        %5514 = vmatmul.mubr.f32.gmra.mrb[0].mxu0 %v5513
        %v5515 = vpop.f32.mrb[0].mxu0
        %v5516 = vadd.f32 %v5200, %v5515
        %v5517 = vpop.f32.mrb[0].mxu0
        %5518 = vmatprep.mubr.f32.mxu0 0.0
        %v5519 = vand.u32 %v4467, 4294901760
        %v5520 = vsub.f32 %v4467, %v5519
        %5521 = vmatmul.mubr.f32.gmra.mrb[0].mxu0 %v5520
        %v5522 = vpop.f32.mrb[0].mxu0
        %v5523 = vadd.f32 %v5206, %v5522
        %v5524 = vpop.f32.mrb[0].mxu0
        %5525 = vmatprep.mubr.f32.mxu0 0.0
        %v5526 = vand.u32 %v4468, 4294901760
        %v5527 = vsub.f32 %v4468, %v5526
        %5528 = vmatmul.mubr.f32.gmra.mrb[0].mxu0 %v5527
        %v5529 = vpop.f32.mrb[0].mxu0
        %v5530 = vadd.f32 %v5212, %v5529
        %v5531 = vpop.f32.mrb[0].mxu0
        %5532 = vmatprep.mubr.f32.mxu0 0.0
        %v5533 = vand.u32 %v4469, 4294901760
        %v5534 = vsub.f32 %v4469, %v5533
        %5535 = vmatmul.mubr.f32.gmra.mrb[0].mxu0 %v5534
        %v5536 = vpop.f32.mrb[0].mxu0
        %v5537 = vadd.f32 %v5218, %v5536
        %v5538 = vpop.f32.mrb[0].mxu0
        %5539 = vmatprep.mubr.f32.mxu0 0.0
        %v5540 = vand.u32 %v4470, 4294901760
        %v5541 = vsub.f32 %v4470, %v5540
        %5542 = vmatmul.mubr.f32.gmra.mrb[0].mxu0 %v5541
        %v5543 = vpop.f32.mrb[0].mxu0
        %v5544 = vadd.f32 %v5224, %v5543
        %v5545 = vpop.f32.mrb[0].mxu0
        %5546 = vmatprep.mubr.f32.mxu0 0.0
        %v5547 = vand.u32 %v4471, 4294901760
        %v5548 = vsub.f32 %v4471, %v5547
        %5549 = vmatmul.mubr.f32.gmra.mrb[0].mxu0 %v5548
        %v5550 = vpop.f32.mrb[0].mxu0
        %v5551 = vadd.f32 %v5230, %v5550
        %v5552 = vpop.f32.mrb[0].mxu0
        %5553 = vdwg.mxu0
        %5554 = vmatprep.subr.mxu0 0.0
        %v5555 = vand.u32 %v4472, 4294901760
        %5556 = vmatpush1.msra.mxu0 %v5555
        %5557 = vmatprep.subr.mxu0 0.0
        %v5558 = vand.u32 %v4473, 4294901760
        %5559 = vmatpush1.msra.mxu0 %v5558
        %5560 = vmatprep.subr.mxu0 0.0
        %v5561 = vand.u32 %v4474, 4294901760
        %5562 = vmatpush1.msra.mxu0 %v5561
        %5563 = vmatprep.subr.mxu0 0.0
        %v5564 = vand.u32 %v4475, 4294901760
        %5565 = vmatpush1.msra.mxu0 %v5564
        %5566 = vmatprep.subr.mxu0 0.0
        %v5567 = vand.u32 %v4476, 4294901760
        %5568 = vmatpush1.msra.mxu0 %v5567
        %5569 = vmatprep.subr.mxu0 0.0
        %v5570 = vand.u32 %v4477, 4294901760
        %5571 = vmatpush1.msra.mxu0 %v5570
        %5572 = vmatprep.subr.mxu0 0.0
        %v5573 = vand.u32 %v4478, 4294901760
        %5574 = vmatpush1.msra.mxu0 %v5573
        %5575 = vmatprep.subr.mxu0 0.0
        %v5576 = vand.u32 %v4479, 4294901760
        %5577 = vmatpush1.msra.mxu0 %v5576
        %5578 = vmatprep.subr.mxu0 0.0
        %v5579 = vand.u32 %v4480, 4294901760
        %5580 = vmatpush1.msra.mxu0 %v5579
        %5581 = vmatprep.subr.mxu0 0.0
        %v5582 = vand.u32 %v4481, 4294901760
        %5583 = vmatpush1.msra.mxu0 %v5582
        %5584 = vmatprep.subr.mxu0 0.0
        %v5585 = vand.u32 %v4482, 4294901760
        %5586 = vmatpush1.msra.mxu0 %v5585
        %5587 = vmatprep.subr.mxu0 0.0
        %v5588 = vand.u32 %v4483, 4294901760
        %5589 = vmatpush1.msra.mxu0 %v5588
        %5590 = vmatprep.subr.mxu0 0.0
        %v5591 = vand.u32 %v4484, 4294901760
        %5592 = vmatpush1.msra.mxu0 %v5591
        %5593 = vmatprep.subr.mxu0 0.0
        %v5594 = vand.u32 %v4485, 4294901760
        %5595 = vmatpush1.msra.mxu0 %v5594
        %5596 = vmatprep.subr.mxu0 0.0
        %v5597 = vand.u32 %v4486, 4294901760
        %5598 = vmatpush1.msra.mxu0 %v5597
        %5599 = vmatprep.subr.mxu0 0.0
        %v5600 = vand.u32 %v4487, 4294901760
        %5601 = vmatpush1.msra.mxu0 %v5600
        %5602 = vmatprep.subr.mxu0 0.0
        %5603 = vmatpush1.msra.mxu0 0.0
        %5604 = vmatprep.subr.mxu0 0.0
        %5605 = vmatpush1.msra.mxu0 0.0
        %5606 = vmatprep.subr.mxu0 0.0
        %5607 = vmatpush1.msra.mxu0 0.0
        %5608 = vmatprep.subr.mxu0 0.0
        %5609 = vmatpush1.msra.mxu0 0.0
        %5610 = vmatprep.subr.mxu0 0.0
        %5611 = vmatpush1.msra.mxu0 0.0
        %5612 = vmatprep.subr.mxu0 0.0
        %5613 = vmatpush1.msra.mxu0 0.0
        %5614 = vmatprep.subr.mxu0 0.0
        %5615 = vmatpush1.msra.mxu0 0.0
        %5616 = vmatprep.subr.mxu0 0.0
        %5617 = vmatpush1.msra.mxu0 0.0
        %5618 = vmatprep.subr.mxu0 0.0
        %5619 = vmatpush1.msra.mxu0 0.0
        %5620 = vmatprep.subr.mxu0 0.0
        %5621 = vmatpush1.msra.mxu0 0.0
        %5622 = vmatprep.subr.mxu0 0.0
        %5623 = vmatpush1.msra.mxu0 0.0
        %5624 = vmatprep.subr.mxu0 0.0
        %5625 = vmatpush1.msra.mxu0 0.0
        %5626 = vmatprep.subr.mxu0 0.0
        %5627 = vmatpush1.msra.mxu0 0.0
        %5628 = vmatprep.subr.mxu0 0.0
        %5629 = vmatpush1.msra.mxu0 0.0
        %5630 = vmatprep.subr.mxu0 0.0
        %5631 = vmatpush1.msra.mxu0 0.0
        %5632 = vmatprep.subr.mxu0 0.0
        %5633 = vmatpush1.msra.mxu0 0.0
        %5634 = vmatprep.mubr.f32.mxu0 0.0
        %v5635 = vand.u32 %v4440, 4294901760
        %v5636 = vsub.f32 %v4440, %v5635
        %v5637 = vand.u32 %v5636, 4294901760
        %5638 = vmatmul.mubr.f32.gmra.mrb[0].mxu0 %v5637
        %v5639 = vpop.f32.mrb[0].mxu0
        %v5640 = vadd.f32 %v5334, %v5639
        %v5641 = vpop.f32.mrb[0].mxu0
        %5642 = vmatprep.mubr.f32.mxu0 0.0
        %v5643 = vand.u32 %v4441, 4294901760
        %v5644 = vsub.f32 %v4441, %v5643
        %v5645 = vand.u32 %v5644, 4294901760
        %5646 = vmatmul.mubr.f32.gmra.mrb[0].mxu0 %v5645
        %v5647 = vpop.f32.mrb[0].mxu0
        %v5648 = vadd.f32 %v5341, %v5647
        %v5649 = vpop.f32.mrb[0].mxu0
        %5650 = vmatprep.mubr.f32.mxu0 0.0
        %v5651 = vand.u32 %v4442, 4294901760
        %v5652 = vsub.f32 %v4442, %v5651
        %v5653 = vand.u32 %v5652, 4294901760
        %5654 = vmatmul.mubr.f32.gmra.mrb[0].mxu0 %v5653
        %v5655 = vpop.f32.mrb[0].mxu0
        %v5656 = vadd.f32 %v5348, %v5655
        %v5657 = vpop.f32.mrb[0].mxu0
        %5658 = vmatprep.mubr.f32.mxu0 0.0
        %v5659 = vand.u32 %v4443, 4294901760
        %v5660 = vsub.f32 %v4443, %v5659
        %v5661 = vand.u32 %v5660, 4294901760
        %5662 = vmatmul.mubr.f32.gmra.mrb[0].mxu0 %v5661
        %v5663 = vpop.f32.mrb[0].mxu0
        %v5664 = vadd.f32 %v5355, %v5663
        %v5665 = vpop.f32.mrb[0].mxu0
        %5666 = vmatprep.mubr.f32.mxu0 0.0
        %v5667 = vand.u32 %v4444, 4294901760
        %v5668 = vsub.f32 %v4444, %v5667
        %v5669 = vand.u32 %v5668, 4294901760
        %5670 = vmatmul.mubr.f32.gmra.mrb[0].mxu0 %v5669
        %v5671 = vpop.f32.mrb[0].mxu0
        %v5672 = vadd.f32 %v5362, %v5671
        %v5673 = vpop.f32.mrb[0].mxu0
        %5674 = vmatprep.mubr.f32.mxu0 0.0
        %v5675 = vand.u32 %v4445, 4294901760
        %v5676 = vsub.f32 %v4445, %v5675
        %v5677 = vand.u32 %v5676, 4294901760
        %5678 = vmatmul.mubr.f32.gmra.mrb[0].mxu0 %v5677
        %v5679 = vpop.f32.mrb[0].mxu0
        %v5680 = vadd.f32 %v5369, %v5679
        %v5681 = vpop.f32.mrb[0].mxu0
        %5682 = vmatprep.mubr.f32.mxu0 0.0
        %v5683 = vand.u32 %v4446, 4294901760
        %v5684 = vsub.f32 %v4446, %v5683
        %v5685 = vand.u32 %v5684, 4294901760
        %5686 = vmatmul.mubr.f32.gmra.mrb[0].mxu0 %v5685
        %v5687 = vpop.f32.mrb[0].mxu0
        %v5688 = vadd.f32 %v5376, %v5687
        %v5689 = vpop.f32.mrb[0].mxu0
        %5690 = vmatprep.mubr.f32.mxu0 0.0
        %v5691 = vand.u32 %v4447, 4294901760
        %v5692 = vsub.f32 %v4447, %v5691
        %v5693 = vand.u32 %v5692, 4294901760
        %5694 = vmatmul.mubr.f32.gmra.mrb[0].mxu0 %v5693
        %v5695 = vpop.f32.mrb[0].mxu0
        %v5696 = vadd.f32 %v5383, %v5695
        %v5697 = vpop.f32.mrb[0].mxu0
        %5698 = vmatprep.mubr.f32.mxu0 0.0
        %v5699 = vand.u32 %v4448, 4294901760
        %v5700 = vsub.f32 %v4448, %v5699
        %v5701 = vand.u32 %v5700, 4294901760
        %5702 = vmatmul.mubr.f32.gmra.mrb[0].mxu0 %v5701
        %v5703 = vpop.f32.mrb[0].mxu0
        %v5704 = vadd.f32 %v5390, %v5703
        %v5705 = vpop.f32.mrb[0].mxu0
        %5706 = vmatprep.mubr.f32.mxu0 0.0
        %v5707 = vand.u32 %v4449, 4294901760
        %v5708 = vsub.f32 %v4449, %v5707
        %v5709 = vand.u32 %v5708, 4294901760
        %5710 = vmatmul.mubr.f32.gmra.mrb[0].mxu0 %v5709
        %v5711 = vpop.f32.mrb[0].mxu0
        %v5712 = vadd.f32 %v5397, %v5711
        %v5713 = vpop.f32.mrb[0].mxu0
        %5714 = vmatprep.mubr.f32.mxu0 0.0
        %v5715 = vand.u32 %v4450, 4294901760
        %v5716 = vsub.f32 %v4450, %v5715
        %v5717 = vand.u32 %v5716, 4294901760
        %5718 = vmatmul.mubr.f32.gmra.mrb[0].mxu0 %v5717
        %v5719 = vpop.f32.mrb[0].mxu0
        %v5720 = vadd.f32 %v5404, %v5719
        %v5721 = vpop.f32.mrb[0].mxu0
        %5722 = vmatprep.mubr.f32.mxu0 0.0
        %v5723 = vand.u32 %v4451, 4294901760
        %v5724 = vsub.f32 %v4451, %v5723
        %v5725 = vand.u32 %v5724, 4294901760
        %5726 = vmatmul.mubr.f32.gmra.mrb[0].mxu0 %v5725
        %v5727 = vpop.f32.mrb[0].mxu0
        %v5728 = vadd.f32 %v5411, %v5727
        %v5729 = vpop.f32.mrb[0].mxu0
        %5730 = vmatprep.mubr.f32.mxu0 0.0
        %v5731 = vand.u32 %v4452, 4294901760
        %v5732 = vsub.f32 %v4452, %v5731
        %v5733 = vand.u32 %v5732, 4294901760
        %5734 = vmatmul.mubr.f32.gmra.mrb[0].mxu0 %v5733
        %v5735 = vpop.f32.mrb[0].mxu0
        %v5736 = vadd.f32 %v5418, %v5735
        %v5737 = vpop.f32.mrb[0].mxu0
        %5738 = vmatprep.mubr.f32.mxu0 0.0
        %v5739 = vand.u32 %v4453, 4294901760
        %v5740 = vsub.f32 %v4453, %v5739
        %v5741 = vand.u32 %v5740, 4294901760
        %5742 = vmatmul.mubr.f32.gmra.mrb[0].mxu0 %v5741
        %v5743 = vpop.f32.mrb[0].mxu0
        %v5744 = vadd.f32 %v5425, %v5743
        %v5745 = vpop.f32.mrb[0].mxu0
        %5746 = vmatprep.mubr.f32.mxu0 0.0
        %v5747 = vand.u32 %v4454, 4294901760
        %v5748 = vsub.f32 %v4454, %v5747
        %v5749 = vand.u32 %v5748, 4294901760
        %5750 = vmatmul.mubr.f32.gmra.mrb[0].mxu0 %v5749
        %v5751 = vpop.f32.mrb[0].mxu0
        %v5752 = vadd.f32 %v5432, %v5751
        %v5753 = vpop.f32.mrb[0].mxu0
        %5754 = vmatprep.mubr.f32.mxu0 0.0
        %v5755 = vand.u32 %v4455, 4294901760
        %v5756 = vsub.f32 %v4455, %v5755
        %v5757 = vand.u32 %v5756, 4294901760
        %5758 = vmatmul.mubr.f32.gmra.mrb[0].mxu0 %v5757
        %v5759 = vpop.f32.mrb[0].mxu0
        %v5760 = vadd.f32 %v5439, %v5759
        %v5761 = vpop.f32.mrb[0].mxu0
        %5762 = vmatprep.mubr.f32.mxu0 0.0
        %v5763 = vand.u32 %v4456, 4294901760
        %v5764 = vsub.f32 %v4456, %v5763
        %v5765 = vand.u32 %v5764, 4294901760
        %5766 = vmatmul.mubr.f32.gmra.mrb[0].mxu0 %v5765
        %v5767 = vpop.f32.mrb[0].mxu0
        %v5768 = vadd.f32 %v5446, %v5767
        %v5769 = vpop.f32.mrb[0].mxu0
        %5770 = vmatprep.mubr.f32.mxu0 0.0
        %v5771 = vand.u32 %v4457, 4294901760
        %v5772 = vsub.f32 %v4457, %v5771
        %v5773 = vand.u32 %v5772, 4294901760
        %5774 = vmatmul.mubr.f32.gmra.mrb[0].mxu0 %v5773
        %v5775 = vpop.f32.mrb[0].mxu0
        %v5776 = vadd.f32 %v5453, %v5775
        %v5777 = vpop.f32.mrb[0].mxu0
        %5778 = vmatprep.mubr.f32.mxu0 0.0
        %v5779 = vand.u32 %v4458, 4294901760
        %v5780 = vsub.f32 %v4458, %v5779
        %v5781 = vand.u32 %v5780, 4294901760
        %5782 = vmatmul.mubr.f32.gmra.mrb[0].mxu0 %v5781
        %v5783 = vpop.f32.mrb[0].mxu0
        %v5784 = vadd.f32 %v5460, %v5783
        %v5785 = vpop.f32.mrb[0].mxu0
        %5786 = vmatprep.mubr.f32.mxu0 0.0
        %v5787 = vand.u32 %v4459, 4294901760
        %v5788 = vsub.f32 %v4459, %v5787
        %v5789 = vand.u32 %v5788, 4294901760
        %5790 = vmatmul.mubr.f32.gmra.mrb[0].mxu0 %v5789
        %v5791 = vpop.f32.mrb[0].mxu0
        %v5792 = vadd.f32 %v5467, %v5791
        %v5793 = vpop.f32.mrb[0].mxu0
        %5794 = vmatprep.mubr.f32.mxu0 0.0
        %v5795 = vand.u32 %v4460, 4294901760
        %v5796 = vsub.f32 %v4460, %v5795
        %v5797 = vand.u32 %v5796, 4294901760
        %5798 = vmatmul.mubr.f32.gmra.mrb[0].mxu0 %v5797
        %v5799 = vpop.f32.mrb[0].mxu0
        %v5800 = vadd.f32 %v5474, %v5799
        %v5801 = vpop.f32.mrb[0].mxu0
        %5802 = vmatprep.mubr.f32.mxu0 0.0
        %v5803 = vand.u32 %v4461, 4294901760
        %v5804 = vsub.f32 %v4461, %v5803
        %v5805 = vand.u32 %v5804, 4294901760
        %5806 = vmatmul.mubr.f32.gmra.mrb[0].mxu0 %v5805
        %v5807 = vpop.f32.mrb[0].mxu0
        %v5808 = vadd.f32 %v5481, %v5807
        %v5809 = vpop.f32.mrb[0].mxu0
        %5810 = vmatprep.mubr.f32.mxu0 0.0
        %v5811 = vand.u32 %v4462, 4294901760
        %v5812 = vsub.f32 %v4462, %v5811
        %v5813 = vand.u32 %v5812, 4294901760
        %5814 = vmatmul.mubr.f32.gmra.mrb[0].mxu0 %v5813
        %v5815 = vpop.f32.mrb[0].mxu0
        %v5816 = vadd.f32 %v5488, %v5815
        %v5817 = vpop.f32.mrb[0].mxu0
        %5818 = vmatprep.mubr.f32.mxu0 0.0
        %v5819 = vand.u32 %v4463, 4294901760
        %v5820 = vsub.f32 %v4463, %v5819
        %v5821 = vand.u32 %v5820, 4294901760
        %5822 = vmatmul.mubr.f32.gmra.mrb[0].mxu0 %v5821
        %v5823 = vpop.f32.mrb[0].mxu0
        %v5824 = vadd.f32 %v5495, %v5823
        %v5825 = vpop.f32.mrb[0].mxu0
        %5826 = vmatprep.mubr.f32.mxu0 0.0
        %v5827 = vand.u32 %v4464, 4294901760
        %v5828 = vsub.f32 %v4464, %v5827
        %v5829 = vand.u32 %v5828, 4294901760
        %5830 = vmatmul.mubr.f32.gmra.mrb[0].mxu0 %v5829
        %v5831 = vpop.f32.mrb[0].mxu0
        %v5832 = vadd.f32 %v5502, %v5831
        %v5833 = vpop.f32.mrb[0].mxu0
        %5834 = vmatprep.mubr.f32.mxu0 0.0
        %v5835 = vand.u32 %v4465, 4294901760
        %v5836 = vsub.f32 %v4465, %v5835
        %v5837 = vand.u32 %v5836, 4294901760
        %5838 = vmatmul.mubr.f32.gmra.mrb[0].mxu0 %v5837
        %v5839 = vpop.f32.mrb[0].mxu0
        %v5840 = vadd.f32 %v5509, %v5839
        %v5841 = vpop.f32.mrb[0].mxu0
        %5842 = vmatprep.mubr.f32.mxu0 0.0
        %v5843 = vand.u32 %v4466, 4294901760
        %v5844 = vsub.f32 %v4466, %v5843
        %v5845 = vand.u32 %v5844, 4294901760
        %5846 = vmatmul.mubr.f32.gmra.mrb[0].mxu0 %v5845
        %v5847 = vpop.f32.mrb[0].mxu0
        %v5848 = vadd.f32 %v5516, %v5847
        %v5849 = vpop.f32.mrb[0].mxu0
        %5850 = vmatprep.mubr.f32.mxu0 0.0
        %v5851 = vand.u32 %v4467, 4294901760
        %v5852 = vsub.f32 %v4467, %v5851
        %v5853 = vand.u32 %v5852, 4294901760
        %5854 = vmatmul.mubr.f32.gmra.mrb[0].mxu0 %v5853
        %v5855 = vpop.f32.mrb[0].mxu0
        %v5856 = vadd.f32 %v5523, %v5855
        %v5857 = vpop.f32.mrb[0].mxu0
        %5858 = vmatprep.mubr.f32.mxu0 0.0
        %v5859 = vand.u32 %v4468, 4294901760
        %v5860 = vsub.f32 %v4468, %v5859
        %v5861 = vand.u32 %v5860, 4294901760
        %5862 = vmatmul.mubr.f32.gmra.mrb[0].mxu0 %v5861
        %v5863 = vpop.f32.mrb[0].mxu0
        %v5864 = vadd.f32 %v5530, %v5863
        %v5865 = vpop.f32.mrb[0].mxu0
        %5866 = vmatprep.mubr.f32.mxu0 0.0
        %v5867 = vand.u32 %v4469, 4294901760
        %v5868 = vsub.f32 %v4469, %v5867
        %v5869 = vand.u32 %v5868, 4294901760
        %5870 = vmatmul.mubr.f32.gmra.mrb[0].mxu0 %v5869
        %v5871 = vpop.f32.mrb[0].mxu0
        %v5872 = vadd.f32 %v5537, %v5871
        %v5873 = vpop.f32.mrb[0].mxu0
        %5874 = vmatprep.mubr.f32.mxu0 0.0
        %v5875 = vand.u32 %v4470, 4294901760
        %v5876 = vsub.f32 %v4470, %v5875
        %v5877 = vand.u32 %v5876, 4294901760
        %5878 = vmatmul.mubr.f32.gmra.mrb[0].mxu0 %v5877
        %v5879 = vpop.f32.mrb[0].mxu0
        %v5880 = vadd.f32 %v5544, %v5879
        %v5881 = vpop.f32.mrb[0].mxu0
        %5882 = vmatprep.mubr.f32.mxu0 0.0
        %v5883 = vand.u32 %v4471, 4294901760
        %v5884 = vsub.f32 %v4471, %v5883
        %v5885 = vand.u32 %v5884, 4294901760
        %5886 = vmatmul.mubr.f32.gmra.mrb[0].mxu0 %v5885
        %v5887 = vpop.f32.mrb[0].mxu0
        %v5888 = vadd.f32 %v5551, %v5887
        %v5889 = vpop.f32.mrb[0].mxu0
        %5890 = vdwg.mxu0
        %5891 = vmatprep.subr.mxu0 0.0
        %v5892 = vand.u32 %v4472, 4294901760
        %v5893 = vsub.f32 %v4472, %v5892
        %v5894 = vand.u32 %v5893, 4294901760
        %5895 = vmatpush1.msra.mxu0 %v5894
        %5896 = vmatprep.subr.mxu0 0.0
        %v5897 = vand.u32 %v4473, 4294901760
        %v5898 = vsub.f32 %v4473, %v5897
        %v5899 = vand.u32 %v5898, 4294901760
        %5900 = vmatpush1.msra.mxu0 %v5899
        %5901 = vmatprep.subr.mxu0 0.0
        %v5902 = vand.u32 %v4474, 4294901760
        %v5903 = vsub.f32 %v4474, %v5902
        %v5904 = vand.u32 %v5903, 4294901760
        %5905 = vmatpush1.msra.mxu0 %v5904
        %5906 = vmatprep.subr.mxu0 0.0
        %v5907 = vand.u32 %v4475, 4294901760
        %v5908 = vsub.f32 %v4475, %v5907
        %v5909 = vand.u32 %v5908, 4294901760
        %5910 = vmatpush1.msra.mxu0 %v5909
        %5911 = vmatprep.subr.mxu0 0.0
        %v5912 = vand.u32 %v4476, 4294901760
        %v5913 = vsub.f32 %v4476, %v5912
        %v5914 = vand.u32 %v5913, 4294901760
        %5915 = vmatpush1.msra.mxu0 %v5914
        %5916 = vmatprep.subr.mxu0 0.0
        %v5917 = vand.u32 %v4477, 4294901760
        %v5918 = vsub.f32 %v4477, %v5917
        %v5919 = vand.u32 %v5918, 4294901760
        %5920 = vmatpush1.msra.mxu0 %v5919
        %5921 = vmatprep.subr.mxu0 0.0
        %v5922 = vand.u32 %v4478, 4294901760
        %v5923 = vsub.f32 %v4478, %v5922
        %v5924 = vand.u32 %v5923, 4294901760
        %5925 = vmatpush1.msra.mxu0 %v5924
        %5926 = vmatprep.subr.mxu0 0.0
        %v5927 = vand.u32 %v4479, 4294901760
        %v5928 = vsub.f32 %v4479, %v5927
        %v5929 = vand.u32 %v5928, 4294901760
        %5930 = vmatpush1.msra.mxu0 %v5929
        %5931 = vmatprep.subr.mxu0 0.0
        %v5932 = vand.u32 %v4480, 4294901760
        %v5933 = vsub.f32 %v4480, %v5932
        %v5934 = vand.u32 %v5933, 4294901760
        %5935 = vmatpush1.msra.mxu0 %v5934
        %5936 = vmatprep.subr.mxu0 0.0
        %v5937 = vand.u32 %v4481, 4294901760
        %v5938 = vsub.f32 %v4481, %v5937
        %v5939 = vand.u32 %v5938, 4294901760
        %5940 = vmatpush1.msra.mxu0 %v5939
        %5941 = vmatprep.subr.mxu0 0.0
        %v5942 = vand.u32 %v4482, 4294901760
        %v5943 = vsub.f32 %v4482, %v5942
        %v5944 = vand.u32 %v5943, 4294901760
        %5945 = vmatpush1.msra.mxu0 %v5944
        %5946 = vmatprep.subr.mxu0 0.0
        %v5947 = vand.u32 %v4483, 4294901760
        %v5948 = vsub.f32 %v4483, %v5947
        %v5949 = vand.u32 %v5948, 4294901760
        %5950 = vmatpush1.msra.mxu0 %v5949
        %5951 = vmatprep.subr.mxu0 0.0
        %v5952 = vand.u32 %v4484, 4294901760
        %v5953 = vsub.f32 %v4484, %v5952
        %v5954 = vand.u32 %v5953, 4294901760
        %5955 = vmatpush1.msra.mxu0 %v5954
        %5956 = vmatprep.subr.mxu0 0.0
        %v5957 = vand.u32 %v4485, 4294901760
        %v5958 = vsub.f32 %v4485, %v5957
        %v5959 = vand.u32 %v5958, 4294901760
        %5960 = vmatpush1.msra.mxu0 %v5959
        %5961 = vmatprep.subr.mxu0 0.0
        %v5962 = vand.u32 %v4486, 4294901760
        %v5963 = vsub.f32 %v4486, %v5962
        %v5964 = vand.u32 %v5963, 4294901760
        %5965 = vmatpush1.msra.mxu0 %v5964
        %5966 = vmatprep.subr.mxu0 0.0
        %v5967 = vand.u32 %v4487, 4294901760
        %v5968 = vsub.f32 %v4487, %v5967
        %v5969 = vand.u32 %v5968, 4294901760
        %5970 = vmatpush1.msra.mxu0 %v5969
        %5971 = vmatprep.subr.mxu0 0.0
        %5972 = vmatpush1.msra.mxu0 0.0
        %5973 = vmatprep.subr.mxu0 0.0
        %5974 = vmatpush1.msra.mxu0 0.0
        %5975 = vmatprep.subr.mxu0 0.0
        %5976 = vmatpush1.msra.mxu0 0.0
        %5977 = vmatprep.subr.mxu0 0.0
        %5978 = vmatpush1.msra.mxu0 0.0
        %5979 = vmatprep.subr.mxu0 0.0
        %5980 = vmatpush1.msra.mxu0 0.0
        %5981 = vmatprep.subr.mxu0 0.0
        %5982 = vmatpush1.msra.mxu0 0.0
        %5983 = vmatprep.subr.mxu0 0.0
        %5984 = vmatpush1.msra.mxu0 0.0
        %5985 = vmatprep.subr.mxu0 0.0
        %5986 = vmatpush1.msra.mxu0 0.0
        %5987 = vmatprep.subr.mxu0 0.0
        %5988 = vmatpush1.msra.mxu0 0.0
        %5989 = vmatprep.subr.mxu0 0.0
        %5990 = vmatpush1.msra.mxu0 0.0
        %5991 = vmatprep.subr.mxu0 0.0
        %5992 = vmatpush1.msra.mxu0 0.0
        %5993 = vmatprep.subr.mxu0 0.0
        %5994 = vmatpush1.msra.mxu0 0.0
        %5995 = vmatprep.subr.mxu0 0.0
        %5996 = vmatpush1.msra.mxu0 0.0
        %5997 = vmatprep.subr.mxu0 0.0
        %5998 = vmatpush1.msra.mxu0 0.0
        %5999 = vmatprep.subr.mxu0 0.0
        %6000 = vmatpush1.msra.mxu0 0.0
        %6001 = vmatprep.subr.mxu0 0.0
        %6002 = vmatpush1.msra.mxu0 0.0
        %6003 = vmatprep.mubr.f32.mxu0 0.0
        %v6004 = vand.u32 %v4440, 4294901760
        %6005 = vmatmul.mubr.f32.gmra.mrb[0].mxu0 %v6004
        %v6006 = vpop.f32.mrb[0].mxu0
        %v6007 = vadd.f32 %v5640, %v6006
        %v6008 = vpop.f32.mrb[0].mxu0
        %6009 = vmatprep.mubr.f32.mxu0 0.0
        %v6010 = vand.u32 %v4441, 4294901760
        %6011 = vmatmul.mubr.f32.gmra.mrb[0].mxu0 %v6010
        %v6012 = vpop.f32.mrb[0].mxu0
        %v6013 = vadd.f32 %v5648, %v6012
        %v6014 = vpop.f32.mrb[0].mxu0
        %6015 = vmatprep.mubr.f32.mxu0 0.0
        %v6016 = vand.u32 %v4442, 4294901760
        %6017 = vmatmul.mubr.f32.gmra.mrb[0].mxu0 %v6016
        %v6018 = vpop.f32.mrb[0].mxu0
        %v6019 = vadd.f32 %v5656, %v6018
        %v6020 = vpop.f32.mrb[0].mxu0
        %6021 = vmatprep.mubr.f32.mxu0 0.0
        %v6022 = vand.u32 %v4443, 4294901760
        %6023 = vmatmul.mubr.f32.gmra.mrb[0].mxu0 %v6022
        %v6024 = vpop.f32.mrb[0].mxu0
        %v6025 = vadd.f32 %v5664, %v6024
        %v6026 = vpop.f32.mrb[0].mxu0
        %6027 = vmatprep.mubr.f32.mxu0 0.0
        %v6028 = vand.u32 %v4444, 4294901760
        %6029 = vmatmul.mubr.f32.gmra.mrb[0].mxu0 %v6028
        %v6030 = vpop.f32.mrb[0].mxu0
        %v6031 = vadd.f32 %v5672, %v6030
        %v6032 = vpop.f32.mrb[0].mxu0
        %6033 = vmatprep.mubr.f32.mxu0 0.0
        %v6034 = vand.u32 %v4445, 4294901760
        %6035 = vmatmul.mubr.f32.gmra.mrb[0].mxu0 %v6034
        %v6036 = vpop.f32.mrb[0].mxu0
        %v6037 = vadd.f32 %v5680, %v6036
        %v6038 = vpop.f32.mrb[0].mxu0
        %6039 = vmatprep.mubr.f32.mxu0 0.0
        %v6040 = vand.u32 %v4446, 4294901760
        %6041 = vmatmul.mubr.f32.gmra.mrb[0].mxu0 %v6040
        %v6042 = vpop.f32.mrb[0].mxu0
        %v6043 = vadd.f32 %v5688, %v6042
        %v6044 = vpop.f32.mrb[0].mxu0
        %6045 = vmatprep.mubr.f32.mxu0 0.0
        %v6046 = vand.u32 %v4447, 4294901760
        %6047 = vmatmul.mubr.f32.gmra.mrb[0].mxu0 %v6046
        %v6048 = vpop.f32.mrb[0].mxu0
        %v6049 = vadd.f32 %v5696, %v6048
        %v6050 = vpop.f32.mrb[0].mxu0
        %6051 = vmatprep.mubr.f32.mxu0 0.0
        %v6052 = vand.u32 %v4448, 4294901760
        %6053 = vmatmul.mubr.f32.gmra.mrb[0].mxu0 %v6052
        %v6054 = vpop.f32.mrb[0].mxu0
        %v6055 = vadd.f32 %v5704, %v6054
        %v6056 = vpop.f32.mrb[0].mxu0
        %6057 = vmatprep.mubr.f32.mxu0 0.0
        %v6058 = vand.u32 %v4449, 4294901760
        %6059 = vmatmul.mubr.f32.gmra.mrb[0].mxu0 %v6058
        %v6060 = vpop.f32.mrb[0].mxu0
        %v6061 = vadd.f32 %v5712, %v6060
        %v6062 = vpop.f32.mrb[0].mxu0
        %6063 = vmatprep.mubr.f32.mxu0 0.0
        %v6064 = vand.u32 %v4450, 4294901760
        %6065 = vmatmul.mubr.f32.gmra.mrb[0].mxu0 %v6064
        %v6066 = vpop.f32.mrb[0].mxu0
        %v6067 = vadd.f32 %v5720, %v6066
        %v6068 = vpop.f32.mrb[0].mxu0
        %6069 = vmatprep.mubr.f32.mxu0 0.0
        %v6070 = vand.u32 %v4451, 4294901760
        %6071 = vmatmul.mubr.f32.gmra.mrb[0].mxu0 %v6070
        %v6072 = vpop.f32.mrb[0].mxu0
        %v6073 = vadd.f32 %v5728, %v6072
        %v6074 = vpop.f32.mrb[0].mxu0
        %6075 = vmatprep.mubr.f32.mxu0 0.0
        %v6076 = vand.u32 %v4452, 4294901760
        %6077 = vmatmul.mubr.f32.gmra.mrb[0].mxu0 %v6076
        %v6078 = vpop.f32.mrb[0].mxu0
        %v6079 = vadd.f32 %v5736, %v6078
        %v6080 = vpop.f32.mrb[0].mxu0
        %6081 = vmatprep.mubr.f32.mxu0 0.0
        %v6082 = vand.u32 %v4453, 4294901760
        %6083 = vmatmul.mubr.f32.gmra.mrb[0].mxu0 %v6082
        %v6084 = vpop.f32.mrb[0].mxu0
        %v6085 = vadd.f32 %v5744, %v6084
        %v6086 = vpop.f32.mrb[0].mxu0
        %6087 = vmatprep.mubr.f32.mxu0 0.0
        %v6088 = vand.u32 %v4454, 4294901760
        %6089 = vmatmul.mubr.f32.gmra.mrb[0].mxu0 %v6088
        %v6090 = vpop.f32.mrb[0].mxu0
        %v6091 = vadd.f32 %v5752, %v6090
        %v6092 = vpop.f32.mrb[0].mxu0
        %6093 = vmatprep.mubr.f32.mxu0 0.0
        %v6094 = vand.u32 %v4455, 4294901760
        %6095 = vmatmul.mubr.f32.gmra.mrb[0].mxu0 %v6094
        %v6096 = vpop.f32.mrb[0].mxu0
        %v6097 = vadd.f32 %v5760, %v6096
        %v6098 = vpop.f32.mrb[0].mxu0
        %6099 = vmatprep.mubr.f32.mxu0 0.0
        %v6100 = vand.u32 %v4456, 4294901760
        %6101 = vmatmul.mubr.f32.gmra.mrb[0].mxu0 %v6100
        %v6102 = vpop.f32.mrb[0].mxu0
        %v6103 = vadd.f32 %v5768, %v6102
        %v6104 = vpop.f32.mrb[0].mxu0
        %6105 = vmatprep.mubr.f32.mxu0 0.0
        %v6106 = vand.u32 %v4457, 4294901760
        %6107 = vmatmul.mubr.f32.gmra.mrb[0].mxu0 %v6106
        %v6108 = vpop.f32.mrb[0].mxu0
        %v6109 = vadd.f32 %v5776, %v6108
        %v6110 = vpop.f32.mrb[0].mxu0
        %6111 = vmatprep.mubr.f32.mxu0 0.0
        %v6112 = vand.u32 %v4458, 4294901760
        %6113 = vmatmul.mubr.f32.gmra.mrb[0].mxu0 %v6112
        %v6114 = vpop.f32.mrb[0].mxu0
        %v6115 = vadd.f32 %v5784, %v6114
        %v6116 = vpop.f32.mrb[0].mxu0
        %6117 = vmatprep.mubr.f32.mxu0 0.0
        %v6118 = vand.u32 %v4459, 4294901760
        %6119 = vmatmul.mubr.f32.gmra.mrb[0].mxu0 %v6118
        %v6120 = vpop.f32.mrb[0].mxu0
        %v6121 = vadd.f32 %v5792, %v6120
        %v6122 = vpop.f32.mrb[0].mxu0
        %6123 = vmatprep.mubr.f32.mxu0 0.0
        %v6124 = vand.u32 %v4460, 4294901760
        %6125 = vmatmul.mubr.f32.gmra.mrb[0].mxu0 %v6124
        %v6126 = vpop.f32.mrb[0].mxu0
        %v6127 = vadd.f32 %v5800, %v6126
        %v6128 = vpop.f32.mrb[0].mxu0
        %6129 = vmatprep.mubr.f32.mxu0 0.0
        %v6130 = vand.u32 %v4461, 4294901760
        %6131 = vmatmul.mubr.f32.gmra.mrb[0].mxu0 %v6130
        %v6132 = vpop.f32.mrb[0].mxu0
        %v6133 = vadd.f32 %v5808, %v6132
        %v6134 = vpop.f32.mrb[0].mxu0
        %6135 = vmatprep.mubr.f32.mxu0 0.0
        %v6136 = vand.u32 %v4462, 4294901760
        %6137 = vmatmul.mubr.f32.gmra.mrb[0].mxu0 %v6136
        %v6138 = vpop.f32.mrb[0].mxu0
        %v6139 = vadd.f32 %v5816, %v6138
        %v6140 = vpop.f32.mrb[0].mxu0
        %6141 = vmatprep.mubr.f32.mxu0 0.0
        %v6142 = vand.u32 %v4463, 4294901760
        %6143 = vmatmul.mubr.f32.gmra.mrb[0].mxu0 %v6142
        %v6144 = vpop.f32.mrb[0].mxu0
        %v6145 = vadd.f32 %v5824, %v6144
        %v6146 = vpop.f32.mrb[0].mxu0
        %6147 = vmatprep.mubr.f32.mxu0 0.0
        %v6148 = vand.u32 %v4464, 4294901760
        %6149 = vmatmul.mubr.f32.gmra.mrb[0].mxu0 %v6148
        %v6150 = vpop.f32.mrb[0].mxu0
        %v6151 = vadd.f32 %v5832, %v6150
        %v6152 = vpop.f32.mrb[0].mxu0
        %6153 = vmatprep.mubr.f32.mxu0 0.0
        %v6154 = vand.u32 %v4465, 4294901760
        %6155 = vmatmul.mubr.f32.gmra.mrb[0].mxu0 %v6154
        %v6156 = vpop.f32.mrb[0].mxu0
        %v6157 = vadd.f32 %v5840, %v6156
        %v6158 = vpop.f32.mrb[0].mxu0
        %6159 = vmatprep.mubr.f32.mxu0 0.0
        %v6160 = vand.u32 %v4466, 4294901760
        %6161 = vmatmul.mubr.f32.gmra.mrb[0].mxu0 %v6160
        %v6162 = vpop.f32.mrb[0].mxu0
        %v6163 = vadd.f32 %v5848, %v6162
        %v6164 = vpop.f32.mrb[0].mxu0
        %6165 = vmatprep.mubr.f32.mxu0 0.0
        %v6166 = vand.u32 %v4467, 4294901760
        %6167 = vmatmul.mubr.f32.gmra.mrb[0].mxu0 %v6166
        %v6168 = vpop.f32.mrb[0].mxu0
        %v6169 = vadd.f32 %v5856, %v6168
        %v6170 = vpop.f32.mrb[0].mxu0
        %6171 = vmatprep.mubr.f32.mxu0 0.0
        %v6172 = vand.u32 %v4468, 4294901760
        %6173 = vmatmul.mubr.f32.gmra.mrb[0].mxu0 %v6172
        %v6174 = vpop.f32.mrb[0].mxu0
        %v6175 = vadd.f32 %v5864, %v6174
        %v6176 = vpop.f32.mrb[0].mxu0
        %6177 = vmatprep.mubr.f32.mxu0 0.0
        %v6178 = vand.u32 %v4469, 4294901760
        %6179 = vmatmul.mubr.f32.gmra.mrb[0].mxu0 %v6178
        %v6180 = vpop.f32.mrb[0].mxu0
        %v6181 = vadd.f32 %v5872, %v6180
        %v6182 = vpop.f32.mrb[0].mxu0
        %6183 = vmatprep.mubr.f32.mxu0 0.0
        %v6184 = vand.u32 %v4470, 4294901760
        %6185 = vmatmul.mubr.f32.gmra.mrb[0].mxu0 %v6184
        %v6186 = vpop.f32.mrb[0].mxu0
        %v6187 = vadd.f32 %v5880, %v6186
        %v6188 = vpop.f32.mrb[0].mxu0
        %6189 = vmatprep.mubr.f32.mxu0 0.0
        %v6190 = vand.u32 %v4471, 4294901760
        %6191 = vmatmul.mubr.f32.gmra.mrb[0].mxu0 %v6190
        %v6192 = vpop.f32.mrb[0].mxu0
        %v6193 = vadd.f32 %v5888, %v6192
        %v6194 = vpop.f32.mrb[0].mxu0
        %6195 = vdwg.mxu0
        %6196 = vmatprep.subr.mxu0 0.0
        %v6197 = vand.u32 %v4472, 4294901760
        %6198 = vmatpush1.msra.mxu0 %v6197
        %6199 = vmatprep.subr.mxu0 0.0
        %v6200 = vand.u32 %v4473, 4294901760
        %6201 = vmatpush1.msra.mxu0 %v6200
        %6202 = vmatprep.subr.mxu0 0.0
        %v6203 = vand.u32 %v4474, 4294901760
        %6204 = vmatpush1.msra.mxu0 %v6203
        %6205 = vmatprep.subr.mxu0 0.0
        %v6206 = vand.u32 %v4475, 4294901760
        %6207 = vmatpush1.msra.mxu0 %v6206
        %6208 = vmatprep.subr.mxu0 0.0
        %v6209 = vand.u32 %v4476, 4294901760
        %6210 = vmatpush1.msra.mxu0 %v6209
        %6211 = vmatprep.subr.mxu0 0.0
        %v6212 = vand.u32 %v4477, 4294901760
        %6213 = vmatpush1.msra.mxu0 %v6212
        %6214 = vmatprep.subr.mxu0 0.0
        %v6215 = vand.u32 %v4478, 4294901760
        %6216 = vmatpush1.msra.mxu0 %v6215
        %6217 = vmatprep.subr.mxu0 0.0
        %v6218 = vand.u32 %v4479, 4294901760
        %6219 = vmatpush1.msra.mxu0 %v6218
        %6220 = vmatprep.subr.mxu0 0.0
        %v6221 = vand.u32 %v4480, 4294901760
        %6222 = vmatpush1.msra.mxu0 %v6221
        %6223 = vmatprep.subr.mxu0 0.0
        %v6224 = vand.u32 %v4481, 4294901760
        %6225 = vmatpush1.msra.mxu0 %v6224
        %6226 = vmatprep.subr.mxu0 0.0
        %v6227 = vand.u32 %v4482, 4294901760
        %6228 = vmatpush1.msra.mxu0 %v6227
        %6229 = vmatprep.subr.mxu0 0.0
        %v6230 = vand.u32 %v4483, 4294901760
        %6231 = vmatpush1.msra.mxu0 %v6230
        %6232 = vmatprep.subr.mxu0 0.0
        %v6233 = vand.u32 %v4484, 4294901760
        %6234 = vmatpush1.msra.mxu0 %v6233
        %6235 = vmatprep.subr.mxu0 0.0
        %v6236 = vand.u32 %v4485, 4294901760
        %6237 = vmatpush1.msra.mxu0 %v6236
        %6238 = vmatprep.subr.mxu0 0.0
        %v6239 = vand.u32 %v4486, 4294901760
        %6240 = vmatpush1.msra.mxu0 %v6239
        %6241 = vmatprep.subr.mxu0 0.0
        %v6242 = vand.u32 %v4487, 4294901760
        %6243 = vmatpush1.msra.mxu0 %v6242
        %6244 = vmatprep.subr.mxu0 0.0
        %6245 = vmatpush1.msra.mxu0 0.0
        %6246 = vmatprep.subr.mxu0 0.0
        %6247 = vmatpush1.msra.mxu0 0.0
        %6248 = vmatprep.subr.mxu0 0.0
        %6249 = vmatpush1.msra.mxu0 0.0
        %6250 = vmatprep.subr.mxu0 0.0
        %6251 = vmatpush1.msra.mxu0 0.0
        %6252 = vmatprep.subr.mxu0 0.0
        %6253 = vmatpush1.msra.mxu0 0.0
        %6254 = vmatprep.subr.mxu0 0.0
        %6255 = vmatpush1.msra.mxu0 0.0
        %6256 = vmatprep.subr.mxu0 0.0
        %6257 = vmatpush1.msra.mxu0 0.0
        %6258 = vmatprep.subr.mxu0 0.0
        %6259 = vmatpush1.msra.mxu0 0.0
        %6260 = vmatprep.subr.mxu0 0.0
        %6261 = vmatpush1.msra.mxu0 0.0
        %6262 = vmatprep.subr.mxu0 0.0
        %6263 = vmatpush1.msra.mxu0 0.0
        %6264 = vmatprep.subr.mxu0 0.0
        %6265 = vmatpush1.msra.mxu0 0.0
        %6266 = vmatprep.subr.mxu0 0.0
        %6267 = vmatpush1.msra.mxu0 0.0
        %6268 = vmatprep.subr.mxu0 0.0
        %6269 = vmatpush1.msra.mxu0 0.0
        %6270 = vmatprep.subr.mxu0 0.0
        %6271 = vmatpush1.msra.mxu0 0.0
        %6272 = vmatprep.subr.mxu0 0.0
        %6273 = vmatpush1.msra.mxu0 0.0
        %6274 = vmatprep.subr.mxu0 0.0
        %6275 = vmatpush1.msra.mxu0 0.0
        %6276 = vmatprep.mubr.f32.mxu0 0.0
        %v6277 = vand.u32 %v4440, 4294901760
        %6278 = vmatmul.mubr.f32.gmra.mrb[0].mxu0 %v6277
        %v6279 = vpop.f32.mrb[0].mxu0
        %v6280 = vadd.f32 %v6007, %v6279
        %v6281 = vpop.f32.mrb[0].mxu0
        %6282 = vmatprep.mubr.f32.mxu0 0.0
        %v6283 = vand.u32 %v4441, 4294901760
        %6284 = vmatmul.mubr.f32.gmra.mrb[0].mxu0 %v6283
        %v6285 = vpop.f32.mrb[0].mxu0
        %v6286 = vadd.f32 %v6013, %v6285
        %v6287 = vpop.f32.mrb[0].mxu0
        %6288 = vmatprep.mubr.f32.mxu0 0.0
        %v6289 = vand.u32 %v4442, 4294901760
        %6290 = vmatmul.mubr.f32.gmra.mrb[0].mxu0 %v6289
        %v6291 = vpop.f32.mrb[0].mxu0
        %v6292 = vadd.f32 %v6019, %v6291
        %v6293 = vpop.f32.mrb[0].mxu0
        %6294 = vmatprep.mubr.f32.mxu0 0.0
        %v6295 = vand.u32 %v4443, 4294901760
        %6296 = vmatmul.mubr.f32.gmra.mrb[0].mxu0 %v6295
        %v6297 = vpop.f32.mrb[0].mxu0
        %v6298 = vadd.f32 %v6025, %v6297
        %v6299 = vpop.f32.mrb[0].mxu0
        %6300 = vmatprep.mubr.f32.mxu0 0.0
        %v6301 = vand.u32 %v4444, 4294901760
        %6302 = vmatmul.mubr.f32.gmra.mrb[0].mxu0 %v6301
        %v6303 = vpop.f32.mrb[0].mxu0
        %v6304 = vadd.f32 %v6031, %v6303
        %v6305 = vpop.f32.mrb[0].mxu0
        %6306 = vmatprep.mubr.f32.mxu0 0.0
        %v6307 = vand.u32 %v4445, 4294901760
        %6308 = vmatmul.mubr.f32.gmra.mrb[0].mxu0 %v6307
        %v6309 = vpop.f32.mrb[0].mxu0
        %v6310 = vadd.f32 %v6037, %v6309
        %v6311 = vpop.f32.mrb[0].mxu0
        %6312 = vmatprep.mubr.f32.mxu0 0.0
        %v6313 = vand.u32 %v4446, 4294901760
        %6314 = vmatmul.mubr.f32.gmra.mrb[0].mxu0 %v6313
        %v6315 = vpop.f32.mrb[0].mxu0
        %v6316 = vadd.f32 %v6043, %v6315
        %v6317 = vpop.f32.mrb[0].mxu0
        %6318 = vmatprep.mubr.f32.mxu0 0.0
        %v6319 = vand.u32 %v4447, 4294901760
        %6320 = vmatmul.mubr.f32.gmra.mrb[0].mxu0 %v6319
        %v6321 = vpop.f32.mrb[0].mxu0
        %v6322 = vadd.f32 %v6049, %v6321
        %v6323 = vpop.f32.mrb[0].mxu0
        %6324 = vmatprep.mubr.f32.mxu0 0.0
        %v6325 = vand.u32 %v4448, 4294901760
        %6326 = vmatmul.mubr.f32.gmra.mrb[0].mxu0 %v6325
        %v6327 = vpop.f32.mrb[0].mxu0
        %v6328 = vadd.f32 %v6055, %v6327
        %v6329 = vpop.f32.mrb[0].mxu0
        %6330 = vmatprep.mubr.f32.mxu0 0.0
        %v6331 = vand.u32 %v4449, 4294901760
        %6332 = vmatmul.mubr.f32.gmra.mrb[0].mxu0 %v6331
        %v6333 = vpop.f32.mrb[0].mxu0
        %v6334 = vadd.f32 %v6061, %v6333
        %v6335 = vpop.f32.mrb[0].mxu0
        %6336 = vmatprep.mubr.f32.mxu0 0.0
        %v6337 = vand.u32 %v4450, 4294901760
        %6338 = vmatmul.mubr.f32.gmra.mrb[0].mxu0 %v6337
        %v6339 = vpop.f32.mrb[0].mxu0
        %v6340 = vadd.f32 %v6067, %v6339
        %v6341 = vpop.f32.mrb[0].mxu0
        %6342 = vmatprep.mubr.f32.mxu0 0.0
        %v6343 = vand.u32 %v4451, 4294901760
        %6344 = vmatmul.mubr.f32.gmra.mrb[0].mxu0 %v6343
        %v6345 = vpop.f32.mrb[0].mxu0
        %v6346 = vadd.f32 %v6073, %v6345
        %v6347 = vpop.f32.mrb[0].mxu0
        %6348 = vmatprep.mubr.f32.mxu0 0.0
        %v6349 = vand.u32 %v4452, 4294901760
        %6350 = vmatmul.mubr.f32.gmra.mrb[0].mxu0 %v6349
        %v6351 = vpop.f32.mrb[0].mxu0
        %v6352 = vadd.f32 %v6079, %v6351
        %v6353 = vpop.f32.mrb[0].mxu0
        %6354 = vmatprep.mubr.f32.mxu0 0.0
        %v6355 = vand.u32 %v4453, 4294901760
        %6356 = vmatmul.mubr.f32.gmra.mrb[0].mxu0 %v6355
        %v6357 = vpop.f32.mrb[0].mxu0
        %v6358 = vadd.f32 %v6085, %v6357
        %v6359 = vpop.f32.mrb[0].mxu0
        %6360 = vmatprep.mubr.f32.mxu0 0.0
        %v6361 = vand.u32 %v4454, 4294901760
        %6362 = vmatmul.mubr.f32.gmra.mrb[0].mxu0 %v6361
        %v6363 = vpop.f32.mrb[0].mxu0
        %v6364 = vadd.f32 %v6091, %v6363
        %v6365 = vpop.f32.mrb[0].mxu0
        %6366 = vmatprep.mubr.f32.mxu0 0.0
        %v6367 = vand.u32 %v4455, 4294901760
        %6368 = vmatmul.mubr.f32.gmra.mrb[0].mxu0 %v6367
        %v6369 = vpop.f32.mrb[0].mxu0
        %v6370 = vadd.f32 %v6097, %v6369
        %v6371 = vpop.f32.mrb[0].mxu0
        %6372 = vmatprep.mubr.f32.mxu0 0.0
        %v6373 = vand.u32 %v4456, 4294901760
        %6374 = vmatmul.mubr.f32.gmra.mrb[0].mxu0 %v6373
        %v6375 = vpop.f32.mrb[0].mxu0
        %v6376 = vadd.f32 %v6103, %v6375
        %v6377 = vpop.f32.mrb[0].mxu0
        %6378 = vmatprep.mubr.f32.mxu0 0.0
        %v6379 = vand.u32 %v4457, 4294901760
        %6380 = vmatmul.mubr.f32.gmra.mrb[0].mxu0 %v6379
        %v6381 = vpop.f32.mrb[0].mxu0
        %v6382 = vadd.f32 %v6109, %v6381
        %v6383 = vpop.f32.mrb[0].mxu0
        %6384 = vmatprep.mubr.f32.mxu0 0.0
        %v6385 = vand.u32 %v4458, 4294901760
        %6386 = vmatmul.mubr.f32.gmra.mrb[0].mxu0 %v6385
        %v6387 = vpop.f32.mrb[0].mxu0
        %v6388 = vadd.f32 %v6115, %v6387
        %v6389 = vpop.f32.mrb[0].mxu0
        %6390 = vmatprep.mubr.f32.mxu0 0.0
        %v6391 = vand.u32 %v4459, 4294901760
        %6392 = vmatmul.mubr.f32.gmra.mrb[0].mxu0 %v6391
        %v6393 = vpop.f32.mrb[0].mxu0
        %v6394 = vadd.f32 %v6121, %v6393
        %v6395 = vpop.f32.mrb[0].mxu0
        %6396 = vmatprep.mubr.f32.mxu0 0.0
        %v6397 = vand.u32 %v4460, 4294901760
        %6398 = vmatmul.mubr.f32.gmra.mrb[0].mxu0 %v6397
        %v6399 = vpop.f32.mrb[0].mxu0
        %v6400 = vadd.f32 %v6127, %v6399
        %v6401 = vpop.f32.mrb[0].mxu0
        %6402 = vmatprep.mubr.f32.mxu0 0.0
        %v6403 = vand.u32 %v4461, 4294901760
        %6404 = vmatmul.mubr.f32.gmra.mrb[0].mxu0 %v6403
        %v6405 = vpop.f32.mrb[0].mxu0
        %v6406 = vadd.f32 %v6133, %v6405
        %v6407 = vpop.f32.mrb[0].mxu0
        %6408 = vmatprep.mubr.f32.mxu0 0.0
        %v6409 = vand.u32 %v4462, 4294901760
        %6410 = vmatmul.mubr.f32.gmra.mrb[0].mxu0 %v6409
        %v6411 = vpop.f32.mrb[0].mxu0
        %v6412 = vadd.f32 %v6139, %v6411
        %v6413 = vpop.f32.mrb[0].mxu0
        %6414 = vmatprep.mubr.f32.mxu0 0.0
        %v6415 = vand.u32 %v4463, 4294901760
        %6416 = vmatmul.mubr.f32.gmra.mrb[0].mxu0 %v6415
        %v6417 = vpop.f32.mrb[0].mxu0
        %v6418 = vadd.f32 %v6145, %v6417
        %v6419 = vpop.f32.mrb[0].mxu0
        %6420 = vmatprep.mubr.f32.mxu0 0.0
        %v6421 = vand.u32 %v4464, 4294901760
        %6422 = vmatmul.mubr.f32.gmra.mrb[0].mxu0 %v6421
        %v6423 = vpop.f32.mrb[0].mxu0
        %v6424 = vadd.f32 %v6151, %v6423
        %v6425 = vpop.f32.mrb[0].mxu0
        %6426 = vmatprep.mubr.f32.mxu0 0.0
        %v6427 = vand.u32 %v4465, 4294901760
        %6428 = vmatmul.mubr.f32.gmra.mrb[0].mxu0 %v6427
        %v6429 = vpop.f32.mrb[0].mxu0
        %v6430 = vadd.f32 %v6157, %v6429
        %v6431 = vpop.f32.mrb[0].mxu0
        %6432 = vmatprep.mubr.f32.mxu0 0.0
        %v6433 = vand.u32 %v4466, 4294901760
        %6434 = vmatmul.mubr.f32.gmra.mrb[0].mxu0 %v6433
        %v6435 = vpop.f32.mrb[0].mxu0
        %v6436 = vadd.f32 %v6163, %v6435
        %v6437 = vpop.f32.mrb[0].mxu0
        %6438 = vmatprep.mubr.f32.mxu0 0.0
        %v6439 = vand.u32 %v4467, 4294901760
        %6440 = vmatmul.mubr.f32.gmra.mrb[0].mxu0 %v6439
        %v6441 = vpop.f32.mrb[0].mxu0
        %v6442 = vadd.f32 %v6169, %v6441
        %v6443 = vpop.f32.mrb[0].mxu0
        %6444 = vmatprep.mubr.f32.mxu0 0.0
        %v6445 = vand.u32 %v4468, 4294901760
        %6446 = vmatmul.mubr.f32.gmra.mrb[0].mxu0 %v6445
        %v6447 = vpop.f32.mrb[0].mxu0
        %v6448 = vadd.f32 %v6175, %v6447
        %v6449 = vpop.f32.mrb[0].mxu0
        %6450 = vmatprep.mubr.f32.mxu0 0.0
        %v6451 = vand.u32 %v4469, 4294901760
        %6452 = vmatmul.mubr.f32.gmra.mrb[0].mxu0 %v6451
        %v6453 = vpop.f32.mrb[0].mxu0
        %v6454 = vadd.f32 %v6181, %v6453
        %v6455 = vpop.f32.mrb[0].mxu0
        %6456 = vmatprep.mubr.f32.mxu0 0.0
        %v6457 = vand.u32 %v4470, 4294901760
        %6458 = vmatmul.mubr.f32.gmra.mrb[0].mxu0 %v6457
        %v6459 = vpop.f32.mrb[0].mxu0
        %v6460 = vadd.f32 %v6187, %v6459
        %v6461 = vpop.f32.mrb[0].mxu0
        %6462 = vmatprep.mubr.f32.mxu0 0.0
        %v6463 = vand.u32 %v4471, 4294901760
        %6464 = vmatmul.mubr.f32.gmra.mrb[0].mxu0 %v6463
        %v6465 = vpop.f32.mrb[0].mxu0
        %v6466 = vadd.f32 %v6193, %v6465
        %v6467 = vpop.f32.mrb[0].mxu0
        %6468 = vdwg.mxu0
        %s6469 = sadd.s32 %s292, 1
        %s6470 = smul.u32 %s6469, 24
        %s6471 = scalar_lea.vmem %s290, %s6470
        %v6472 = vld [vmem:[%s6471 + $0x1] sm:$0xff]
        %v6473 = vld [vmem:[%s6471 + $0x9] sm:$0xff]
        %v6474 = vld [vmem:[%s6471 + $0x19] sm:$0xff]
        %v6475 = vld [vmem:[%s6471 + $0x21] sm:$0xff]
        %v6476 = vld [vmem:[%s6471 + $0x31] sm:$0xff]
        %v6477 = vld [vmem:[%s6471 + $0x39] sm:$0xff]
        %v6478 = vld [vmem:[%s6471 + $0x49] sm:$0xff]
        %v6479 = vld [vmem:[%s6471 + $0x51] sm:$0xff]
        %v6480 = vld [vmem:[%s6471 + $0x61] sm:$0xff]
        %v6481 = vld [vmem:[%s6471 + $0x69] sm:$0xff]
        %v6482 = vld [vmem:[%s6471 + $0x79] sm:$0xff]
        %v6483 = vld [vmem:[%s6471 + $0x81] sm:$0xff]
        %v6484 = vld [vmem:[%s6471 + $0x91] sm:$0xff]
        %v6485 = vld [vmem:[%s6471 + $0x99] sm:$0xff]
        %v6486 = vld [vmem:[%s6471 + $0xa9] sm:$0xff]
        %v6487 = vld [vmem:[%s6471 + $0xb1] sm:$0xff]
        %v6488 = vld [vmem:[%s6471 + $0xc1] sm:$0xff]
        %v6489 = vld [vmem:[%s6471 + $0xc9] sm:$0xff]
        %v6490 = vld [vmem:[%s6471 + $0xd9] sm:$0xff]
        %v6491 = vld [vmem:[%s6471 + $0xe1] sm:$0xff]
        %v6492 = vld [vmem:[%s6471 + $0xf1] sm:$0xff]
        %v6493 = vld [vmem:[%s6471 + $0xf9] sm:$0xff]
        %v6494 = vld [vmem:[%s6471 + $0x109] sm:$0xff]
        %v6495 = vld [vmem:[%s6471 + $0x111] sm:$0xff]
        %v6496 = vld [vmem:[%s6471 + $0x121] sm:$0xff]
        %v6497 = vld [vmem:[%s6471 + $0x129] sm:$0xff]
        %v6498 = vld [vmem:[%s6471 + $0x139] sm:$0xff]
        %v6499 = vld [vmem:[%s6471 + $0x141] sm:$0xff]
        %v6500 = vld [vmem:[%s6471 + $0x151] sm:$0xff]
        %v6501 = vld [vmem:[%s6471 + $0x159] sm:$0xff]
        %v6502 = vld [vmem:[%s6471 + $0x169] sm:$0xff]
        %v6503 = vld [vmem:[%s6471 + $0x171] sm:$0xff]
        %v6504 = vadd.f32 %v6280, %v6472
        %v6505 = vadd.f32 %v6286, %v6473
        %v6506 = vadd.f32 %v6292, %v6474
        %v6507 = vadd.f32 %v6298, %v6475
        %v6508 = vadd.f32 %v6304, %v6476
        %v6509 = vadd.f32 %v6310, %v6477
        %v6510 = vadd.f32 %v6316, %v6478
        %v6511 = vadd.f32 %v6322, %v6479
        %v6512 = vadd.f32 %v6328, %v6480
        %v6513 = vadd.f32 %v6334, %v6481
        %v6514 = vadd.f32 %v6340, %v6482
        %v6515 = vadd.f32 %v6346, %v6483
        %v6516 = vadd.f32 %v6352, %v6484
        %v6517 = vadd.f32 %v6358, %v6485
        %v6518 = vadd.f32 %v6364, %v6486
        %v6519 = vadd.f32 %v6370, %v6487
        %v6520 = vadd.f32 %v6376, %v6488
        %v6521 = vadd.f32 %v6382, %v6489
        %v6522 = vadd.f32 %v6388, %v6490
        %v6523 = vadd.f32 %v6394, %v6491
        %v6524 = vadd.f32 %v6400, %v6492
        %v6525 = vadd.f32 %v6406, %v6493
        %v6526 = vadd.f32 %v6412, %v6494
        %v6527 = vadd.f32 %v6418, %v6495
        %v6528 = vadd.f32 %v6424, %v6496
        %v6529 = vadd.f32 %v6430, %v6497
        %v6530 = vadd.f32 %v6436, %v6498
        %v6531 = vadd.f32 %v6442, %v6499
        %v6532 = vadd.f32 %v6448, %v6500
        %v6533 = vadd.f32 %v6454, %v6501
        %v6534 = vadd.f32 %v6460, %v6502
        %v6535 = vadd.f32 %v6466, %v6503
        %v6536 = vcombine.low %v6504, %v6508
        %v6537 = vcombine.high %v6504, %v6508
        %v6539 = vunpack.c.l.s4 1983009808
        %v6540 = vunpack.c.0.s8 %v6539
        %v6541 = vlaneseq
        %v6542 = vshrl.u32 %v6541, 7
        %v6543 = vsub.s32 %v6540, %v6542
        %v6544 = vrot.slane %v6536, %v6543
        %v6546 = vunpack.c.l.s4 1983009808
        %v6547 = vunpack.c.0.s8 %v6546
        %v6548 = vlaneseq
        %v6549 = vshrl.u32 %v6548, 7
        %v6550 = vsub.s32 %v6547, %v6549
        %v6551 = vrot.slane %v6537, %v6550
        %v6552 = vcombine.low %v6506, %v6510
        %v6553 = vcombine.high %v6506, %v6510
        %v6555 = vunpack.c.l.s4 1983009808
        %v6556 = vunpack.c.0.s8 %v6555
        %v6557 = vlaneseq
        %v6558 = vshrl.u32 %v6557, 7
        %v6559 = vsub.s32 %v6556, %v6558
        %v6560 = vrot.slane %v6552, %v6559
        %v6562 = vunpack.c.l.s4 1983009808
        %v6563 = vunpack.c.0.s8 %v6562
        %v6564 = vlaneseq
        %v6565 = vshrl.u32 %v6564, 7
        %v6566 = vsub.s32 %v6563, %v6565
        %v6567 = vrot.slane %v6553, %v6566
        %v6568 = vcombine.low %v6512, %v6516
        %v6569 = vcombine.high %v6512, %v6516
        %v6571 = vunpack.c.l.s4 1983009808
        %v6572 = vunpack.c.0.s8 %v6571
        %v6573 = vlaneseq
        %v6574 = vshrl.u32 %v6573, 7
        %v6575 = vsub.s32 %v6572, %v6574
        %v6576 = vrot.slane %v6568, %v6575
        %v6578 = vunpack.c.l.s4 1983009808
        %v6579 = vunpack.c.0.s8 %v6578
        %v6580 = vlaneseq
        %v6581 = vshrl.u32 %v6580, 7
        %v6582 = vsub.s32 %v6579, %v6581
        %v6583 = vrot.slane %v6569, %v6582
        %v6584 = vcombine.low %v6514, %v6518
        %v6585 = vcombine.high %v6514, %v6518
        %v6587 = vunpack.c.l.s4 1983009808
        %v6588 = vunpack.c.0.s8 %v6587
        %v6589 = vlaneseq
        %v6590 = vshrl.u32 %v6589, 7
        %v6591 = vsub.s32 %v6588, %v6590
        %v6592 = vrot.slane %v6584, %v6591
        %v6594 = vunpack.c.l.s4 1983009808
        %v6595 = vunpack.c.0.s8 %v6594
        %v6596 = vlaneseq
        %v6597 = vshrl.u32 %v6596, 7
        %v6598 = vsub.s32 %v6595, %v6597
        %v6599 = vrot.slane %v6585, %v6598
        %v6600 = vcombine.low %v6544, %v6560
        %v6601 = vcombine.high %v6544, %v6560
        %v6603 = vunpack.c.l.s4 1934713408
        %v6604 = vunpack.c.0.s8 %v6603
        %v6605 = vlaneseq
        %v6606 = vshrl.u32 %v6605, 7
        %v6607 = vsub.s32 %v6604, %v6606
        %v6608 = vrot.slane %v6600, %v6607
        %v6610 = vunpack.c.l.s4 1934713408
        %v6611 = vunpack.c.0.s8 %v6610
        %v6612 = vlaneseq
        %v6613 = vshrl.u32 %v6612, 7
        %v6614 = vsub.s32 %v6611, %v6613
        %v6615 = vrot.slane %v6601, %v6614
        %v6616 = vcombine.low %v6551, %v6567
        %v6617 = vcombine.high %v6551, %v6567
        %v6619 = vunpack.c.l.s4 1934713408
        %v6620 = vunpack.c.0.s8 %v6619
        %v6621 = vlaneseq
        %v6622 = vshrl.u32 %v6621, 7
        %v6623 = vsub.s32 %v6620, %v6622
        %v6624 = vrot.slane %v6616, %v6623
        %v6626 = vunpack.c.l.s4 1934713408
        %v6627 = vunpack.c.0.s8 %v6626
        %v6628 = vlaneseq
        %v6629 = vshrl.u32 %v6628, 7
        %v6630 = vsub.s32 %v6627, %v6629
        %v6631 = vrot.slane %v6617, %v6630
        %v6632 = vcombine.low %v6576, %v6592
        %v6633 = vcombine.high %v6576, %v6592
        %v6635 = vunpack.c.l.s4 1934713408
        %v6636 = vunpack.c.0.s8 %v6635
        %v6637 = vlaneseq
        %v6638 = vshrl.u32 %v6637, 7
        %v6639 = vsub.s32 %v6636, %v6638
        %v6640 = vrot.slane %v6632, %v6639
        %v6642 = vunpack.c.l.s4 1934713408
        %v6643 = vunpack.c.0.s8 %v6642
        %v6644 = vlaneseq
        %v6645 = vshrl.u32 %v6644, 7
        %v6646 = vsub.s32 %v6643, %v6645
        %v6647 = vrot.slane %v6633, %v6646
        %v6648 = vcombine.low %v6583, %v6599
        %v6649 = vcombine.high %v6583, %v6599
        %v6651 = vunpack.c.l.s4 1934713408
        %v6652 = vunpack.c.0.s8 %v6651
        %v6653 = vlaneseq
        %v6654 = vshrl.u32 %v6653, 7
        %v6655 = vsub.s32 %v6652, %v6654
        %v6656 = vrot.slane %v6648, %v6655
        %v6658 = vunpack.c.l.s4 1934713408
        %v6659 = vunpack.c.0.s8 %v6658
        %v6660 = vlaneseq
        %v6661 = vshrl.u32 %v6660, 7
        %v6662 = vsub.s32 %v6659, %v6661
        %v6663 = vrot.slane %v6649, %v6662
        %v6664 = vcombine.low %v6608, %v6640
        %v6665 = vcombine.high %v6608, %v6640
        %v6666 = vcombine.low %v6615, %v6647
        %v6667 = vcombine.high %v6615, %v6647
        %v6668 = vcombine.low %v6624, %v6656
        %v6669 = vcombine.high %v6624, %v6656
        %v6670 = vcombine.low %v6631, %v6663
        %v6671 = vcombine.high %v6631, %v6663
        %v6672 = vcombine.low %v6520, %v6524
        %v6673 = vcombine.high %v6520, %v6524
        %v6675 = vunpack.c.l.s4 1983009808
        %v6676 = vunpack.c.0.s8 %v6675
        %v6677 = vlaneseq
        %v6678 = vshrl.u32 %v6677, 7
        %v6679 = vsub.s32 %v6676, %v6678
        %v6680 = vrot.slane %v6672, %v6679
        %v6682 = vunpack.c.l.s4 1983009808
        %v6683 = vunpack.c.0.s8 %v6682
        %v6684 = vlaneseq
        %v6685 = vshrl.u32 %v6684, 7
        %v6686 = vsub.s32 %v6683, %v6685
        %v6687 = vrot.slane %v6673, %v6686
        %v6688 = vcombine.low %v6522, %v6526
        %v6689 = vcombine.high %v6522, %v6526
        %v6691 = vunpack.c.l.s4 1983009808
        %v6692 = vunpack.c.0.s8 %v6691
        %v6693 = vlaneseq
        %v6694 = vshrl.u32 %v6693, 7
        %v6695 = vsub.s32 %v6692, %v6694
        %v6696 = vrot.slane %v6688, %v6695
        %v6698 = vunpack.c.l.s4 1983009808
        %v6699 = vunpack.c.0.s8 %v6698
        %v6700 = vlaneseq
        %v6701 = vshrl.u32 %v6700, 7
        %v6702 = vsub.s32 %v6699, %v6701
        %v6703 = vrot.slane %v6689, %v6702
        %v6704 = vcombine.low %v6528, %v6532
        %v6705 = vcombine.high %v6528, %v6532
        %v6707 = vunpack.c.l.s4 1983009808
        %v6708 = vunpack.c.0.s8 %v6707
        %v6709 = vlaneseq
        %v6710 = vshrl.u32 %v6709, 7
        %v6711 = vsub.s32 %v6708, %v6710
        %v6712 = vrot.slane %v6704, %v6711
        %v6714 = vunpack.c.l.s4 1983009808
        %v6715 = vunpack.c.0.s8 %v6714
        %v6716 = vlaneseq
        %v6717 = vshrl.u32 %v6716, 7
        %v6718 = vsub.s32 %v6715, %v6717
        %v6719 = vrot.slane %v6705, %v6718
        %v6720 = vcombine.low %v6530, %v6534
        %v6721 = vcombine.high %v6530, %v6534
        %v6723 = vunpack.c.l.s4 1983009808
        %v6724 = vunpack.c.0.s8 %v6723
        %v6725 = vlaneseq
        %v6726 = vshrl.u32 %v6725, 7
        %v6727 = vsub.s32 %v6724, %v6726
        %v6728 = vrot.slane %v6720, %v6727
        %v6730 = vunpack.c.l.s4 1983009808
        %v6731 = vunpack.c.0.s8 %v6730
        %v6732 = vlaneseq
        %v6733 = vshrl.u32 %v6732, 7
        %v6734 = vsub.s32 %v6731, %v6733
        %v6735 = vrot.slane %v6721, %v6734
        %v6736 = vcombine.low %v6680, %v6696
        %v6737 = vcombine.high %v6680, %v6696
        %v6739 = vunpack.c.l.s4 1934713408
        %v6740 = vunpack.c.0.s8 %v6739
        %v6741 = vlaneseq
        %v6742 = vshrl.u32 %v6741, 7
        %v6743 = vsub.s32 %v6740, %v6742
        %v6744 = vrot.slane %v6736, %v6743
        %v6746 = vunpack.c.l.s4 1934713408
        %v6747 = vunpack.c.0.s8 %v6746
        %v6748 = vlaneseq
        %v6749 = vshrl.u32 %v6748, 7
        %v6750 = vsub.s32 %v6747, %v6749
        %v6751 = vrot.slane %v6737, %v6750
        %v6752 = vcombine.low %v6687, %v6703
        %v6753 = vcombine.high %v6687, %v6703
        %v6755 = vunpack.c.l.s4 1934713408
        %v6756 = vunpack.c.0.s8 %v6755
        %v6757 = vlaneseq
        %v6758 = vshrl.u32 %v6757, 7
        %v6759 = vsub.s32 %v6756, %v6758
        %v6760 = vrot.slane %v6752, %v6759
        %v6762 = vunpack.c.l.s4 1934713408
        %v6763 = vunpack.c.0.s8 %v6762
        %v6764 = vlaneseq
        %v6765 = vshrl.u32 %v6764, 7
        %v6766 = vsub.s32 %v6763, %v6765
        %v6767 = vrot.slane %v6753, %v6766
        %v6768 = vcombine.low %v6712, %v6728
        %v6769 = vcombine.high %v6712, %v6728
        %v6771 = vunpack.c.l.s4 1934713408
        %v6772 = vunpack.c.0.s8 %v6771
        %v6773 = vlaneseq
        %v6774 = vshrl.u32 %v6773, 7
        %v6775 = vsub.s32 %v6772, %v6774
        %v6776 = vrot.slane %v6768, %v6775
        %v6778 = vunpack.c.l.s4 1934713408
        %v6779 = vunpack.c.0.s8 %v6778
        %v6780 = vlaneseq
        %v6781 = vshrl.u32 %v6780, 7
        %v6782 = vsub.s32 %v6779, %v6781
        %v6783 = vrot.slane %v6769, %v6782
        %v6784 = vcombine.low %v6719, %v6735
        %v6785 = vcombine.high %v6719, %v6735
        %v6787 = vunpack.c.l.s4 1934713408
        %v6788 = vunpack.c.0.s8 %v6787
        %v6789 = vlaneseq
        %v6790 = vshrl.u32 %v6789, 7
        %v6791 = vsub.s32 %v6788, %v6790
        %v6792 = vrot.slane %v6784, %v6791
        %v6794 = vunpack.c.l.s4 1934713408
        %v6795 = vunpack.c.0.s8 %v6794
        %v6796 = vlaneseq
        %v6797 = vshrl.u32 %v6796, 7
        %v6798 = vsub.s32 %v6795, %v6797
        %v6799 = vrot.slane %v6785, %v6798
        %v6800 = vcombine.low %v6744, %v6776
        %v6801 = vcombine.high %v6744, %v6776
        %v6802 = vcombine.low %v6751, %v6783
        %v6803 = vcombine.high %v6751, %v6783
        %v6804 = vcombine.low %v6760, %v6792
        %v6805 = vcombine.high %v6760, %v6792
        %v6806 = vcombine.low %v6767, %v6799
        %v6807 = vcombine.high %v6767, %v6799
        %v6808 = vcombine.low %v6505, %v6509
        %v6809 = vcombine.high %v6505, %v6509
        %v6811 = vunpack.c.l.s4 1983009808
        %v6812 = vunpack.c.0.s8 %v6811
        %v6813 = vlaneseq
        %v6814 = vshrl.u32 %v6813, 7
        %v6815 = vsub.s32 %v6812, %v6814
        %v6816 = vrot.slane %v6808, %v6815
        %v6818 = vunpack.c.l.s4 1983009808
        %v6819 = vunpack.c.0.s8 %v6818
        %v6820 = vlaneseq
        %v6821 = vshrl.u32 %v6820, 7
        %v6822 = vsub.s32 %v6819, %v6821
        %v6823 = vrot.slane %v6809, %v6822
        %v6824 = vcombine.low %v6507, %v6511
        %v6825 = vcombine.high %v6507, %v6511
        %v6827 = vunpack.c.l.s4 1983009808
        %v6828 = vunpack.c.0.s8 %v6827
        %v6829 = vlaneseq
        %v6830 = vshrl.u32 %v6829, 7
        %v6831 = vsub.s32 %v6828, %v6830
        %v6832 = vrot.slane %v6824, %v6831
        %v6834 = vunpack.c.l.s4 1983009808
        %v6835 = vunpack.c.0.s8 %v6834
        %v6836 = vlaneseq
        %v6837 = vshrl.u32 %v6836, 7
        %v6838 = vsub.s32 %v6835, %v6837
        %v6839 = vrot.slane %v6825, %v6838
        %v6840 = vcombine.low %v6513, %v6517
        %v6841 = vcombine.high %v6513, %v6517
        %v6843 = vunpack.c.l.s4 1983009808
        %v6844 = vunpack.c.0.s8 %v6843
        %v6845 = vlaneseq
        %v6846 = vshrl.u32 %v6845, 7
        %v6847 = vsub.s32 %v6844, %v6846
        %v6848 = vrot.slane %v6840, %v6847
        %v6850 = vunpack.c.l.s4 1983009808
        %v6851 = vunpack.c.0.s8 %v6850
        %v6852 = vlaneseq
        %v6853 = vshrl.u32 %v6852, 7
        %v6854 = vsub.s32 %v6851, %v6853
        %v6855 = vrot.slane %v6841, %v6854
        %v6856 = vcombine.low %v6515, %v6519
        %v6857 = vcombine.high %v6515, %v6519
        %v6859 = vunpack.c.l.s4 1983009808
        %v6860 = vunpack.c.0.s8 %v6859
        %v6861 = vlaneseq
        %v6862 = vshrl.u32 %v6861, 7
        %v6863 = vsub.s32 %v6860, %v6862
        %v6864 = vrot.slane %v6856, %v6863
        %v6866 = vunpack.c.l.s4 1983009808
        %v6867 = vunpack.c.0.s8 %v6866
        %v6868 = vlaneseq
        %v6869 = vshrl.u32 %v6868, 7
        %v6870 = vsub.s32 %v6867, %v6869
        %v6871 = vrot.slane %v6857, %v6870
        %v6872 = vcombine.low %v6816, %v6832
        %v6873 = vcombine.high %v6816, %v6832
        %v6875 = vunpack.c.l.s4 1934713408
        %v6876 = vunpack.c.0.s8 %v6875
        %v6877 = vlaneseq
        %v6878 = vshrl.u32 %v6877, 7
        %v6879 = vsub.s32 %v6876, %v6878
        %v6880 = vrot.slane %v6872, %v6879
        %v6882 = vunpack.c.l.s4 1934713408
        %v6883 = vunpack.c.0.s8 %v6882
        %v6884 = vlaneseq
        %v6885 = vshrl.u32 %v6884, 7
        %v6886 = vsub.s32 %v6883, %v6885
        %v6887 = vrot.slane %v6873, %v6886
        %v6888 = vcombine.low %v6823, %v6839
        %v6889 = vcombine.high %v6823, %v6839
        %v6891 = vunpack.c.l.s4 1934713408
        %v6892 = vunpack.c.0.s8 %v6891
        %v6893 = vlaneseq
        %v6894 = vshrl.u32 %v6893, 7
        %v6895 = vsub.s32 %v6892, %v6894
        %v6896 = vrot.slane %v6888, %v6895
        %v6898 = vunpack.c.l.s4 1934713408
        %v6899 = vunpack.c.0.s8 %v6898
        %v6900 = vlaneseq
        %v6901 = vshrl.u32 %v6900, 7
        %v6902 = vsub.s32 %v6899, %v6901
        %v6903 = vrot.slane %v6889, %v6902
        %v6904 = vcombine.low %v6848, %v6864
        %v6905 = vcombine.high %v6848, %v6864
        %v6907 = vunpack.c.l.s4 1934713408
        %v6908 = vunpack.c.0.s8 %v6907
        %v6909 = vlaneseq
        %v6910 = vshrl.u32 %v6909, 7
        %v6911 = vsub.s32 %v6908, %v6910
        %v6912 = vrot.slane %v6904, %v6911
        %v6914 = vunpack.c.l.s4 1934713408
        %v6915 = vunpack.c.0.s8 %v6914
        %v6916 = vlaneseq
        %v6917 = vshrl.u32 %v6916, 7
        %v6918 = vsub.s32 %v6915, %v6917
        %v6919 = vrot.slane %v6905, %v6918
        %v6920 = vcombine.low %v6855, %v6871
        %v6921 = vcombine.high %v6855, %v6871
        %v6923 = vunpack.c.l.s4 1934713408
        %v6924 = vunpack.c.0.s8 %v6923
        %v6925 = vlaneseq
        %v6926 = vshrl.u32 %v6925, 7
        %v6927 = vsub.s32 %v6924, %v6926
        %v6928 = vrot.slane %v6920, %v6927
        %v6930 = vunpack.c.l.s4 1934713408
        %v6931 = vunpack.c.0.s8 %v6930
        %v6932 = vlaneseq
        %v6933 = vshrl.u32 %v6932, 7
        %v6934 = vsub.s32 %v6931, %v6933
        %v6935 = vrot.slane %v6921, %v6934
        %v6936 = vcombine.low %v6880, %v6912
        %v6937 = vcombine.high %v6880, %v6912
        %v6938 = vcombine.low %v6887, %v6919
        %v6939 = vcombine.high %v6887, %v6919
        %v6940 = vcombine.low %v6896, %v6928
        %v6941 = vcombine.high %v6896, %v6928
        %v6942 = vcombine.low %v6903, %v6935
        %v6943 = vcombine.high %v6903, %v6935
        %v6944 = vcombine.low %v6521, %v6525
        %v6945 = vcombine.high %v6521, %v6525
        %v6947 = vunpack.c.l.s4 1983009808
        %v6948 = vunpack.c.0.s8 %v6947
        %v6949 = vlaneseq
        %v6950 = vshrl.u32 %v6949, 7
        %v6951 = vsub.s32 %v6948, %v6950
        %v6952 = vrot.slane %v6944, %v6951
        %v6954 = vunpack.c.l.s4 1983009808
        %v6955 = vunpack.c.0.s8 %v6954
        %v6956 = vlaneseq
        %v6957 = vshrl.u32 %v6956, 7
        %v6958 = vsub.s32 %v6955, %v6957
        %v6959 = vrot.slane %v6945, %v6958
        %v6960 = vcombine.low %v6523, %v6527
        %v6961 = vcombine.high %v6523, %v6527
        %v6963 = vunpack.c.l.s4 1983009808
        %v6964 = vunpack.c.0.s8 %v6963
        %v6965 = vlaneseq
        %v6966 = vshrl.u32 %v6965, 7
        %v6967 = vsub.s32 %v6964, %v6966
        %v6968 = vrot.slane %v6960, %v6967
        %v6970 = vunpack.c.l.s4 1983009808
        %v6971 = vunpack.c.0.s8 %v6970
        %v6972 = vlaneseq
        %v6973 = vshrl.u32 %v6972, 7
        %v6974 = vsub.s32 %v6971, %v6973
        %v6975 = vrot.slane %v6961, %v6974
        %v6976 = vcombine.low %v6529, %v6533
        %v6977 = vcombine.high %v6529, %v6533
        %v6979 = vunpack.c.l.s4 1983009808
        %v6980 = vunpack.c.0.s8 %v6979
        %v6981 = vlaneseq
        %v6982 = vshrl.u32 %v6981, 7
        %v6983 = vsub.s32 %v6980, %v6982
        %v6984 = vrot.slane %v6976, %v6983
        %v6986 = vunpack.c.l.s4 1983009808
        %v6987 = vunpack.c.0.s8 %v6986
        %v6988 = vlaneseq
        %v6989 = vshrl.u32 %v6988, 7
        %v6990 = vsub.s32 %v6987, %v6989
        %v6991 = vrot.slane %v6977, %v6990
        %v6992 = vcombine.low %v6531, %v6535
        %v6993 = vcombine.high %v6531, %v6535
        %v6995 = vunpack.c.l.s4 1983009808
        %v6996 = vunpack.c.0.s8 %v6995
        %v6997 = vlaneseq
        %v6998 = vshrl.u32 %v6997, 7
        %v6999 = vsub.s32 %v6996, %v6998
        %v7000 = vrot.slane %v6992, %v6999
        %v7002 = vunpack.c.l.s4 1983009808
        %v7003 = vunpack.c.0.s8 %v7002
        %v7004 = vlaneseq
        %v7005 = vshrl.u32 %v7004, 7
        %v7006 = vsub.s32 %v7003, %v7005
        %v7007 = vrot.slane %v6993, %v7006
        %v7008 = vcombine.low %v6952, %v6968
        %v7009 = vcombine.high %v6952, %v6968
        %v7011 = vunpack.c.l.s4 1934713408
        %v7012 = vunpack.c.0.s8 %v7011
        %v7013 = vlaneseq
        %v7014 = vshrl.u32 %v7013, 7
        %v7015 = vsub.s32 %v7012, %v7014
        %v7016 = vrot.slane %v7008, %v7015
        %v7018 = vunpack.c.l.s4 1934713408
        %v7019 = vunpack.c.0.s8 %v7018
        %v7020 = vlaneseq
        %v7021 = vshrl.u32 %v7020, 7
        %v7022 = vsub.s32 %v7019, %v7021
        %v7023 = vrot.slane %v7009, %v7022
        %v7024 = vcombine.low %v6959, %v6975
        %v7025 = vcombine.high %v6959, %v6975
        %v7027 = vunpack.c.l.s4 1934713408
        %v7028 = vunpack.c.0.s8 %v7027
        %v7029 = vlaneseq
        %v7030 = vshrl.u32 %v7029, 7
        %v7031 = vsub.s32 %v7028, %v7030
        %v7032 = vrot.slane %v7024, %v7031
        %v7034 = vunpack.c.l.s4 1934713408
        %v7035 = vunpack.c.0.s8 %v7034
        %v7036 = vlaneseq
        %v7037 = vshrl.u32 %v7036, 7
        %v7038 = vsub.s32 %v7035, %v7037
        %v7039 = vrot.slane %v7025, %v7038
        %v7040 = vcombine.low %v6984, %v7000
        %v7041 = vcombine.high %v6984, %v7000
        %v7043 = vunpack.c.l.s4 1934713408
        %v7044 = vunpack.c.0.s8 %v7043
        %v7045 = vlaneseq
        %v7046 = vshrl.u32 %v7045, 7
        %v7047 = vsub.s32 %v7044, %v7046
        %v7048 = vrot.slane %v7040, %v7047
        %v7050 = vunpack.c.l.s4 1934713408
        %v7051 = vunpack.c.0.s8 %v7050
        %v7052 = vlaneseq
        %v7053 = vshrl.u32 %v7052, 7
        %v7054 = vsub.s32 %v7051, %v7053
        %v7055 = vrot.slane %v7041, %v7054
        %v7056 = vcombine.low %v6991, %v7007
        %v7057 = vcombine.high %v6991, %v7007
        %v7059 = vunpack.c.l.s4 1934713408
        %v7060 = vunpack.c.0.s8 %v7059
        %v7061 = vlaneseq
        %v7062 = vshrl.u32 %v7061, 7
        %v7063 = vsub.s32 %v7060, %v7062
        %v7064 = vrot.slane %v7056, %v7063
        %v7066 = vunpack.c.l.s4 1934713408
        %v7067 = vunpack.c.0.s8 %v7066
        %v7068 = vlaneseq
        %v7069 = vshrl.u32 %v7068, 7
        %v7070 = vsub.s32 %v7067, %v7069
        %v7071 = vrot.slane %v7057, %v7070
        %v7072 = vcombine.low %v7016, %v7048
        %v7073 = vcombine.high %v7016, %v7048
        %v7074 = vcombine.low %v7023, %v7055
        %v7075 = vcombine.high %v7023, %v7055
        %v7076 = vcombine.low %v7032, %v7064
        %v7077 = vcombine.high %v7032, %v7064
        %v7078 = vcombine.low %v7039, %v7071
        %v7079 = vcombine.high %v7039, %v7071
        %7082 = vrot.lane.b32.xlu0 %v6665, 4
        %v7083 = vpop.permute.xlu0 %7082
        %7084 = vrot.lane.b32.xlu0 %v6801, 4
        %v7085 = vpop.permute.xlu0 %7084
        %7090 = vrot.lane.b32.xlu0 %v6666, 8
        %v7091 = vpop.permute.xlu0 %7090
        %7092 = vrot.lane.b32.xlu0 %v6802, 8
        %v7093 = vpop.permute.xlu0 %7092
        %7098 = vrot.lane.b32.xlu0 %v6667, 12
        %v7099 = vpop.permute.xlu0 %7098
        %7100 = vrot.lane.b32.xlu0 %v6803, 12
        %v7101 = vpop.permute.xlu0 %7100
        %7106 = vrot.lane.b32.xlu0 %v6668, 16
        %v7107 = vpop.permute.xlu0 %7106
        %7108 = vrot.lane.b32.xlu0 %v6804, 16
        %v7109 = vpop.permute.xlu0 %7108
        %7114 = vrot.lane.b32.xlu0 %v6669, 20
        %v7115 = vpop.permute.xlu0 %7114
        %7116 = vrot.lane.b32.xlu0 %v6805, 20
        %v7117 = vpop.permute.xlu0 %7116
        %7122 = vrot.lane.b32.xlu0 %v6670, 24
        %v7123 = vpop.permute.xlu0 %7122
        %7124 = vrot.lane.b32.xlu0 %v6806, 24
        %v7125 = vpop.permute.xlu0 %7124
        %7130 = vrot.lane.b32.xlu0 %v6671, 28
        %v7131 = vpop.permute.xlu0 %7130
        %7132 = vrot.lane.b32.xlu0 %v6807, 28
        %v7133 = vpop.permute.xlu0 %7132
        %7138 = vrot.lane.b32.xlu0 %v6936, 32
        %v7139 = vpop.permute.xlu0 %7138
        %7140 = vrot.lane.b32.xlu0 %v7072, 32
        %v7141 = vpop.permute.xlu0 %7140
        %7146 = vrot.lane.b32.xlu0 %v6937, 36
        %v7147 = vpop.permute.xlu0 %7146
        %7148 = vrot.lane.b32.xlu0 %v7073, 36
        %v7149 = vpop.permute.xlu0 %7148
        %7154 = vrot.lane.b32.xlu0 %v6938, 40
        %v7155 = vpop.permute.xlu0 %7154
        %7156 = vrot.lane.b32.xlu0 %v7074, 40
        %v7157 = vpop.permute.xlu0 %7156
        %7162 = vrot.lane.b32.xlu0 %v6939, 44
        %v7163 = vpop.permute.xlu0 %7162
        %7164 = vrot.lane.b32.xlu0 %v7075, 44
        %v7165 = vpop.permute.xlu0 %7164
        %7170 = vrot.lane.b32.xlu0 %v6940, 48
        %v7171 = vpop.permute.xlu0 %7170
        %7172 = vrot.lane.b32.xlu0 %v7076, 48
        %v7173 = vpop.permute.xlu0 %7172
        %7178 = vrot.lane.b32.xlu0 %v6941, 52
        %v7179 = vpop.permute.xlu0 %7178
        %7180 = vrot.lane.b32.xlu0 %v7077, 52
        %v7181 = vpop.permute.xlu0 %7180
        %7186 = vrot.lane.b32.xlu0 %v6942, 56
        %v7187 = vpop.permute.xlu0 %7186
        %7188 = vrot.lane.b32.xlu0 %v7078, 56
        %v7189 = vpop.permute.xlu0 %7188
        %7194 = vrot.lane.b32.xlu0 %v6943, 60
        %v7195 = vpop.permute.xlu0 %7194
        %7196 = vrot.lane.b32.xlu0 %v7079, 60
        %v7197 = vpop.permute.xlu0 %7196
        %v7200 = vsel %vm357, %v6664, %v7083
        %v7201 = vsel %vm357, %v6800, %v7085
        %vm7202 = vcmask 64512
        %v7203 = vsel %vm7202, %v7200, %v7091
        %v7204 = vsel %vm7202, %v7201, %v7093
        %vm7205 = vcmask 97280
        %v7206 = vsel %vm7205, %v7203, %v7099
        %v7207 = vsel %vm7205, %v7204, %v7101
        %vm7208 = vcmask 130048
        %v7209 = vsel %vm7208, %v7206, %v7107
        %v7210 = vsel %vm7208, %v7207, %v7109
        %vm7211 = vcmask 162816
        %v7212 = vsel %vm7211, %v7209, %v7115
        %v7213 = vsel %vm7211, %v7210, %v7117
        %vm7214 = vcmask 195584
        %v7215 = vsel %vm7214, %v7212, %v7123
        %v7216 = vsel %vm7214, %v7213, %v7125
        %vm7217 = vcmask 228352
        %v7218 = vsel %vm7217, %v7215, %v7131
        %v7219 = vsel %vm7217, %v7216, %v7133
        %vm7220 = vcmask 261120
        %v7221 = vsel %vm7220, %v7218, %v7139
        %v7222 = vsel %vm7220, %v7219, %v7141
        %vm7223 = vcmask 293888
        %v7224 = vsel %vm7223, %v7221, %v7147
        %v7225 = vsel %vm7223, %v7222, %v7149
        %vm7226 = vcmask 326656
        %v7227 = vsel %vm7226, %v7224, %v7155
        %v7228 = vsel %vm7226, %v7225, %v7157
        %vm7229 = vcmask 359424
        %v7230 = vsel %vm7229, %v7227, %v7163
        %v7231 = vsel %vm7229, %v7228, %v7165
        %vm7232 = vcmask 392192
        %v7233 = vsel %vm7232, %v7230, %v7171
        %v7234 = vsel %vm7232, %v7231, %v7173
        %vm7235 = vcmask 424960
        %v7236 = vsel %vm7235, %v7233, %v7179
        %v7237 = vsel %vm7235, %v7234, %v7181
        %vm7238 = vcmask 457728
        %v7239 = vsel %vm7238, %v7236, %v7187
        %v7240 = vsel %vm7238, %v7237, %v7189
        %vm7241 = vcmask 490496
        %v7242 = vsel %vm7241, %v7239, %v7195
        %v7243 = vsel %vm7241, %v7240, %v7197
        %vm7244 = vcmask 523264
        %7245 = vst.msk [vmem:[%s285] sm:$0xff] %vm7244, %v7242
        %7246 = vst.msk [vmem:[%s285 + $0x8] sm:$0xff] %vm7244, %v7243
        %s7247 = sand.u32 %s195, 1
        %s7248 = scalar_lea.sflag [#allocation4], %s7247
        %s7249 = sand.u32 %s195, 1
        %s7250 = smul.addr %s7249, 16
        %s7251 = scalar_lea.vmem [#allocation3], %s7250
        // Predicated region
        $region53: #{tpu_custom_call.1} parent=47 // pred_check
          %p7252 = pneg %p205
        $region54: #{tpu_custom_call.1} parent=47 // pred_check_branch
          %7254 = sbr.rel (%p7252) target = $region56
        $region55: #{tpu_custom_call.1} parent=47 // pred_region
          %s7255 = smul.u32 2, %s26
          %s7257 = ssub.s32 256, 256
          %7258 = vsyncadd %s7248, %s7257
          %s7259 = smul.addr %s25, 2
          %s7260 = sadd.s32 %s7255, %s7259
          %s7261 = smul.addr %s7260, 128
          %s7262 = scalar_lea.hbm %s7, %s7261
          %s7263 = sshll.u32 %s7251, 4
          %s7264 = int_to_ptr.vmem [resolvable:$true] %s7263
          %7269 = dma.vmem_to_hbm [thread:$0]  %s7264, 256, %s7262, %s7248, 128, 128, 8
        $region56: #{tpu_custom_call.1} parent=47 // pred_fallthru
          _
      $region48: #{tpu_custom_call.1} parent=5 // pred_fallthru
        _
      %p7270 = scmp.le.s32.totalorder 2, %s16
      // Predicated region
      $region57: #{tpu_custom_call.1} parent=5 // pred_check
        %p7271 = pneg %p7270
      $region58: #{tpu_custom_call.1} parent=5 // pred_check_branch
        %7273 = sbr.rel (%p7271) target = $region60
      $region59: #{tpu_custom_call.1} parent=5 // pred_region
        %s7274 = ssub.s32 %s16, 2
        // Predicated region
        $region61: #{tpu_custom_call.1} parent=59 // pred_check
          %p7275 = pneg %p211
        $region62: #{tpu_custom_call.1} parent=59 // pred_check_branch
          %7277 = sbr.rel (%p7275) target = $region64
        $region63: #{tpu_custom_call.1} parent=59 // pred_region
          %s7278 = sand.u32 %s196, 1
          %s7279 = scalar_lea.sflag [#allocation4], %s7278
          %s7280 = sand.u32 %s196, 1
          %s7281 = smul.addr %s7280, 16
          %s7282 = scalar_lea.vmem [#allocation3], %s7281
          %7283 = dma.done %s7279, 256
        $region64: #{tpu_custom_call.1} parent=59 // pred_fallthru
          _
      $region60: #{tpu_custom_call.1} parent=5 // pred_fallthru
        _
    $region6: #{tpu_custom_call.1} parent=1 // loop_footer
      %s20 = sadd.s32 1, %s16
    $region7: #{tpu_custom_call.1} parent=1 // loop_footer_branch
      %15 = sbr.rel target = $region3
    $region8: #{tpu_custom_call.1} parent=1 // loop_exit
      _
    %7284 = vsyncpa [#allocation4], 1
    %s7285 = scalar_lea.sflag [#allocation4], 1
    %7286 = vsyncpa %s7285, 1

</llo_original>
